<compile_context>
chip_gen: v7x
topology: tpu7x:2x2x1
jax: 0.10.0
libtpu: 0.0.40
codegen_flags: <defaults>
</compile_context>

<pallas_src>
import jax
import jax.numpy as jnp
from jax.experimental import pallas as pl
from jax.experimental.pallas import tpu as pltpu

CLIP_LEN = 8
N_ROIS_PER_FRAME = 5                      # implied by x.view(B//8, 8*5, 512, 1, 1)
C_IN = 2048                               # nn.Conv2d(2048, 512, 1)
C_SQ = 512
N_ROI_ROWS = CLIP_LEN * N_ROIS_PER_FRAME  # 40 rois per clip
ROWS_PER_CLIP = N_ROI_ROWS + CLIP_LEN     # + 8 per-frame spatial-mean rows = 48


# ----------------------------------------------------------------------------
# Fused per-clip kernel: squeeze conv + RoIAlign/mean matmul + max pools +
# Linear(1024, 2) + Softmax.
# ----------------------------------------------------------------------------
def _v2g_fused_kernel(x_ref, wsq_ref, bsq_ref, wb_ref, wc_ref, bc_ref, o_ref):
    # x_ref:   (CLIP_LEN*HW, 2048) bf16  one clip of NHWC-flat backbone rows
    # wsq_ref: (2048, 512) bf16          resident 1x1 squeeze-conv weight (Cin,Cout)
    # bsq_ref: (1, 512) f32
    # wb_ref:  (48, CLIP_LEN*HW) f32     rows 0..39: RoIAlign bilinear weights of
    #                                    this clip's 40 rois; rows 40..47: per-frame
    #                                    spatial-mean rows (1/HW)
    # wc_ref:  (2, 1024) f32             nn.Linear(1024, 2) weight (PyTorch layout)
    # bc_ref:  (1, 2) f32
    # o_ref:   (1, 8, 128) f32           probs land at [0, 0:2, :] (lane-broadcast)

    # 1x1 squeeze conv: ONE lane-dense bf16 MXU matmul, f32 accumulation.
    feat = jnp.dot(x_ref[...], wsq_ref[...],
                   preferred_element_type=jnp.float32) + bsq_ref[...]   # (8*HW, 512) f32

    # RoIAlign((1,1), aligned=True) + adaptive_avg_pool2d folded into one f32
    # matmul against the precomputed pooling rows (kept f32 for parity).
    pooled = jnp.dot(wb_ref[...], feat,
                     preferred_element_type=jnp.float32)                # (48, 512) f32

    x4 = jnp.max(pooled[:N_ROI_ROWS, :], axis=0, keepdims=True)   # max over 40 rois
    x0 = jnp.max(pooled[N_ROI_ROWS:, :], axis=0, keepdims=True)   # max over 8 frame means

    # Classifier (eval-mode Dropout is identity): Linear(1024, 2) + Softmax.
    xcat = jnp.concatenate([x4, x0], axis=-1)                             # (1, 1024)
    l0 = jnp.sum(xcat * wc_ref[0:1, :], axis=-1, keepdims=True)           # (1, 1)
    l1 = jnp.sum(xcat * wc_ref[1:2, :], axis=-1, keepdims=True)           # (1, 1)
    logits = jnp.concatenate([l0, l1], axis=-1) + bc_ref[...]             # (1, 2)
    m = jnp.max(logits, axis=-1, keepdims=True)
    e = jnp.exp(logits - m)
    probs = e / jnp.sum(e, axis=-1, keepdims=True)                        # (1, 2)

    # Lane-dense padded output tile: sublane s holds prob_s broadcast over lanes.
    row0 = jnp.broadcast_to(probs[:, 0:1], (1, 128))
    row1 = jnp.broadcast_to(probs[:, 1:2], (1, 128))
    o_ref[0] = jnp.concatenate(
        [row0, row1, jnp.zeros((6, 128), jnp.float32)], axis=0)           # (8, 128)


def _vmem_limit_bytes():
    # Per-generation scoped-VMEM limit (v7x: 64 MiB physical; v5e/v6e: 128 MiB).
    try:
        cap = int(pltpu.get_tpu_info().vmem_capacity_bytes)
    except Exception:
        cap = 64 * 1024 * 1024
    return int(min(cap * 3 // 4, 96 * 1024 * 1024))


# ----------------------------------------------------------------------------
# RoIAlign((1,1), spatial_scale=1.0, sampling_ratio=-1, aligned=True) +
# per-frame spatial-mean, as a dense per-clip pooling-weight matrix.
# Built with one-hot ops in plain JAX (no gathers).
# ----------------------------------------------------------------------------
def _roi_align_rows(rois, H, W):
    """Bilinear RoIAlign rows over ONE clip's (CLIP_LEN, H, W) pixels.

    Assumes roi row r belongs to clip r // 40 (frame-major rois with 5 per
    frame), exactly the grouping the reference's
    `x.view(B//clip_len, clip_len*5, 512, 1, 1)` implies.
    """
    R = rois.shape[0]
    f32 = jnp.float32

    frame_in_clip = rois[:, 0].astype(jnp.int32) % CLIP_LEN
    x1 = rois[:, 1] - 0.5
    y1 = rois[:, 2] - 0.5
    x2 = rois[:, 3] - 0.5
    y2 = rois[:, 4] - 0.5
    roi_w = x2 - x1
    roi_h = y2 - y1

    grid_h = jnp.ceil(roi_h).astype(jnp.int32)       # adaptive sampling ratio (-1)
    grid_w = jnp.ceil(roi_w).astype(jnp.int32)
    count = jnp.maximum(grid_h * grid_w, 1).astype(f32)
    gh = jnp.maximum(grid_h, 1).astype(f32)
    gw = jnp.maximum(grid_w, 1).astype(f32)

    # TODO(synk): GH=H, GW=W is a static upper bound on the adaptive per-roi
    # sampling grid; rois larger than the feature map are under-sampled vs
    # torchvision sampling_ratio=-1 (fine for rois contained in the map).
    GH, GW = H, W
    iy = jnp.arange(GH, dtype=f32)
    ix = jnp.arange(GW, dtype=f32)
    y = y1[:, None] + (iy[None, :] + 0.5) * roi_h[:, None] / gh[:, None]   # (R, GH)
    x = x1[:, None] + (ix[None, :] + 0.5) * roi_w[:, None] / gw[:, None]   # (R, GW)
    in_grid = ((jnp.arange(GH)[None, :] < grid_h[:, None])[:, :, None]
               & (jnp.arange(GW)[None, :] < grid_w[:, None])[:, None, :])  # (R,GH,GW)

    yy = jnp.broadcast_to(y[:, :, None], (R, GH, GW))
    xx = jnp.broadcast_to(x[:, None, :], (R, GH, GW))
    in_bounds = (yy >= -1.0) & (yy <= H) & (xx >= -1.0) & (xx <= W)
    valid = (in_grid & in_bounds).astype(f32)

    yc = jnp.maximum(yy, 0.0)
    xc = jnp.maximum(xx, 0.0)
    y_lo0 = yc.astype(jnp.int32)
    x_lo0 = xc.astype(jnp.int32)
    cy = y_lo0 >= H - 1
    cx = x_lo0 >= W - 1
    y_lo = jnp.where(cy, H - 1, y_lo0)
    y_hi = jnp.where(cy, H - 1, y_lo0 + 1)
    x_lo = jnp.where(cx, W - 1, x_lo0)
    x_hi = jnp.where(cx, W - 1, x_lo0 + 1)
    yv = jnp.where(cy, y_lo.astype(f32), yc)
    xv = jnp.where(cx, x_lo.astype(f32), xc)
    ly = yv - y_lo.astype(f32)
    lx = xv - x_lo.astype(f32)
    hy = 1.0 - ly
    hx = 1.0 - lx

    oh_y_lo = jax.nn.one_hot(y_lo, H, dtype=f32)      # (R, GH, GW, H)
    oh_y_hi = jax.nn.one_hot(y_hi, H, dtype=f32)
    oh_x_lo = jax.nn.one_hot(x_lo, W, dtype=f32)      # (R, GH, GW, W)
    oh_x_hi = jax.nn.one_hot(x_hi, W, dtype=f32)

    def corner(wgt, oh_y, oh_x):
        wy = (wgt * valid)[..., None] * oh_y                          # (R,GH,GW,H)
        return jnp.einsum('rgsy,rgsx->ryx', wy, oh_x)                 # (R, H, W)

    m = (corner(hy * hx, oh_y_lo, oh_x_lo)
         + corner(hy * lx, oh_y_lo, oh_x_hi)
         + corner(ly * hx, oh_y_hi, oh_x_lo)
         + corner(ly * lx, oh_y_hi, oh_x_hi)) / count[:, None, None]  # (R, H, W)

    # Column layout (frame-in-clip, y, x) matches the clip's NHWC-flat rows.
    oh_f = jax.nn.one_hot(frame_in_clip, CLIP_LEN, dtype=f32)         # (R, CLIP_LEN)
    return jnp.einsum('rf,ryx->rfyx', oh_f, m).reshape(R, CLIP_LEN * H * W)


def pooling_weight_matrix(rois, B, H, W):
    """(nc*48, CLIP_LEN*H*W) f32: per clip, 40 RoIAlign rows + 8 mean rows."""
    nc = B // CLIP_LEN
    hw = H * W
    wb_roi = _roi_align_rows(rois, H, W)                              # (R, 8*hw)
    wb_roi = wb_roi.reshape(nc, N_ROI_ROWS, CLIP_LEN * hw)
    mean_rows = jnp.repeat(jnp.eye(CLIP_LEN, dtype=jnp.float32) / hw, hw, axis=1)
    mean_rows = jnp.broadcast_to(mean_rows[None], (nc, CLIP_LEN, CLIP_LEN * hw))
    wb = jnp.concatenate([wb_roi, mean_rows], axis=1)                 # (nc, 48, 8*hw)
    return wb.reshape(nc * ROWS_PER_CLIP, CLIP_LEN * hw)


# ----------------------------------------------------------------------------
# Full forward
# ----------------------------------------------------------------------------
def v2g_forward(feat_nhwc, rois, params):
    """V2G forward pass (post-backbone).

    feat_nhwc: (B, H, W, 2048) backbone feature map, NHWC (bf16 preferred).
               TODO(synk): Xception_Fea backbone is external and not defined in
               the reference snippet; this stands in for its output. NHWC/bf16
               is the chosen backbone output layout (NCHW callers need one
               transpose upstream).
    rois:      (B*5, 5) rows (batch_idx, x1, y1, x2, y2), frame-major order.
    params:    sq_w (2048, 512) = conv weight[:, :, 0, 0].T, sq_b (512,),
               cls_w (2, 1024) = nn.Linear(1024, 2).weight, cls_b (2,).
    Returns (B // CLIP_LEN, 2) softmax probabilities (f32).
    """
    B, H, W, cin = feat_nhwc.shape
    assert B % CLIP_LEN == 0
    assert rois.shape == (B * N_ROIS_PER_FRAME, 5)
    nc = B // CLIP_LEN
    hw = H * W
    chw = CLIP_LEN * hw

    x_flat = feat_nhwc.astype(jnp.bfloat16).reshape(B * hw, cin)      # free reshape
    wb = pooling_weight_matrix(rois, B, H, W)                         # (nc*48, chw) f32

    out_pad = pl.pallas_call(
        _v2g_fused_kernel,
        out_shape=jax.ShapeDtypeStruct((nc, 8, 128), jnp.float32),
        grid_spec=pltpu.PrefetchScalarGridSpec(
            num_scalar_prefetch=0,
            grid=(nc,),
            in_specs=[
                pl.BlockSpec((chw, cin), lambda i: (i, 0)),            # clip activations
                pl.BlockSpec((cin, C_SQ), lambda i: (0, 0)),           # resident weight
                pl.BlockSpec((1, C_SQ), lambda i: (0, 0)),
                pl.BlockSpec((ROWS_PER_CLIP, chw), lambda i: (i, 0)),  # clip pooling rows
                pl.BlockSpec((2, 2 * C_SQ), lambda i: (0, 0)),
                pl.BlockSpec((1, 2), lambda i: (0, 0)),
            ],
            out_specs=pl.BlockSpec((1, 8, 128), lambda i: (i, 0, 0)),
        ),
        compiler_params=pltpu.CompilerParams(
            dimension_semantics=("parallel",),
            vmem_limit_bytes=_vmem_limit_bytes(),
        ),
    )(
        x_flat,
        params["sq_w"].astype(jnp.bfloat16),
        params["sq_b"].reshape(1, C_SQ).astype(jnp.float32),
        wb,
        params["cls_w"].astype(jnp.float32),
        params["cls_b"].reshape(1, 2).astype(jnp.float32),
    )
    # TODO(synk): eval-mode Dropout and the trailing F.adaptive_avg_pool2d on
    # the 2-D concat tensor are identities and are folded into the kernel.
    return out_pad[:, 0:2, 0]


if __name__ == "__main__":
    key = jax.random.PRNGKey(0)
    k1, k2, k3, k4, k5, k6, k7 = jax.random.split(key, 7)

    n_clips = 2
    B = n_clips * CLIP_LEN              # 16 frames
    H = W = 8                           # small feature-map spatial size

    # Stand-in for the 2048-channel backbone output, NHWC bf16.
    feat = jax.random.normal(k1, (B, H, W, C_IN), jnp.float32).astype(jnp.bfloat16)

    # rois: (B*5, 5) rows = (batch_idx, x1, y1, x2, y2), frame-major order
    batch_idx = jnp.repeat(jnp.arange(B, dtype=jnp.float32), N_ROIS_PER_FRAME)
    xy1 = jax.random.uniform(k2, (B * N_ROIS_PER_FRAME, 2), minval=0.0, maxval=3.0)
    wh = jax.random.uniform(k3, (B * N_ROIS_PER_FRAME, 2), minval=1.0, maxval=4.0)
    rois = jnp.concatenate([batch_idx[:, None], xy1, xy1 + wh], axis=1)

    params = {
        "sq_w": 0.02 * jax.random.normal(k4, (C_IN, C_SQ), jnp.float32),
        "sq_b": 0.02 * jax.random.normal(k5, (C_SQ,), jnp.float32),
        "cls_w": 0.02 * jax.random.normal(k6, (2, 2 * C_SQ), jnp.float32),  # nn.Linear layout
        "cls_b": 0.02 * jax.random.normal(k7, (2,), jnp.float32),
    }

    out = jax.jit(v2g_forward)(feat, rois, params)
    out = jax.block_until_ready(out)
    assert out.shape == (n_clips, 2)
    assert bool(jnp.all(jnp.isfinite(out)))
    assert bool(jnp.allclose(jnp.sum(out, axis=1), 1.0, atol=1e-3))
    print("KERNEL_OK")
</pallas_src>

<mosaic_0001>
module attributes {stable_mosaic.version = 11 : i64} {
  func.func @_v2g_fused_kernel(%arg0: i32, %arg1: memref<512x2048xbf16, #tpu.memory_space<vmem>>, %arg2: memref<2048x512xbf16, #tpu.memory_space<vmem>>, %arg3: memref<1x512xf32, #tpu.memory_space<vmem>>, %arg4: memref<48x512xf32, #tpu.memory_space<vmem>>, %arg5: memref<2x1024xf32, #tpu.memory_space<vmem>>, %arg6: memref<1x2xf32, #tpu.memory_space<vmem>>, %arg7: memref<1x8x128xf32, #tpu.memory_space<vmem>>) attributes {dimension_semantics = [#tpu.dimension_semantics<parallel>], iteration_bounds = array<i64: 2>, scalar_prefetch = 0 : i64, scratch_operands = 0 : i64, tpu.core_type = #tpu.core_type<tc>, window_params = [{transform_indices = @transform_0, window_bounds = array<i64: 512, 2048>}, {pipeline_mode = #tpu.pipeline_mode<synchronous>, transform_indices = @transform_1, window_bounds = array<i64: 2048, 512>}, {pipeline_mode = #tpu.pipeline_mode<synchronous>, transform_indices = @transform_2, window_bounds = array<i64: 1, 512>}, {transform_indices = @transform_3, window_bounds = array<i64: 48, 512>}, {pipeline_mode = #tpu.pipeline_mode<synchronous>, transform_indices = @transform_4, window_bounds = array<i64: 2, 1024>}, {pipeline_mode = #tpu.pipeline_mode<synchronous>, transform_indices = @transform_5, window_bounds = array<i64: 1, 2>}, {transform_indices = @transform_6, window_bounds = array<i64: 1, 8, 128>}]} {
    %c0 = arith.constant 0 : index
    %c0_0 = arith.constant 0 : index
    %0 = vector.load %arg1[%c0, %c0_0] : memref<512x2048xbf16, #tpu.memory_space<vmem>>, vector<512x2048xbf16>
    %c0_1 = arith.constant 0 : index
    %c0_2 = arith.constant 0 : index
    %1 = vector.load %arg2[%c0_1, %c0_2] : memref<2048x512xbf16, #tpu.memory_space<vmem>>, vector<2048x512xbf16>
    %cst = arith.constant dense<0.000000e+00> : vector<512x512xf32>
    %2 = tpu.matmul %0, %1, %cst {dimension_numbers = #tpu.dot_dimension_numbers<[1], [0], [0], [1], [0, 0, 1, 1], [], []>} : vector<512x2048xbf16>, vector<2048x512xbf16>, vector<512x512xf32> -> vector<512x512xf32>
    %c0_3 = arith.constant 0 : index
    %c0_4 = arith.constant 0 : index
    %3 = vector.load %arg3[%c0_3, %c0_4] : memref<1x512xf32, #tpu.memory_space<vmem>>, vector<1x512xf32>
    %4 = vector.broadcast %3 : vector<1x512xf32> to vector<512x512xf32>
    %5 = arith.addf %2, %4 : vector<512x512xf32>
    %c0_5 = arith.constant 0 : index
    %c0_6 = arith.constant 0 : index
    %6 = vector.load %arg4[%c0_5, %c0_6] : memref<48x512xf32, #tpu.memory_space<vmem>>, vector<48x512xf32>
    %cst_7 = arith.constant dense<0.000000e+00> : vector<48x512xf32>
    %7 = tpu.matmul %6, %5, %cst_7 {dimension_numbers = #tpu.dot_dimension_numbers<[1], [0], [0], [1], [0, 0, 1, 1], [], []>} : vector<48x512xf32>, vector<512x512xf32>, vector<48x512xf32> -> vector<48x512xf32>
    %8 = vector.extract_strided_slice %7 {offsets = [0, 0], sizes = [40, 512], strides = [1, 1]} : vector<48x512xf32> to vector<40x512xf32>
    %cst_8 = arith.constant dense<0xFF800000> : vector<512xf32>
    %9 = vector.multi_reduction <maximumf>, %8, %cst_8 [0] : vector<40x512xf32> to vector<512xf32>
    %10 = vector.shape_cast %9 : vector<512xf32> to vector<1x512xf32>
    %11 = vector.extract_strided_slice %7 {offsets = [40, 0], sizes = [8, 512], strides = [1, 1]} : vector<48x512xf32> to vector<8x512xf32>
    %cst_9 = arith.constant dense<0xFF800000> : vector<512xf32>
    %12 = vector.multi_reduction <maximumf>, %11, %cst_9 [0] : vector<8x512xf32> to vector<512xf32>
    %13 = vector.shape_cast %12 : vector<512xf32> to vector<1x512xf32>
    %14 = tpu.concatenate %10, %13 in 1 : vector<1x512xf32>, vector<1x512xf32> -> vector<1x1024xf32>
    %c0_10 = arith.constant 0 : index
    %c0_11 = arith.constant 0 : index
    %15 = vector.load %arg5[%c0_10, %c0_11] : memref<2x1024xf32, #tpu.memory_space<vmem>>, vector<1x1024xf32>
    %16 = arith.mulf %14, %15 : vector<1x1024xf32>
    %cst_12 = arith.constant dense<0.000000e+00> : vector<1xf32>
    %17 = vector.multi_reduction <add>, %16, %cst_12 [1] : vector<1x1024xf32> to vector<1xf32>
    %18 = vector.shape_cast %17 : vector<1xf32> to vector<1x1xf32>
    %c1 = arith.constant 1 : index
    %c0_13 = arith.constant 0 : index
    %19 = vector.load %arg5[%c1, %c0_13] : memref<2x1024xf32, #tpu.memory_space<vmem>>, vector<1x1024xf32>
    %20 = arith.mulf %14, %19 : vector<1x1024xf32>
    %cst_14 = arith.constant dense<0.000000e+00> : vector<1xf32>
    %21 = vector.multi_reduction <add>, %20, %cst_14 [1] : vector<1x1024xf32> to vector<1xf32>
    %22 = vector.shape_cast %21 : vector<1xf32> to vector<1x1xf32>
    %23 = tpu.concatenate %18, %22 in 1 : vector<1x1xf32>, vector<1x1xf32> -> vector<1x2xf32>
    %c0_15 = arith.constant 0 : index
    %c0_16 = arith.constant 0 : index
    %24 = vector.load %arg6[%c0_15, %c0_16] : memref<1x2xf32, #tpu.memory_space<vmem>>, vector<1x2xf32>
    %25 = arith.addf %23, %24 : vector<1x2xf32>
    %cst_17 = arith.constant dense<0xFF800000> : vector<1xf32>
    %26 = vector.multi_reduction <maximumf>, %25, %cst_17 [1] : vector<1x2xf32> to vector<1xf32>
    %27 = vector.shape_cast %26 : vector<1xf32> to vector<1x1xf32>
    %28 = vector.broadcast %27 : vector<1x1xf32> to vector<1x2xf32>
    %29 = arith.subf %25, %28 : vector<1x2xf32>
    %30 = math.exp %29 : vector<1x2xf32>
    %cst_18 = arith.constant dense<0.000000e+00> : vector<1xf32>
    %31 = vector.multi_reduction <add>, %30, %cst_18 [1] : vector<1x2xf32> to vector<1xf32>
    %32 = vector.shape_cast %31 : vector<1xf32> to vector<1x1xf32>
    %33 = vector.broadcast %32 : vector<1x1xf32> to vector<1x2xf32>
    %34 = arith.divf %30, %33 : vector<1x2xf32>
    %35 = vector.extract_strided_slice %34 {offsets = [0, 0], sizes = [1, 1], strides = [1, 1]} : vector<1x2xf32> to vector<1x1xf32>
    %36 = vector.shape_cast %35 : vector<1x1xf32> to vector<1x1xf32>
    %37 = vector.broadcast %36 : vector<1x1xf32> to vector<1x128xf32>
    %38 = vector.extract_strided_slice %34 {offsets = [0, 1], sizes = [1, 1], strides = [1, 1]} : vector<1x2xf32> to vector<1x1xf32>
    %39 = vector.shape_cast %38 : vector<1x1xf32> to vector<1x1xf32>
    %40 = vector.broadcast %39 : vector<1x1xf32> to vector<1x128xf32>
    %cst_19 = arith.constant 0.000000e+00 : f32
    %41 = vector.broadcast %cst_19 : f32 to vector<6x128xf32>
    %42 = tpu.concatenate %37, %40, %41 in 0 : vector<1x128xf32>, vector<1x128xf32>, vector<6x128xf32> -> vector<8x128xf32>
    %c0_20 = arith.constant 0 : index
    %c0_21 = arith.constant 0 : index
    %c0_22 = arith.constant 0 : index
    %43 = vector.load %arg7[%c0_20, %c0_21, %c0_22] : memref<1x8x128xf32, #tpu.memory_space<vmem>>, vector<1x8x128xf32>
    %44 = vector.shape_cast %43 : vector<1x8x128xf32> to vector<8x128xf32>
    %45 = vector.shape_cast %42 : vector<8x128xf32> to vector<1x8x128xf32>
    tpu.vector_store %arg7[%c0_20, %c0_21, %c0_22], %45 {strides = array<i32>} : memref<1x8x128xf32, #tpu.memory_space<vmem>>, vector<1x8x128xf32>,
    return
  }
  func.func @transform_0(%arg0: i32) -> (i32, i32) {
    %c0_i32 = arith.constant 0 : i32
    %c0_i32_0 = arith.constant 0 : i32
    return %arg0, %c0_i32 : i32, i32
  }
  func.func @transform_1(%arg0: i32) -> (i32, i32) {
    %c0_i32 = arith.constant 0 : i32
    %c0_i32_0 = arith.constant 0 : i32
    %c0_i32_1 = arith.constant 0 : i32
    return %c0_i32, %c0_i32_0 : i32, i32
  }
  func.func @transform_2(%arg0: i32) -> (i32, i32) {
    %c0_i32 = arith.constant 0 : i32
    %c0_i32_0 = arith.constant 0 : i32
    %c0_i32_1 = arith.constant 0 : i32
    return %c0_i32, %c0_i32_0 : i32, i32
  }
  func.func @transform_3(%arg0: i32) -> (i32, i32) {
    %c0_i32 = arith.constant 0 : i32
    %c0_i32_0 = arith.constant 0 : i32
    return %arg0, %c0_i32 : i32, i32
  }
  func.func @transform_4(%arg0: i32) -> (i32, i32) {
    %c0_i32 = arith.constant 0 : i32
    %c0_i32_0 = arith.constant 0 : i32
    %c0_i32_1 = arith.constant 0 : i32
    return %c0_i32, %c0_i32_0 : i32, i32
  }
  func.func @transform_5(%arg0: i32) -> (i32, i32) {
    %c0_i32 = arith.constant 0 : i32
    %c0_i32_0 = arith.constant 0 : i32
    %c0_i32_1 = arith.constant 0 : i32
    return %c0_i32, %c0_i32_0 : i32, i32
  }
  func.func @transform_6(%arg0: i32) -> (i32, i32, i32) {
    %c0_i32 = arith.constant 0 : i32
    %c0_i32_0 = arith.constant 0 : i32
    %c0_i32_1 = arith.constant 0 : i32
    return %arg0, %c0_i32, %c0_i32_0 : i32, i32, i32
  }
}

</mosaic_0001>

<llo_original>
// kernel: v2g_forward.1
$region0: #{v2g_forward.1}
  #allocation0 [shape = 'u32[]', space=smem, size = 0x4, offset = 0x4, fixed_abs, tag = 'smem constant byte address 0x4 - core index']
  #allocation1 [shape = 'u32[144,128]{1,0:T(1,128)}', space=vmem, size = 0x12000, scoped, tag = 'internal scratch']
  %s0 = inlined_call_operand.vmem [shape: bf16[1024,2048], index: 0, kind: input, shape index: {}]
  %s1 = inlined_call_operand.vmem [shape: bf16[2048,512], index: 1, kind: input, shape index: {}]
  %s2 = inlined_call_operand.vmem [shape: f32[1,512], index: 2, kind: input, shape index: {}]
  %s3 = inlined_call_operand.vmem [shape: f32[96,512], index: 3, kind: input, shape index: {}]
  %s4 = inlined_call_operand.vmem [shape: f32[2,1024], index: 4, kind: input, shape index: {}]
  %s5 = inlined_call_operand.vmem [shape: f32[1,2], index: 5, kind: input, shape index: {}]
  %s6 = inlined_call_operand.vmem [shape: f32[2,8,128], index: 6, kind: output, shape index: {}]
  %s7 = sld [smem:[#allocation0]]
  $region57: #{v2g_forward.1} parent=0
    _
  %s9 = ssub.s32 1, %s7
  %s10 = scalar_select 0, %s9, %s7
  loop: start=0, step=1, limit=4
  $region2: #{v2g_forward.1} parent=0 // loop_pre_header
    _
  $region3: #{v2g_forward.1} parent=0 // loop_header
    %s12 = sphi 0, %s16
    %p13 = scmp.ge.s32.totalorder %s12, 4
    %s22 = sphi 0, %s24
    %s25 = sphi 0, %s22
    %s26 = sphi 0, %s25
    %s42 = sphi 0, %s26
    %s46 = sphi 0, %s46
    %s48 = sphi 0, %s46
    %s49 = sphi 0, %s48
    %s63 = sphi 0, %s49
    %s67 = sphi 0, %s67
    %s69 = sphi 0, %s67
    %s70 = sphi 0, %s69
    %s84 = sphi 0, %s70
    %s90 = sphi 0, %s92
    %s93 = sphi 0, %s90
    %s94 = sphi 0, %s93
    %s110 = sphi 0, %s94
    %s114 = sphi 0, %s114
    %s116 = sphi 0, %s114
    %s117 = sphi 0, %s116
    %s131 = sphi 0, %s117
    %s135 = sphi 0, %s135
    %s137 = sphi 0, %s135
    %s138 = sphi 0, %s137
    %s152 = sphi 0, %s138
    %s158 = sphi 0, %s160
    %s161 = sphi 0, %s158
    %s162 = sphi 0, %s161
    %s178 = sphi 0, %s162
  $region4: #{v2g_forward.1} parent=0 // loop_header_branch
    %15 = sbr.rel (%p13) target = $region8
  $region5: #{v2g_forward.1} parent=0 // loop_body
    %s17 = ssub.s32 %s12, 1
    %s18 = ssub.s32 %s12, 2
    %s19 = sadd.s32 %s12, 1
    %s20 = ssub.s32 %s12, %s19
    %p21 = scmp.eq.s32.totalorder %s20, 0
    %s23 = sadd.s32 %s22, 1
    %s24 = scalar_select %p21, %s22, %s23
    %p27 = pneg %p21
    %p28 = scmp.eq.s32.totalorder %s12, 1
    %p29 = por %p27, %p28
    %p30 = scmp.ne.s32.totalorder %s22, %s25
    %p31 = scmp.eq.s32.totalorder %s12, 0
    %p32 = por %p30, %p31
    %p33 = scmp.ne.s32.totalorder %s22, %s25
    %p34 = scmp.eq.s32.totalorder %s17, 1
    %p35 = por %p33, %p34
    %p36 = scmp.ne.s32.totalorder %s25, %s26
    %p37 = scmp.eq.s32.totalorder %s17, 0
    %p38 = por %p36, %p37
    %p39 = scmp.ne.s32.totalorder %s25, %s26
    %p40 = scmp.eq.s32.totalorder %s18, 1
    %p41 = por %p39, %p40
    %p43 = scmp.ne.s32.totalorder %s26, %s42
    %p44 = scmp.eq.s32.totalorder %s18, 0
    %p45 = por %p43, %p44
    %s47 = sadd.s32 %s46, 1
    %p50 = scmp.eq.s32.totalorder %s12, 1
    %p51 = scmp.ne.s32.totalorder %s46, %s48
    %p52 = scmp.eq.s32.totalorder %s12, 0
    %p53 = por %p51, %p52
    %p54 = scmp.ne.s32.totalorder %s46, %s48
    %p55 = scmp.eq.s32.totalorder %s17, 1
    %p56 = por %p54, %p55
    %p57 = scmp.ne.s32.totalorder %s48, %s49
    %p58 = scmp.eq.s32.totalorder %s17, 0
    %p59 = por %p57, %p58
    %p60 = scmp.ne.s32.totalorder %s48, %s49
    %p61 = scmp.eq.s32.totalorder %s18, 1
    %p62 = por %p60, %p61
    %p64 = scmp.ne.s32.totalorder %s49, %s63
    %p65 = scmp.eq.s32.totalorder %s18, 0
    %p66 = por %p64, %p65
    %s68 = sadd.s32 %s67, 1
    %p71 = scmp.eq.s32.totalorder %s12, 1
    %p72 = scmp.ne.s32.totalorder %s67, %s69
    %p73 = scmp.eq.s32.totalorder %s12, 0
    %p74 = por %p72, %p73
    %p75 = scmp.ne.s32.totalorder %s67, %s69
    %p76 = scmp.eq.s32.totalorder %s17, 1
    %p77 = por %p75, %p76
    %p78 = scmp.ne.s32.totalorder %s69, %s70
    %p79 = scmp.eq.s32.totalorder %s17, 0
    %p80 = por %p78, %p79
    %p81 = scmp.ne.s32.totalorder %s69, %s70
    %p82 = scmp.eq.s32.totalorder %s18, 1
    %p83 = por %p81, %p82
    %p85 = scmp.ne.s32.totalorder %s70, %s84
    %p86 = scmp.eq.s32.totalorder %s18, 0
    %p87 = por %p85, %p86
    %s88 = ssub.s32 %s12, %s19
    %p89 = scmp.eq.s32.totalorder %s88, 0
    %s91 = sadd.s32 %s90, 1
    %s92 = scalar_select %p89, %s90, %s91
    %p95 = pneg %p89
    %p96 = scmp.eq.s32.totalorder %s12, 1
    %p97 = por %p95, %p96
    %p98 = scmp.ne.s32.totalorder %s90, %s93
    %p99 = scmp.eq.s32.totalorder %s12, 0
    %p100 = por %p98, %p99
    %p101 = scmp.ne.s32.totalorder %s90, %s93
    %p102 = scmp.eq.s32.totalorder %s17, 1
    %p103 = por %p101, %p102
    %p104 = scmp.ne.s32.totalorder %s93, %s94
    %p105 = scmp.eq.s32.totalorder %s17, 0
    %p106 = por %p104, %p105
    %p107 = scmp.ne.s32.totalorder %s93, %s94
    %p108 = scmp.eq.s32.totalorder %s18, 1
    %p109 = por %p107, %p108
    %p111 = scmp.ne.s32.totalorder %s94, %s110
    %p112 = scmp.eq.s32.totalorder %s18, 0
    %p113 = por %p111, %p112
    %s115 = sadd.s32 %s114, 1
    %p118 = scmp.eq.s32.totalorder %s12, 1
    %p119 = scmp.ne.s32.totalorder %s114, %s116
    %p120 = scmp.eq.s32.totalorder %s12, 0
    %p121 = por %p119, %p120
    %p122 = scmp.ne.s32.totalorder %s114, %s116
    %p123 = scmp.eq.s32.totalorder %s17, 1
    %p124 = por %p122, %p123
    %p125 = scmp.ne.s32.totalorder %s116, %s117
    %p126 = scmp.eq.s32.totalorder %s17, 0
    %p127 = por %p125, %p126
    %p128 = scmp.ne.s32.totalorder %s116, %s117
    %p129 = scmp.eq.s32.totalorder %s18, 1
    %p130 = por %p128, %p129
    %p132 = scmp.ne.s32.totalorder %s117, %s131
    %p133 = scmp.eq.s32.totalorder %s18, 0
    %p134 = por %p132, %p133
    %s136 = sadd.s32 %s135, 1
    %p139 = scmp.eq.s32.totalorder %s12, 1
    %p140 = scmp.ne.s32.totalorder %s135, %s137
    %p141 = scmp.eq.s32.totalorder %s12, 0
    %p142 = por %p140, %p141
    %p143 = scmp.ne.s32.totalorder %s135, %s137
    %p144 = scmp.eq.s32.totalorder %s17, 1
    %p145 = por %p143, %p144
    %p146 = scmp.ne.s32.totalorder %s137, %s138
    %p147 = scmp.eq.s32.totalorder %s17, 0
    %p148 = por %p146, %p147
    %p149 = scmp.ne.s32.totalorder %s137, %s138
    %p150 = scmp.eq.s32.totalorder %s18, 1
    %p151 = por %p149, %p150
    %p153 = scmp.ne.s32.totalorder %s138, %s152
    %p154 = scmp.eq.s32.totalorder %s18, 0
    %p155 = por %p153, %p154
    %s156 = ssub.s32 %s12, %s19
    %p157 = scmp.eq.s32.totalorder %s156, 0
    %s159 = sadd.s32 %s158, 1
    %s160 = scalar_select %p157, %s158, %s159
    %p163 = pneg %p157
    %p164 = scmp.eq.s32.totalorder %s12, 1
    %p165 = por %p163, %p164
    %p166 = scmp.ne.s32.totalorder %s158, %s161
    %p167 = scmp.eq.s32.totalorder %s12, 0
    %p168 = por %p166, %p167
    %p169 = scmp.ne.s32.totalorder %s158, %s161
    %p170 = scmp.eq.s32.totalorder %s17, 1
    %p171 = por %p169, %p170
    %p172 = scmp.ne.s32.totalorder %s161, %s162
    %p173 = scmp.eq.s32.totalorder %s17, 0
    %p174 = por %p172, %p173
    %p175 = scmp.ne.s32.totalorder %s161, %s162
    %p176 = scmp.eq.s32.totalorder %s18, 1
    %p177 = por %p175, %p176
    %p179 = scmp.ne.s32.totalorder %s162, %s178
    %p180 = scmp.eq.s32.totalorder %s18, 0
    %p181 = por %p179, %p180
    %p182 = scmp.le.s32.totalorder 1, %s12
    %p183 = scmp.lt.s32.totalorder %s12, 3
    %p184 = pnand %p182, %p183
    %p185 = pneg %p184
    // Predicated region
    $region9: #{v2g_forward.1} parent=5 // pred_check
      _
    $region10: #{v2g_forward.1} parent=5 // pred_check_branch
      %187 = sbr.rel (%p184) target = $region12
    $region11: #{v2g_forward.1} parent=5 // pred_region
      %s188 = ssub.s32 %s12, 1
      // Predicated region
      $region13: #{v2g_forward.1} parent=11 // pred_check
        %p189 = pneg %p59
      $region14: #{v2g_forward.1} parent=11 // pred_check_branch
        %191 = sbr.rel (%p189) target = $region16
      $region15: #{v2g_forward.1} parent=11 // pred_region
        _
      $region16: #{v2g_forward.1} parent=11 // pred_fallthru
        _
      // Predicated region
      $region17: #{v2g_forward.1} parent=11 // pred_check
        %p192 = pneg %p80
      $region18: #{v2g_forward.1} parent=11 // pred_check_branch
        %194 = sbr.rel (%p192) target = $region20
      $region19: #{v2g_forward.1} parent=11 // pred_region
        _
      $region20: #{v2g_forward.1} parent=11 // pred_fallthru
        _
      // Predicated region
      $region21: #{v2g_forward.1} parent=11 // pred_check
        %p195 = pneg %p127
      $region22: #{v2g_forward.1} parent=11 // pred_check_branch
        %197 = sbr.rel (%p195) target = $region24
      $region23: #{v2g_forward.1} parent=11 // pred_region
        _
      $region24: #{v2g_forward.1} parent=11 // pred_fallthru
        _
      // Predicated region
      $region25: #{v2g_forward.1} parent=11 // pred_check
        %p198 = pneg %p148
      $region26: #{v2g_forward.1} parent=11 // pred_check_branch
        %200 = sbr.rel (%p198) target = $region28
      $region27: #{v2g_forward.1} parent=11 // pred_region
        _
      $region28: #{v2g_forward.1} parent=11 // pred_fallthru
        _
    $region12: #{v2g_forward.1} parent=5 // pred_fallthru
      _
    %p201 = scmp.lt.s32.totalorder %s12, 2
    // Predicated region
    $region29: #{v2g_forward.1} parent=5 // pred_check
      %p202 = pneg %p201
    $region30: #{v2g_forward.1} parent=5 // pred_check_branch
      %204 = sbr.rel (%p202) target = $region32
    $region31: #{v2g_forward.1} parent=5 // pred_region
      // Predicated region
      $region33: #{v2g_forward.1} parent=31 // pred_check
        %p205 = pneg %p32
      $region34: #{v2g_forward.1} parent=31 // pred_check_branch
        %207 = sbr.rel (%p205) target = $region36
      $region35: #{v2g_forward.1} parent=31 // pred_region
        %s208 = smul.u32 64, %s12
        %p209 = scmp.lt.s32.totalorder %s208, 127
        %s210 = scalar_select %p209, %s208, 127
        %s211 = smul.addr %s210, 16
        %s212 = smul.addr %s211, 4
        %s213 = scalar_lea.vmem %s0, %s212
        %s214 = smul.u32 64, %s12
      $region36: #{v2g_forward.1} parent=31 // pred_fallthru
        _
      // Predicated region
      $region37: #{v2g_forward.1} parent=31 // pred_check
        %p215 = pneg %p100
      $region38: #{v2g_forward.1} parent=31 // pred_check_branch
        %217 = sbr.rel (%p215) target = $region40
      $region39: #{v2g_forward.1} parent=31 // pred_region
        %s218 = smul.u32 6, %s12
        %p219 = scmp.lt.s32.totalorder %s218, 11
        %s220 = scalar_select %p219, %s218, 11
        %s221 = smul.addr %s220, 4
        %s222 = smul.addr %s221, 8
        %s223 = scalar_lea.vmem %s3, %s222
        %s224 = smul.u32 6, %s12
      $region40: #{v2g_forward.1} parent=31 // pred_fallthru
        _
    $region32: #{v2g_forward.1} parent=5 // pred_fallthru
      _
    %p225 = scmp.le.s32.totalorder 1, %s12
    %p226 = scmp.lt.s32.totalorder %s12, 3
    %p227 = pnand %p225, %p226
    %p228 = pneg %p227
    // Predicated region
    $region41: #{v2g_forward.1} parent=5 // pred_check
      _
    $region42: #{v2g_forward.1} parent=5 // pred_check_branch
      %230 = sbr.rel (%p227) target = $region44
    $region43: #{v2g_forward.1} parent=5 // pred_region
      %s231 = ssub.s32 %s12, 1
      %s232 = smul.u32 64, %s17
      %p233 = scmp.lt.s32.totalorder %s232, 127
      %s234 = scalar_select %p233, %s232, 127
      %s235 = smul.addr %s234, 16
      %s236 = smul.addr %s235, 4
      %s237 = scalar_lea.vmem %s0, %s236
      %p238 = pneg %p38
      %p239 = pneg %p35
      %p240 = pneg %p59
      %p241 = pneg %p56
      %p242 = pneg %p80
      %p243 = pneg %p77
      %s244 = smul.u32 6, %s17
      %p245 = scmp.lt.s32.totalorder %s244, 11
      %s246 = scalar_select %p245, %s244, 11
      %s247 = smul.addr %s246, 4
      %s248 = smul.addr %s247, 8
      %s249 = scalar_lea.vmem %s3, %s248
      %p250 = pneg %p106
      %p251 = pneg %p103
      %p252 = pneg %p127
      %p253 = pneg %p124
      %p254 = pneg %p148
      %p255 = pneg %p145
      %p256 = pneg %p174
      %p257 = pneg %p171
      %p258 = scmp.lt.s32.totalorder %s17, 1
      %s259 = scalar_select %p258, %s17, 1
      %s260 = smul.addr %s259, 8
      %s261 = scalar_lea.vmem %s6, %s260
      %s262 = smul.u32 64, %s17
      %p263 = scmp.lt.s32.totalorder %s262, 127
      %s264 = scalar_select %p263, %s262, 127
      %s265 = smul.addr %s264, 16
      %s266 = smul.addr %s265, 4
      %s267 = scalar_lea.vmem %s0, %s266
      %s268 = smul.u32 64, %s17
      %s269 = smul.u32 6, %s17
      %p270 = scmp.lt.s32.totalorder %s269, 11
      %s271 = scalar_select %p270, %s269, 11
      %s272 = smul.addr %s271, 4
      %s273 = smul.addr %s272, 8
      %s274 = scalar_lea.vmem %s3, %s273
      %s275 = smul.u32 6, %s17
      %p276 = scmp.lt.s32.totalorder %s17, 1
      %s277 = scalar_select %p276, %s17, 1
      %s278 = smul.addr %s277, 8
      %s279 = scalar_lea.vmem %s6, %s278
      %v280 = vld [vmem:[%s267] sm:$0xff]
      %v281 = vld [vmem:[%s267 + $0x8] sm:$0xff]
      %v282 = vld [vmem:[%s267 + $0x10] sm:$0xff]
      %v283 = vld [vmem:[%s267 + $0x18] sm:$0xff]
      %v284 = vld [vmem:[%s267 + $0x20] sm:$0xff]
      %v285 = vld [vmem:[%s267 + $0x28] sm:$0xff]
      %v286 = vld [vmem:[%s267 + $0x30] sm:$0xff]
      %v287 = vld [vmem:[%s267 + $0x38] sm:$0xff]
      %v288 = vld [vmem:[%s267 + $0x40] sm:$0xff]
      %v289 = vld [vmem:[%s267 + $0x48] sm:$0xff]
      %v290 = vld [vmem:[%s267 + $0x50] sm:$0xff]
      %v291 = vld [vmem:[%s267 + $0x58] sm:$0xff]
      %v292 = vld [vmem:[%s267 + $0x60] sm:$0xff]
      %v293 = vld [vmem:[%s267 + $0x68] sm:$0xff]
      %v294 = vld [vmem:[%s267 + $0x70] sm:$0xff]
      %v295 = vld [vmem:[%s267 + $0x78] sm:$0xff]
      %v296 = vld [vmem:[%s267 + $0x80] sm:$0xff]
      %v297 = vld [vmem:[%s267 + $0x88] sm:$0xff]
      %v298 = vld [vmem:[%s267 + $0x90] sm:$0xff]
      %v299 = vld [vmem:[%s267 + $0x98] sm:$0xff]
      %v300 = vld [vmem:[%s267 + $0xa0] sm:$0xff]
      %v301 = vld [vmem:[%s267 + $0xa8] sm:$0xff]
      %v302 = vld [vmem:[%s267 + $0xb0] sm:$0xff]
      %v303 = vld [vmem:[%s267 + $0xb8] sm:$0xff]
      %v304 = vld [vmem:[%s267 + $0xc0] sm:$0xff]
      %v305 = vld [vmem:[%s267 + $0xc8] sm:$0xff]
      %v306 = vld [vmem:[%s267 + $0xd0] sm:$0xff]
      %v307 = vld [vmem:[%s267 + $0xd8] sm:$0xff]
      %v308 = vld [vmem:[%s267 + $0xe0] sm:$0xff]
      %v309 = vld [vmem:[%s267 + $0xe8] sm:$0xff]
      %v310 = vld [vmem:[%s267 + $0xf0] sm:$0xff]
      %v311 = vld [vmem:[%s267 + $0xf8] sm:$0xff]
      %v312 = vld [vmem:[%s267 + $0x100] sm:$0xff]
      %v313 = vld [vmem:[%s267 + $0x108] sm:$0xff]
      %v314 = vld [vmem:[%s267 + $0x110] sm:$0xff]
      %v315 = vld [vmem:[%s267 + $0x118] sm:$0xff]
      %v316 = vld [vmem:[%s267 + $0x120] sm:$0xff]
      %v317 = vld [vmem:[%s267 + $0x128] sm:$0xff]
      %v318 = vld [vmem:[%s267 + $0x130] sm:$0xff]
      %v319 = vld [vmem:[%s267 + $0x138] sm:$0xff]
      %v320 = vld [vmem:[%s267 + $0x140] sm:$0xff]
      %v321 = vld [vmem:[%s267 + $0x148] sm:$0xff]
      %v322 = vld [vmem:[%s267 + $0x150] sm:$0xff]
      %v323 = vld [vmem:[%s267 + $0x158] sm:$0xff]
      %v324 = vld [vmem:[%s267 + $0x160] sm:$0xff]
      %v325 = vld [vmem:[%s267 + $0x168] sm:$0xff]
      %v326 = vld [vmem:[%s267 + $0x170] sm:$0xff]
      %v327 = vld [vmem:[%s267 + $0x178] sm:$0xff]
      %v328 = vld [vmem:[%s267 + $0x180] sm:$0xff]
      %v329 = vld [vmem:[%s267 + $0x188] sm:$0xff]
      %v330 = vld [vmem:[%s267 + $0x190] sm:$0xff]
      %v331 = vld [vmem:[%s267 + $0x198] sm:$0xff]
      %v332 = vld [vmem:[%s267 + $0x1a0] sm:$0xff]
      %v333 = vld [vmem:[%s267 + $0x1a8] sm:$0xff]
      %v334 = vld [vmem:[%s267 + $0x1b0] sm:$0xff]
      %v335 = vld [vmem:[%s267 + $0x1b8] sm:$0xff]
      %v336 = vld [vmem:[%s267 + $0x1c0] sm:$0xff]
      %v337 = vld [vmem:[%s267 + $0x1c8] sm:$0xff]
      %v338 = vld [vmem:[%s267 + $0x1d0] sm:$0xff]
      %v339 = vld [vmem:[%s267 + $0x1d8] sm:$0xff]
      %v340 = vld [vmem:[%s267 + $0x1e0] sm:$0xff]
      %v341 = vld [vmem:[%s267 + $0x1e8] sm:$0xff]
      %v342 = vld [vmem:[%s267 + $0x1f0] sm:$0xff]
      %v343 = vld [vmem:[%s267 + $0x1f8] sm:$0xff]
      %v344 = vld [vmem:[%s267 + $0x200] sm:$0xff]
      %v345 = vld [vmem:[%s267 + $0x208] sm:$0xff]
      %v346 = vld [vmem:[%s267 + $0x210] sm:$0xff]
      %v347 = vld [vmem:[%s267 + $0x218] sm:$0xff]
      %v348 = vld [vmem:[%s267 + $0x220] sm:$0xff]
      %v349 = vld [vmem:[%s267 + $0x228] sm:$0xff]
      %v350 = vld [vmem:[%s267 + $0x230] sm:$0xff]
      %v351 = vld [vmem:[%s267 + $0x238] sm:$0xff]
      %v352 = vld [vmem:[%s267 + $0x240] sm:$0xff]
      %v353 = vld [vmem:[%s267 + $0x248] sm:$0xff]
      %v354 = vld [vmem:[%s267 + $0x250] sm:$0xff]
      %v355 = vld [vmem:[%s267 + $0x258] sm:$0xff]
      %v356 = vld [vmem:[%s267 + $0x260] sm:$0xff]
      %v357 = vld [vmem:[%s267 + $0x268] sm:$0xff]
      %v358 = vld [vmem:[%s267 + $0x270] sm:$0xff]
      %v359 = vld [vmem:[%s267 + $0x278] sm:$0xff]
      %v360 = vld [vmem:[%s267 + $0x280] sm:$0xff]
      %v361 = vld [vmem:[%s267 + $0x288] sm:$0xff]
      %v362 = vld [vmem:[%s267 + $0x290] sm:$0xff]
      %v363 = vld [vmem:[%s267 + $0x298] sm:$0xff]
      %v364 = vld [vmem:[%s267 + $0x2a0] sm:$0xff]
      %v365 = vld [vmem:[%s267 + $0x2a8] sm:$0xff]
      %v366 = vld [vmem:[%s267 + $0x2b0] sm:$0xff]
      %v367 = vld [vmem:[%s267 + $0x2b8] sm:$0xff]
      %v368 = vld [vmem:[%s267 + $0x2c0] sm:$0xff]
      %v369 = vld [vmem:[%s267 + $0x2c8] sm:$0xff]
      %v370 = vld [vmem:[%s267 + $0x2d0] sm:$0xff]
      %v371 = vld [vmem:[%s267 + $0x2d8] sm:$0xff]
      %v372 = vld [vmem:[%s267 + $0x2e0] sm:$0xff]
      %v373 = vld [vmem:[%s267 + $0x2e8] sm:$0xff]
      %v374 = vld [vmem:[%s267 + $0x2f0] sm:$0xff]
      %v375 = vld [vmem:[%s267 + $0x2f8] sm:$0xff]
      %v376 = vld [vmem:[%s267 + $0x300] sm:$0xff]
      %v377 = vld [vmem:[%s267 + $0x308] sm:$0xff]
      %v378 = vld [vmem:[%s267 + $0x310] sm:$0xff]
      %v379 = vld [vmem:[%s267 + $0x318] sm:$0xff]
      %v380 = vld [vmem:[%s267 + $0x320] sm:$0xff]
      %v381 = vld [vmem:[%s267 + $0x328] sm:$0xff]
      %v382 = vld [vmem:[%s267 + $0x330] sm:$0xff]
      %v383 = vld [vmem:[%s267 + $0x338] sm:$0xff]
      %v384 = vld [vmem:[%s267 + $0x340] sm:$0xff]
      %v385 = vld [vmem:[%s267 + $0x348] sm:$0xff]
      %v386 = vld [vmem:[%s267 + $0x350] sm:$0xff]
      %v387 = vld [vmem:[%s267 + $0x358] sm:$0xff]
      %v388 = vld [vmem:[%s267 + $0x360] sm:$0xff]
      %v389 = vld [vmem:[%s267 + $0x368] sm:$0xff]
      %v390 = vld [vmem:[%s267 + $0x370] sm:$0xff]
      %v391 = vld [vmem:[%s267 + $0x378] sm:$0xff]
      %v392 = vld [vmem:[%s267 + $0x380] sm:$0xff]
      %v393 = vld [vmem:[%s267 + $0x388] sm:$0xff]
      %v394 = vld [vmem:[%s267 + $0x390] sm:$0xff]
      %v395 = vld [vmem:[%s267 + $0x398] sm:$0xff]
      %v396 = vld [vmem:[%s267 + $0x3a0] sm:$0xff]
      %v397 = vld [vmem:[%s267 + $0x3a8] sm:$0xff]
      %v398 = vld [vmem:[%s267 + $0x3b0] sm:$0xff]
      %v399 = vld [vmem:[%s267 + $0x3b8] sm:$0xff]
      %v400 = vld [vmem:[%s267 + $0x3c0] sm:$0xff]
      %v401 = vld [vmem:[%s267 + $0x3c8] sm:$0xff]
      %v402 = vld [vmem:[%s267 + $0x3d0] sm:$0xff]
      %v403 = vld [vmem:[%s267 + $0x3d8] sm:$0xff]
      %v404 = vld [vmem:[%s267 + $0x3e0] sm:$0xff]
      %v405 = vld [vmem:[%s267 + $0x3e8] sm:$0xff]
      %v406 = vld [vmem:[%s267 + $0x3f0] sm:$0xff]
      %v407 = vld [vmem:[%s267 + $0x3f8] sm:$0xff]
      %v408 = vld [vmem:[%s267 + $0x400] sm:$0xff]
      %v409 = vld [vmem:[%s267 + $0x408] sm:$0xff]
      %v410 = vld [vmem:[%s267 + $0x410] sm:$0xff]
      %v411 = vld [vmem:[%s267 + $0x418] sm:$0xff]
      %v412 = vld [vmem:[%s267 + $0x420] sm:$0xff]
      %v413 = vld [vmem:[%s267 + $0x428] sm:$0xff]
      %v414 = vld [vmem:[%s267 + $0x430] sm:$0xff]
      %v415 = vld [vmem:[%s267 + $0x438] sm:$0xff]
      %v416 = vld [vmem:[%s267 + $0x440] sm:$0xff]
      %v417 = vld [vmem:[%s267 + $0x448] sm:$0xff]
      %v418 = vld [vmem:[%s267 + $0x450] sm:$0xff]
      %v419 = vld [vmem:[%s267 + $0x458] sm:$0xff]
      %v420 = vld [vmem:[%s267 + $0x460] sm:$0xff]
      %v421 = vld [vmem:[%s267 + $0x468] sm:$0xff]
      %v422 = vld [vmem:[%s267 + $0x470] sm:$0xff]
      %v423 = vld [vmem:[%s267 + $0x478] sm:$0xff]
      %v424 = vld [vmem:[%s267 + $0x480] sm:$0xff]
      %v425 = vld [vmem:[%s267 + $0x488] sm:$0xff]
      %v426 = vld [vmem:[%s267 + $0x490] sm:$0xff]
      %v427 = vld [vmem:[%s267 + $0x498] sm:$0xff]
      %v428 = vld [vmem:[%s267 + $0x4a0] sm:$0xff]
      %v429 = vld [vmem:[%s267 + $0x4a8] sm:$0xff]
      %v430 = vld [vmem:[%s267 + $0x4b0] sm:$0xff]
      %v431 = vld [vmem:[%s267 + $0x4b8] sm:$0xff]
      %v432 = vld [vmem:[%s267 + $0x4c0] sm:$0xff]
      %v433 = vld [vmem:[%s267 + $0x4c8] sm:$0xff]
      %v434 = vld [vmem:[%s267 + $0x4d0] sm:$0xff]
      %v435 = vld [vmem:[%s267 + $0x4d8] sm:$0xff]
      %v436 = vld [vmem:[%s267 + $0x4e0] sm:$0xff]
      %v437 = vld [vmem:[%s267 + $0x4e8] sm:$0xff]
      %v438 = vld [vmem:[%s267 + $0x4f0] sm:$0xff]
      %v439 = vld [vmem:[%s267 + $0x4f8] sm:$0xff]
      %v440 = vld [vmem:[%s267 + $0x500] sm:$0xff]
      %v441 = vld [vmem:[%s267 + $0x508] sm:$0xff]
      %v442 = vld [vmem:[%s267 + $0x510] sm:$0xff]
      %v443 = vld [vmem:[%s267 + $0x518] sm:$0xff]
      %v444 = vld [vmem:[%s267 + $0x520] sm:$0xff]
      %v445 = vld [vmem:[%s267 + $0x528] sm:$0xff]
      %v446 = vld [vmem:[%s267 + $0x530] sm:$0xff]
      %v447 = vld [vmem:[%s267 + $0x538] sm:$0xff]
      %v448 = vld [vmem:[%s267 + $0x540] sm:$0xff]
      %v449 = vld [vmem:[%s267 + $0x548] sm:$0xff]
      %v450 = vld [vmem:[%s267 + $0x550] sm:$0xff]
      %v451 = vld [vmem:[%s267 + $0x558] sm:$0xff]
      %v452 = vld [vmem:[%s267 + $0x560] sm:$0xff]
      %v453 = vld [vmem:[%s267 + $0x568] sm:$0xff]
      %v454 = vld [vmem:[%s267 + $0x570] sm:$0xff]
      %v455 = vld [vmem:[%s267 + $0x578] sm:$0xff]
      %v456 = vld [vmem:[%s267 + $0x580] sm:$0xff]
      %v457 = vld [vmem:[%s267 + $0x588] sm:$0xff]
      %v458 = vld [vmem:[%s267 + $0x590] sm:$0xff]
      %v459 = vld [vmem:[%s267 + $0x598] sm:$0xff]
      %v460 = vld [vmem:[%s267 + $0x5a0] sm:$0xff]
      %v461 = vld [vmem:[%s267 + $0x5a8] sm:$0xff]
      %v462 = vld [vmem:[%s267 + $0x5b0] sm:$0xff]
      %v463 = vld [vmem:[%s267 + $0x5b8] sm:$0xff]
      %v464 = vld [vmem:[%s267 + $0x5c0] sm:$0xff]
      %v465 = vld [vmem:[%s267 + $0x5c8] sm:$0xff]
      %v466 = vld [vmem:[%s267 + $0x5d0] sm:$0xff]
      %v467 = vld [vmem:[%s267 + $0x5d8] sm:$0xff]
      %v468 = vld [vmem:[%s267 + $0x5e0] sm:$0xff]
      %v469 = vld [vmem:[%s267 + $0x5e8] sm:$0xff]
      %v470 = vld [vmem:[%s267 + $0x5f0] sm:$0xff]
      %v471 = vld [vmem:[%s267 + $0x5f8] sm:$0xff]
      %v472 = vld [vmem:[%s267 + $0x600] sm:$0xff]
      %v473 = vld [vmem:[%s267 + $0x608] sm:$0xff]
      %v474 = vld [vmem:[%s267 + $0x610] sm:$0xff]
      %v475 = vld [vmem:[%s267 + $0x618] sm:$0xff]
      %v476 = vld [vmem:[%s267 + $0x620] sm:$0xff]
      %v477 = vld [vmem:[%s267 + $0x628] sm:$0xff]
      %v478 = vld [vmem:[%s267 + $0x630] sm:$0xff]
      %v479 = vld [vmem:[%s267 + $0x638] sm:$0xff]
      %v480 = vld [vmem:[%s267 + $0x640] sm:$0xff]
      %v481 = vld [vmem:[%s267 + $0x648] sm:$0xff]
      %v482 = vld [vmem:[%s267 + $0x650] sm:$0xff]
      %v483 = vld [vmem:[%s267 + $0x658] sm:$0xff]
      %v484 = vld [vmem:[%s267 + $0x660] sm:$0xff]
      %v485 = vld [vmem:[%s267 + $0x668] sm:$0xff]
      %v486 = vld [vmem:[%s267 + $0x670] sm:$0xff]
      %v487 = vld [vmem:[%s267 + $0x678] sm:$0xff]
      %v488 = vld [vmem:[%s267 + $0x680] sm:$0xff]
      %v489 = vld [vmem:[%s267 + $0x688] sm:$0xff]
      %v490 = vld [vmem:[%s267 + $0x690] sm:$0xff]
      %v491 = vld [vmem:[%s267 + $0x698] sm:$0xff]
      %v492 = vld [vmem:[%s267 + $0x6a0] sm:$0xff]
      %v493 = vld [vmem:[%s267 + $0x6a8] sm:$0xff]
      %v494 = vld [vmem:[%s267 + $0x6b0] sm:$0xff]
      %v495 = vld [vmem:[%s267 + $0x6b8] sm:$0xff]
      %v496 = vld [vmem:[%s267 + $0x6c0] sm:$0xff]
      %v497 = vld [vmem:[%s267 + $0x6c8] sm:$0xff]
      %v498 = vld [vmem:[%s267 + $0x6d0] sm:$0xff]
      %v499 = vld [vmem:[%s267 + $0x6d8] sm:$0xff]
      %v500 = vld [vmem:[%s267 + $0x6e0] sm:$0xff]
      %v501 = vld [vmem:[%s267 + $0x6e8] sm:$0xff]
      %v502 = vld [vmem:[%s267 + $0x6f0] sm:$0xff]
      %v503 = vld [vmem:[%s267 + $0x6f8] sm:$0xff]
      %v504 = vld [vmem:[%s267 + $0x700] sm:$0xff]
      %v505 = vld [vmem:[%s267 + $0x708] sm:$0xff]
      %v506 = vld [vmem:[%s267 + $0x710] sm:$0xff]
      %v507 = vld [vmem:[%s267 + $0x718] sm:$0xff]
      %v508 = vld [vmem:[%s267 + $0x720] sm:$0xff]
      %v509 = vld [vmem:[%s267 + $0x728] sm:$0xff]
      %v510 = vld [vmem:[%s267 + $0x730] sm:$0xff]
      %v511 = vld [vmem:[%s267 + $0x738] sm:$0xff]
      %v512 = vld [vmem:[%s267 + $0x740] sm:$0xff]
      %v513 = vld [vmem:[%s267 + $0x748] sm:$0xff]
      %v514 = vld [vmem:[%s267 + $0x750] sm:$0xff]
      %v515 = vld [vmem:[%s267 + $0x758] sm:$0xff]
      %v516 = vld [vmem:[%s267 + $0x760] sm:$0xff]
      %v517 = vld [vmem:[%s267 + $0x768] sm:$0xff]
      %v518 = vld [vmem:[%s267 + $0x770] sm:$0xff]
      %v519 = vld [vmem:[%s267 + $0x778] sm:$0xff]
      %v520 = vld [vmem:[%s267 + $0x780] sm:$0xff]
      %v521 = vld [vmem:[%s267 + $0x788] sm:$0xff]
      %v522 = vld [vmem:[%s267 + $0x790] sm:$0xff]
      %v523 = vld [vmem:[%s267 + $0x798] sm:$0xff]
      %v524 = vld [vmem:[%s267 + $0x7a0] sm:$0xff]
      %v525 = vld [vmem:[%s267 + $0x7a8] sm:$0xff]
      %v526 = vld [vmem:[%s267 + $0x7b0] sm:$0xff]
      %v527 = vld [vmem:[%s267 + $0x7b8] sm:$0xff]
      %v528 = vld [vmem:[%s267 + $0x7c0] sm:$0xff]
      %v529 = vld [vmem:[%s267 + $0x7c8] sm:$0xff]
      %v530 = vld [vmem:[%s267 + $0x7d0] sm:$0xff]
      %v531 = vld [vmem:[%s267 + $0x7d8] sm:$0xff]
      %v532 = vld [vmem:[%s267 + $0x7e0] sm:$0xff]
      %v533 = vld [vmem:[%s267 + $0x7e8] sm:$0xff]
      %v534 = vld [vmem:[%s267 + $0x7f0] sm:$0xff]
      %v535 = vld [vmem:[%s267 + $0x7f8] sm:$0xff]
      %v536 = vld [vmem:[%s267 + $0x800] sm:$0xff]
      %v537 = vld [vmem:[%s267 + $0x808] sm:$0xff]
      %v538 = vld [vmem:[%s267 + $0x810] sm:$0xff]
      %v539 = vld [vmem:[%s267 + $0x818] sm:$0xff]
      %v540 = vld [vmem:[%s267 + $0x820] sm:$0xff]
      %v541 = vld [vmem:[%s267 + $0x828] sm:$0xff]
      %v542 = vld [vmem:[%s267 + $0x830] sm:$0xff]
      %v543 = vld [vmem:[%s267 + $0x838] sm:$0xff]
      %v544 = vld [vmem:[%s267 + $0x840] sm:$0xff]
      %v545 = vld [vmem:[%s267 + $0x848] sm:$0xff]
      %v546 = vld [vmem:[%s267 + $0x850] sm:$0xff]
      %v547 = vld [vmem:[%s267 + $0x858] sm:$0xff]
      %v548 = vld [vmem:[%s267 + $0x860] sm:$0xff]
      %v549 = vld [vmem:[%s267 + $0x868] sm:$0xff]
      %v550 = vld [vmem:[%s267 + $0x870] sm:$0xff]
      %v551 = vld [vmem:[%s267 + $0x878] sm:$0xff]
      %v552 = vld [vmem:[%s267 + $0x880] sm:$0xff]
      %v553 = vld [vmem:[%s267 + $0x888] sm:$0xff]
      %v554 = vld [vmem:[%s267 + $0x890] sm:$0xff]
      %v555 = vld [vmem:[%s267 + $0x898] sm:$0xff]
      %v556 = vld [vmem:[%s267 + $0x8a0] sm:$0xff]
      %v557 = vld [vmem:[%s267 + $0x8a8] sm:$0xff]
      %v558 = vld [vmem:[%s267 + $0x8b0] sm:$0xff]
      %v559 = vld [vmem:[%s267 + $0x8b8] sm:$0xff]
      %v560 = vld [vmem:[%s267 + $0x8c0] sm:$0xff]
      %v561 = vld [vmem:[%s267 + $0x8c8] sm:$0xff]
      %v562 = vld [vmem:[%s267 + $0x8d0] sm:$0xff]
      %v563 = vld [vmem:[%s267 + $0x8d8] sm:$0xff]
      %v564 = vld [vmem:[%s267 + $0x8e0] sm:$0xff]
      %v565 = vld [vmem:[%s267 + $0x8e8] sm:$0xff]
      %v566 = vld [vmem:[%s267 + $0x8f0] sm:$0xff]
      %v567 = vld [vmem:[%s267 + $0x8f8] sm:$0xff]
      %v568 = vld [vmem:[%s267 + $0x900] sm:$0xff]
      %v569 = vld [vmem:[%s267 + $0x908] sm:$0xff]
      %v570 = vld [vmem:[%s267 + $0x910] sm:$0xff]
      %v571 = vld [vmem:[%s267 + $0x918] sm:$0xff]
      %v572 = vld [vmem:[%s267 + $0x920] sm:$0xff]
      %v573 = vld [vmem:[%s267 + $0x928] sm:$0xff]
      %v574 = vld [vmem:[%s267 + $0x930] sm:$0xff]
      %v575 = vld [vmem:[%s267 + $0x938] sm:$0xff]
      %v576 = vld [vmem:[%s267 + $0x940] sm:$0xff]
      %v577 = vld [vmem:[%s267 + $0x948] sm:$0xff]
      %v578 = vld [vmem:[%s267 + $0x950] sm:$0xff]
      %v579 = vld [vmem:[%s267 + $0x958] sm:$0xff]
      %v580 = vld [vmem:[%s267 + $0x960] sm:$0xff]
      %v581 = vld [vmem:[%s267 + $0x968] sm:$0xff]
      %v582 = vld [vmem:[%s267 + $0x970] sm:$0xff]
      %v583 = vld [vmem:[%s267 + $0x978] sm:$0xff]
      %v584 = vld [vmem:[%s267 + $0x980] sm:$0xff]
      %v585 = vld [vmem:[%s267 + $0x988] sm:$0xff]
      %v586 = vld [vmem:[%s267 + $0x990] sm:$0xff]
      %v587 = vld [vmem:[%s267 + $0x998] sm:$0xff]
      %v588 = vld [vmem:[%s267 + $0x9a0] sm:$0xff]
      %v589 = vld [vmem:[%s267 + $0x9a8] sm:$0xff]
      %v590 = vld [vmem:[%s267 + $0x9b0] sm:$0xff]
      %v591 = vld [vmem:[%s267 + $0x9b8] sm:$0xff]
      %v592 = vld [vmem:[%s267 + $0x9c0] sm:$0xff]
      %v593 = vld [vmem:[%s267 + $0x9c8] sm:$0xff]
      %v594 = vld [vmem:[%s267 + $0x9d0] sm:$0xff]
      %v595 = vld [vmem:[%s267 + $0x9d8] sm:$0xff]
      %v596 = vld [vmem:[%s267 + $0x9e0] sm:$0xff]
      %v597 = vld [vmem:[%s267 + $0x9e8] sm:$0xff]
      %v598 = vld [vmem:[%s267 + $0x9f0] sm:$0xff]
      %v599 = vld [vmem:[%s267 + $0x9f8] sm:$0xff]
      %v600 = vld [vmem:[%s267 + $0xa00] sm:$0xff]
      %v601 = vld [vmem:[%s267 + $0xa08] sm:$0xff]
      %v602 = vld [vmem:[%s267 + $0xa10] sm:$0xff]
      %v603 = vld [vmem:[%s267 + $0xa18] sm:$0xff]
      %v604 = vld [vmem:[%s267 + $0xa20] sm:$0xff]
      %v605 = vld [vmem:[%s267 + $0xa28] sm:$0xff]
      %v606 = vld [vmem:[%s267 + $0xa30] sm:$0xff]
      %v607 = vld [vmem:[%s267 + $0xa38] sm:$0xff]
      %v608 = vld [vmem:[%s267 + $0xa40] sm:$0xff]
      %v609 = vld [vmem:[%s267 + $0xa48] sm:$0xff]
      %v610 = vld [vmem:[%s267 + $0xa50] sm:$0xff]
      %v611 = vld [vmem:[%s267 + $0xa58] sm:$0xff]
      %v612 = vld [vmem:[%s267 + $0xa60] sm:$0xff]
      %v613 = vld [vmem:[%s267 + $0xa68] sm:$0xff]
      %v614 = vld [vmem:[%s267 + $0xa70] sm:$0xff]
      %v615 = vld [vmem:[%s267 + $0xa78] sm:$0xff]
      %v616 = vld [vmem:[%s267 + $0xa80] sm:$0xff]
      %v617 = vld [vmem:[%s267 + $0xa88] sm:$0xff]
      %v618 = vld [vmem:[%s267 + $0xa90] sm:$0xff]
      %v619 = vld [vmem:[%s267 + $0xa98] sm:$0xff]
      %v620 = vld [vmem:[%s267 + $0xaa0] sm:$0xff]
      %v621 = vld [vmem:[%s267 + $0xaa8] sm:$0xff]
      %v622 = vld [vmem:[%s267 + $0xab0] sm:$0xff]
      %v623 = vld [vmem:[%s267 + $0xab8] sm:$0xff]
      %v624 = vld [vmem:[%s267 + $0xac0] sm:$0xff]
      %v625 = vld [vmem:[%s267 + $0xac8] sm:$0xff]
      %v626 = vld [vmem:[%s267 + $0xad0] sm:$0xff]
      %v627 = vld [vmem:[%s267 + $0xad8] sm:$0xff]
      %v628 = vld [vmem:[%s267 + $0xae0] sm:$0xff]
      %v629 = vld [vmem:[%s267 + $0xae8] sm:$0xff]
      %v630 = vld [vmem:[%s267 + $0xaf0] sm:$0xff]
      %v631 = vld [vmem:[%s267 + $0xaf8] sm:$0xff]
      %v632 = vld [vmem:[%s267 + $0xb00] sm:$0xff]
      %v633 = vld [vmem:[%s267 + $0xb08] sm:$0xff]
      %v634 = vld [vmem:[%s267 + $0xb10] sm:$0xff]
      %v635 = vld [vmem:[%s267 + $0xb18] sm:$0xff]
      %v636 = vld [vmem:[%s267 + $0xb20] sm:$0xff]
      %v637 = vld [vmem:[%s267 + $0xb28] sm:$0xff]
      %v638 = vld [vmem:[%s267 + $0xb30] sm:$0xff]
      %v639 = vld [vmem:[%s267 + $0xb38] sm:$0xff]
      %v640 = vld [vmem:[%s267 + $0xb40] sm:$0xff]
      %v641 = vld [vmem:[%s267 + $0xb48] sm:$0xff]
      %v642 = vld [vmem:[%s267 + $0xb50] sm:$0xff]
      %v643 = vld [vmem:[%s267 + $0xb58] sm:$0xff]
      %v644 = vld [vmem:[%s267 + $0xb60] sm:$0xff]
      %v645 = vld [vmem:[%s267 + $0xb68] sm:$0xff]
      %v646 = vld [vmem:[%s267 + $0xb70] sm:$0xff]
      %v647 = vld [vmem:[%s267 + $0xb78] sm:$0xff]
      %v648 = vld [vmem:[%s267 + $0xb80] sm:$0xff]
      %v649 = vld [vmem:[%s267 + $0xb88] sm:$0xff]
      %v650 = vld [vmem:[%s267 + $0xb90] sm:$0xff]
      %v651 = vld [vmem:[%s267 + $0xb98] sm:$0xff]
      %v652 = vld [vmem:[%s267 + $0xba0] sm:$0xff]
      %v653 = vld [vmem:[%s267 + $0xba8] sm:$0xff]
      %v654 = vld [vmem:[%s267 + $0xbb0] sm:$0xff]
      %v655 = vld [vmem:[%s267 + $0xbb8] sm:$0xff]
      %v656 = vld [vmem:[%s267 + $0xbc0] sm:$0xff]
      %v657 = vld [vmem:[%s267 + $0xbc8] sm:$0xff]
      %v658 = vld [vmem:[%s267 + $0xbd0] sm:$0xff]
      %v659 = vld [vmem:[%s267 + $0xbd8] sm:$0xff]
      %v660 = vld [vmem:[%s267 + $0xbe0] sm:$0xff]
      %v661 = vld [vmem:[%s267 + $0xbe8] sm:$0xff]
      %v662 = vld [vmem:[%s267 + $0xbf0] sm:$0xff]
      %v663 = vld [vmem:[%s267 + $0xbf8] sm:$0xff]
      %v664 = vld [vmem:[%s267 + $0xc00] sm:$0xff]
      %v665 = vld [vmem:[%s267 + $0xc08] sm:$0xff]
      %v666 = vld [vmem:[%s267 + $0xc10] sm:$0xff]
      %v667 = vld [vmem:[%s267 + $0xc18] sm:$0xff]
      %v668 = vld [vmem:[%s267 + $0xc20] sm:$0xff]
      %v669 = vld [vmem:[%s267 + $0xc28] sm:$0xff]
      %v670 = vld [vmem:[%s267 + $0xc30] sm:$0xff]
      %v671 = vld [vmem:[%s267 + $0xc38] sm:$0xff]
      %v672 = vld [vmem:[%s267 + $0xc40] sm:$0xff]
      %v673 = vld [vmem:[%s267 + $0xc48] sm:$0xff]
      %v674 = vld [vmem:[%s267 + $0xc50] sm:$0xff]
      %v675 = vld [vmem:[%s267 + $0xc58] sm:$0xff]
      %v676 = vld [vmem:[%s267 + $0xc60] sm:$0xff]
      %v677 = vld [vmem:[%s267 + $0xc68] sm:$0xff]
      %v678 = vld [vmem:[%s267 + $0xc70] sm:$0xff]
      %v679 = vld [vmem:[%s267 + $0xc78] sm:$0xff]
      %v680 = vld [vmem:[%s267 + $0xc80] sm:$0xff]
      %v681 = vld [vmem:[%s267 + $0xc88] sm:$0xff]
      %v682 = vld [vmem:[%s267 + $0xc90] sm:$0xff]
      %v683 = vld [vmem:[%s267 + $0xc98] sm:$0xff]
      %v684 = vld [vmem:[%s267 + $0xca0] sm:$0xff]
      %v685 = vld [vmem:[%s267 + $0xca8] sm:$0xff]
      %v686 = vld [vmem:[%s267 + $0xcb0] sm:$0xff]
      %v687 = vld [vmem:[%s267 + $0xcb8] sm:$0xff]
      %v688 = vld [vmem:[%s267 + $0xcc0] sm:$0xff]
      %v689 = vld [vmem:[%s267 + $0xcc8] sm:$0xff]
      %v690 = vld [vmem:[%s267 + $0xcd0] sm:$0xff]
      %v691 = vld [vmem:[%s267 + $0xcd8] sm:$0xff]
      %v692 = vld [vmem:[%s267 + $0xce0] sm:$0xff]
      %v693 = vld [vmem:[%s267 + $0xce8] sm:$0xff]
      %v694 = vld [vmem:[%s267 + $0xcf0] sm:$0xff]
      %v695 = vld [vmem:[%s267 + $0xcf8] sm:$0xff]
      %v696 = vld [vmem:[%s267 + $0xd00] sm:$0xff]
      %v697 = vld [vmem:[%s267 + $0xd08] sm:$0xff]
      %v698 = vld [vmem:[%s267 + $0xd10] sm:$0xff]
      %v699 = vld [vmem:[%s267 + $0xd18] sm:$0xff]
      %v700 = vld [vmem:[%s267 + $0xd20] sm:$0xff]
      %v701 = vld [vmem:[%s267 + $0xd28] sm:$0xff]
      %v702 = vld [vmem:[%s267 + $0xd30] sm:$0xff]
      %v703 = vld [vmem:[%s267 + $0xd38] sm:$0xff]
      %v704 = vld [vmem:[%s267 + $0xd40] sm:$0xff]
      %v705 = vld [vmem:[%s267 + $0xd48] sm:$0xff]
      %v706 = vld [vmem:[%s267 + $0xd50] sm:$0xff]
      %v707 = vld [vmem:[%s267 + $0xd58] sm:$0xff]
      %v708 = vld [vmem:[%s267 + $0xd60] sm:$0xff]
      %v709 = vld [vmem:[%s267 + $0xd68] sm:$0xff]
      %v710 = vld [vmem:[%s267 + $0xd70] sm:$0xff]
      %v711 = vld [vmem:[%s267 + $0xd78] sm:$0xff]
      %v712 = vld [vmem:[%s267 + $0xd80] sm:$0xff]
      %v713 = vld [vmem:[%s267 + $0xd88] sm:$0xff]
      %v714 = vld [vmem:[%s267 + $0xd90] sm:$0xff]
      %v715 = vld [vmem:[%s267 + $0xd98] sm:$0xff]
      %v716 = vld [vmem:[%s267 + $0xda0] sm:$0xff]
      %v717 = vld [vmem:[%s267 + $0xda8] sm:$0xff]
      %v718 = vld [vmem:[%s267 + $0xdb0] sm:$0xff]
      %v719 = vld [vmem:[%s267 + $0xdb8] sm:$0xff]
      %v720 = vld [vmem:[%s267 + $0xdc0] sm:$0xff]
      %v721 = vld [vmem:[%s267 + $0xdc8] sm:$0xff]
      %v722 = vld [vmem:[%s267 + $0xdd0] sm:$0xff]
      %v723 = vld [vmem:[%s267 + $0xdd8] sm:$0xff]
      %v724 = vld [vmem:[%s267 + $0xde0] sm:$0xff]
      %v725 = vld [vmem:[%s267 + $0xde8] sm:$0xff]
      %v726 = vld [vmem:[%s267 + $0xdf0] sm:$0xff]
      %v727 = vld [vmem:[%s267 + $0xdf8] sm:$0xff]
      %v728 = vld [vmem:[%s267 + $0xe00] sm:$0xff]
      %v729 = vld [vmem:[%s267 + $0xe08] sm:$0xff]
      %v730 = vld [vmem:[%s267 + $0xe10] sm:$0xff]
      %v731 = vld [vmem:[%s267 + $0xe18] sm:$0xff]
      %v732 = vld [vmem:[%s267 + $0xe20] sm:$0xff]
      %v733 = vld [vmem:[%s267 + $0xe28] sm:$0xff]
      %v734 = vld [vmem:[%s267 + $0xe30] sm:$0xff]
      %v735 = vld [vmem:[%s267 + $0xe38] sm:$0xff]
      %v736 = vld [vmem:[%s267 + $0xe40] sm:$0xff]
      %v737 = vld [vmem:[%s267 + $0xe48] sm:$0xff]
      %v738 = vld [vmem:[%s267 + $0xe50] sm:$0xff]
      %v739 = vld [vmem:[%s267 + $0xe58] sm:$0xff]
      %v740 = vld [vmem:[%s267 + $0xe60] sm:$0xff]
      %v741 = vld [vmem:[%s267 + $0xe68] sm:$0xff]
      %v742 = vld [vmem:[%s267 + $0xe70] sm:$0xff]
      %v743 = vld [vmem:[%s267 + $0xe78] sm:$0xff]
      %v744 = vld [vmem:[%s267 + $0xe80] sm:$0xff]
      %v745 = vld [vmem:[%s267 + $0xe88] sm:$0xff]
      %v746 = vld [vmem:[%s267 + $0xe90] sm:$0xff]
      %v747 = vld [vmem:[%s267 + $0xe98] sm:$0xff]
      %v748 = vld [vmem:[%s267 + $0xea0] sm:$0xff]
      %v749 = vld [vmem:[%s267 + $0xea8] sm:$0xff]
      %v750 = vld [vmem:[%s267 + $0xeb0] sm:$0xff]
      %v751 = vld [vmem:[%s267 + $0xeb8] sm:$0xff]
      %v752 = vld [vmem:[%s267 + $0xec0] sm:$0xff]
      %v753 = vld [vmem:[%s267 + $0xec8] sm:$0xff]
      %v754 = vld [vmem:[%s267 + $0xed0] sm:$0xff]
      %v755 = vld [vmem:[%s267 + $0xed8] sm:$0xff]
      %v756 = vld [vmem:[%s267 + $0xee0] sm:$0xff]
      %v757 = vld [vmem:[%s267 + $0xee8] sm:$0xff]
      %v758 = vld [vmem:[%s267 + $0xef0] sm:$0xff]
      %v759 = vld [vmem:[%s267 + $0xef8] sm:$0xff]
      %v760 = vld [vmem:[%s267 + $0xf00] sm:$0xff]
      %v761 = vld [vmem:[%s267 + $0xf08] sm:$0xff]
      %v762 = vld [vmem:[%s267 + $0xf10] sm:$0xff]
      %v763 = vld [vmem:[%s267 + $0xf18] sm:$0xff]
      %v764 = vld [vmem:[%s267 + $0xf20] sm:$0xff]
      %v765 = vld [vmem:[%s267 + $0xf28] sm:$0xff]
      %v766 = vld [vmem:[%s267 + $0xf30] sm:$0xff]
      %v767 = vld [vmem:[%s267 + $0xf38] sm:$0xff]
      %v768 = vld [vmem:[%s267 + $0xf40] sm:$0xff]
      %v769 = vld [vmem:[%s267 + $0xf48] sm:$0xff]
      %v770 = vld [vmem:[%s267 + $0xf50] sm:$0xff]
      %v771 = vld [vmem:[%s267 + $0xf58] sm:$0xff]
      %v772 = vld [vmem:[%s267 + $0xf60] sm:$0xff]
      %v773 = vld [vmem:[%s267 + $0xf68] sm:$0xff]
      %v774 = vld [vmem:[%s267 + $0xf70] sm:$0xff]
      %v775 = vld [vmem:[%s267 + $0xf78] sm:$0xff]
      %v776 = vld [vmem:[%s267 + $0xf80] sm:$0xff]
      %v777 = vld [vmem:[%s267 + $0xf88] sm:$0xff]
      %v778 = vld [vmem:[%s267 + $0xf90] sm:$0xff]
      %v779 = vld [vmem:[%s267 + $0xf98] sm:$0xff]
      %v780 = vld [vmem:[%s267 + $0xfa0] sm:$0xff]
      %v781 = vld [vmem:[%s267 + $0xfa8] sm:$0xff]
      %v782 = vld [vmem:[%s267 + $0xfb0] sm:$0xff]
      %v783 = vld [vmem:[%s267 + $0xfb8] sm:$0xff]
      %v784 = vld [vmem:[%s267 + $0xfc0] sm:$0xff]
      %v785 = vld [vmem:[%s267 + $0xfc8] sm:$0xff]
      %v786 = vld [vmem:[%s267 + $0xfd0] sm:$0xff]
      %v787 = vld [vmem:[%s267 + $0xfd8] sm:$0xff]
      %v788 = vld [vmem:[%s267 + $0xfe0] sm:$0xff]
      %v789 = vld [vmem:[%s267 + $0xfe8] sm:$0xff]
      %v790 = vld [vmem:[%s267 + $0xff0] sm:$0xff]
      %v791 = vld [vmem:[%s267 + $0xff8] sm:$0xff]
      %v792 = vld [vmem:[%s1] sm:$0xff]
      %v793 = vld [vmem:[%s1 + $0x8] sm:$0xff]
      %v794 = vld [vmem:[%s1 + $0x10] sm:$0xff]
      %v795 = vld [vmem:[%s1 + $0x18] sm:$0xff]
      %v796 = vld [vmem:[%s1 + $0x20] sm:$0xff]
      %v797 = vld [vmem:[%s1 + $0x28] sm:$0xff]
      %v798 = vld [vmem:[%s1 + $0x30] sm:$0xff]
      %v799 = vld [vmem:[%s1 + $0x38] sm:$0xff]
      %v800 = vld [vmem:[%s1 + $0x40] sm:$0xff]
      %v801 = vld [vmem:[%s1 + $0x48] sm:$0xff]
      %v802 = vld [vmem:[%s1 + $0x50] sm:$0xff]
      %v803 = vld [vmem:[%s1 + $0x58] sm:$0xff]
      %v804 = vld [vmem:[%s1 + $0x60] sm:$0xff]
      %v805 = vld [vmem:[%s1 + $0x68] sm:$0xff]
      %v806 = vld [vmem:[%s1 + $0x70] sm:$0xff]
      %v807 = vld [vmem:[%s1 + $0x78] sm:$0xff]
      %v808 = vld [vmem:[%s1 + $0x80] sm:$0xff]
      %v809 = vld [vmem:[%s1 + $0x88] sm:$0xff]
      %v810 = vld [vmem:[%s1 + $0x90] sm:$0xff]
      %v811 = vld [vmem:[%s1 + $0x98] sm:$0xff]
      %v812 = vld [vmem:[%s1 + $0xa0] sm:$0xff]
      %v813 = vld [vmem:[%s1 + $0xa8] sm:$0xff]
      %v814 = vld [vmem:[%s1 + $0xb0] sm:$0xff]
      %v815 = vld [vmem:[%s1 + $0xb8] sm:$0xff]
      %v816 = vld [vmem:[%s1 + $0xc0] sm:$0xff]
      %v817 = vld [vmem:[%s1 + $0xc8] sm:$0xff]
      %v818 = vld [vmem:[%s1 + $0xd0] sm:$0xff]
      %v819 = vld [vmem:[%s1 + $0xd8] sm:$0xff]
      %v820 = vld [vmem:[%s1 + $0xe0] sm:$0xff]
      %v821 = vld [vmem:[%s1 + $0xe8] sm:$0xff]
      %v822 = vld [vmem:[%s1 + $0xf0] sm:$0xff]
      %v823 = vld [vmem:[%s1 + $0xf8] sm:$0xff]
      %v824 = vld [vmem:[%s1 + $0x100] sm:$0xff]
      %v825 = vld [vmem:[%s1 + $0x108] sm:$0xff]
      %v826 = vld [vmem:[%s1 + $0x110] sm:$0xff]
      %v827 = vld [vmem:[%s1 + $0x118] sm:$0xff]
      %v828 = vld [vmem:[%s1 + $0x120] sm:$0xff]
      %v829 = vld [vmem:[%s1 + $0x128] sm:$0xff]
      %v830 = vld [vmem:[%s1 + $0x130] sm:$0xff]
      %v831 = vld [vmem:[%s1 + $0x138] sm:$0xff]
      %v832 = vld [vmem:[%s1 + $0x140] sm:$0xff]
      %v833 = vld [vmem:[%s1 + $0x148] sm:$0xff]
      %v834 = vld [vmem:[%s1 + $0x150] sm:$0xff]
      %v835 = vld [vmem:[%s1 + $0x158] sm:$0xff]
      %v836 = vld [vmem:[%s1 + $0x160] sm:$0xff]
      %v837 = vld [vmem:[%s1 + $0x168] sm:$0xff]
      %v838 = vld [vmem:[%s1 + $0x170] sm:$0xff]
      %v839 = vld [vmem:[%s1 + $0x178] sm:$0xff]
      %v840 = vld [vmem:[%s1 + $0x180] sm:$0xff]
      %v841 = vld [vmem:[%s1 + $0x188] sm:$0xff]
      %v842 = vld [vmem:[%s1 + $0x190] sm:$0xff]
      %v843 = vld [vmem:[%s1 + $0x198] sm:$0xff]
      %v844 = vld [vmem:[%s1 + $0x1a0] sm:$0xff]
      %v845 = vld [vmem:[%s1 + $0x1a8] sm:$0xff]
      %v846 = vld [vmem:[%s1 + $0x1b0] sm:$0xff]
      %v847 = vld [vmem:[%s1 + $0x1b8] sm:$0xff]
      %v848 = vld [vmem:[%s1 + $0x1c0] sm:$0xff]
      %v849 = vld [vmem:[%s1 + $0x1c8] sm:$0xff]
      %v850 = vld [vmem:[%s1 + $0x1d0] sm:$0xff]
      %v851 = vld [vmem:[%s1 + $0x1d8] sm:$0xff]
      %v852 = vld [vmem:[%s1 + $0x1e0] sm:$0xff]
      %v853 = vld [vmem:[%s1 + $0x1e8] sm:$0xff]
      %v854 = vld [vmem:[%s1 + $0x1f0] sm:$0xff]
      %v855 = vld [vmem:[%s1 + $0x1f8] sm:$0xff]
      %v856 = vld [vmem:[%s1 + $0x200] sm:$0xff]
      %v857 = vld [vmem:[%s1 + $0x208] sm:$0xff]
      %v858 = vld [vmem:[%s1 + $0x210] sm:$0xff]
      %v859 = vld [vmem:[%s1 + $0x218] sm:$0xff]
      %v860 = vld [vmem:[%s1 + $0x220] sm:$0xff]
      %v861 = vld [vmem:[%s1 + $0x228] sm:$0xff]
      %v862 = vld [vmem:[%s1 + $0x230] sm:$0xff]
      %v863 = vld [vmem:[%s1 + $0x238] sm:$0xff]
      %v864 = vld [vmem:[%s1 + $0x240] sm:$0xff]
      %v865 = vld [vmem:[%s1 + $0x248] sm:$0xff]
      %v866 = vld [vmem:[%s1 + $0x250] sm:$0xff]
      %v867 = vld [vmem:[%s1 + $0x258] sm:$0xff]
      %v868 = vld [vmem:[%s1 + $0x260] sm:$0xff]
      %v869 = vld [vmem:[%s1 + $0x268] sm:$0xff]
      %v870 = vld [vmem:[%s1 + $0x270] sm:$0xff]
      %v871 = vld [vmem:[%s1 + $0x278] sm:$0xff]
      %v872 = vld [vmem:[%s1 + $0x280] sm:$0xff]
      %v873 = vld [vmem:[%s1 + $0x288] sm:$0xff]
      %v874 = vld [vmem:[%s1 + $0x290] sm:$0xff]
      %v875 = vld [vmem:[%s1 + $0x298] sm:$0xff]
      %v876 = vld [vmem:[%s1 + $0x2a0] sm:$0xff]
      %v877 = vld [vmem:[%s1 + $0x2a8] sm:$0xff]
      %v878 = vld [vmem:[%s1 + $0x2b0] sm:$0xff]
      %v879 = vld [vmem:[%s1 + $0x2b8] sm:$0xff]
      %v880 = vld [vmem:[%s1 + $0x2c0] sm:$0xff]
      %v881 = vld [vmem:[%s1 + $0x2c8] sm:$0xff]
      %v882 = vld [vmem:[%s1 + $0x2d0] sm:$0xff]
      %v883 = vld [vmem:[%s1 + $0x2d8] sm:$0xff]
      %v884 = vld [vmem:[%s1 + $0x2e0] sm:$0xff]
      %v885 = vld [vmem:[%s1 + $0x2e8] sm:$0xff]
      %v886 = vld [vmem:[%s1 + $0x2f0] sm:$0xff]
      %v887 = vld [vmem:[%s1 + $0x2f8] sm:$0xff]
      %v888 = vld [vmem:[%s1 + $0x300] sm:$0xff]
      %v889 = vld [vmem:[%s1 + $0x308] sm:$0xff]
      %v890 = vld [vmem:[%s1 + $0x310] sm:$0xff]
      %v891 = vld [vmem:[%s1 + $0x318] sm:$0xff]
      %v892 = vld [vmem:[%s1 + $0x320] sm:$0xff]
      %v893 = vld [vmem:[%s1 + $0x328] sm:$0xff]
      %v894 = vld [vmem:[%s1 + $0x330] sm:$0xff]
      %v895 = vld [vmem:[%s1 + $0x338] sm:$0xff]
      %v896 = vld [vmem:[%s1 + $0x340] sm:$0xff]
      %v897 = vld [vmem:[%s1 + $0x348] sm:$0xff]
      %v898 = vld [vmem:[%s1 + $0x350] sm:$0xff]
      %v899 = vld [vmem:[%s1 + $0x358] sm:$0xff]
      %v900 = vld [vmem:[%s1 + $0x360] sm:$0xff]
      %v901 = vld [vmem:[%s1 + $0x368] sm:$0xff]
      %v902 = vld [vmem:[%s1 + $0x370] sm:$0xff]
      %v903 = vld [vmem:[%s1 + $0x378] sm:$0xff]
      %v904 = vld [vmem:[%s1 + $0x380] sm:$0xff]
      %v905 = vld [vmem:[%s1 + $0x388] sm:$0xff]
      %v906 = vld [vmem:[%s1 + $0x390] sm:$0xff]
      %v907 = vld [vmem:[%s1 + $0x398] sm:$0xff]
      %v908 = vld [vmem:[%s1 + $0x3a0] sm:$0xff]
      %v909 = vld [vmem:[%s1 + $0x3a8] sm:$0xff]
      %v910 = vld [vmem:[%s1 + $0x3b0] sm:$0xff]
      %v911 = vld [vmem:[%s1 + $0x3b8] sm:$0xff]
      %v912 = vld [vmem:[%s1 + $0x3c0] sm:$0xff]
      %v913 = vld [vmem:[%s1 + $0x3c8] sm:$0xff]
      %v914 = vld [vmem:[%s1 + $0x3d0] sm:$0xff]
      %v915 = vld [vmem:[%s1 + $0x3d8] sm:$0xff]
      %v916 = vld [vmem:[%s1 + $0x3e0] sm:$0xff]
      %v917 = vld [vmem:[%s1 + $0x3e8] sm:$0xff]
      %v918 = vld [vmem:[%s1 + $0x3f0] sm:$0xff]
      %v919 = vld [vmem:[%s1 + $0x3f8] sm:$0xff]
      %v920 = vld [vmem:[%s1 + $0x400] sm:$0xff]
      %v921 = vld [vmem:[%s1 + $0x408] sm:$0xff]
      %v922 = vld [vmem:[%s1 + $0x410] sm:$0xff]
      %v923 = vld [vmem:[%s1 + $0x418] sm:$0xff]
      %v924 = vld [vmem:[%s1 + $0x420] sm:$0xff]
      %v925 = vld [vmem:[%s1 + $0x428] sm:$0xff]
      %v926 = vld [vmem:[%s1 + $0x430] sm:$0xff]
      %v927 = vld [vmem:[%s1 + $0x438] sm:$0xff]
      %v928 = vld [vmem:[%s1 + $0x440] sm:$0xff]
      %v929 = vld [vmem:[%s1 + $0x448] sm:$0xff]
      %v930 = vld [vmem:[%s1 + $0x450] sm:$0xff]
      %v931 = vld [vmem:[%s1 + $0x458] sm:$0xff]
      %v932 = vld [vmem:[%s1 + $0x460] sm:$0xff]
      %v933 = vld [vmem:[%s1 + $0x468] sm:$0xff]
      %v934 = vld [vmem:[%s1 + $0x470] sm:$0xff]
      %v935 = vld [vmem:[%s1 + $0x478] sm:$0xff]
      %v936 = vld [vmem:[%s1 + $0x480] sm:$0xff]
      %v937 = vld [vmem:[%s1 + $0x488] sm:$0xff]
      %v938 = vld [vmem:[%s1 + $0x490] sm:$0xff]
      %v939 = vld [vmem:[%s1 + $0x498] sm:$0xff]
      %v940 = vld [vmem:[%s1 + $0x4a0] sm:$0xff]
      %v941 = vld [vmem:[%s1 + $0x4a8] sm:$0xff]
      %v942 = vld [vmem:[%s1 + $0x4b0] sm:$0xff]
      %v943 = vld [vmem:[%s1 + $0x4b8] sm:$0xff]
      %v944 = vld [vmem:[%s1 + $0x4c0] sm:$0xff]
      %v945 = vld [vmem:[%s1 + $0x4c8] sm:$0xff]
      %v946 = vld [vmem:[%s1 + $0x4d0] sm:$0xff]
      %v947 = vld [vmem:[%s1 + $0x4d8] sm:$0xff]
      %v948 = vld [vmem:[%s1 + $0x4e0] sm:$0xff]
      %v949 = vld [vmem:[%s1 + $0x4e8] sm:$0xff]
      %v950 = vld [vmem:[%s1 + $0x4f0] sm:$0xff]
      %v951 = vld [vmem:[%s1 + $0x4f8] sm:$0xff]
      %v952 = vld [vmem:[%s1 + $0x500] sm:$0xff]
      %v953 = vld [vmem:[%s1 + $0x508] sm:$0xff]
      %v954 = vld [vmem:[%s1 + $0x510] sm:$0xff]
      %v955 = vld [vmem:[%s1 + $0x518] sm:$0xff]
      %v956 = vld [vmem:[%s1 + $0x520] sm:$0xff]
      %v957 = vld [vmem:[%s1 + $0x528] sm:$0xff]
      %v958 = vld [vmem:[%s1 + $0x530] sm:$0xff]
      %v959 = vld [vmem:[%s1 + $0x538] sm:$0xff]
      %v960 = vld [vmem:[%s1 + $0x540] sm:$0xff]
      %v961 = vld [vmem:[%s1 + $0x548] sm:$0xff]
      %v962 = vld [vmem:[%s1 + $0x550] sm:$0xff]
      %v963 = vld [vmem:[%s1 + $0x558] sm:$0xff]
      %v964 = vld [vmem:[%s1 + $0x560] sm:$0xff]
      %v965 = vld [vmem:[%s1 + $0x568] sm:$0xff]
      %v966 = vld [vmem:[%s1 + $0x570] sm:$0xff]
      %v967 = vld [vmem:[%s1 + $0x578] sm:$0xff]
      %v968 = vld [vmem:[%s1 + $0x580] sm:$0xff]
      %v969 = vld [vmem:[%s1 + $0x588] sm:$0xff]
      %v970 = vld [vmem:[%s1 + $0x590] sm:$0xff]
      %v971 = vld [vmem:[%s1 + $0x598] sm:$0xff]
      %v972 = vld [vmem:[%s1 + $0x5a0] sm:$0xff]
      %v973 = vld [vmem:[%s1 + $0x5a8] sm:$0xff]
      %v974 = vld [vmem:[%s1 + $0x5b0] sm:$0xff]
      %v975 = vld [vmem:[%s1 + $0x5b8] sm:$0xff]
      %v976 = vld [vmem:[%s1 + $0x5c0] sm:$0xff]
      %v977 = vld [vmem:[%s1 + $0x5c8] sm:$0xff]
      %v978 = vld [vmem:[%s1 + $0x5d0] sm:$0xff]
      %v979 = vld [vmem:[%s1 + $0x5d8] sm:$0xff]
      %v980 = vld [vmem:[%s1 + $0x5e0] sm:$0xff]
      %v981 = vld [vmem:[%s1 + $0x5e8] sm:$0xff]
      %v982 = vld [vmem:[%s1 + $0x5f0] sm:$0xff]
      %v983 = vld [vmem:[%s1 + $0x5f8] sm:$0xff]
      %v984 = vld [vmem:[%s1 + $0x600] sm:$0xff]
      %v985 = vld [vmem:[%s1 + $0x608] sm:$0xff]
      %v986 = vld [vmem:[%s1 + $0x610] sm:$0xff]
      %v987 = vld [vmem:[%s1 + $0x618] sm:$0xff]
      %v988 = vld [vmem:[%s1 + $0x620] sm:$0xff]
      %v989 = vld [vmem:[%s1 + $0x628] sm:$0xff]
      %v990 = vld [vmem:[%s1 + $0x630] sm:$0xff]
      %v991 = vld [vmem:[%s1 + $0x638] sm:$0xff]
      %v992 = vld [vmem:[%s1 + $0x640] sm:$0xff]
      %v993 = vld [vmem:[%s1 + $0x648] sm:$0xff]
      %v994 = vld [vmem:[%s1 + $0x650] sm:$0xff]
      %v995 = vld [vmem:[%s1 + $0x658] sm:$0xff]
      %v996 = vld [vmem:[%s1 + $0x660] sm:$0xff]
      %v997 = vld [vmem:[%s1 + $0x668] sm:$0xff]
      %v998 = vld [vmem:[%s1 + $0x670] sm:$0xff]
      %v999 = vld [vmem:[%s1 + $0x678] sm:$0xff]
      %v1000 = vld [vmem:[%s1 + $0x680] sm:$0xff]
      %v1001 = vld [vmem:[%s1 + $0x688] sm:$0xff]
      %v1002 = vld [vmem:[%s1 + $0x690] sm:$0xff]
      %v1003 = vld [vmem:[%s1 + $0x698] sm:$0xff]
      %v1004 = vld [vmem:[%s1 + $0x6a0] sm:$0xff]
      %v1005 = vld [vmem:[%s1 + $0x6a8] sm:$0xff]
      %v1006 = vld [vmem:[%s1 + $0x6b0] sm:$0xff]
      %v1007 = vld [vmem:[%s1 + $0x6b8] sm:$0xff]
      %v1008 = vld [vmem:[%s1 + $0x6c0] sm:$0xff]
      %v1009 = vld [vmem:[%s1 + $0x6c8] sm:$0xff]
      %v1010 = vld [vmem:[%s1 + $0x6d0] sm:$0xff]
      %v1011 = vld [vmem:[%s1 + $0x6d8] sm:$0xff]
      %v1012 = vld [vmem:[%s1 + $0x6e0] sm:$0xff]
      %v1013 = vld [vmem:[%s1 + $0x6e8] sm:$0xff]
      %v1014 = vld [vmem:[%s1 + $0x6f0] sm:$0xff]
      %v1015 = vld [vmem:[%s1 + $0x6f8] sm:$0xff]
      %v1016 = vld [vmem:[%s1 + $0x700] sm:$0xff]
      %v1017 = vld [vmem:[%s1 + $0x708] sm:$0xff]
      %v1018 = vld [vmem:[%s1 + $0x710] sm:$0xff]
      %v1019 = vld [vmem:[%s1 + $0x718] sm:$0xff]
      %v1020 = vld [vmem:[%s1 + $0x720] sm:$0xff]
      %v1021 = vld [vmem:[%s1 + $0x728] sm:$0xff]
      %v1022 = vld [vmem:[%s1 + $0x730] sm:$0xff]
      %v1023 = vld [vmem:[%s1 + $0x738] sm:$0xff]
      %v1024 = vld [vmem:[%s1 + $0x740] sm:$0xff]
      %v1025 = vld [vmem:[%s1 + $0x748] sm:$0xff]
      %v1026 = vld [vmem:[%s1 + $0x750] sm:$0xff]
      %v1027 = vld [vmem:[%s1 + $0x758] sm:$0xff]
      %v1028 = vld [vmem:[%s1 + $0x760] sm:$0xff]
      %v1029 = vld [vmem:[%s1 + $0x768] sm:$0xff]
      %v1030 = vld [vmem:[%s1 + $0x770] sm:$0xff]
      %v1031 = vld [vmem:[%s1 + $0x778] sm:$0xff]
      %v1032 = vld [vmem:[%s1 + $0x780] sm:$0xff]
      %v1033 = vld [vmem:[%s1 + $0x788] sm:$0xff]
      %v1034 = vld [vmem:[%s1 + $0x790] sm:$0xff]
      %v1035 = vld [vmem:[%s1 + $0x798] sm:$0xff]
      %v1036 = vld [vmem:[%s1 + $0x7a0] sm:$0xff]
      %v1037 = vld [vmem:[%s1 + $0x7a8] sm:$0xff]
      %v1038 = vld [vmem:[%s1 + $0x7b0] sm:$0xff]
      %v1039 = vld [vmem:[%s1 + $0x7b8] sm:$0xff]
      %v1040 = vld [vmem:[%s1 + $0x7c0] sm:$0xff]
      %v1041 = vld [vmem:[%s1 + $0x7c8] sm:$0xff]
      %v1042 = vld [vmem:[%s1 + $0x7d0] sm:$0xff]
      %v1043 = vld [vmem:[%s1 + $0x7d8] sm:$0xff]
      %v1044 = vld [vmem:[%s1 + $0x7e0] sm:$0xff]
      %v1045 = vld [vmem:[%s1 + $0x7e8] sm:$0xff]
      %v1046 = vld [vmem:[%s1 + $0x7f0] sm:$0xff]
      %v1047 = vld [vmem:[%s1 + $0x7f8] sm:$0xff]
      %v1048 = vld [vmem:[%s1 + $0x800] sm:$0xff]
      %v1049 = vld [vmem:[%s1 + $0x808] sm:$0xff]
      %v1050 = vld [vmem:[%s1 + $0x810] sm:$0xff]
      %v1051 = vld [vmem:[%s1 + $0x818] sm:$0xff]
      %v1052 = vld [vmem:[%s1 + $0x820] sm:$0xff]
      %v1053 = vld [vmem:[%s1 + $0x828] sm:$0xff]
      %v1054 = vld [vmem:[%s1 + $0x830] sm:$0xff]
      %v1055 = vld [vmem:[%s1 + $0x838] sm:$0xff]
      %v1056 = vld [vmem:[%s1 + $0x840] sm:$0xff]
      %v1057 = vld [vmem:[%s1 + $0x848] sm:$0xff]
      %v1058 = vld [vmem:[%s1 + $0x850] sm:$0xff]
      %v1059 = vld [vmem:[%s1 + $0x858] sm:$0xff]
      %v1060 = vld [vmem:[%s1 + $0x860] sm:$0xff]
      %v1061 = vld [vmem:[%s1 + $0x868] sm:$0xff]
      %v1062 = vld [vmem:[%s1 + $0x870] sm:$0xff]
      %v1063 = vld [vmem:[%s1 + $0x878] sm:$0xff]
      %v1064 = vld [vmem:[%s1 + $0x880] sm:$0xff]
      %v1065 = vld [vmem:[%s1 + $0x888] sm:$0xff]
      %v1066 = vld [vmem:[%s1 + $0x890] sm:$0xff]
      %v1067 = vld [vmem:[%s1 + $0x898] sm:$0xff]
      %v1068 = vld [vmem:[%s1 + $0x8a0] sm:$0xff]
      %v1069 = vld [vmem:[%s1 + $0x8a8] sm:$0xff]
      %v1070 = vld [vmem:[%s1 + $0x8b0] sm:$0xff]
      %v1071 = vld [vmem:[%s1 + $0x8b8] sm:$0xff]
      %v1072 = vld [vmem:[%s1 + $0x8c0] sm:$0xff]
      %v1073 = vld [vmem:[%s1 + $0x8c8] sm:$0xff]
      %v1074 = vld [vmem:[%s1 + $0x8d0] sm:$0xff]
      %v1075 = vld [vmem:[%s1 + $0x8d8] sm:$0xff]
      %v1076 = vld [vmem:[%s1 + $0x8e0] sm:$0xff]
      %v1077 = vld [vmem:[%s1 + $0x8e8] sm:$0xff]
      %v1078 = vld [vmem:[%s1 + $0x8f0] sm:$0xff]
      %v1079 = vld [vmem:[%s1 + $0x8f8] sm:$0xff]
      %v1080 = vld [vmem:[%s1 + $0x900] sm:$0xff]
      %v1081 = vld [vmem:[%s1 + $0x908] sm:$0xff]
      %v1082 = vld [vmem:[%s1 + $0x910] sm:$0xff]
      %v1083 = vld [vmem:[%s1 + $0x918] sm:$0xff]
      %v1084 = vld [vmem:[%s1 + $0x920] sm:$0xff]
      %v1085 = vld [vmem:[%s1 + $0x928] sm:$0xff]
      %v1086 = vld [vmem:[%s1 + $0x930] sm:$0xff]
      %v1087 = vld [vmem:[%s1 + $0x938] sm:$0xff]
      %v1088 = vld [vmem:[%s1 + $0x940] sm:$0xff]
      %v1089 = vld [vmem:[%s1 + $0x948] sm:$0xff]
      %v1090 = vld [vmem:[%s1 + $0x950] sm:$0xff]
      %v1091 = vld [vmem:[%s1 + $0x958] sm:$0xff]
      %v1092 = vld [vmem:[%s1 + $0x960] sm:$0xff]
      %v1093 = vld [vmem:[%s1 + $0x968] sm:$0xff]
      %v1094 = vld [vmem:[%s1 + $0x970] sm:$0xff]
      %v1095 = vld [vmem:[%s1 + $0x978] sm:$0xff]
      %v1096 = vld [vmem:[%s1 + $0x980] sm:$0xff]
      %v1097 = vld [vmem:[%s1 + $0x988] sm:$0xff]
      %v1098 = vld [vmem:[%s1 + $0x990] sm:$0xff]
      %v1099 = vld [vmem:[%s1 + $0x998] sm:$0xff]
      %v1100 = vld [vmem:[%s1 + $0x9a0] sm:$0xff]
      %v1101 = vld [vmem:[%s1 + $0x9a8] sm:$0xff]
      %v1102 = vld [vmem:[%s1 + $0x9b0] sm:$0xff]
      %v1103 = vld [vmem:[%s1 + $0x9b8] sm:$0xff]
      %v1104 = vld [vmem:[%s1 + $0x9c0] sm:$0xff]
      %v1105 = vld [vmem:[%s1 + $0x9c8] sm:$0xff]
      %v1106 = vld [vmem:[%s1 + $0x9d0] sm:$0xff]
      %v1107 = vld [vmem:[%s1 + $0x9d8] sm:$0xff]
      %v1108 = vld [vmem:[%s1 + $0x9e0] sm:$0xff]
      %v1109 = vld [vmem:[%s1 + $0x9e8] sm:$0xff]
      %v1110 = vld [vmem:[%s1 + $0x9f0] sm:$0xff]
      %v1111 = vld [vmem:[%s1 + $0x9f8] sm:$0xff]
      %v1112 = vld [vmem:[%s1 + $0xa00] sm:$0xff]
      %v1113 = vld [vmem:[%s1 + $0xa08] sm:$0xff]
      %v1114 = vld [vmem:[%s1 + $0xa10] sm:$0xff]
      %v1115 = vld [vmem:[%s1 + $0xa18] sm:$0xff]
      %v1116 = vld [vmem:[%s1 + $0xa20] sm:$0xff]
      %v1117 = vld [vmem:[%s1 + $0xa28] sm:$0xff]
      %v1118 = vld [vmem:[%s1 + $0xa30] sm:$0xff]
      %v1119 = vld [vmem:[%s1 + $0xa38] sm:$0xff]
      %v1120 = vld [vmem:[%s1 + $0xa40] sm:$0xff]
      %v1121 = vld [vmem:[%s1 + $0xa48] sm:$0xff]
      %v1122 = vld [vmem:[%s1 + $0xa50] sm:$0xff]
      %v1123 = vld [vmem:[%s1 + $0xa58] sm:$0xff]
      %v1124 = vld [vmem:[%s1 + $0xa60] sm:$0xff]
      %v1125 = vld [vmem:[%s1 + $0xa68] sm:$0xff]
      %v1126 = vld [vmem:[%s1 + $0xa70] sm:$0xff]
      %v1127 = vld [vmem:[%s1 + $0xa78] sm:$0xff]
      %v1128 = vld [vmem:[%s1 + $0xa80] sm:$0xff]
      %v1129 = vld [vmem:[%s1 + $0xa88] sm:$0xff]
      %v1130 = vld [vmem:[%s1 + $0xa90] sm:$0xff]
      %v1131 = vld [vmem:[%s1 + $0xa98] sm:$0xff]
      %v1132 = vld [vmem:[%s1 + $0xaa0] sm:$0xff]
      %v1133 = vld [vmem:[%s1 + $0xaa8] sm:$0xff]
      %v1134 = vld [vmem:[%s1 + $0xab0] sm:$0xff]
      %v1135 = vld [vmem:[%s1 + $0xab8] sm:$0xff]
      %v1136 = vld [vmem:[%s1 + $0xac0] sm:$0xff]
      %v1137 = vld [vmem:[%s1 + $0xac8] sm:$0xff]
      %v1138 = vld [vmem:[%s1 + $0xad0] sm:$0xff]
      %v1139 = vld [vmem:[%s1 + $0xad8] sm:$0xff]
      %v1140 = vld [vmem:[%s1 + $0xae0] sm:$0xff]
      %v1141 = vld [vmem:[%s1 + $0xae8] sm:$0xff]
      %v1142 = vld [vmem:[%s1 + $0xaf0] sm:$0xff]
      %v1143 = vld [vmem:[%s1 + $0xaf8] sm:$0xff]
      %v1144 = vld [vmem:[%s1 + $0xb00] sm:$0xff]
      %v1145 = vld [vmem:[%s1 + $0xb08] sm:$0xff]
      %v1146 = vld [vmem:[%s1 + $0xb10] sm:$0xff]
      %v1147 = vld [vmem:[%s1 + $0xb18] sm:$0xff]
      %v1148 = vld [vmem:[%s1 + $0xb20] sm:$0xff]
      %v1149 = vld [vmem:[%s1 + $0xb28] sm:$0xff]
      %v1150 = vld [vmem:[%s1 + $0xb30] sm:$0xff]
      %v1151 = vld [vmem:[%s1 + $0xb38] sm:$0xff]
      %v1152 = vld [vmem:[%s1 + $0xb40] sm:$0xff]
      %v1153 = vld [vmem:[%s1 + $0xb48] sm:$0xff]
      %v1154 = vld [vmem:[%s1 + $0xb50] sm:$0xff]
      %v1155 = vld [vmem:[%s1 + $0xb58] sm:$0xff]
      %v1156 = vld [vmem:[%s1 + $0xb60] sm:$0xff]
      %v1157 = vld [vmem:[%s1 + $0xb68] sm:$0xff]
      %v1158 = vld [vmem:[%s1 + $0xb70] sm:$0xff]
      %v1159 = vld [vmem:[%s1 + $0xb78] sm:$0xff]
      %v1160 = vld [vmem:[%s1 + $0xb80] sm:$0xff]
      %v1161 = vld [vmem:[%s1 + $0xb88] sm:$0xff]
      %v1162 = vld [vmem:[%s1 + $0xb90] sm:$0xff]
      %v1163 = vld [vmem:[%s1 + $0xb98] sm:$0xff]
      %v1164 = vld [vmem:[%s1 + $0xba0] sm:$0xff]
      %v1165 = vld [vmem:[%s1 + $0xba8] sm:$0xff]
      %v1166 = vld [vmem:[%s1 + $0xbb0] sm:$0xff]
      %v1167 = vld [vmem:[%s1 + $0xbb8] sm:$0xff]
      %v1168 = vld [vmem:[%s1 + $0xbc0] sm:$0xff]
      %v1169 = vld [vmem:[%s1 + $0xbc8] sm:$0xff]
      %v1170 = vld [vmem:[%s1 + $0xbd0] sm:$0xff]
      %v1171 = vld [vmem:[%s1 + $0xbd8] sm:$0xff]
      %v1172 = vld [vmem:[%s1 + $0xbe0] sm:$0xff]
      %v1173 = vld [vmem:[%s1 + $0xbe8] sm:$0xff]
      %v1174 = vld [vmem:[%s1 + $0xbf0] sm:$0xff]
      %v1175 = vld [vmem:[%s1 + $0xbf8] sm:$0xff]
      %v1176 = vld [vmem:[%s1 + $0xc00] sm:$0xff]
      %v1177 = vld [vmem:[%s1 + $0xc08] sm:$0xff]
      %v1178 = vld [vmem:[%s1 + $0xc10] sm:$0xff]
      %v1179 = vld [vmem:[%s1 + $0xc18] sm:$0xff]
      %v1180 = vld [vmem:[%s1 + $0xc20] sm:$0xff]
      %v1181 = vld [vmem:[%s1 + $0xc28] sm:$0xff]
      %v1182 = vld [vmem:[%s1 + $0xc30] sm:$0xff]
      %v1183 = vld [vmem:[%s1 + $0xc38] sm:$0xff]
      %v1184 = vld [vmem:[%s1 + $0xc40] sm:$0xff]
      %v1185 = vld [vmem:[%s1 + $0xc48] sm:$0xff]
      %v1186 = vld [vmem:[%s1 + $0xc50] sm:$0xff]
      %v1187 = vld [vmem:[%s1 + $0xc58] sm:$0xff]
      %v1188 = vld [vmem:[%s1 + $0xc60] sm:$0xff]
      %v1189 = vld [vmem:[%s1 + $0xc68] sm:$0xff]
      %v1190 = vld [vmem:[%s1 + $0xc70] sm:$0xff]
      %v1191 = vld [vmem:[%s1 + $0xc78] sm:$0xff]
      %v1192 = vld [vmem:[%s1 + $0xc80] sm:$0xff]
      %v1193 = vld [vmem:[%s1 + $0xc88] sm:$0xff]
      %v1194 = vld [vmem:[%s1 + $0xc90] sm:$0xff]
      %v1195 = vld [vmem:[%s1 + $0xc98] sm:$0xff]
      %v1196 = vld [vmem:[%s1 + $0xca0] sm:$0xff]
      %v1197 = vld [vmem:[%s1 + $0xca8] sm:$0xff]
      %v1198 = vld [vmem:[%s1 + $0xcb0] sm:$0xff]
      %v1199 = vld [vmem:[%s1 + $0xcb8] sm:$0xff]
      %v1200 = vld [vmem:[%s1 + $0xcc0] sm:$0xff]
      %v1201 = vld [vmem:[%s1 + $0xcc8] sm:$0xff]
      %v1202 = vld [vmem:[%s1 + $0xcd0] sm:$0xff]
      %v1203 = vld [vmem:[%s1 + $0xcd8] sm:$0xff]
      %v1204 = vld [vmem:[%s1 + $0xce0] sm:$0xff]
      %v1205 = vld [vmem:[%s1 + $0xce8] sm:$0xff]
      %v1206 = vld [vmem:[%s1 + $0xcf0] sm:$0xff]
      %v1207 = vld [vmem:[%s1 + $0xcf8] sm:$0xff]
      %v1208 = vld [vmem:[%s1 + $0xd00] sm:$0xff]
      %v1209 = vld [vmem:[%s1 + $0xd08] sm:$0xff]
      %v1210 = vld [vmem:[%s1 + $0xd10] sm:$0xff]
      %v1211 = vld [vmem:[%s1 + $0xd18] sm:$0xff]
      %v1212 = vld [vmem:[%s1 + $0xd20] sm:$0xff]
      %v1213 = vld [vmem:[%s1 + $0xd28] sm:$0xff]
      %v1214 = vld [vmem:[%s1 + $0xd30] sm:$0xff]
      %v1215 = vld [vmem:[%s1 + $0xd38] sm:$0xff]
      %v1216 = vld [vmem:[%s1 + $0xd40] sm:$0xff]
      %v1217 = vld [vmem:[%s1 + $0xd48] sm:$0xff]
      %v1218 = vld [vmem:[%s1 + $0xd50] sm:$0xff]
      %v1219 = vld [vmem:[%s1 + $0xd58] sm:$0xff]
      %v1220 = vld [vmem:[%s1 + $0xd60] sm:$0xff]
      %v1221 = vld [vmem:[%s1 + $0xd68] sm:$0xff]
      %v1222 = vld [vmem:[%s1 + $0xd70] sm:$0xff]
      %v1223 = vld [vmem:[%s1 + $0xd78] sm:$0xff]
      %v1224 = vld [vmem:[%s1 + $0xd80] sm:$0xff]
      %v1225 = vld [vmem:[%s1 + $0xd88] sm:$0xff]
      %v1226 = vld [vmem:[%s1 + $0xd90] sm:$0xff]
      %v1227 = vld [vmem:[%s1 + $0xd98] sm:$0xff]
      %v1228 = vld [vmem:[%s1 + $0xda0] sm:$0xff]
      %v1229 = vld [vmem:[%s1 + $0xda8] sm:$0xff]
      %v1230 = vld [vmem:[%s1 + $0xdb0] sm:$0xff]
      %v1231 = vld [vmem:[%s1 + $0xdb8] sm:$0xff]
      %v1232 = vld [vmem:[%s1 + $0xdc0] sm:$0xff]
      %v1233 = vld [vmem:[%s1 + $0xdc8] sm:$0xff]
      %v1234 = vld [vmem:[%s1 + $0xdd0] sm:$0xff]
      %v1235 = vld [vmem:[%s1 + $0xdd8] sm:$0xff]
      %v1236 = vld [vmem:[%s1 + $0xde0] sm:$0xff]
      %v1237 = vld [vmem:[%s1 + $0xde8] sm:$0xff]
      %v1238 = vld [vmem:[%s1 + $0xdf0] sm:$0xff]
      %v1239 = vld [vmem:[%s1 + $0xdf8] sm:$0xff]
      %v1240 = vld [vmem:[%s1 + $0xe00] sm:$0xff]
      %v1241 = vld [vmem:[%s1 + $0xe08] sm:$0xff]
      %v1242 = vld [vmem:[%s1 + $0xe10] sm:$0xff]
      %v1243 = vld [vmem:[%s1 + $0xe18] sm:$0xff]
      %v1244 = vld [vmem:[%s1 + $0xe20] sm:$0xff]
      %v1245 = vld [vmem:[%s1 + $0xe28] sm:$0xff]
      %v1246 = vld [vmem:[%s1 + $0xe30] sm:$0xff]
      %v1247 = vld [vmem:[%s1 + $0xe38] sm:$0xff]
      %v1248 = vld [vmem:[%s1 + $0xe40] sm:$0xff]
      %v1249 = vld [vmem:[%s1 + $0xe48] sm:$0xff]
      %v1250 = vld [vmem:[%s1 + $0xe50] sm:$0xff]
      %v1251 = vld [vmem:[%s1 + $0xe58] sm:$0xff]
      %v1252 = vld [vmem:[%s1 + $0xe60] sm:$0xff]
      %v1253 = vld [vmem:[%s1 + $0xe68] sm:$0xff]
      %v1254 = vld [vmem:[%s1 + $0xe70] sm:$0xff]
      %v1255 = vld [vmem:[%s1 + $0xe78] sm:$0xff]
      %v1256 = vld [vmem:[%s1 + $0xe80] sm:$0xff]
      %v1257 = vld [vmem:[%s1 + $0xe88] sm:$0xff]
      %v1258 = vld [vmem:[%s1 + $0xe90] sm:$0xff]
      %v1259 = vld [vmem:[%s1 + $0xe98] sm:$0xff]
      %v1260 = vld [vmem:[%s1 + $0xea0] sm:$0xff]
      %v1261 = vld [vmem:[%s1 + $0xea8] sm:$0xff]
      %v1262 = vld [vmem:[%s1 + $0xeb0] sm:$0xff]
      %v1263 = vld [vmem:[%s1 + $0xeb8] sm:$0xff]
      %v1264 = vld [vmem:[%s1 + $0xec0] sm:$0xff]
      %v1265 = vld [vmem:[%s1 + $0xec8] sm:$0xff]
      %v1266 = vld [vmem:[%s1 + $0xed0] sm:$0xff]
      %v1267 = vld [vmem:[%s1 + $0xed8] sm:$0xff]
      %v1268 = vld [vmem:[%s1 + $0xee0] sm:$0xff]
      %v1269 = vld [vmem:[%s1 + $0xee8] sm:$0xff]
      %v1270 = vld [vmem:[%s1 + $0xef0] sm:$0xff]
      %v1271 = vld [vmem:[%s1 + $0xef8] sm:$0xff]
      %v1272 = vld [vmem:[%s1 + $0xf00] sm:$0xff]
      %v1273 = vld [vmem:[%s1 + $0xf08] sm:$0xff]
      %v1274 = vld [vmem:[%s1 + $0xf10] sm:$0xff]
      %v1275 = vld [vmem:[%s1 + $0xf18] sm:$0xff]
      %v1276 = vld [vmem:[%s1 + $0xf20] sm:$0xff]
      %v1277 = vld [vmem:[%s1 + $0xf28] sm:$0xff]
      %v1278 = vld [vmem:[%s1 + $0xf30] sm:$0xff]
      %v1279 = vld [vmem:[%s1 + $0xf38] sm:$0xff]
      %v1280 = vld [vmem:[%s1 + $0xf40] sm:$0xff]
      %v1281 = vld [vmem:[%s1 + $0xf48] sm:$0xff]
      %v1282 = vld [vmem:[%s1 + $0xf50] sm:$0xff]
      %v1283 = vld [vmem:[%s1 + $0xf58] sm:$0xff]
      %v1284 = vld [vmem:[%s1 + $0xf60] sm:$0xff]
      %v1285 = vld [vmem:[%s1 + $0xf68] sm:$0xff]
      %v1286 = vld [vmem:[%s1 + $0xf70] sm:$0xff]
      %v1287 = vld [vmem:[%s1 + $0xf78] sm:$0xff]
      %v1288 = vld [vmem:[%s1 + $0xf80] sm:$0xff]
      %v1289 = vld [vmem:[%s1 + $0xf88] sm:$0xff]
      %v1290 = vld [vmem:[%s1 + $0xf90] sm:$0xff]
      %v1291 = vld [vmem:[%s1 + $0xf98] sm:$0xff]
      %v1292 = vld [vmem:[%s1 + $0xfa0] sm:$0xff]
      %v1293 = vld [vmem:[%s1 + $0xfa8] sm:$0xff]
      %v1294 = vld [vmem:[%s1 + $0xfb0] sm:$0xff]
      %v1295 = vld [vmem:[%s1 + $0xfb8] sm:$0xff]
      %v1296 = vld [vmem:[%s1 + $0xfc0] sm:$0xff]
      %v1297 = vld [vmem:[%s1 + $0xfc8] sm:$0xff]
      %v1298 = vld [vmem:[%s1 + $0xfd0] sm:$0xff]
      %v1299 = vld [vmem:[%s1 + $0xfd8] sm:$0xff]
      %v1300 = vld [vmem:[%s1 + $0xfe0] sm:$0xff]
      %v1301 = vld [vmem:[%s1 + $0xfe8] sm:$0xff]
      %v1302 = vld [vmem:[%s1 + $0xff0] sm:$0xff]
      %v1303 = vld [vmem:[%s1 + $0xff8] sm:$0xff]
      %v1304 = vld [vmem:[%s2] sm:$0xf]
      %v1306 = vlaneseq
      %v1307 = vshrl.u32 %v1306, 7
      %v1308 = vsub.s32 0, %v1307
      %v1309 = vrot.slane %v1304, %v1308
      %v1310 = vlaneseq
      %v1311 = vshrl.u32 %v1310, 7
      %v1312 = vsub.s32 1, %v1311
      %v1313 = vrot.slane %v1304, %v1312
      %v1314 = vlaneseq
      %v1315 = vshrl.u32 %v1314, 7
      %v1316 = vsub.s32 2, %v1315
      %v1317 = vrot.slane %v1304, %v1316
      %v1318 = vlaneseq
      %v1319 = vshrl.u32 %v1318, 7
      %v1320 = vsub.s32 3, %v1319
      %v1321 = vrot.slane %v1304, %v1320
      %v1838 = vunpack.c.l.b16 %v280
      %v1839 = vunpack.c.h.b16 %v280
      %v1840 = vunpack.c.l.b16 %v281
      %v1841 = vunpack.c.h.b16 %v281
      %v1842 = vunpack.c.l.b16 %v282
      %v1843 = vunpack.c.h.b16 %v282
      %v1844 = vunpack.c.l.b16 %v283
      %v1845 = vunpack.c.h.b16 %v283
      %v1846 = vunpack.c.l.b16 %v284
      %v1847 = vunpack.c.h.b16 %v284
      %v1848 = vunpack.c.l.b16 %v285
      %v1849 = vunpack.c.h.b16 %v285
      %v1850 = vunpack.c.l.b16 %v286
      %v1851 = vunpack.c.h.b16 %v286
      %v1852 = vunpack.c.l.b16 %v287
      %v1853 = vunpack.c.h.b16 %v287
      %v1854 = vunpack.c.l.b16 %v288
      %v1855 = vunpack.c.h.b16 %v288
      %v1856 = vunpack.c.l.b16 %v289
      %v1857 = vunpack.c.h.b16 %v289
      %v1858 = vunpack.c.l.b16 %v290
      %v1859 = vunpack.c.h.b16 %v290
      %v1860 = vunpack.c.l.b16 %v291
      %v1861 = vunpack.c.h.b16 %v291
      %v1862 = vunpack.c.l.b16 %v292
      %v1863 = vunpack.c.h.b16 %v292
      %v1864 = vunpack.c.l.b16 %v293
      %v1865 = vunpack.c.h.b16 %v293
      %v1866 = vunpack.c.l.b16 %v294
      %v1867 = vunpack.c.h.b16 %v294
      %v1868 = vunpack.c.l.b16 %v295
      %v1869 = vunpack.c.h.b16 %v295
      %v1870 = vunpack.c.l.b16 %v296
      %v1871 = vunpack.c.h.b16 %v296
      %v1872 = vunpack.c.l.b16 %v297
      %v1873 = vunpack.c.h.b16 %v297
      %v1874 = vunpack.c.l.b16 %v298
      %v1875 = vunpack.c.h.b16 %v298
      %v1876 = vunpack.c.l.b16 %v299
      %v1877 = vunpack.c.h.b16 %v299
      %v1878 = vunpack.c.l.b16 %v300
      %v1879 = vunpack.c.h.b16 %v300
      %v1880 = vunpack.c.l.b16 %v301
      %v1881 = vunpack.c.h.b16 %v301
      %v1882 = vunpack.c.l.b16 %v302
      %v1883 = vunpack.c.h.b16 %v302
      %v1884 = vunpack.c.l.b16 %v303
      %v1885 = vunpack.c.h.b16 %v303
      %v1886 = vunpack.c.l.b16 %v304
      %v1887 = vunpack.c.h.b16 %v304
      %v1888 = vunpack.c.l.b16 %v305
      %v1889 = vunpack.c.h.b16 %v305
      %v1890 = vunpack.c.l.b16 %v306
      %v1891 = vunpack.c.h.b16 %v306
      %v1892 = vunpack.c.l.b16 %v307
      %v1893 = vunpack.c.h.b16 %v307
      %v1894 = vunpack.c.l.b16 %v308
      %v1895 = vunpack.c.h.b16 %v308
      %v1896 = vunpack.c.l.b16 %v309
      %v1897 = vunpack.c.h.b16 %v309
      %v1898 = vunpack.c.l.b16 %v310
      %v1899 = vunpack.c.h.b16 %v310
      %v1900 = vunpack.c.l.b16 %v311
      %v1901 = vunpack.c.h.b16 %v311
      %v1902 = vunpack.c.l.b16 %v312
      %v1903 = vunpack.c.h.b16 %v312
      %v1904 = vunpack.c.l.b16 %v313
      %v1905 = vunpack.c.h.b16 %v313
      %v1906 = vunpack.c.l.b16 %v314
      %v1907 = vunpack.c.h.b16 %v314
      %v1908 = vunpack.c.l.b16 %v315
      %v1909 = vunpack.c.h.b16 %v315
      %v1910 = vunpack.c.l.b16 %v316
      %v1911 = vunpack.c.h.b16 %v316
      %v1912 = vunpack.c.l.b16 %v317
      %v1913 = vunpack.c.h.b16 %v317
      %v1914 = vunpack.c.l.b16 %v318
      %v1915 = vunpack.c.h.b16 %v318
      %v1916 = vunpack.c.l.b16 %v319
      %v1917 = vunpack.c.h.b16 %v319
      %v1918 = vunpack.c.l.b16 %v320
      %v1919 = vunpack.c.h.b16 %v320
      %v1920 = vunpack.c.l.b16 %v321
      %v1921 = vunpack.c.h.b16 %v321
      %v1922 = vunpack.c.l.b16 %v322
      %v1923 = vunpack.c.h.b16 %v322
      %v1924 = vunpack.c.l.b16 %v323
      %v1925 = vunpack.c.h.b16 %v323
      %v1926 = vunpack.c.l.b16 %v324
      %v1927 = vunpack.c.h.b16 %v324
      %v1928 = vunpack.c.l.b16 %v325
      %v1929 = vunpack.c.h.b16 %v325
      %v1930 = vunpack.c.l.b16 %v326
      %v1931 = vunpack.c.h.b16 %v326
      %v1932 = vunpack.c.l.b16 %v327
      %v1933 = vunpack.c.h.b16 %v327
      %v1934 = vunpack.c.l.b16 %v328
      %v1935 = vunpack.c.h.b16 %v328
      %v1936 = vunpack.c.l.b16 %v329
      %v1937 = vunpack.c.h.b16 %v329
      %v1938 = vunpack.c.l.b16 %v330
      %v1939 = vunpack.c.h.b16 %v330
      %v1940 = vunpack.c.l.b16 %v331
      %v1941 = vunpack.c.h.b16 %v331
      %v1942 = vunpack.c.l.b16 %v332
      %v1943 = vunpack.c.h.b16 %v332
      %v1944 = vunpack.c.l.b16 %v333
      %v1945 = vunpack.c.h.b16 %v333
      %v1946 = vunpack.c.l.b16 %v334
      %v1947 = vunpack.c.h.b16 %v334
      %v1948 = vunpack.c.l.b16 %v335
      %v1949 = vunpack.c.h.b16 %v335
      %v1950 = vunpack.c.l.b16 %v336
      %v1951 = vunpack.c.h.b16 %v336
      %v1952 = vunpack.c.l.b16 %v337
      %v1953 = vunpack.c.h.b16 %v337
      %v1954 = vunpack.c.l.b16 %v338
      %v1955 = vunpack.c.h.b16 %v338
      %v1956 = vunpack.c.l.b16 %v339
      %v1957 = vunpack.c.h.b16 %v339
      %v1958 = vunpack.c.l.b16 %v340
      %v1959 = vunpack.c.h.b16 %v340
      %v1960 = vunpack.c.l.b16 %v341
      %v1961 = vunpack.c.h.b16 %v341
      %v1962 = vunpack.c.l.b16 %v342
      %v1963 = vunpack.c.h.b16 %v342
      %v1964 = vunpack.c.l.b16 %v343
      %v1965 = vunpack.c.h.b16 %v343
      %v1966 = vunpack.c.l.b16 %v344
      %v1967 = vunpack.c.h.b16 %v344
      %v1968 = vunpack.c.l.b16 %v345
      %v1969 = vunpack.c.h.b16 %v345
      %v1970 = vunpack.c.l.b16 %v346
      %v1971 = vunpack.c.h.b16 %v346
      %v1972 = vunpack.c.l.b16 %v347
      %v1973 = vunpack.c.h.b16 %v347
      %v1974 = vunpack.c.l.b16 %v348
      %v1975 = vunpack.c.h.b16 %v348
      %v1976 = vunpack.c.l.b16 %v349
      %v1977 = vunpack.c.h.b16 %v349
      %v1978 = vunpack.c.l.b16 %v350
      %v1979 = vunpack.c.h.b16 %v350
      %v1980 = vunpack.c.l.b16 %v351
      %v1981 = vunpack.c.h.b16 %v351
      %v1982 = vunpack.c.l.b16 %v352
      %v1983 = vunpack.c.h.b16 %v352
      %v1984 = vunpack.c.l.b16 %v353
      %v1985 = vunpack.c.h.b16 %v353
      %v1986 = vunpack.c.l.b16 %v354
      %v1987 = vunpack.c.h.b16 %v354
      %v1988 = vunpack.c.l.b16 %v355
      %v1989 = vunpack.c.h.b16 %v355
      %v1990 = vunpack.c.l.b16 %v356
      %v1991 = vunpack.c.h.b16 %v356
      %v1992 = vunpack.c.l.b16 %v357
      %v1993 = vunpack.c.h.b16 %v357
      %v1994 = vunpack.c.l.b16 %v358
      %v1995 = vunpack.c.h.b16 %v358
      %v1996 = vunpack.c.l.b16 %v359
      %v1997 = vunpack.c.h.b16 %v359
      %v1998 = vunpack.c.l.b16 %v360
      %v1999 = vunpack.c.h.b16 %v360
      %v2000 = vunpack.c.l.b16 %v361
      %v2001 = vunpack.c.h.b16 %v361
      %v2002 = vunpack.c.l.b16 %v362
      %v2003 = vunpack.c.h.b16 %v362
      %v2004 = vunpack.c.l.b16 %v363
      %v2005 = vunpack.c.h.b16 %v363
      %v2006 = vunpack.c.l.b16 %v364
      %v2007 = vunpack.c.h.b16 %v364
      %v2008 = vunpack.c.l.b16 %v365
      %v2009 = vunpack.c.h.b16 %v365
      %v2010 = vunpack.c.l.b16 %v366
      %v2011 = vunpack.c.h.b16 %v366
      %v2012 = vunpack.c.l.b16 %v367
      %v2013 = vunpack.c.h.b16 %v367
      %v2014 = vunpack.c.l.b16 %v368
      %v2015 = vunpack.c.h.b16 %v368
      %v2016 = vunpack.c.l.b16 %v369
      %v2017 = vunpack.c.h.b16 %v369
      %v2018 = vunpack.c.l.b16 %v370
      %v2019 = vunpack.c.h.b16 %v370
      %v2020 = vunpack.c.l.b16 %v371
      %v2021 = vunpack.c.h.b16 %v371
      %v2022 = vunpack.c.l.b16 %v372
      %v2023 = vunpack.c.h.b16 %v372
      %v2024 = vunpack.c.l.b16 %v373
      %v2025 = vunpack.c.h.b16 %v373
      %v2026 = vunpack.c.l.b16 %v374
      %v2027 = vunpack.c.h.b16 %v374
      %v2028 = vunpack.c.l.b16 %v375
      %v2029 = vunpack.c.h.b16 %v375
      %v2030 = vunpack.c.l.b16 %v376
      %v2031 = vunpack.c.h.b16 %v376
      %v2032 = vunpack.c.l.b16 %v377
      %v2033 = vunpack.c.h.b16 %v377
      %v2034 = vunpack.c.l.b16 %v378
      %v2035 = vunpack.c.h.b16 %v378
      %v2036 = vunpack.c.l.b16 %v379
      %v2037 = vunpack.c.h.b16 %v379
      %v2038 = vunpack.c.l.b16 %v380
      %v2039 = vunpack.c.h.b16 %v380
      %v2040 = vunpack.c.l.b16 %v381
      %v2041 = vunpack.c.h.b16 %v381
      %v2042 = vunpack.c.l.b16 %v382
      %v2043 = vunpack.c.h.b16 %v382
      %v2044 = vunpack.c.l.b16 %v383
      %v2045 = vunpack.c.h.b16 %v383
      %v2046 = vunpack.c.l.b16 %v384
      %v2047 = vunpack.c.h.b16 %v384
      %v2048 = vunpack.c.l.b16 %v385
      %v2049 = vunpack.c.h.b16 %v385
      %v2050 = vunpack.c.l.b16 %v386
      %v2051 = vunpack.c.h.b16 %v386
      %v2052 = vunpack.c.l.b16 %v387
      %v2053 = vunpack.c.h.b16 %v387
      %v2054 = vunpack.c.l.b16 %v388
      %v2055 = vunpack.c.h.b16 %v388
      %v2056 = vunpack.c.l.b16 %v389
      %v2057 = vunpack.c.h.b16 %v389
      %v2058 = vunpack.c.l.b16 %v390
      %v2059 = vunpack.c.h.b16 %v390
      %v2060 = vunpack.c.l.b16 %v391
      %v2061 = vunpack.c.h.b16 %v391
      %v2062 = vunpack.c.l.b16 %v392
      %v2063 = vunpack.c.h.b16 %v392
      %v2064 = vunpack.c.l.b16 %v393
      %v2065 = vunpack.c.h.b16 %v393
      %v2066 = vunpack.c.l.b16 %v394
      %v2067 = vunpack.c.h.b16 %v394
      %v2068 = vunpack.c.l.b16 %v395
      %v2069 = vunpack.c.h.b16 %v395
      %v2070 = vunpack.c.l.b16 %v396
      %v2071 = vunpack.c.h.b16 %v396
      %v2072 = vunpack.c.l.b16 %v397
      %v2073 = vunpack.c.h.b16 %v397
      %v2074 = vunpack.c.l.b16 %v398
      %v2075 = vunpack.c.h.b16 %v398
      %v2076 = vunpack.c.l.b16 %v399
      %v2077 = vunpack.c.h.b16 %v399
      %v2078 = vunpack.c.l.b16 %v400
      %v2079 = vunpack.c.h.b16 %v400
      %v2080 = vunpack.c.l.b16 %v401
      %v2081 = vunpack.c.h.b16 %v401
      %v2082 = vunpack.c.l.b16 %v402
      %v2083 = vunpack.c.h.b16 %v402
      %v2084 = vunpack.c.l.b16 %v403
      %v2085 = vunpack.c.h.b16 %v403
      %v2086 = vunpack.c.l.b16 %v404
      %v2087 = vunpack.c.h.b16 %v404
      %v2088 = vunpack.c.l.b16 %v405
      %v2089 = vunpack.c.h.b16 %v405
      %v2090 = vunpack.c.l.b16 %v406
      %v2091 = vunpack.c.h.b16 %v406
      %v2092 = vunpack.c.l.b16 %v407
      %v2093 = vunpack.c.h.b16 %v407
      %v2094 = vunpack.c.l.b16 %v408
      %v2095 = vunpack.c.h.b16 %v408
      %v2096 = vunpack.c.l.b16 %v409
      %v2097 = vunpack.c.h.b16 %v409
      %v2098 = vunpack.c.l.b16 %v410
      %v2099 = vunpack.c.h.b16 %v410
      %v2100 = vunpack.c.l.b16 %v411
      %v2101 = vunpack.c.h.b16 %v411
      %v2102 = vunpack.c.l.b16 %v412
      %v2103 = vunpack.c.h.b16 %v412
      %v2104 = vunpack.c.l.b16 %v413
      %v2105 = vunpack.c.h.b16 %v413
      %v2106 = vunpack.c.l.b16 %v414
      %v2107 = vunpack.c.h.b16 %v414
      %v2108 = vunpack.c.l.b16 %v415
      %v2109 = vunpack.c.h.b16 %v415
      %v2110 = vunpack.c.l.b16 %v416
      %v2111 = vunpack.c.h.b16 %v416
      %v2112 = vunpack.c.l.b16 %v417
      %v2113 = vunpack.c.h.b16 %v417
      %v2114 = vunpack.c.l.b16 %v418
      %v2115 = vunpack.c.h.b16 %v418
      %v2116 = vunpack.c.l.b16 %v419
      %v2117 = vunpack.c.h.b16 %v419
      %v2118 = vunpack.c.l.b16 %v420
      %v2119 = vunpack.c.h.b16 %v420
      %v2120 = vunpack.c.l.b16 %v421
      %v2121 = vunpack.c.h.b16 %v421
      %v2122 = vunpack.c.l.b16 %v422
      %v2123 = vunpack.c.h.b16 %v422
      %v2124 = vunpack.c.l.b16 %v423
      %v2125 = vunpack.c.h.b16 %v423
      %v2126 = vunpack.c.l.b16 %v424
      %v2127 = vunpack.c.h.b16 %v424
      %v2128 = vunpack.c.l.b16 %v425
      %v2129 = vunpack.c.h.b16 %v425
      %v2130 = vunpack.c.l.b16 %v426
      %v2131 = vunpack.c.h.b16 %v426
      %v2132 = vunpack.c.l.b16 %v427
      %v2133 = vunpack.c.h.b16 %v427
      %v2134 = vunpack.c.l.b16 %v428
      %v2135 = vunpack.c.h.b16 %v428
      %v2136 = vunpack.c.l.b16 %v429
      %v2137 = vunpack.c.h.b16 %v429
      %v2138 = vunpack.c.l.b16 %v430
      %v2139 = vunpack.c.h.b16 %v430
      %v2140 = vunpack.c.l.b16 %v431
      %v2141 = vunpack.c.h.b16 %v431
      %v2142 = vunpack.c.l.b16 %v432
      %v2143 = vunpack.c.h.b16 %v432
      %v2144 = vunpack.c.l.b16 %v433
      %v2145 = vunpack.c.h.b16 %v433
      %v2146 = vunpack.c.l.b16 %v434
      %v2147 = vunpack.c.h.b16 %v434
      %v2148 = vunpack.c.l.b16 %v435
      %v2149 = vunpack.c.h.b16 %v435
      %v2150 = vunpack.c.l.b16 %v436
      %v2151 = vunpack.c.h.b16 %v436
      %v2152 = vunpack.c.l.b16 %v437
      %v2153 = vunpack.c.h.b16 %v437
      %v2154 = vunpack.c.l.b16 %v438
      %v2155 = vunpack.c.h.b16 %v438
      %v2156 = vunpack.c.l.b16 %v439
      %v2157 = vunpack.c.h.b16 %v439
      %v2158 = vunpack.c.l.b16 %v440
      %v2159 = vunpack.c.h.b16 %v440
      %v2160 = vunpack.c.l.b16 %v441
      %v2161 = vunpack.c.h.b16 %v441
      %v2162 = vunpack.c.l.b16 %v442
      %v2163 = vunpack.c.h.b16 %v442
      %v2164 = vunpack.c.l.b16 %v443
      %v2165 = vunpack.c.h.b16 %v443
      %v2166 = vunpack.c.l.b16 %v444
      %v2167 = vunpack.c.h.b16 %v444
      %v2168 = vunpack.c.l.b16 %v445
      %v2169 = vunpack.c.h.b16 %v445
      %v2170 = vunpack.c.l.b16 %v446
      %v2171 = vunpack.c.h.b16 %v446
      %v2172 = vunpack.c.l.b16 %v447
      %v2173 = vunpack.c.h.b16 %v447
      %v2174 = vunpack.c.l.b16 %v448
      %v2175 = vunpack.c.h.b16 %v448
      %v2176 = vunpack.c.l.b16 %v449
      %v2177 = vunpack.c.h.b16 %v449
      %v2178 = vunpack.c.l.b16 %v450
      %v2179 = vunpack.c.h.b16 %v450
      %v2180 = vunpack.c.l.b16 %v451
      %v2181 = vunpack.c.h.b16 %v451
      %v2182 = vunpack.c.l.b16 %v452
      %v2183 = vunpack.c.h.b16 %v452
      %v2184 = vunpack.c.l.b16 %v453
      %v2185 = vunpack.c.h.b16 %v453
      %v2186 = vunpack.c.l.b16 %v454
      %v2187 = vunpack.c.h.b16 %v454
      %v2188 = vunpack.c.l.b16 %v455
      %v2189 = vunpack.c.h.b16 %v455
      %v2190 = vunpack.c.l.b16 %v456
      %v2191 = vunpack.c.h.b16 %v456
      %v2192 = vunpack.c.l.b16 %v457
      %v2193 = vunpack.c.h.b16 %v457
      %v2194 = vunpack.c.l.b16 %v458
      %v2195 = vunpack.c.h.b16 %v458
      %v2196 = vunpack.c.l.b16 %v459
      %v2197 = vunpack.c.h.b16 %v459
      %v2198 = vunpack.c.l.b16 %v460
      %v2199 = vunpack.c.h.b16 %v460
      %v2200 = vunpack.c.l.b16 %v461
      %v2201 = vunpack.c.h.b16 %v461
      %v2202 = vunpack.c.l.b16 %v462
      %v2203 = vunpack.c.h.b16 %v462
      %v2204 = vunpack.c.l.b16 %v463
      %v2205 = vunpack.c.h.b16 %v463
      %v2206 = vunpack.c.l.b16 %v464
      %v2207 = vunpack.c.h.b16 %v464
      %v2208 = vunpack.c.l.b16 %v465
      %v2209 = vunpack.c.h.b16 %v465
      %v2210 = vunpack.c.l.b16 %v466
      %v2211 = vunpack.c.h.b16 %v466
      %v2212 = vunpack.c.l.b16 %v467
      %v2213 = vunpack.c.h.b16 %v467
      %v2214 = vunpack.c.l.b16 %v468
      %v2215 = vunpack.c.h.b16 %v468
      %v2216 = vunpack.c.l.b16 %v469
      %v2217 = vunpack.c.h.b16 %v469
      %v2218 = vunpack.c.l.b16 %v470
      %v2219 = vunpack.c.h.b16 %v470
      %v2220 = vunpack.c.l.b16 %v471
      %v2221 = vunpack.c.h.b16 %v471
      %v2222 = vunpack.c.l.b16 %v472
      %v2223 = vunpack.c.h.b16 %v472
      %v2224 = vunpack.c.l.b16 %v473
      %v2225 = vunpack.c.h.b16 %v473
      %v2226 = vunpack.c.l.b16 %v474
      %v2227 = vunpack.c.h.b16 %v474
      %v2228 = vunpack.c.l.b16 %v475
      %v2229 = vunpack.c.h.b16 %v475
      %v2230 = vunpack.c.l.b16 %v476
      %v2231 = vunpack.c.h.b16 %v476
      %v2232 = vunpack.c.l.b16 %v477
      %v2233 = vunpack.c.h.b16 %v477
      %v2234 = vunpack.c.l.b16 %v478
      %v2235 = vunpack.c.h.b16 %v478
      %v2236 = vunpack.c.l.b16 %v479
      %v2237 = vunpack.c.h.b16 %v479
      %v2238 = vunpack.c.l.b16 %v480
      %v2239 = vunpack.c.h.b16 %v480
      %v2240 = vunpack.c.l.b16 %v481
      %v2241 = vunpack.c.h.b16 %v481
      %v2242 = vunpack.c.l.b16 %v482
      %v2243 = vunpack.c.h.b16 %v482
      %v2244 = vunpack.c.l.b16 %v483
      %v2245 = vunpack.c.h.b16 %v483
      %v2246 = vunpack.c.l.b16 %v484
      %v2247 = vunpack.c.h.b16 %v484
      %v2248 = vunpack.c.l.b16 %v485
      %v2249 = vunpack.c.h.b16 %v485
      %v2250 = vunpack.c.l.b16 %v486
      %v2251 = vunpack.c.h.b16 %v486
      %v2252 = vunpack.c.l.b16 %v487
      %v2253 = vunpack.c.h.b16 %v487
      %v2254 = vunpack.c.l.b16 %v488
      %v2255 = vunpack.c.h.b16 %v488
      %v2256 = vunpack.c.l.b16 %v489
      %v2257 = vunpack.c.h.b16 %v489
      %v2258 = vunpack.c.l.b16 %v490
      %v2259 = vunpack.c.h.b16 %v490
      %v2260 = vunpack.c.l.b16 %v491
      %v2261 = vunpack.c.h.b16 %v491
      %v2262 = vunpack.c.l.b16 %v492
      %v2263 = vunpack.c.h.b16 %v492
      %v2264 = vunpack.c.l.b16 %v493
      %v2265 = vunpack.c.h.b16 %v493
      %v2266 = vunpack.c.l.b16 %v494
      %v2267 = vunpack.c.h.b16 %v494
      %v2268 = vunpack.c.l.b16 %v495
      %v2269 = vunpack.c.h.b16 %v495
      %v2270 = vunpack.c.l.b16 %v496
      %v2271 = vunpack.c.h.b16 %v496
      %v2272 = vunpack.c.l.b16 %v497
      %v2273 = vunpack.c.h.b16 %v497
      %v2274 = vunpack.c.l.b16 %v498
      %v2275 = vunpack.c.h.b16 %v498
      %v2276 = vunpack.c.l.b16 %v499
      %v2277 = vunpack.c.h.b16 %v499
      %v2278 = vunpack.c.l.b16 %v500
      %v2279 = vunpack.c.h.b16 %v500
      %v2280 = vunpack.c.l.b16 %v501
      %v2281 = vunpack.c.h.b16 %v501
      %v2282 = vunpack.c.l.b16 %v502
      %v2283 = vunpack.c.h.b16 %v502
      %v2284 = vunpack.c.l.b16 %v503
      %v2285 = vunpack.c.h.b16 %v503
      %v2286 = vunpack.c.l.b16 %v504
      %v2287 = vunpack.c.h.b16 %v504
      %v2288 = vunpack.c.l.b16 %v505
      %v2289 = vunpack.c.h.b16 %v505
      %v2290 = vunpack.c.l.b16 %v506
      %v2291 = vunpack.c.h.b16 %v506
      %v2292 = vunpack.c.l.b16 %v507
      %v2293 = vunpack.c.h.b16 %v507
      %v2294 = vunpack.c.l.b16 %v508
      %v2295 = vunpack.c.h.b16 %v508
      %v2296 = vunpack.c.l.b16 %v509
      %v2297 = vunpack.c.h.b16 %v509
      %v2298 = vunpack.c.l.b16 %v510
      %v2299 = vunpack.c.h.b16 %v510
      %v2300 = vunpack.c.l.b16 %v511
      %v2301 = vunpack.c.h.b16 %v511
      %v2302 = vunpack.c.l.b16 %v512
      %v2303 = vunpack.c.h.b16 %v512
      %v2304 = vunpack.c.l.b16 %v513
      %v2305 = vunpack.c.h.b16 %v513
      %v2306 = vunpack.c.l.b16 %v514
      %v2307 = vunpack.c.h.b16 %v514
      %v2308 = vunpack.c.l.b16 %v515
      %v2309 = vunpack.c.h.b16 %v515
      %v2310 = vunpack.c.l.b16 %v516
      %v2311 = vunpack.c.h.b16 %v516
      %v2312 = vunpack.c.l.b16 %v517
      %v2313 = vunpack.c.h.b16 %v517
      %v2314 = vunpack.c.l.b16 %v518
      %v2315 = vunpack.c.h.b16 %v518
      %v2316 = vunpack.c.l.b16 %v519
      %v2317 = vunpack.c.h.b16 %v519
      %v2318 = vunpack.c.l.b16 %v520
      %v2319 = vunpack.c.h.b16 %v520
      %v2320 = vunpack.c.l.b16 %v521
      %v2321 = vunpack.c.h.b16 %v521
      %v2322 = vunpack.c.l.b16 %v522
      %v2323 = vunpack.c.h.b16 %v522
      %v2324 = vunpack.c.l.b16 %v523
      %v2325 = vunpack.c.h.b16 %v523
      %v2326 = vunpack.c.l.b16 %v524
      %v2327 = vunpack.c.h.b16 %v524
      %v2328 = vunpack.c.l.b16 %v525
      %v2329 = vunpack.c.h.b16 %v525
      %v2330 = vunpack.c.l.b16 %v526
      %v2331 = vunpack.c.h.b16 %v526
      %v2332 = vunpack.c.l.b16 %v527
      %v2333 = vunpack.c.h.b16 %v527
      %v2334 = vunpack.c.l.b16 %v528
      %v2335 = vunpack.c.h.b16 %v528
      %v2336 = vunpack.c.l.b16 %v529
      %v2337 = vunpack.c.h.b16 %v529
      %v2338 = vunpack.c.l.b16 %v530
      %v2339 = vunpack.c.h.b16 %v530
      %v2340 = vunpack.c.l.b16 %v531
      %v2341 = vunpack.c.h.b16 %v531
      %v2342 = vunpack.c.l.b16 %v532
      %v2343 = vunpack.c.h.b16 %v532
      %v2344 = vunpack.c.l.b16 %v533
      %v2345 = vunpack.c.h.b16 %v533
      %v2346 = vunpack.c.l.b16 %v534
      %v2347 = vunpack.c.h.b16 %v534
      %v2348 = vunpack.c.l.b16 %v535
      %v2349 = vunpack.c.h.b16 %v535
      %v2350 = vunpack.c.l.b16 %v536
      %v2351 = vunpack.c.h.b16 %v536
      %v2352 = vunpack.c.l.b16 %v537
      %v2353 = vunpack.c.h.b16 %v537
      %v2354 = vunpack.c.l.b16 %v538
      %v2355 = vunpack.c.h.b16 %v538
      %v2356 = vunpack.c.l.b16 %v539
      %v2357 = vunpack.c.h.b16 %v539
      %v2358 = vunpack.c.l.b16 %v540
      %v2359 = vunpack.c.h.b16 %v540
      %v2360 = vunpack.c.l.b16 %v541
      %v2361 = vunpack.c.h.b16 %v541
      %v2362 = vunpack.c.l.b16 %v542
      %v2363 = vunpack.c.h.b16 %v542
      %v2364 = vunpack.c.l.b16 %v543
      %v2365 = vunpack.c.h.b16 %v543
      %v2366 = vunpack.c.l.b16 %v544
      %v2367 = vunpack.c.h.b16 %v544
      %v2368 = vunpack.c.l.b16 %v545
      %v2369 = vunpack.c.h.b16 %v545
      %v2370 = vunpack.c.l.b16 %v546
      %v2371 = vunpack.c.h.b16 %v546
      %v2372 = vunpack.c.l.b16 %v547
      %v2373 = vunpack.c.h.b16 %v547
      %v2374 = vunpack.c.l.b16 %v548
      %v2375 = vunpack.c.h.b16 %v548
      %v2376 = vunpack.c.l.b16 %v549
      %v2377 = vunpack.c.h.b16 %v549
      %v2378 = vunpack.c.l.b16 %v550
      %v2379 = vunpack.c.h.b16 %v550
      %v2380 = vunpack.c.l.b16 %v551
      %v2381 = vunpack.c.h.b16 %v551
      %v2382 = vunpack.c.l.b16 %v552
      %v2383 = vunpack.c.h.b16 %v552
      %v2384 = vunpack.c.l.b16 %v553
      %v2385 = vunpack.c.h.b16 %v553
      %v2386 = vunpack.c.l.b16 %v554
      %v2387 = vunpack.c.h.b16 %v554
      %v2388 = vunpack.c.l.b16 %v555
      %v2389 = vunpack.c.h.b16 %v555
      %v2390 = vunpack.c.l.b16 %v556
      %v2391 = vunpack.c.h.b16 %v556
      %v2392 = vunpack.c.l.b16 %v557
      %v2393 = vunpack.c.h.b16 %v557
      %v2394 = vunpack.c.l.b16 %v558
      %v2395 = vunpack.c.h.b16 %v558
      %v2396 = vunpack.c.l.b16 %v559
      %v2397 = vunpack.c.h.b16 %v559
      %v2398 = vunpack.c.l.b16 %v560
      %v2399 = vunpack.c.h.b16 %v560
      %v2400 = vunpack.c.l.b16 %v561
      %v2401 = vunpack.c.h.b16 %v561
      %v2402 = vunpack.c.l.b16 %v562
      %v2403 = vunpack.c.h.b16 %v562
      %v2404 = vunpack.c.l.b16 %v563
      %v2405 = vunpack.c.h.b16 %v563
      %v2406 = vunpack.c.l.b16 %v564
      %v2407 = vunpack.c.h.b16 %v564
      %v2408 = vunpack.c.l.b16 %v565
      %v2409 = vunpack.c.h.b16 %v565
      %v2410 = vunpack.c.l.b16 %v566
      %v2411 = vunpack.c.h.b16 %v566
      %v2412 = vunpack.c.l.b16 %v567
      %v2413 = vunpack.c.h.b16 %v567
      %v2414 = vunpack.c.l.b16 %v568
      %v2415 = vunpack.c.h.b16 %v568
      %v2416 = vunpack.c.l.b16 %v569
      %v2417 = vunpack.c.h.b16 %v569
      %v2418 = vunpack.c.l.b16 %v570
      %v2419 = vunpack.c.h.b16 %v570
      %v2420 = vunpack.c.l.b16 %v571
      %v2421 = vunpack.c.h.b16 %v571
      %v2422 = vunpack.c.l.b16 %v572
      %v2423 = vunpack.c.h.b16 %v572
      %v2424 = vunpack.c.l.b16 %v573
      %v2425 = vunpack.c.h.b16 %v573
      %v2426 = vunpack.c.l.b16 %v574
      %v2427 = vunpack.c.h.b16 %v574
      %v2428 = vunpack.c.l.b16 %v575
      %v2429 = vunpack.c.h.b16 %v575
      %v2430 = vunpack.c.l.b16 %v576
      %v2431 = vunpack.c.h.b16 %v576
      %v2432 = vunpack.c.l.b16 %v577
      %v2433 = vunpack.c.h.b16 %v577
      %v2434 = vunpack.c.l.b16 %v578
      %v2435 = vunpack.c.h.b16 %v578
      %v2436 = vunpack.c.l.b16 %v579
      %v2437 = vunpack.c.h.b16 %v579
      %v2438 = vunpack.c.l.b16 %v580
      %v2439 = vunpack.c.h.b16 %v580
      %v2440 = vunpack.c.l.b16 %v581
      %v2441 = vunpack.c.h.b16 %v581
      %v2442 = vunpack.c.l.b16 %v582
      %v2443 = vunpack.c.h.b16 %v582
      %v2444 = vunpack.c.l.b16 %v583
      %v2445 = vunpack.c.h.b16 %v583
      %v2446 = vunpack.c.l.b16 %v584
      %v2447 = vunpack.c.h.b16 %v584
      %v2448 = vunpack.c.l.b16 %v585
      %v2449 = vunpack.c.h.b16 %v585
      %v2450 = vunpack.c.l.b16 %v586
      %v2451 = vunpack.c.h.b16 %v586
      %v2452 = vunpack.c.l.b16 %v587
      %v2453 = vunpack.c.h.b16 %v587
      %v2454 = vunpack.c.l.b16 %v588
      %v2455 = vunpack.c.h.b16 %v588
      %v2456 = vunpack.c.l.b16 %v589
      %v2457 = vunpack.c.h.b16 %v589
      %v2458 = vunpack.c.l.b16 %v590
      %v2459 = vunpack.c.h.b16 %v590
      %v2460 = vunpack.c.l.b16 %v591
      %v2461 = vunpack.c.h.b16 %v591
      %v2462 = vunpack.c.l.b16 %v592
      %v2463 = vunpack.c.h.b16 %v592
      %v2464 = vunpack.c.l.b16 %v593
      %v2465 = vunpack.c.h.b16 %v593
      %v2466 = vunpack.c.l.b16 %v594
      %v2467 = vunpack.c.h.b16 %v594
      %v2468 = vunpack.c.l.b16 %v595
      %v2469 = vunpack.c.h.b16 %v595
      %v2470 = vunpack.c.l.b16 %v596
      %v2471 = vunpack.c.h.b16 %v596
      %v2472 = vunpack.c.l.b16 %v597
      %v2473 = vunpack.c.h.b16 %v597
      %v2474 = vunpack.c.l.b16 %v598
      %v2475 = vunpack.c.h.b16 %v598
      %v2476 = vunpack.c.l.b16 %v599
      %v2477 = vunpack.c.h.b16 %v599
      %v2478 = vunpack.c.l.b16 %v600
      %v2479 = vunpack.c.h.b16 %v600
      %v2480 = vunpack.c.l.b16 %v601
      %v2481 = vunpack.c.h.b16 %v601
      %v2482 = vunpack.c.l.b16 %v602
      %v2483 = vunpack.c.h.b16 %v602
      %v2484 = vunpack.c.l.b16 %v603
      %v2485 = vunpack.c.h.b16 %v603
      %v2486 = vunpack.c.l.b16 %v604
      %v2487 = vunpack.c.h.b16 %v604
      %v2488 = vunpack.c.l.b16 %v605
      %v2489 = vunpack.c.h.b16 %v605
      %v2490 = vunpack.c.l.b16 %v606
      %v2491 = vunpack.c.h.b16 %v606
      %v2492 = vunpack.c.l.b16 %v607
      %v2493 = vunpack.c.h.b16 %v607
      %v2494 = vunpack.c.l.b16 %v608
      %v2495 = vunpack.c.h.b16 %v608
      %v2496 = vunpack.c.l.b16 %v609
      %v2497 = vunpack.c.h.b16 %v609
      %v2498 = vunpack.c.l.b16 %v610
      %v2499 = vunpack.c.h.b16 %v610
      %v2500 = vunpack.c.l.b16 %v611
      %v2501 = vunpack.c.h.b16 %v611
      %v2502 = vunpack.c.l.b16 %v612
      %v2503 = vunpack.c.h.b16 %v612
      %v2504 = vunpack.c.l.b16 %v613
      %v2505 = vunpack.c.h.b16 %v613
      %v2506 = vunpack.c.l.b16 %v614
      %v2507 = vunpack.c.h.b16 %v614
      %v2508 = vunpack.c.l.b16 %v615
      %v2509 = vunpack.c.h.b16 %v615
      %v2510 = vunpack.c.l.b16 %v616
      %v2511 = vunpack.c.h.b16 %v616
      %v2512 = vunpack.c.l.b16 %v617
      %v2513 = vunpack.c.h.b16 %v617
      %v2514 = vunpack.c.l.b16 %v618
      %v2515 = vunpack.c.h.b16 %v618
      %v2516 = vunpack.c.l.b16 %v619
      %v2517 = vunpack.c.h.b16 %v619
      %v2518 = vunpack.c.l.b16 %v620
      %v2519 = vunpack.c.h.b16 %v620
      %v2520 = vunpack.c.l.b16 %v621
      %v2521 = vunpack.c.h.b16 %v621
      %v2522 = vunpack.c.l.b16 %v622
      %v2523 = vunpack.c.h.b16 %v622
      %v2524 = vunpack.c.l.b16 %v623
      %v2525 = vunpack.c.h.b16 %v623
      %v2526 = vunpack.c.l.b16 %v624
      %v2527 = vunpack.c.h.b16 %v624
      %v2528 = vunpack.c.l.b16 %v625
      %v2529 = vunpack.c.h.b16 %v625
      %v2530 = vunpack.c.l.b16 %v626
      %v2531 = vunpack.c.h.b16 %v626
      %v2532 = vunpack.c.l.b16 %v627
      %v2533 = vunpack.c.h.b16 %v627
      %v2534 = vunpack.c.l.b16 %v628
      %v2535 = vunpack.c.h.b16 %v628
      %v2536 = vunpack.c.l.b16 %v629
      %v2537 = vunpack.c.h.b16 %v629
      %v2538 = vunpack.c.l.b16 %v630
      %v2539 = vunpack.c.h.b16 %v630
      %v2540 = vunpack.c.l.b16 %v631
      %v2541 = vunpack.c.h.b16 %v631
      %v2542 = vunpack.c.l.b16 %v632
      %v2543 = vunpack.c.h.b16 %v632
      %v2544 = vunpack.c.l.b16 %v633
      %v2545 = vunpack.c.h.b16 %v633
      %v2546 = vunpack.c.l.b16 %v634
      %v2547 = vunpack.c.h.b16 %v634
      %v2548 = vunpack.c.l.b16 %v635
      %v2549 = vunpack.c.h.b16 %v635
      %v2550 = vunpack.c.l.b16 %v636
      %v2551 = vunpack.c.h.b16 %v636
      %v2552 = vunpack.c.l.b16 %v637
      %v2553 = vunpack.c.h.b16 %v637
      %v2554 = vunpack.c.l.b16 %v638
      %v2555 = vunpack.c.h.b16 %v638
      %v2556 = vunpack.c.l.b16 %v639
      %v2557 = vunpack.c.h.b16 %v639
      %v2558 = vunpack.c.l.b16 %v640
      %v2559 = vunpack.c.h.b16 %v640
      %v2560 = vunpack.c.l.b16 %v641
      %v2561 = vunpack.c.h.b16 %v641
      %v2562 = vunpack.c.l.b16 %v642
      %v2563 = vunpack.c.h.b16 %v642
      %v2564 = vunpack.c.l.b16 %v643
      %v2565 = vunpack.c.h.b16 %v643
      %v2566 = vunpack.c.l.b16 %v644
      %v2567 = vunpack.c.h.b16 %v644
      %v2568 = vunpack.c.l.b16 %v645
      %v2569 = vunpack.c.h.b16 %v645
      %v2570 = vunpack.c.l.b16 %v646
      %v2571 = vunpack.c.h.b16 %v646
      %v2572 = vunpack.c.l.b16 %v647
      %v2573 = vunpack.c.h.b16 %v647
      %v2574 = vunpack.c.l.b16 %v648
      %v2575 = vunpack.c.h.b16 %v648
      %v2576 = vunpack.c.l.b16 %v649
      %v2577 = vunpack.c.h.b16 %v649
      %v2578 = vunpack.c.l.b16 %v650
      %v2579 = vunpack.c.h.b16 %v650
      %v2580 = vunpack.c.l.b16 %v651
      %v2581 = vunpack.c.h.b16 %v651
      %v2582 = vunpack.c.l.b16 %v652
      %v2583 = vunpack.c.h.b16 %v652
      %v2584 = vunpack.c.l.b16 %v653
      %v2585 = vunpack.c.h.b16 %v653
      %v2586 = vunpack.c.l.b16 %v654
      %v2587 = vunpack.c.h.b16 %v654
      %v2588 = vunpack.c.l.b16 %v655
      %v2589 = vunpack.c.h.b16 %v655
      %v2590 = vunpack.c.l.b16 %v656
      %v2591 = vunpack.c.h.b16 %v656
      %v2592 = vunpack.c.l.b16 %v657
      %v2593 = vunpack.c.h.b16 %v657
      %v2594 = vunpack.c.l.b16 %v658
      %v2595 = vunpack.c.h.b16 %v658
      %v2596 = vunpack.c.l.b16 %v659
      %v2597 = vunpack.c.h.b16 %v659
      %v2598 = vunpack.c.l.b16 %v660
      %v2599 = vunpack.c.h.b16 %v660
      %v2600 = vunpack.c.l.b16 %v661
      %v2601 = vunpack.c.h.b16 %v661
      %v2602 = vunpack.c.l.b16 %v662
      %v2603 = vunpack.c.h.b16 %v662
      %v2604 = vunpack.c.l.b16 %v663
      %v2605 = vunpack.c.h.b16 %v663
      %v2606 = vunpack.c.l.b16 %v664
      %v2607 = vunpack.c.h.b16 %v664
      %v2608 = vunpack.c.l.b16 %v665
      %v2609 = vunpack.c.h.b16 %v665
      %v2610 = vunpack.c.l.b16 %v666
      %v2611 = vunpack.c.h.b16 %v666
      %v2612 = vunpack.c.l.b16 %v667
      %v2613 = vunpack.c.h.b16 %v667
      %v2614 = vunpack.c.l.b16 %v668
      %v2615 = vunpack.c.h.b16 %v668
      %v2616 = vunpack.c.l.b16 %v669
      %v2617 = vunpack.c.h.b16 %v669
      %v2618 = vunpack.c.l.b16 %v670
      %v2619 = vunpack.c.h.b16 %v670
      %v2620 = vunpack.c.l.b16 %v671
      %v2621 = vunpack.c.h.b16 %v671
      %v2622 = vunpack.c.l.b16 %v672
      %v2623 = vunpack.c.h.b16 %v672
      %v2624 = vunpack.c.l.b16 %v673
      %v2625 = vunpack.c.h.b16 %v673
      %v2626 = vunpack.c.l.b16 %v674
      %v2627 = vunpack.c.h.b16 %v674
      %v2628 = vunpack.c.l.b16 %v675
      %v2629 = vunpack.c.h.b16 %v675
      %v2630 = vunpack.c.l.b16 %v676
      %v2631 = vunpack.c.h.b16 %v676
      %v2632 = vunpack.c.l.b16 %v677
      %v2633 = vunpack.c.h.b16 %v677
      %v2634 = vunpack.c.l.b16 %v678
      %v2635 = vunpack.c.h.b16 %v678
      %v2636 = vunpack.c.l.b16 %v679
      %v2637 = vunpack.c.h.b16 %v679
      %v2638 = vunpack.c.l.b16 %v680
      %v2639 = vunpack.c.h.b16 %v680
      %v2640 = vunpack.c.l.b16 %v681
      %v2641 = vunpack.c.h.b16 %v681
      %v2642 = vunpack.c.l.b16 %v682
      %v2643 = vunpack.c.h.b16 %v682
      %v2644 = vunpack.c.l.b16 %v683
      %v2645 = vunpack.c.h.b16 %v683
      %v2646 = vunpack.c.l.b16 %v684
      %v2647 = vunpack.c.h.b16 %v684
      %v2648 = vunpack.c.l.b16 %v685
      %v2649 = vunpack.c.h.b16 %v685
      %v2650 = vunpack.c.l.b16 %v686
      %v2651 = vunpack.c.h.b16 %v686
      %v2652 = vunpack.c.l.b16 %v687
      %v2653 = vunpack.c.h.b16 %v687
      %v2654 = vunpack.c.l.b16 %v688
      %v2655 = vunpack.c.h.b16 %v688
      %v2656 = vunpack.c.l.b16 %v689
      %v2657 = vunpack.c.h.b16 %v689
      %v2658 = vunpack.c.l.b16 %v690
      %v2659 = vunpack.c.h.b16 %v690
      %v2660 = vunpack.c.l.b16 %v691
      %v2661 = vunpack.c.h.b16 %v691
      %v2662 = vunpack.c.l.b16 %v692
      %v2663 = vunpack.c.h.b16 %v692
      %v2664 = vunpack.c.l.b16 %v693
      %v2665 = vunpack.c.h.b16 %v693
      %v2666 = vunpack.c.l.b16 %v694
      %v2667 = vunpack.c.h.b16 %v694
      %v2668 = vunpack.c.l.b16 %v695
      %v2669 = vunpack.c.h.b16 %v695
      %v2670 = vunpack.c.l.b16 %v696
      %v2671 = vunpack.c.h.b16 %v696
      %v2672 = vunpack.c.l.b16 %v697
      %v2673 = vunpack.c.h.b16 %v697
      %v2674 = vunpack.c.l.b16 %v698
      %v2675 = vunpack.c.h.b16 %v698
      %v2676 = vunpack.c.l.b16 %v699
      %v2677 = vunpack.c.h.b16 %v699
      %v2678 = vunpack.c.l.b16 %v700
      %v2679 = vunpack.c.h.b16 %v700
      %v2680 = vunpack.c.l.b16 %v701
      %v2681 = vunpack.c.h.b16 %v701
      %v2682 = vunpack.c.l.b16 %v702
      %v2683 = vunpack.c.h.b16 %v702
      %v2684 = vunpack.c.l.b16 %v703
      %v2685 = vunpack.c.h.b16 %v703
      %v2686 = vunpack.c.l.b16 %v704
      %v2687 = vunpack.c.h.b16 %v704
      %v2688 = vunpack.c.l.b16 %v705
      %v2689 = vunpack.c.h.b16 %v705
      %v2690 = vunpack.c.l.b16 %v706
      %v2691 = vunpack.c.h.b16 %v706
      %v2692 = vunpack.c.l.b16 %v707
      %v2693 = vunpack.c.h.b16 %v707
      %v2694 = vunpack.c.l.b16 %v708
      %v2695 = vunpack.c.h.b16 %v708
      %v2696 = vunpack.c.l.b16 %v709
      %v2697 = vunpack.c.h.b16 %v709
      %v2698 = vunpack.c.l.b16 %v710
      %v2699 = vunpack.c.h.b16 %v710
      %v2700 = vunpack.c.l.b16 %v711
      %v2701 = vunpack.c.h.b16 %v711
      %v2702 = vunpack.c.l.b16 %v712
      %v2703 = vunpack.c.h.b16 %v712
      %v2704 = vunpack.c.l.b16 %v713
      %v2705 = vunpack.c.h.b16 %v713
      %v2706 = vunpack.c.l.b16 %v714
      %v2707 = vunpack.c.h.b16 %v714
      %v2708 = vunpack.c.l.b16 %v715
      %v2709 = vunpack.c.h.b16 %v715
      %v2710 = vunpack.c.l.b16 %v716
      %v2711 = vunpack.c.h.b16 %v716
      %v2712 = vunpack.c.l.b16 %v717
      %v2713 = vunpack.c.h.b16 %v717
      %v2714 = vunpack.c.l.b16 %v718
      %v2715 = vunpack.c.h.b16 %v718
      %v2716 = vunpack.c.l.b16 %v719
      %v2717 = vunpack.c.h.b16 %v719
      %v2718 = vunpack.c.l.b16 %v720
      %v2719 = vunpack.c.h.b16 %v720
      %v2720 = vunpack.c.l.b16 %v721
      %v2721 = vunpack.c.h.b16 %v721
      %v2722 = vunpack.c.l.b16 %v722
      %v2723 = vunpack.c.h.b16 %v722
      %v2724 = vunpack.c.l.b16 %v723
      %v2725 = vunpack.c.h.b16 %v723
      %v2726 = vunpack.c.l.b16 %v724
      %v2727 = vunpack.c.h.b16 %v724
      %v2728 = vunpack.c.l.b16 %v725
      %v2729 = vunpack.c.h.b16 %v725
      %v2730 = vunpack.c.l.b16 %v726
      %v2731 = vunpack.c.h.b16 %v726
      %v2732 = vunpack.c.l.b16 %v727
      %v2733 = vunpack.c.h.b16 %v727
      %v2734 = vunpack.c.l.b16 %v728
      %v2735 = vunpack.c.h.b16 %v728
      %v2736 = vunpack.c.l.b16 %v729
      %v2737 = vunpack.c.h.b16 %v729
      %v2738 = vunpack.c.l.b16 %v730
      %v2739 = vunpack.c.h.b16 %v730
      %v2740 = vunpack.c.l.b16 %v731
      %v2741 = vunpack.c.h.b16 %v731
      %v2742 = vunpack.c.l.b16 %v732
      %v2743 = vunpack.c.h.b16 %v732
      %v2744 = vunpack.c.l.b16 %v733
      %v2745 = vunpack.c.h.b16 %v733
      %v2746 = vunpack.c.l.b16 %v734
      %v2747 = vunpack.c.h.b16 %v734
      %v2748 = vunpack.c.l.b16 %v735
      %v2749 = vunpack.c.h.b16 %v735
      %v2750 = vunpack.c.l.b16 %v736
      %v2751 = vunpack.c.h.b16 %v736
      %v2752 = vunpack.c.l.b16 %v737
      %v2753 = vunpack.c.h.b16 %v737
      %v2754 = vunpack.c.l.b16 %v738
      %v2755 = vunpack.c.h.b16 %v738
      %v2756 = vunpack.c.l.b16 %v739
      %v2757 = vunpack.c.h.b16 %v739
      %v2758 = vunpack.c.l.b16 %v740
      %v2759 = vunpack.c.h.b16 %v740
      %v2760 = vunpack.c.l.b16 %v741
      %v2761 = vunpack.c.h.b16 %v741
      %v2762 = vunpack.c.l.b16 %v742
      %v2763 = vunpack.c.h.b16 %v742
      %v2764 = vunpack.c.l.b16 %v743
      %v2765 = vunpack.c.h.b16 %v743
      %v2766 = vunpack.c.l.b16 %v744
      %v2767 = vunpack.c.h.b16 %v744
      %v2768 = vunpack.c.l.b16 %v745
      %v2769 = vunpack.c.h.b16 %v745
      %v2770 = vunpack.c.l.b16 %v746
      %v2771 = vunpack.c.h.b16 %v746
      %v2772 = vunpack.c.l.b16 %v747
      %v2773 = vunpack.c.h.b16 %v747
      %v2774 = vunpack.c.l.b16 %v748
      %v2775 = vunpack.c.h.b16 %v748
      %v2776 = vunpack.c.l.b16 %v749
      %v2777 = vunpack.c.h.b16 %v749
      %v2778 = vunpack.c.l.b16 %v750
      %v2779 = vunpack.c.h.b16 %v750
      %v2780 = vunpack.c.l.b16 %v751
      %v2781 = vunpack.c.h.b16 %v751
      %v2782 = vunpack.c.l.b16 %v752
      %v2783 = vunpack.c.h.b16 %v752
      %v2784 = vunpack.c.l.b16 %v753
      %v2785 = vunpack.c.h.b16 %v753
      %v2786 = vunpack.c.l.b16 %v754
      %v2787 = vunpack.c.h.b16 %v754
      %v2788 = vunpack.c.l.b16 %v755
      %v2789 = vunpack.c.h.b16 %v755
      %v2790 = vunpack.c.l.b16 %v756
      %v2791 = vunpack.c.h.b16 %v756
      %v2792 = vunpack.c.l.b16 %v757
      %v2793 = vunpack.c.h.b16 %v757
      %v2794 = vunpack.c.l.b16 %v758
      %v2795 = vunpack.c.h.b16 %v758
      %v2796 = vunpack.c.l.b16 %v759
      %v2797 = vunpack.c.h.b16 %v759
      %v2798 = vunpack.c.l.b16 %v760
      %v2799 = vunpack.c.h.b16 %v760
      %v2800 = vunpack.c.l.b16 %v761
      %v2801 = vunpack.c.h.b16 %v761
      %v2802 = vunpack.c.l.b16 %v762
      %v2803 = vunpack.c.h.b16 %v762
      %v2804 = vunpack.c.l.b16 %v763
      %v2805 = vunpack.c.h.b16 %v763
      %v2806 = vunpack.c.l.b16 %v764
      %v2807 = vunpack.c.h.b16 %v764
      %v2808 = vunpack.c.l.b16 %v765
      %v2809 = vunpack.c.h.b16 %v765
      %v2810 = vunpack.c.l.b16 %v766
      %v2811 = vunpack.c.h.b16 %v766
      %v2812 = vunpack.c.l.b16 %v767
      %v2813 = vunpack.c.h.b16 %v767
      %v2814 = vunpack.c.l.b16 %v768
      %v2815 = vunpack.c.h.b16 %v768
      %v2816 = vunpack.c.l.b16 %v769
      %v2817 = vunpack.c.h.b16 %v769
      %v2818 = vunpack.c.l.b16 %v770
      %v2819 = vunpack.c.h.b16 %v770
      %v2820 = vunpack.c.l.b16 %v771
      %v2821 = vunpack.c.h.b16 %v771
      %v2822 = vunpack.c.l.b16 %v772
      %v2823 = vunpack.c.h.b16 %v772
      %v2824 = vunpack.c.l.b16 %v773
      %v2825 = vunpack.c.h.b16 %v773
      %v2826 = vunpack.c.l.b16 %v774
      %v2827 = vunpack.c.h.b16 %v774
      %v2828 = vunpack.c.l.b16 %v775
      %v2829 = vunpack.c.h.b16 %v775
      %v2830 = vunpack.c.l.b16 %v776
      %v2831 = vunpack.c.h.b16 %v776
      %v2832 = vunpack.c.l.b16 %v777
      %v2833 = vunpack.c.h.b16 %v777
      %v2834 = vunpack.c.l.b16 %v778
      %v2835 = vunpack.c.h.b16 %v778
      %v2836 = vunpack.c.l.b16 %v779
      %v2837 = vunpack.c.h.b16 %v779
      %v2838 = vunpack.c.l.b16 %v780
      %v2839 = vunpack.c.h.b16 %v780
      %v2840 = vunpack.c.l.b16 %v781
      %v2841 = vunpack.c.h.b16 %v781
      %v2842 = vunpack.c.l.b16 %v782
      %v2843 = vunpack.c.h.b16 %v782
      %v2844 = vunpack.c.l.b16 %v783
      %v2845 = vunpack.c.h.b16 %v783
      %v2846 = vunpack.c.l.b16 %v784
      %v2847 = vunpack.c.h.b16 %v784
      %v2848 = vunpack.c.l.b16 %v785
      %v2849 = vunpack.c.h.b16 %v785
      %v2850 = vunpack.c.l.b16 %v786
      %v2851 = vunpack.c.h.b16 %v786
      %v2852 = vunpack.c.l.b16 %v787
      %v2853 = vunpack.c.h.b16 %v787
      %v2854 = vunpack.c.l.b16 %v788
      %v2855 = vunpack.c.h.b16 %v788
      %v2856 = vunpack.c.l.b16 %v789
      %v2857 = vunpack.c.h.b16 %v789
      %v2858 = vunpack.c.l.b16 %v790
      %v2859 = vunpack.c.h.b16 %v790
      %v2860 = vunpack.c.l.b16 %v791
      %v2861 = vunpack.c.h.b16 %v791
      %v2862 = vpack.c.b16 %v1854, %v1838
      %v2863 = vpack.c.b16 %v1855, %v1839
      %v2864 = vpack.c.b16 %v1856, %v1840
      %v2865 = vpack.c.b16 %v1857, %v1841
      %v2866 = vpack.c.b16 %v1858, %v1842
      %v2867 = vpack.c.b16 %v1859, %v1843
      %v2868 = vpack.c.b16 %v1860, %v1844
      %v2869 = vpack.c.b16 %v1861, %v1845
      %v2870 = vpack.c.b16 %v1862, %v1846
      %v2871 = vpack.c.b16 %v1863, %v1847
      %v2872 = vpack.c.b16 %v1864, %v1848
      %v2873 = vpack.c.b16 %v1865, %v1849
      %v2874 = vpack.c.b16 %v1866, %v1850
      %v2875 = vpack.c.b16 %v1867, %v1851
      %v2876 = vpack.c.b16 %v1868, %v1852
      %v2877 = vpack.c.b16 %v1869, %v1853
      %v2878 = vpack.c.b16 %v1886, %v1870
      %v2879 = vpack.c.b16 %v1887, %v1871
      %v2880 = vpack.c.b16 %v1888, %v1872
      %v2881 = vpack.c.b16 %v1889, %v1873
      %v2882 = vpack.c.b16 %v1890, %v1874
      %v2883 = vpack.c.b16 %v1891, %v1875
      %v2884 = vpack.c.b16 %v1892, %v1876
      %v2885 = vpack.c.b16 %v1893, %v1877
      %v2886 = vpack.c.b16 %v1894, %v1878
      %v2887 = vpack.c.b16 %v1895, %v1879
      %v2888 = vpack.c.b16 %v1896, %v1880
      %v2889 = vpack.c.b16 %v1897, %v1881
      %v2890 = vpack.c.b16 %v1898, %v1882
      %v2891 = vpack.c.b16 %v1899, %v1883
      %v2892 = vpack.c.b16 %v1900, %v1884
      %v2893 = vpack.c.b16 %v1901, %v1885
      %v2894 = vpack.c.b16 %v1918, %v1902
      %v2895 = vpack.c.b16 %v1919, %v1903
      %v2896 = vpack.c.b16 %v1920, %v1904
      %v2897 = vpack.c.b16 %v1921, %v1905
      %v2898 = vpack.c.b16 %v1922, %v1906
      %v2899 = vpack.c.b16 %v1923, %v1907
      %v2900 = vpack.c.b16 %v1924, %v1908
      %v2901 = vpack.c.b16 %v1925, %v1909
      %v2902 = vpack.c.b16 %v1926, %v1910
      %v2903 = vpack.c.b16 %v1927, %v1911
      %v2904 = vpack.c.b16 %v1928, %v1912
      %v2905 = vpack.c.b16 %v1929, %v1913
      %v2906 = vpack.c.b16 %v1930, %v1914
      %v2907 = vpack.c.b16 %v1931, %v1915
      %v2908 = vpack.c.b16 %v1932, %v1916
      %v2909 = vpack.c.b16 %v1933, %v1917
      %v2910 = vpack.c.b16 %v1950, %v1934
      %v2911 = vpack.c.b16 %v1951, %v1935
      %v2912 = vpack.c.b16 %v1952, %v1936
      %v2913 = vpack.c.b16 %v1953, %v1937
      %v2914 = vpack.c.b16 %v1954, %v1938
      %v2915 = vpack.c.b16 %v1955, %v1939
      %v2916 = vpack.c.b16 %v1956, %v1940
      %v2917 = vpack.c.b16 %v1957, %v1941
      %v2918 = vpack.c.b16 %v1958, %v1942
      %v2919 = vpack.c.b16 %v1959, %v1943
      %v2920 = vpack.c.b16 %v1960, %v1944
      %v2921 = vpack.c.b16 %v1961, %v1945
      %v2922 = vpack.c.b16 %v1962, %v1946
      %v2923 = vpack.c.b16 %v1963, %v1947
      %v2924 = vpack.c.b16 %v1964, %v1948
      %v2925 = vpack.c.b16 %v1965, %v1949
      %v2926 = vpack.c.b16 %v1982, %v1966
      %v2927 = vpack.c.b16 %v1983, %v1967
      %v2928 = vpack.c.b16 %v1984, %v1968
      %v2929 = vpack.c.b16 %v1985, %v1969
      %v2930 = vpack.c.b16 %v1986, %v1970
      %v2931 = vpack.c.b16 %v1987, %v1971
      %v2932 = vpack.c.b16 %v1988, %v1972
      %v2933 = vpack.c.b16 %v1989, %v1973
      %v2934 = vpack.c.b16 %v1990, %v1974
      %v2935 = vpack.c.b16 %v1991, %v1975
      %v2936 = vpack.c.b16 %v1992, %v1976
      %v2937 = vpack.c.b16 %v1993, %v1977
      %v2938 = vpack.c.b16 %v1994, %v1978
      %v2939 = vpack.c.b16 %v1995, %v1979
      %v2940 = vpack.c.b16 %v1996, %v1980
      %v2941 = vpack.c.b16 %v1997, %v1981
      %v2942 = vpack.c.b16 %v2014, %v1998
      %v2943 = vpack.c.b16 %v2015, %v1999
      %v2944 = vpack.c.b16 %v2016, %v2000
      %v2945 = vpack.c.b16 %v2017, %v2001
      %v2946 = vpack.c.b16 %v2018, %v2002
      %v2947 = vpack.c.b16 %v2019, %v2003
      %v2948 = vpack.c.b16 %v2020, %v2004
      %v2949 = vpack.c.b16 %v2021, %v2005
      %v2950 = vpack.c.b16 %v2022, %v2006
      %v2951 = vpack.c.b16 %v2023, %v2007
      %v2952 = vpack.c.b16 %v2024, %v2008
      %v2953 = vpack.c.b16 %v2025, %v2009
      %v2954 = vpack.c.b16 %v2026, %v2010
      %v2955 = vpack.c.b16 %v2027, %v2011
      %v2956 = vpack.c.b16 %v2028, %v2012
      %v2957 = vpack.c.b16 %v2029, %v2013
      %v2958 = vpack.c.b16 %v2046, %v2030
      %v2959 = vpack.c.b16 %v2047, %v2031
      %v2960 = vpack.c.b16 %v2048, %v2032
      %v2961 = vpack.c.b16 %v2049, %v2033
      %v2962 = vpack.c.b16 %v2050, %v2034
      %v2963 = vpack.c.b16 %v2051, %v2035
      %v2964 = vpack.c.b16 %v2052, %v2036
      %v2965 = vpack.c.b16 %v2053, %v2037
      %v2966 = vpack.c.b16 %v2054, %v2038
      %v2967 = vpack.c.b16 %v2055, %v2039
      %v2968 = vpack.c.b16 %v2056, %v2040
      %v2969 = vpack.c.b16 %v2057, %v2041
      %v2970 = vpack.c.b16 %v2058, %v2042
      %v2971 = vpack.c.b16 %v2059, %v2043
      %v2972 = vpack.c.b16 %v2060, %v2044
      %v2973 = vpack.c.b16 %v2061, %v2045
      %v2974 = vpack.c.b16 %v2078, %v2062
      %v2975 = vpack.c.b16 %v2079, %v2063
      %v2976 = vpack.c.b16 %v2080, %v2064
      %v2977 = vpack.c.b16 %v2081, %v2065
      %v2978 = vpack.c.b16 %v2082, %v2066
      %v2979 = vpack.c.b16 %v2083, %v2067
      %v2980 = vpack.c.b16 %v2084, %v2068
      %v2981 = vpack.c.b16 %v2085, %v2069
      %v2982 = vpack.c.b16 %v2086, %v2070
      %v2983 = vpack.c.b16 %v2087, %v2071
      %v2984 = vpack.c.b16 %v2088, %v2072
      %v2985 = vpack.c.b16 %v2089, %v2073
      %v2986 = vpack.c.b16 %v2090, %v2074
      %v2987 = vpack.c.b16 %v2091, %v2075
      %v2988 = vpack.c.b16 %v2092, %v2076
      %v2989 = vpack.c.b16 %v2093, %v2077
      %v2990 = vpack.c.b16 %v2110, %v2094
      %v2991 = vpack.c.b16 %v2111, %v2095
      %v2992 = vpack.c.b16 %v2112, %v2096
      %v2993 = vpack.c.b16 %v2113, %v2097
      %v2994 = vpack.c.b16 %v2114, %v2098
      %v2995 = vpack.c.b16 %v2115, %v2099
      %v2996 = vpack.c.b16 %v2116, %v2100
      %v2997 = vpack.c.b16 %v2117, %v2101
      %v2998 = vpack.c.b16 %v2118, %v2102
      %v2999 = vpack.c.b16 %v2119, %v2103
      %v3000 = vpack.c.b16 %v2120, %v2104
      %v3001 = vpack.c.b16 %v2121, %v2105
      %v3002 = vpack.c.b16 %v2122, %v2106
      %v3003 = vpack.c.b16 %v2123, %v2107
      %v3004 = vpack.c.b16 %v2124, %v2108
      %v3005 = vpack.c.b16 %v2125, %v2109
      %v3006 = vpack.c.b16 %v2142, %v2126
      %v3007 = vpack.c.b16 %v2143, %v2127
      %v3008 = vpack.c.b16 %v2144, %v2128
      %v3009 = vpack.c.b16 %v2145, %v2129
      %v3010 = vpack.c.b16 %v2146, %v2130
      %v3011 = vpack.c.b16 %v2147, %v2131
      %v3012 = vpack.c.b16 %v2148, %v2132
      %v3013 = vpack.c.b16 %v2149, %v2133
      %v3014 = vpack.c.b16 %v2150, %v2134
      %v3015 = vpack.c.b16 %v2151, %v2135
      %v3016 = vpack.c.b16 %v2152, %v2136
      %v3017 = vpack.c.b16 %v2153, %v2137
      %v3018 = vpack.c.b16 %v2154, %v2138
      %v3019 = vpack.c.b16 %v2155, %v2139
      %v3020 = vpack.c.b16 %v2156, %v2140
      %v3021 = vpack.c.b16 %v2157, %v2141
      %v3022 = vpack.c.b16 %v2174, %v2158
      %v3023 = vpack.c.b16 %v2175, %v2159
      %v3024 = vpack.c.b16 %v2176, %v2160
      %v3025 = vpack.c.b16 %v2177, %v2161
      %v3026 = vpack.c.b16 %v2178, %v2162
      %v3027 = vpack.c.b16 %v2179, %v2163
      %v3028 = vpack.c.b16 %v2180, %v2164
      %v3029 = vpack.c.b16 %v2181, %v2165
      %v3030 = vpack.c.b16 %v2182, %v2166
      %v3031 = vpack.c.b16 %v2183, %v2167
      %v3032 = vpack.c.b16 %v2184, %v2168
      %v3033 = vpack.c.b16 %v2185, %v2169
      %v3034 = vpack.c.b16 %v2186, %v2170
      %v3035 = vpack.c.b16 %v2187, %v2171
      %v3036 = vpack.c.b16 %v2188, %v2172
      %v3037 = vpack.c.b16 %v2189, %v2173
      %v3038 = vpack.c.b16 %v2206, %v2190
      %v3039 = vpack.c.b16 %v2207, %v2191
      %v3040 = vpack.c.b16 %v2208, %v2192
      %v3041 = vpack.c.b16 %v2209, %v2193
      %v3042 = vpack.c.b16 %v2210, %v2194
      %v3043 = vpack.c.b16 %v2211, %v2195
      %v3044 = vpack.c.b16 %v2212, %v2196
      %v3045 = vpack.c.b16 %v2213, %v2197
      %v3046 = vpack.c.b16 %v2214, %v2198
      %v3047 = vpack.c.b16 %v2215, %v2199
      %v3048 = vpack.c.b16 %v2216, %v2200
      %v3049 = vpack.c.b16 %v2217, %v2201
      %v3050 = vpack.c.b16 %v2218, %v2202
      %v3051 = vpack.c.b16 %v2219, %v2203
      %v3052 = vpack.c.b16 %v2220, %v2204
      %v3053 = vpack.c.b16 %v2221, %v2205
      %v3054 = vpack.c.b16 %v2238, %v2222
      %v3055 = vpack.c.b16 %v2239, %v2223
      %v3056 = vpack.c.b16 %v2240, %v2224
      %v3057 = vpack.c.b16 %v2241, %v2225
      %v3058 = vpack.c.b16 %v2242, %v2226
      %v3059 = vpack.c.b16 %v2243, %v2227
      %v3060 = vpack.c.b16 %v2244, %v2228
      %v3061 = vpack.c.b16 %v2245, %v2229
      %v3062 = vpack.c.b16 %v2246, %v2230
      %v3063 = vpack.c.b16 %v2247, %v2231
      %v3064 = vpack.c.b16 %v2248, %v2232
      %v3065 = vpack.c.b16 %v2249, %v2233
      %v3066 = vpack.c.b16 %v2250, %v2234
      %v3067 = vpack.c.b16 %v2251, %v2235
      %v3068 = vpack.c.b16 %v2252, %v2236
      %v3069 = vpack.c.b16 %v2253, %v2237
      %v3070 = vpack.c.b16 %v2270, %v2254
      %v3071 = vpack.c.b16 %v2271, %v2255
      %v3072 = vpack.c.b16 %v2272, %v2256
      %v3073 = vpack.c.b16 %v2273, %v2257
      %v3074 = vpack.c.b16 %v2274, %v2258
      %v3075 = vpack.c.b16 %v2275, %v2259
      %v3076 = vpack.c.b16 %v2276, %v2260
      %v3077 = vpack.c.b16 %v2277, %v2261
      %v3078 = vpack.c.b16 %v2278, %v2262
      %v3079 = vpack.c.b16 %v2279, %v2263
      %v3080 = vpack.c.b16 %v2280, %v2264
      %v3081 = vpack.c.b16 %v2281, %v2265
      %v3082 = vpack.c.b16 %v2282, %v2266
      %v3083 = vpack.c.b16 %v2283, %v2267
      %v3084 = vpack.c.b16 %v2284, %v2268
      %v3085 = vpack.c.b16 %v2285, %v2269
      %v3086 = vpack.c.b16 %v2302, %v2286
      %v3087 = vpack.c.b16 %v2303, %v2287
      %v3088 = vpack.c.b16 %v2304, %v2288
      %v3089 = vpack.c.b16 %v2305, %v2289
      %v3090 = vpack.c.b16 %v2306, %v2290
      %v3091 = vpack.c.b16 %v2307, %v2291
      %v3092 = vpack.c.b16 %v2308, %v2292
      %v3093 = vpack.c.b16 %v2309, %v2293
      %v3094 = vpack.c.b16 %v2310, %v2294
      %v3095 = vpack.c.b16 %v2311, %v2295
      %v3096 = vpack.c.b16 %v2312, %v2296
      %v3097 = vpack.c.b16 %v2313, %v2297
      %v3098 = vpack.c.b16 %v2314, %v2298
      %v3099 = vpack.c.b16 %v2315, %v2299
      %v3100 = vpack.c.b16 %v2316, %v2300
      %v3101 = vpack.c.b16 %v2317, %v2301
      %v3102 = vpack.c.b16 %v2334, %v2318
      %v3103 = vpack.c.b16 %v2335, %v2319
      %v3104 = vpack.c.b16 %v2336, %v2320
      %v3105 = vpack.c.b16 %v2337, %v2321
      %v3106 = vpack.c.b16 %v2338, %v2322
      %v3107 = vpack.c.b16 %v2339, %v2323
      %v3108 = vpack.c.b16 %v2340, %v2324
      %v3109 = vpack.c.b16 %v2341, %v2325
      %v3110 = vpack.c.b16 %v2342, %v2326
      %v3111 = vpack.c.b16 %v2343, %v2327
      %v3112 = vpack.c.b16 %v2344, %v2328
      %v3113 = vpack.c.b16 %v2345, %v2329
      %v3114 = vpack.c.b16 %v2346, %v2330
      %v3115 = vpack.c.b16 %v2347, %v2331
      %v3116 = vpack.c.b16 %v2348, %v2332
      %v3117 = vpack.c.b16 %v2349, %v2333
      %v3118 = vpack.c.b16 %v2366, %v2350
      %v3119 = vpack.c.b16 %v2367, %v2351
      %v3120 = vpack.c.b16 %v2368, %v2352
      %v3121 = vpack.c.b16 %v2369, %v2353
      %v3122 = vpack.c.b16 %v2370, %v2354
      %v3123 = vpack.c.b16 %v2371, %v2355
      %v3124 = vpack.c.b16 %v2372, %v2356
      %v3125 = vpack.c.b16 %v2373, %v2357
      %v3126 = vpack.c.b16 %v2374, %v2358
      %v3127 = vpack.c.b16 %v2375, %v2359
      %v3128 = vpack.c.b16 %v2376, %v2360
      %v3129 = vpack.c.b16 %v2377, %v2361
      %v3130 = vpack.c.b16 %v2378, %v2362
      %v3131 = vpack.c.b16 %v2379, %v2363
      %v3132 = vpack.c.b16 %v2380, %v2364
      %v3133 = vpack.c.b16 %v2381, %v2365
      %v3134 = vpack.c.b16 %v2398, %v2382
      %v3135 = vpack.c.b16 %v2399, %v2383
      %v3136 = vpack.c.b16 %v2400, %v2384
      %v3137 = vpack.c.b16 %v2401, %v2385
      %v3138 = vpack.c.b16 %v2402, %v2386
      %v3139 = vpack.c.b16 %v2403, %v2387
      %v3140 = vpack.c.b16 %v2404, %v2388
      %v3141 = vpack.c.b16 %v2405, %v2389
      %v3142 = vpack.c.b16 %v2406, %v2390
      %v3143 = vpack.c.b16 %v2407, %v2391
      %v3144 = vpack.c.b16 %v2408, %v2392
      %v3145 = vpack.c.b16 %v2409, %v2393
      %v3146 = vpack.c.b16 %v2410, %v2394
      %v3147 = vpack.c.b16 %v2411, %v2395
      %v3148 = vpack.c.b16 %v2412, %v2396
      %v3149 = vpack.c.b16 %v2413, %v2397
      %v3150 = vpack.c.b16 %v2430, %v2414
      %v3151 = vpack.c.b16 %v2431, %v2415
      %v3152 = vpack.c.b16 %v2432, %v2416
      %v3153 = vpack.c.b16 %v2433, %v2417
      %v3154 = vpack.c.b16 %v2434, %v2418
      %v3155 = vpack.c.b16 %v2435, %v2419
      %v3156 = vpack.c.b16 %v2436, %v2420
      %v3157 = vpack.c.b16 %v2437, %v2421
      %v3158 = vpack.c.b16 %v2438, %v2422
      %v3159 = vpack.c.b16 %v2439, %v2423
      %v3160 = vpack.c.b16 %v2440, %v2424
      %v3161 = vpack.c.b16 %v2441, %v2425
      %v3162 = vpack.c.b16 %v2442, %v2426
      %v3163 = vpack.c.b16 %v2443, %v2427
      %v3164 = vpack.c.b16 %v2444, %v2428
      %v3165 = vpack.c.b16 %v2445, %v2429
      %v3166 = vpack.c.b16 %v2462, %v2446
      %v3167 = vpack.c.b16 %v2463, %v2447
      %v3168 = vpack.c.b16 %v2464, %v2448
      %v3169 = vpack.c.b16 %v2465, %v2449
      %v3170 = vpack.c.b16 %v2466, %v2450
      %v3171 = vpack.c.b16 %v2467, %v2451
      %v3172 = vpack.c.b16 %v2468, %v2452
      %v3173 = vpack.c.b16 %v2469, %v2453
      %v3174 = vpack.c.b16 %v2470, %v2454
      %v3175 = vpack.c.b16 %v2471, %v2455
      %v3176 = vpack.c.b16 %v2472, %v2456
      %v3177 = vpack.c.b16 %v2473, %v2457
      %v3178 = vpack.c.b16 %v2474, %v2458
      %v3179 = vpack.c.b16 %v2475, %v2459
      %v3180 = vpack.c.b16 %v2476, %v2460
      %v3181 = vpack.c.b16 %v2477, %v2461
      %v3182 = vpack.c.b16 %v2494, %v2478
      %v3183 = vpack.c.b16 %v2495, %v2479
      %v3184 = vpack.c.b16 %v2496, %v2480
      %v3185 = vpack.c.b16 %v2497, %v2481
      %v3186 = vpack.c.b16 %v2498, %v2482
      %v3187 = vpack.c.b16 %v2499, %v2483
      %v3188 = vpack.c.b16 %v2500, %v2484
      %v3189 = vpack.c.b16 %v2501, %v2485
      %v3190 = vpack.c.b16 %v2502, %v2486
      %v3191 = vpack.c.b16 %v2503, %v2487
      %v3192 = vpack.c.b16 %v2504, %v2488
      %v3193 = vpack.c.b16 %v2505, %v2489
      %v3194 = vpack.c.b16 %v2506, %v2490
      %v3195 = vpack.c.b16 %v2507, %v2491
      %v3196 = vpack.c.b16 %v2508, %v2492
      %v3197 = vpack.c.b16 %v2509, %v2493
      %v3198 = vpack.c.b16 %v2526, %v2510
      %v3199 = vpack.c.b16 %v2527, %v2511
      %v3200 = vpack.c.b16 %v2528, %v2512
      %v3201 = vpack.c.b16 %v2529, %v2513
      %v3202 = vpack.c.b16 %v2530, %v2514
      %v3203 = vpack.c.b16 %v2531, %v2515
      %v3204 = vpack.c.b16 %v2532, %v2516
      %v3205 = vpack.c.b16 %v2533, %v2517
      %v3206 = vpack.c.b16 %v2534, %v2518
      %v3207 = vpack.c.b16 %v2535, %v2519
      %v3208 = vpack.c.b16 %v2536, %v2520
      %v3209 = vpack.c.b16 %v2537, %v2521
      %v3210 = vpack.c.b16 %v2538, %v2522
      %v3211 = vpack.c.b16 %v2539, %v2523
      %v3212 = vpack.c.b16 %v2540, %v2524
      %v3213 = vpack.c.b16 %v2541, %v2525
      %v3214 = vpack.c.b16 %v2558, %v2542
      %v3215 = vpack.c.b16 %v2559, %v2543
      %v3216 = vpack.c.b16 %v2560, %v2544
      %v3217 = vpack.c.b16 %v2561, %v2545
      %v3218 = vpack.c.b16 %v2562, %v2546
      %v3219 = vpack.c.b16 %v2563, %v2547
      %v3220 = vpack.c.b16 %v2564, %v2548
      %v3221 = vpack.c.b16 %v2565, %v2549
      %v3222 = vpack.c.b16 %v2566, %v2550
      %v3223 = vpack.c.b16 %v2567, %v2551
      %v3224 = vpack.c.b16 %v2568, %v2552
      %v3225 = vpack.c.b16 %v2569, %v2553
      %v3226 = vpack.c.b16 %v2570, %v2554
      %v3227 = vpack.c.b16 %v2571, %v2555
      %v3228 = vpack.c.b16 %v2572, %v2556
      %v3229 = vpack.c.b16 %v2573, %v2557
      %v3230 = vpack.c.b16 %v2590, %v2574
      %v3231 = vpack.c.b16 %v2591, %v2575
      %v3232 = vpack.c.b16 %v2592, %v2576
      %v3233 = vpack.c.b16 %v2593, %v2577
      %v3234 = vpack.c.b16 %v2594, %v2578
      %v3235 = vpack.c.b16 %v2595, %v2579
      %v3236 = vpack.c.b16 %v2596, %v2580
      %v3237 = vpack.c.b16 %v2597, %v2581
      %v3238 = vpack.c.b16 %v2598, %v2582
      %v3239 = vpack.c.b16 %v2599, %v2583
      %v3240 = vpack.c.b16 %v2600, %v2584
      %v3241 = vpack.c.b16 %v2601, %v2585
      %v3242 = vpack.c.b16 %v2602, %v2586
      %v3243 = vpack.c.b16 %v2603, %v2587
      %v3244 = vpack.c.b16 %v2604, %v2588
      %v3245 = vpack.c.b16 %v2605, %v2589
      %v3246 = vpack.c.b16 %v2622, %v2606
      %v3247 = vpack.c.b16 %v2623, %v2607
      %v3248 = vpack.c.b16 %v2624, %v2608
      %v3249 = vpack.c.b16 %v2625, %v2609
      %v3250 = vpack.c.b16 %v2626, %v2610
      %v3251 = vpack.c.b16 %v2627, %v2611
      %v3252 = vpack.c.b16 %v2628, %v2612
      %v3253 = vpack.c.b16 %v2629, %v2613
      %v3254 = vpack.c.b16 %v2630, %v2614
      %v3255 = vpack.c.b16 %v2631, %v2615
      %v3256 = vpack.c.b16 %v2632, %v2616
      %v3257 = vpack.c.b16 %v2633, %v2617
      %v3258 = vpack.c.b16 %v2634, %v2618
      %v3259 = vpack.c.b16 %v2635, %v2619
      %v3260 = vpack.c.b16 %v2636, %v2620
      %v3261 = vpack.c.b16 %v2637, %v2621
      %v3262 = vpack.c.b16 %v2654, %v2638
      %v3263 = vpack.c.b16 %v2655, %v2639
      %v3264 = vpack.c.b16 %v2656, %v2640
      %v3265 = vpack.c.b16 %v2657, %v2641
      %v3266 = vpack.c.b16 %v2658, %v2642
      %v3267 = vpack.c.b16 %v2659, %v2643
      %v3268 = vpack.c.b16 %v2660, %v2644
      %v3269 = vpack.c.b16 %v2661, %v2645
      %v3270 = vpack.c.b16 %v2662, %v2646
      %v3271 = vpack.c.b16 %v2663, %v2647
      %v3272 = vpack.c.b16 %v2664, %v2648
      %v3273 = vpack.c.b16 %v2665, %v2649
      %v3274 = vpack.c.b16 %v2666, %v2650
      %v3275 = vpack.c.b16 %v2667, %v2651
      %v3276 = vpack.c.b16 %v2668, %v2652
      %v3277 = vpack.c.b16 %v2669, %v2653
      %v3278 = vpack.c.b16 %v2686, %v2670
      %v3279 = vpack.c.b16 %v2687, %v2671
      %v3280 = vpack.c.b16 %v2688, %v2672
      %v3281 = vpack.c.b16 %v2689, %v2673
      %v3282 = vpack.c.b16 %v2690, %v2674
      %v3283 = vpack.c.b16 %v2691, %v2675
      %v3284 = vpack.c.b16 %v2692, %v2676
      %v3285 = vpack.c.b16 %v2693, %v2677
      %v3286 = vpack.c.b16 %v2694, %v2678
      %v3287 = vpack.c.b16 %v2695, %v2679
      %v3288 = vpack.c.b16 %v2696, %v2680
      %v3289 = vpack.c.b16 %v2697, %v2681
      %v3290 = vpack.c.b16 %v2698, %v2682
      %v3291 = vpack.c.b16 %v2699, %v2683
      %v3292 = vpack.c.b16 %v2700, %v2684
      %v3293 = vpack.c.b16 %v2701, %v2685
      %v3294 = vpack.c.b16 %v2718, %v2702
      %v3295 = vpack.c.b16 %v2719, %v2703
      %v3296 = vpack.c.b16 %v2720, %v2704
      %v3297 = vpack.c.b16 %v2721, %v2705
      %v3298 = vpack.c.b16 %v2722, %v2706
      %v3299 = vpack.c.b16 %v2723, %v2707
      %v3300 = vpack.c.b16 %v2724, %v2708
      %v3301 = vpack.c.b16 %v2725, %v2709
      %v3302 = vpack.c.b16 %v2726, %v2710
      %v3303 = vpack.c.b16 %v2727, %v2711
      %v3304 = vpack.c.b16 %v2728, %v2712
      %v3305 = vpack.c.b16 %v2729, %v2713
      %v3306 = vpack.c.b16 %v2730, %v2714
      %v3307 = vpack.c.b16 %v2731, %v2715
      %v3308 = vpack.c.b16 %v2732, %v2716
      %v3309 = vpack.c.b16 %v2733, %v2717
      %v3310 = vpack.c.b16 %v2750, %v2734
      %v3311 = vpack.c.b16 %v2751, %v2735
      %v3312 = vpack.c.b16 %v2752, %v2736
      %v3313 = vpack.c.b16 %v2753, %v2737
      %v3314 = vpack.c.b16 %v2754, %v2738
      %v3315 = vpack.c.b16 %v2755, %v2739
      %v3316 = vpack.c.b16 %v2756, %v2740
      %v3317 = vpack.c.b16 %v2757, %v2741
      %v3318 = vpack.c.b16 %v2758, %v2742
      %v3319 = vpack.c.b16 %v2759, %v2743
      %v3320 = vpack.c.b16 %v2760, %v2744
      %v3321 = vpack.c.b16 %v2761, %v2745
      %v3322 = vpack.c.b16 %v2762, %v2746
      %v3323 = vpack.c.b16 %v2763, %v2747
      %v3324 = vpack.c.b16 %v2764, %v2748
      %v3325 = vpack.c.b16 %v2765, %v2749
      %v3326 = vpack.c.b16 %v2782, %v2766
      %v3327 = vpack.c.b16 %v2783, %v2767
      %v3328 = vpack.c.b16 %v2784, %v2768
      %v3329 = vpack.c.b16 %v2785, %v2769
      %v3330 = vpack.c.b16 %v2786, %v2770
      %v3331 = vpack.c.b16 %v2787, %v2771
      %v3332 = vpack.c.b16 %v2788, %v2772
      %v3333 = vpack.c.b16 %v2789, %v2773
      %v3334 = vpack.c.b16 %v2790, %v2774
      %v3335 = vpack.c.b16 %v2791, %v2775
      %v3336 = vpack.c.b16 %v2792, %v2776
      %v3337 = vpack.c.b16 %v2793, %v2777
      %v3338 = vpack.c.b16 %v2794, %v2778
      %v3339 = vpack.c.b16 %v2795, %v2779
      %v3340 = vpack.c.b16 %v2796, %v2780
      %v3341 = vpack.c.b16 %v2797, %v2781
      %v3342 = vpack.c.b16 %v2814, %v2798
      %v3343 = vpack.c.b16 %v2815, %v2799
      %v3344 = vpack.c.b16 %v2816, %v2800
      %v3345 = vpack.c.b16 %v2817, %v2801
      %v3346 = vpack.c.b16 %v2818, %v2802
      %v3347 = vpack.c.b16 %v2819, %v2803
      %v3348 = vpack.c.b16 %v2820, %v2804
      %v3349 = vpack.c.b16 %v2821, %v2805
      %v3350 = vpack.c.b16 %v2822, %v2806
      %v3351 = vpack.c.b16 %v2823, %v2807
      %v3352 = vpack.c.b16 %v2824, %v2808
      %v3353 = vpack.c.b16 %v2825, %v2809
      %v3354 = vpack.c.b16 %v2826, %v2810
      %v3355 = vpack.c.b16 %v2827, %v2811
      %v3356 = vpack.c.b16 %v2828, %v2812
      %v3357 = vpack.c.b16 %v2829, %v2813
      %v3358 = vpack.c.b16 %v2846, %v2830
      %v3359 = vpack.c.b16 %v2847, %v2831
      %v3360 = vpack.c.b16 %v2848, %v2832
      %v3361 = vpack.c.b16 %v2849, %v2833
      %v3362 = vpack.c.b16 %v2850, %v2834
      %v3363 = vpack.c.b16 %v2851, %v2835
      %v3364 = vpack.c.b16 %v2852, %v2836
      %v3365 = vpack.c.b16 %v2853, %v2837
      %v3366 = vpack.c.b16 %v2854, %v2838
      %v3367 = vpack.c.b16 %v2855, %v2839
      %v3368 = vpack.c.b16 %v2856, %v2840
      %v3369 = vpack.c.b16 %v2857, %v2841
      %v3370 = vpack.c.b16 %v2858, %v2842
      %v3371 = vpack.c.b16 %v2859, %v2843
      %v3372 = vpack.c.b16 %v2860, %v2844
      %v3373 = vpack.c.b16 %v2861, %v2845
      %v4398 = vunpack.c.l.b16 %v792
      %v4399 = vunpack.c.h.b16 %v792
      %v4400 = vunpack.c.l.b16 %v793
      %v4401 = vunpack.c.h.b16 %v793
      %v4402 = vunpack.c.l.b16 %v794
      %v4403 = vunpack.c.h.b16 %v794
      %v4404 = vunpack.c.l.b16 %v795
      %v4405 = vunpack.c.h.b16 %v795
      %v4406 = vunpack.c.l.b16 %v796
      %v4407 = vunpack.c.h.b16 %v796
      %v4408 = vunpack.c.l.b16 %v797
      %v4409 = vunpack.c.h.b16 %v797
      %v4410 = vunpack.c.l.b16 %v798
      %v4411 = vunpack.c.h.b16 %v798
      %v4412 = vunpack.c.l.b16 %v799
      %v4413 = vunpack.c.h.b16 %v799
      %v4414 = vunpack.c.l.b16 %v800
      %v4415 = vunpack.c.h.b16 %v800
      %v4416 = vunpack.c.l.b16 %v801
      %v4417 = vunpack.c.h.b16 %v801
      %v4418 = vunpack.c.l.b16 %v802
      %v4419 = vunpack.c.h.b16 %v802
      %v4420 = vunpack.c.l.b16 %v803
      %v4421 = vunpack.c.h.b16 %v803
      %v4422 = vunpack.c.l.b16 %v804
      %v4423 = vunpack.c.h.b16 %v804
      %v4424 = vunpack.c.l.b16 %v805
      %v4425 = vunpack.c.h.b16 %v805
      %v4426 = vunpack.c.l.b16 %v806
      %v4427 = vunpack.c.h.b16 %v806
      %v4428 = vunpack.c.l.b16 %v807
      %v4429 = vunpack.c.h.b16 %v807
      %v4430 = vunpack.c.l.b16 %v808
      %v4431 = vunpack.c.h.b16 %v808
      %v4432 = vunpack.c.l.b16 %v809
      %v4433 = vunpack.c.h.b16 %v809
      %v4434 = vunpack.c.l.b16 %v810
      %v4435 = vunpack.c.h.b16 %v810
      %v4436 = vunpack.c.l.b16 %v811
      %v4437 = vunpack.c.h.b16 %v811
      %v4438 = vunpack.c.l.b16 %v812
      %v4439 = vunpack.c.h.b16 %v812
      %v4440 = vunpack.c.l.b16 %v813
      %v4441 = vunpack.c.h.b16 %v813
      %v4442 = vunpack.c.l.b16 %v814
      %v4443 = vunpack.c.h.b16 %v814
      %v4444 = vunpack.c.l.b16 %v815
      %v4445 = vunpack.c.h.b16 %v815
      %v4446 = vunpack.c.l.b16 %v816
      %v4447 = vunpack.c.h.b16 %v816
      %v4448 = vunpack.c.l.b16 %v817
      %v4449 = vunpack.c.h.b16 %v817
      %v4450 = vunpack.c.l.b16 %v818
      %v4451 = vunpack.c.h.b16 %v818
      %v4452 = vunpack.c.l.b16 %v819
      %v4453 = vunpack.c.h.b16 %v819
      %v4454 = vunpack.c.l.b16 %v820
      %v4455 = vunpack.c.h.b16 %v820
      %v4456 = vunpack.c.l.b16 %v821
      %v4457 = vunpack.c.h.b16 %v821
      %v4458 = vunpack.c.l.b16 %v822
      %v4459 = vunpack.c.h.b16 %v822
      %v4460 = vunpack.c.l.b16 %v823
      %v4461 = vunpack.c.h.b16 %v823
      %v4462 = vunpack.c.l.b16 %v824
      %v4463 = vunpack.c.h.b16 %v824
      %v4464 = vunpack.c.l.b16 %v825
      %v4465 = vunpack.c.h.b16 %v825
      %v4466 = vunpack.c.l.b16 %v826
      %v4467 = vunpack.c.h.b16 %v826
      %v4468 = vunpack.c.l.b16 %v827
      %v4469 = vunpack.c.h.b16 %v827
      %v4470 = vunpack.c.l.b16 %v828
      %v4471 = vunpack.c.h.b16 %v828
      %v4472 = vunpack.c.l.b16 %v829
      %v4473 = vunpack.c.h.b16 %v829
      %v4474 = vunpack.c.l.b16 %v830
      %v4475 = vunpack.c.h.b16 %v830
      %v4476 = vunpack.c.l.b16 %v831
      %v4477 = vunpack.c.h.b16 %v831
      %v4478 = vunpack.c.l.b16 %v832
      %v4479 = vunpack.c.h.b16 %v832
      %v4480 = vunpack.c.l.b16 %v833
      %v4481 = vunpack.c.h.b16 %v833
      %v4482 = vunpack.c.l.b16 %v834
      %v4483 = vunpack.c.h.b16 %v834
      %v4484 = vunpack.c.l.b16 %v835
      %v4485 = vunpack.c.h.b16 %v835
      %v4486 = vunpack.c.l.b16 %v836
      %v4487 = vunpack.c.h.b16 %v836
      %v4488 = vunpack.c.l.b16 %v837
      %v4489 = vunpack.c.h.b16 %v837
      %v4490 = vunpack.c.l.b16 %v838
      %v4491 = vunpack.c.h.b16 %v838
      %v4492 = vunpack.c.l.b16 %v839
      %v4493 = vunpack.c.h.b16 %v839
      %v4494 = vunpack.c.l.b16 %v840
      %v4495 = vunpack.c.h.b16 %v840
      %v4496 = vunpack.c.l.b16 %v841
      %v4497 = vunpack.c.h.b16 %v841
      %v4498 = vunpack.c.l.b16 %v842
      %v4499 = vunpack.c.h.b16 %v842
      %v4500 = vunpack.c.l.b16 %v843
      %v4501 = vunpack.c.h.b16 %v843
      %v4502 = vunpack.c.l.b16 %v844
      %v4503 = vunpack.c.h.b16 %v844
      %v4504 = vunpack.c.l.b16 %v845
      %v4505 = vunpack.c.h.b16 %v845
      %v4506 = vunpack.c.l.b16 %v846
      %v4507 = vunpack.c.h.b16 %v846
      %v4508 = vunpack.c.l.b16 %v847
      %v4509 = vunpack.c.h.b16 %v847
      %v4510 = vunpack.c.l.b16 %v848
      %v4511 = vunpack.c.h.b16 %v848
      %v4512 = vunpack.c.l.b16 %v849
      %v4513 = vunpack.c.h.b16 %v849
      %v4514 = vunpack.c.l.b16 %v850
      %v4515 = vunpack.c.h.b16 %v850
      %v4516 = vunpack.c.l.b16 %v851
      %v4517 = vunpack.c.h.b16 %v851
      %v4518 = vunpack.c.l.b16 %v852
      %v4519 = vunpack.c.h.b16 %v852
      %v4520 = vunpack.c.l.b16 %v853
      %v4521 = vunpack.c.h.b16 %v853
      %v4522 = vunpack.c.l.b16 %v854
      %v4523 = vunpack.c.h.b16 %v854
      %v4524 = vunpack.c.l.b16 %v855
      %v4525 = vunpack.c.h.b16 %v855
      %v4526 = vunpack.c.l.b16 %v856
      %v4527 = vunpack.c.h.b16 %v856
      %v4528 = vunpack.c.l.b16 %v857
      %v4529 = vunpack.c.h.b16 %v857
      %v4530 = vunpack.c.l.b16 %v858
      %v4531 = vunpack.c.h.b16 %v858
      %v4532 = vunpack.c.l.b16 %v859
      %v4533 = vunpack.c.h.b16 %v859
      %v4534 = vunpack.c.l.b16 %v860
      %v4535 = vunpack.c.h.b16 %v860
      %v4536 = vunpack.c.l.b16 %v861
      %v4537 = vunpack.c.h.b16 %v861
      %v4538 = vunpack.c.l.b16 %v862
      %v4539 = vunpack.c.h.b16 %v862
      %v4540 = vunpack.c.l.b16 %v863
      %v4541 = vunpack.c.h.b16 %v863
      %v4542 = vunpack.c.l.b16 %v864
      %v4543 = vunpack.c.h.b16 %v864
      %v4544 = vunpack.c.l.b16 %v865
      %v4545 = vunpack.c.h.b16 %v865
      %v4546 = vunpack.c.l.b16 %v866
      %v4547 = vunpack.c.h.b16 %v866
      %v4548 = vunpack.c.l.b16 %v867
      %v4549 = vunpack.c.h.b16 %v867
      %v4550 = vunpack.c.l.b16 %v868
      %v4551 = vunpack.c.h.b16 %v868
      %v4552 = vunpack.c.l.b16 %v869
      %v4553 = vunpack.c.h.b16 %v869
      %v4554 = vunpack.c.l.b16 %v870
      %v4555 = vunpack.c.h.b16 %v870
      %v4556 = vunpack.c.l.b16 %v871
      %v4557 = vunpack.c.h.b16 %v871
      %v4558 = vunpack.c.l.b16 %v872
      %v4559 = vunpack.c.h.b16 %v872
      %v4560 = vunpack.c.l.b16 %v873
      %v4561 = vunpack.c.h.b16 %v873
      %v4562 = vunpack.c.l.b16 %v874
      %v4563 = vunpack.c.h.b16 %v874
      %v4564 = vunpack.c.l.b16 %v875
      %v4565 = vunpack.c.h.b16 %v875
      %v4566 = vunpack.c.l.b16 %v876
      %v4567 = vunpack.c.h.b16 %v876
      %v4568 = vunpack.c.l.b16 %v877
      %v4569 = vunpack.c.h.b16 %v877
      %v4570 = vunpack.c.l.b16 %v878
      %v4571 = vunpack.c.h.b16 %v878
      %v4572 = vunpack.c.l.b16 %v879
      %v4573 = vunpack.c.h.b16 %v879
      %v4574 = vunpack.c.l.b16 %v880
      %v4575 = vunpack.c.h.b16 %v880
      %v4576 = vunpack.c.l.b16 %v881
      %v4577 = vunpack.c.h.b16 %v881
      %v4578 = vunpack.c.l.b16 %v882
      %v4579 = vunpack.c.h.b16 %v882
      %v4580 = vunpack.c.l.b16 %v883
      %v4581 = vunpack.c.h.b16 %v883
      %v4582 = vunpack.c.l.b16 %v884
      %v4583 = vunpack.c.h.b16 %v884
      %v4584 = vunpack.c.l.b16 %v885
      %v4585 = vunpack.c.h.b16 %v885
      %v4586 = vunpack.c.l.b16 %v886
      %v4587 = vunpack.c.h.b16 %v886
      %v4588 = vunpack.c.l.b16 %v887
      %v4589 = vunpack.c.h.b16 %v887
      %v4590 = vunpack.c.l.b16 %v888
      %v4591 = vunpack.c.h.b16 %v888
      %v4592 = vunpack.c.l.b16 %v889
      %v4593 = vunpack.c.h.b16 %v889
      %v4594 = vunpack.c.l.b16 %v890
      %v4595 = vunpack.c.h.b16 %v890
      %v4596 = vunpack.c.l.b16 %v891
      %v4597 = vunpack.c.h.b16 %v891
      %v4598 = vunpack.c.l.b16 %v892
      %v4599 = vunpack.c.h.b16 %v892
      %v4600 = vunpack.c.l.b16 %v893
      %v4601 = vunpack.c.h.b16 %v893
      %v4602 = vunpack.c.l.b16 %v894
      %v4603 = vunpack.c.h.b16 %v894
      %v4604 = vunpack.c.l.b16 %v895
      %v4605 = vunpack.c.h.b16 %v895
      %v4606 = vunpack.c.l.b16 %v896
      %v4607 = vunpack.c.h.b16 %v896
      %v4608 = vunpack.c.l.b16 %v897
      %v4609 = vunpack.c.h.b16 %v897
      %v4610 = vunpack.c.l.b16 %v898
      %v4611 = vunpack.c.h.b16 %v898
      %v4612 = vunpack.c.l.b16 %v899
      %v4613 = vunpack.c.h.b16 %v899
      %v4614 = vunpack.c.l.b16 %v900
      %v4615 = vunpack.c.h.b16 %v900
      %v4616 = vunpack.c.l.b16 %v901
      %v4617 = vunpack.c.h.b16 %v901
      %v4618 = vunpack.c.l.b16 %v902
      %v4619 = vunpack.c.h.b16 %v902
      %v4620 = vunpack.c.l.b16 %v903
      %v4621 = vunpack.c.h.b16 %v903
      %v4622 = vunpack.c.l.b16 %v904
      %v4623 = vunpack.c.h.b16 %v904
      %v4624 = vunpack.c.l.b16 %v905
      %v4625 = vunpack.c.h.b16 %v905
      %v4626 = vunpack.c.l.b16 %v906
      %v4627 = vunpack.c.h.b16 %v906
      %v4628 = vunpack.c.l.b16 %v907
      %v4629 = vunpack.c.h.b16 %v907
      %v4630 = vunpack.c.l.b16 %v908
      %v4631 = vunpack.c.h.b16 %v908
      %v4632 = vunpack.c.l.b16 %v909
      %v4633 = vunpack.c.h.b16 %v909
      %v4634 = vunpack.c.l.b16 %v910
      %v4635 = vunpack.c.h.b16 %v910
      %v4636 = vunpack.c.l.b16 %v911
      %v4637 = vunpack.c.h.b16 %v911
      %v4638 = vunpack.c.l.b16 %v912
      %v4639 = vunpack.c.h.b16 %v912
      %v4640 = vunpack.c.l.b16 %v913
      %v4641 = vunpack.c.h.b16 %v913
      %v4642 = vunpack.c.l.b16 %v914
      %v4643 = vunpack.c.h.b16 %v914
      %v4644 = vunpack.c.l.b16 %v915
      %v4645 = vunpack.c.h.b16 %v915
      %v4646 = vunpack.c.l.b16 %v916
      %v4647 = vunpack.c.h.b16 %v916
      %v4648 = vunpack.c.l.b16 %v917
      %v4649 = vunpack.c.h.b16 %v917
      %v4650 = vunpack.c.l.b16 %v918
      %v4651 = vunpack.c.h.b16 %v918
      %v4652 = vunpack.c.l.b16 %v919
      %v4653 = vunpack.c.h.b16 %v919
      %v4654 = vunpack.c.l.b16 %v920
      %v4655 = vunpack.c.h.b16 %v920
      %v4656 = vunpack.c.l.b16 %v921
      %v4657 = vunpack.c.h.b16 %v921
      %v4658 = vunpack.c.l.b16 %v922
      %v4659 = vunpack.c.h.b16 %v922
      %v4660 = vunpack.c.l.b16 %v923
      %v4661 = vunpack.c.h.b16 %v923
      %v4662 = vunpack.c.l.b16 %v924
      %v4663 = vunpack.c.h.b16 %v924
      %v4664 = vunpack.c.l.b16 %v925
      %v4665 = vunpack.c.h.b16 %v925
      %v4666 = vunpack.c.l.b16 %v926
      %v4667 = vunpack.c.h.b16 %v926
      %v4668 = vunpack.c.l.b16 %v927
      %v4669 = vunpack.c.h.b16 %v927
      %v4670 = vunpack.c.l.b16 %v928
      %v4671 = vunpack.c.h.b16 %v928
      %v4672 = vunpack.c.l.b16 %v929
      %v4673 = vunpack.c.h.b16 %v929
      %v4674 = vunpack.c.l.b16 %v930
      %v4675 = vunpack.c.h.b16 %v930
      %v4676 = vunpack.c.l.b16 %v931
      %v4677 = vunpack.c.h.b16 %v931
      %v4678 = vunpack.c.l.b16 %v932
      %v4679 = vunpack.c.h.b16 %v932
      %v4680 = vunpack.c.l.b16 %v933
      %v4681 = vunpack.c.h.b16 %v933
      %v4682 = vunpack.c.l.b16 %v934
      %v4683 = vunpack.c.h.b16 %v934
      %v4684 = vunpack.c.l.b16 %v935
      %v4685 = vunpack.c.h.b16 %v935
      %v4686 = vunpack.c.l.b16 %v936
      %v4687 = vunpack.c.h.b16 %v936
      %v4688 = vunpack.c.l.b16 %v937
      %v4689 = vunpack.c.h.b16 %v937
      %v4690 = vunpack.c.l.b16 %v938
      %v4691 = vunpack.c.h.b16 %v938
      %v4692 = vunpack.c.l.b16 %v939
      %v4693 = vunpack.c.h.b16 %v939
      %v4694 = vunpack.c.l.b16 %v940
      %v4695 = vunpack.c.h.b16 %v940
      %v4696 = vunpack.c.l.b16 %v941
      %v4697 = vunpack.c.h.b16 %v941
      %v4698 = vunpack.c.l.b16 %v942
      %v4699 = vunpack.c.h.b16 %v942
      %v4700 = vunpack.c.l.b16 %v943
      %v4701 = vunpack.c.h.b16 %v943
      %v4702 = vunpack.c.l.b16 %v944
      %v4703 = vunpack.c.h.b16 %v944
      %v4704 = vunpack.c.l.b16 %v945
      %v4705 = vunpack.c.h.b16 %v945
      %v4706 = vunpack.c.l.b16 %v946
      %v4707 = vunpack.c.h.b16 %v946
      %v4708 = vunpack.c.l.b16 %v947
      %v4709 = vunpack.c.h.b16 %v947
      %v4710 = vunpack.c.l.b16 %v948
      %v4711 = vunpack.c.h.b16 %v948
      %v4712 = vunpack.c.l.b16 %v949
      %v4713 = vunpack.c.h.b16 %v949
      %v4714 = vunpack.c.l.b16 %v950
      %v4715 = vunpack.c.h.b16 %v950
      %v4716 = vunpack.c.l.b16 %v951
      %v4717 = vunpack.c.h.b16 %v951
      %v4718 = vunpack.c.l.b16 %v952
      %v4719 = vunpack.c.h.b16 %v952
      %v4720 = vunpack.c.l.b16 %v953
      %v4721 = vunpack.c.h.b16 %v953
      %v4722 = vunpack.c.l.b16 %v954
      %v4723 = vunpack.c.h.b16 %v954
      %v4724 = vunpack.c.l.b16 %v955
      %v4725 = vunpack.c.h.b16 %v955
      %v4726 = vunpack.c.l.b16 %v956
      %v4727 = vunpack.c.h.b16 %v956
      %v4728 = vunpack.c.l.b16 %v957
      %v4729 = vunpack.c.h.b16 %v957
      %v4730 = vunpack.c.l.b16 %v958
      %v4731 = vunpack.c.h.b16 %v958
      %v4732 = vunpack.c.l.b16 %v959
      %v4733 = vunpack.c.h.b16 %v959
      %v4734 = vunpack.c.l.b16 %v960
      %v4735 = vunpack.c.h.b16 %v960
      %v4736 = vunpack.c.l.b16 %v961
      %v4737 = vunpack.c.h.b16 %v961
      %v4738 = vunpack.c.l.b16 %v962
      %v4739 = vunpack.c.h.b16 %v962
      %v4740 = vunpack.c.l.b16 %v963
      %v4741 = vunpack.c.h.b16 %v963
      %v4742 = vunpack.c.l.b16 %v964
      %v4743 = vunpack.c.h.b16 %v964
      %v4744 = vunpack.c.l.b16 %v965
      %v4745 = vunpack.c.h.b16 %v965
      %v4746 = vunpack.c.l.b16 %v966
      %v4747 = vunpack.c.h.b16 %v966
      %v4748 = vunpack.c.l.b16 %v967
      %v4749 = vunpack.c.h.b16 %v967
      %v4750 = vunpack.c.l.b16 %v968
      %v4751 = vunpack.c.h.b16 %v968
      %v4752 = vunpack.c.l.b16 %v969
      %v4753 = vunpack.c.h.b16 %v969
      %v4754 = vunpack.c.l.b16 %v970
      %v4755 = vunpack.c.h.b16 %v970
      %v4756 = vunpack.c.l.b16 %v971
      %v4757 = vunpack.c.h.b16 %v971
      %v4758 = vunpack.c.l.b16 %v972
      %v4759 = vunpack.c.h.b16 %v972
      %v4760 = vunpack.c.l.b16 %v973
      %v4761 = vunpack.c.h.b16 %v973
      %v4762 = vunpack.c.l.b16 %v974
      %v4763 = vunpack.c.h.b16 %v974
      %v4764 = vunpack.c.l.b16 %v975
      %v4765 = vunpack.c.h.b16 %v975
      %v4766 = vunpack.c.l.b16 %v976
      %v4767 = vunpack.c.h.b16 %v976
      %v4768 = vunpack.c.l.b16 %v977
      %v4769 = vunpack.c.h.b16 %v977
      %v4770 = vunpack.c.l.b16 %v978
      %v4771 = vunpack.c.h.b16 %v978
      %v4772 = vunpack.c.l.b16 %v979
      %v4773 = vunpack.c.h.b16 %v979
      %v4774 = vunpack.c.l.b16 %v980
      %v4775 = vunpack.c.h.b16 %v980
      %v4776 = vunpack.c.l.b16 %v981
      %v4777 = vunpack.c.h.b16 %v981
      %v4778 = vunpack.c.l.b16 %v982
      %v4779 = vunpack.c.h.b16 %v982
      %v4780 = vunpack.c.l.b16 %v983
      %v4781 = vunpack.c.h.b16 %v983
      %v4782 = vunpack.c.l.b16 %v984
      %v4783 = vunpack.c.h.b16 %v984
      %v4784 = vunpack.c.l.b16 %v985
      %v4785 = vunpack.c.h.b16 %v985
      %v4786 = vunpack.c.l.b16 %v986
      %v4787 = vunpack.c.h.b16 %v986
      %v4788 = vunpack.c.l.b16 %v987
      %v4789 = vunpack.c.h.b16 %v987
      %v4790 = vunpack.c.l.b16 %v988
      %v4791 = vunpack.c.h.b16 %v988
      %v4792 = vunpack.c.l.b16 %v989
      %v4793 = vunpack.c.h.b16 %v989
      %v4794 = vunpack.c.l.b16 %v990
      %v4795 = vunpack.c.h.b16 %v990
      %v4796 = vunpack.c.l.b16 %v991
      %v4797 = vunpack.c.h.b16 %v991
      %v4798 = vunpack.c.l.b16 %v992
      %v4799 = vunpack.c.h.b16 %v992
      %v4800 = vunpack.c.l.b16 %v993
      %v4801 = vunpack.c.h.b16 %v993
      %v4802 = vunpack.c.l.b16 %v994
      %v4803 = vunpack.c.h.b16 %v994
      %v4804 = vunpack.c.l.b16 %v995
      %v4805 = vunpack.c.h.b16 %v995
      %v4806 = vunpack.c.l.b16 %v996
      %v4807 = vunpack.c.h.b16 %v996
      %v4808 = vunpack.c.l.b16 %v997
      %v4809 = vunpack.c.h.b16 %v997
      %v4810 = vunpack.c.l.b16 %v998
      %v4811 = vunpack.c.h.b16 %v998
      %v4812 = vunpack.c.l.b16 %v999
      %v4813 = vunpack.c.h.b16 %v999
      %v4814 = vunpack.c.l.b16 %v1000
      %v4815 = vunpack.c.h.b16 %v1000
      %v4816 = vunpack.c.l.b16 %v1001
      %v4817 = vunpack.c.h.b16 %v1001
      %v4818 = vunpack.c.l.b16 %v1002
      %v4819 = vunpack.c.h.b16 %v1002
      %v4820 = vunpack.c.l.b16 %v1003
      %v4821 = vunpack.c.h.b16 %v1003
      %v4822 = vunpack.c.l.b16 %v1004
      %v4823 = vunpack.c.h.b16 %v1004
      %v4824 = vunpack.c.l.b16 %v1005
      %v4825 = vunpack.c.h.b16 %v1005
      %v4826 = vunpack.c.l.b16 %v1006
      %v4827 = vunpack.c.h.b16 %v1006
      %v4828 = vunpack.c.l.b16 %v1007
      %v4829 = vunpack.c.h.b16 %v1007
      %v4830 = vunpack.c.l.b16 %v1008
      %v4831 = vunpack.c.h.b16 %v1008
      %v4832 = vunpack.c.l.b16 %v1009
      %v4833 = vunpack.c.h.b16 %v1009
      %v4834 = vunpack.c.l.b16 %v1010
      %v4835 = vunpack.c.h.b16 %v1010
      %v4836 = vunpack.c.l.b16 %v1011
      %v4837 = vunpack.c.h.b16 %v1011
      %v4838 = vunpack.c.l.b16 %v1012
      %v4839 = vunpack.c.h.b16 %v1012
      %v4840 = vunpack.c.l.b16 %v1013
      %v4841 = vunpack.c.h.b16 %v1013
      %v4842 = vunpack.c.l.b16 %v1014
      %v4843 = vunpack.c.h.b16 %v1014
      %v4844 = vunpack.c.l.b16 %v1015
      %v4845 = vunpack.c.h.b16 %v1015
      %v4846 = vunpack.c.l.b16 %v1016
      %v4847 = vunpack.c.h.b16 %v1016
      %v4848 = vunpack.c.l.b16 %v1017
      %v4849 = vunpack.c.h.b16 %v1017
      %v4850 = vunpack.c.l.b16 %v1018
      %v4851 = vunpack.c.h.b16 %v1018
      %v4852 = vunpack.c.l.b16 %v1019
      %v4853 = vunpack.c.h.b16 %v1019
      %v4854 = vunpack.c.l.b16 %v1020
      %v4855 = vunpack.c.h.b16 %v1020
      %v4856 = vunpack.c.l.b16 %v1021
      %v4857 = vunpack.c.h.b16 %v1021
      %v4858 = vunpack.c.l.b16 %v1022
      %v4859 = vunpack.c.h.b16 %v1022
      %v4860 = vunpack.c.l.b16 %v1023
      %v4861 = vunpack.c.h.b16 %v1023
      %v4862 = vunpack.c.l.b16 %v1024
      %v4863 = vunpack.c.h.b16 %v1024
      %v4864 = vunpack.c.l.b16 %v1025
      %v4865 = vunpack.c.h.b16 %v1025
      %v4866 = vunpack.c.l.b16 %v1026
      %v4867 = vunpack.c.h.b16 %v1026
      %v4868 = vunpack.c.l.b16 %v1027
      %v4869 = vunpack.c.h.b16 %v1027
      %v4870 = vunpack.c.l.b16 %v1028
      %v4871 = vunpack.c.h.b16 %v1028
      %v4872 = vunpack.c.l.b16 %v1029
      %v4873 = vunpack.c.h.b16 %v1029
      %v4874 = vunpack.c.l.b16 %v1030
      %v4875 = vunpack.c.h.b16 %v1030
      %v4876 = vunpack.c.l.b16 %v1031
      %v4877 = vunpack.c.h.b16 %v1031
      %v4878 = vunpack.c.l.b16 %v1032
      %v4879 = vunpack.c.h.b16 %v1032
      %v4880 = vunpack.c.l.b16 %v1033
      %v4881 = vunpack.c.h.b16 %v1033
      %v4882 = vunpack.c.l.b16 %v1034
      %v4883 = vunpack.c.h.b16 %v1034
      %v4884 = vunpack.c.l.b16 %v1035
      %v4885 = vunpack.c.h.b16 %v1035
      %v4886 = vunpack.c.l.b16 %v1036
      %v4887 = vunpack.c.h.b16 %v1036
      %v4888 = vunpack.c.l.b16 %v1037
      %v4889 = vunpack.c.h.b16 %v1037
      %v4890 = vunpack.c.l.b16 %v1038
      %v4891 = vunpack.c.h.b16 %v1038
      %v4892 = vunpack.c.l.b16 %v1039
      %v4893 = vunpack.c.h.b16 %v1039
      %v4894 = vunpack.c.l.b16 %v1040
      %v4895 = vunpack.c.h.b16 %v1040
      %v4896 = vunpack.c.l.b16 %v1041
      %v4897 = vunpack.c.h.b16 %v1041
      %v4898 = vunpack.c.l.b16 %v1042
      %v4899 = vunpack.c.h.b16 %v1042
      %v4900 = vunpack.c.l.b16 %v1043
      %v4901 = vunpack.c.h.b16 %v1043
      %v4902 = vunpack.c.l.b16 %v1044
      %v4903 = vunpack.c.h.b16 %v1044
      %v4904 = vunpack.c.l.b16 %v1045
      %v4905 = vunpack.c.h.b16 %v1045
      %v4906 = vunpack.c.l.b16 %v1046
      %v4907 = vunpack.c.h.b16 %v1046
      %v4908 = vunpack.c.l.b16 %v1047
      %v4909 = vunpack.c.h.b16 %v1047
      %v4910 = vunpack.c.l.b16 %v1048
      %v4911 = vunpack.c.h.b16 %v1048
      %v4912 = vunpack.c.l.b16 %v1049
      %v4913 = vunpack.c.h.b16 %v1049
      %v4914 = vunpack.c.l.b16 %v1050
      %v4915 = vunpack.c.h.b16 %v1050
      %v4916 = vunpack.c.l.b16 %v1051
      %v4917 = vunpack.c.h.b16 %v1051
      %v4918 = vunpack.c.l.b16 %v1052
      %v4919 = vunpack.c.h.b16 %v1052
      %v4920 = vunpack.c.l.b16 %v1053
      %v4921 = vunpack.c.h.b16 %v1053
      %v4922 = vunpack.c.l.b16 %v1054
      %v4923 = vunpack.c.h.b16 %v1054
      %v4924 = vunpack.c.l.b16 %v1055
      %v4925 = vunpack.c.h.b16 %v1055
      %v4926 = vunpack.c.l.b16 %v1056
      %v4927 = vunpack.c.h.b16 %v1056
      %v4928 = vunpack.c.l.b16 %v1057
      %v4929 = vunpack.c.h.b16 %v1057
      %v4930 = vunpack.c.l.b16 %v1058
      %v4931 = vunpack.c.h.b16 %v1058
      %v4932 = vunpack.c.l.b16 %v1059
      %v4933 = vunpack.c.h.b16 %v1059
      %v4934 = vunpack.c.l.b16 %v1060
      %v4935 = vunpack.c.h.b16 %v1060
      %v4936 = vunpack.c.l.b16 %v1061
      %v4937 = vunpack.c.h.b16 %v1061
      %v4938 = vunpack.c.l.b16 %v1062
      %v4939 = vunpack.c.h.b16 %v1062
      %v4940 = vunpack.c.l.b16 %v1063
      %v4941 = vunpack.c.h.b16 %v1063
      %v4942 = vunpack.c.l.b16 %v1064
      %v4943 = vunpack.c.h.b16 %v1064
      %v4944 = vunpack.c.l.b16 %v1065
      %v4945 = vunpack.c.h.b16 %v1065
      %v4946 = vunpack.c.l.b16 %v1066
      %v4947 = vunpack.c.h.b16 %v1066
      %v4948 = vunpack.c.l.b16 %v1067
      %v4949 = vunpack.c.h.b16 %v1067
      %v4950 = vunpack.c.l.b16 %v1068
      %v4951 = vunpack.c.h.b16 %v1068
      %v4952 = vunpack.c.l.b16 %v1069
      %v4953 = vunpack.c.h.b16 %v1069
      %v4954 = vunpack.c.l.b16 %v1070
      %v4955 = vunpack.c.h.b16 %v1070
      %v4956 = vunpack.c.l.b16 %v1071
      %v4957 = vunpack.c.h.b16 %v1071
      %v4958 = vunpack.c.l.b16 %v1072
      %v4959 = vunpack.c.h.b16 %v1072
      %v4960 = vunpack.c.l.b16 %v1073
      %v4961 = vunpack.c.h.b16 %v1073
      %v4962 = vunpack.c.l.b16 %v1074
      %v4963 = vunpack.c.h.b16 %v1074
      %v4964 = vunpack.c.l.b16 %v1075
      %v4965 = vunpack.c.h.b16 %v1075
      %v4966 = vunpack.c.l.b16 %v1076
      %v4967 = vunpack.c.h.b16 %v1076
      %v4968 = vunpack.c.l.b16 %v1077
      %v4969 = vunpack.c.h.b16 %v1077
      %v4970 = vunpack.c.l.b16 %v1078
      %v4971 = vunpack.c.h.b16 %v1078
      %v4972 = vunpack.c.l.b16 %v1079
      %v4973 = vunpack.c.h.b16 %v1079
      %v4974 = vunpack.c.l.b16 %v1080
      %v4975 = vunpack.c.h.b16 %v1080
      %v4976 = vunpack.c.l.b16 %v1081
      %v4977 = vunpack.c.h.b16 %v1081
      %v4978 = vunpack.c.l.b16 %v1082
      %v4979 = vunpack.c.h.b16 %v1082
      %v4980 = vunpack.c.l.b16 %v1083
      %v4981 = vunpack.c.h.b16 %v1083
      %v4982 = vunpack.c.l.b16 %v1084
      %v4983 = vunpack.c.h.b16 %v1084
      %v4984 = vunpack.c.l.b16 %v1085
      %v4985 = vunpack.c.h.b16 %v1085
      %v4986 = vunpack.c.l.b16 %v1086
      %v4987 = vunpack.c.h.b16 %v1086
      %v4988 = vunpack.c.l.b16 %v1087
      %v4989 = vunpack.c.h.b16 %v1087
      %v4990 = vunpack.c.l.b16 %v1088
      %v4991 = vunpack.c.h.b16 %v1088
      %v4992 = vunpack.c.l.b16 %v1089
      %v4993 = vunpack.c.h.b16 %v1089
      %v4994 = vunpack.c.l.b16 %v1090
      %v4995 = vunpack.c.h.b16 %v1090
      %v4996 = vunpack.c.l.b16 %v1091
      %v4997 = vunpack.c.h.b16 %v1091
      %v4998 = vunpack.c.l.b16 %v1092
      %v4999 = vunpack.c.h.b16 %v1092
      %v5000 = vunpack.c.l.b16 %v1093
      %v5001 = vunpack.c.h.b16 %v1093
      %v5002 = vunpack.c.l.b16 %v1094
      %v5003 = vunpack.c.h.b16 %v1094
      %v5004 = vunpack.c.l.b16 %v1095
      %v5005 = vunpack.c.h.b16 %v1095
      %v5006 = vunpack.c.l.b16 %v1096
      %v5007 = vunpack.c.h.b16 %v1096
      %v5008 = vunpack.c.l.b16 %v1097
      %v5009 = vunpack.c.h.b16 %v1097
      %v5010 = vunpack.c.l.b16 %v1098
      %v5011 = vunpack.c.h.b16 %v1098
      %v5012 = vunpack.c.l.b16 %v1099
      %v5013 = vunpack.c.h.b16 %v1099
      %v5014 = vunpack.c.l.b16 %v1100
      %v5015 = vunpack.c.h.b16 %v1100
      %v5016 = vunpack.c.l.b16 %v1101
      %v5017 = vunpack.c.h.b16 %v1101
      %v5018 = vunpack.c.l.b16 %v1102
      %v5019 = vunpack.c.h.b16 %v1102
      %v5020 = vunpack.c.l.b16 %v1103
      %v5021 = vunpack.c.h.b16 %v1103
      %v5022 = vunpack.c.l.b16 %v1104
      %v5023 = vunpack.c.h.b16 %v1104
      %v5024 = vunpack.c.l.b16 %v1105
      %v5025 = vunpack.c.h.b16 %v1105
      %v5026 = vunpack.c.l.b16 %v1106
      %v5027 = vunpack.c.h.b16 %v1106
      %v5028 = vunpack.c.l.b16 %v1107
      %v5029 = vunpack.c.h.b16 %v1107
      %v5030 = vunpack.c.l.b16 %v1108
      %v5031 = vunpack.c.h.b16 %v1108
      %v5032 = vunpack.c.l.b16 %v1109
      %v5033 = vunpack.c.h.b16 %v1109
      %v5034 = vunpack.c.l.b16 %v1110
      %v5035 = vunpack.c.h.b16 %v1110
      %v5036 = vunpack.c.l.b16 %v1111
      %v5037 = vunpack.c.h.b16 %v1111
      %v5038 = vunpack.c.l.b16 %v1112
      %v5039 = vunpack.c.h.b16 %v1112
      %v5040 = vunpack.c.l.b16 %v1113
      %v5041 = vunpack.c.h.b16 %v1113
      %v5042 = vunpack.c.l.b16 %v1114
      %v5043 = vunpack.c.h.b16 %v1114
      %v5044 = vunpack.c.l.b16 %v1115
      %v5045 = vunpack.c.h.b16 %v1115
      %v5046 = vunpack.c.l.b16 %v1116
      %v5047 = vunpack.c.h.b16 %v1116
      %v5048 = vunpack.c.l.b16 %v1117
      %v5049 = vunpack.c.h.b16 %v1117
      %v5050 = vunpack.c.l.b16 %v1118
      %v5051 = vunpack.c.h.b16 %v1118
      %v5052 = vunpack.c.l.b16 %v1119
      %v5053 = vunpack.c.h.b16 %v1119
      %v5054 = vunpack.c.l.b16 %v1120
      %v5055 = vunpack.c.h.b16 %v1120
      %v5056 = vunpack.c.l.b16 %v1121
      %v5057 = vunpack.c.h.b16 %v1121
      %v5058 = vunpack.c.l.b16 %v1122
      %v5059 = vunpack.c.h.b16 %v1122
      %v5060 = vunpack.c.l.b16 %v1123
      %v5061 = vunpack.c.h.b16 %v1123
      %v5062 = vunpack.c.l.b16 %v1124
      %v5063 = vunpack.c.h.b16 %v1124
      %v5064 = vunpack.c.l.b16 %v1125
      %v5065 = vunpack.c.h.b16 %v1125
      %v5066 = vunpack.c.l.b16 %v1126
      %v5067 = vunpack.c.h.b16 %v1126
      %v5068 = vunpack.c.l.b16 %v1127
      %v5069 = vunpack.c.h.b16 %v1127
      %v5070 = vunpack.c.l.b16 %v1128
      %v5071 = vunpack.c.h.b16 %v1128
      %v5072 = vunpack.c.l.b16 %v1129
      %v5073 = vunpack.c.h.b16 %v1129
      %v5074 = vunpack.c.l.b16 %v1130
      %v5075 = vunpack.c.h.b16 %v1130
      %v5076 = vunpack.c.l.b16 %v1131
      %v5077 = vunpack.c.h.b16 %v1131
      %v5078 = vunpack.c.l.b16 %v1132
      %v5079 = vunpack.c.h.b16 %v1132
      %v5080 = vunpack.c.l.b16 %v1133
      %v5081 = vunpack.c.h.b16 %v1133
      %v5082 = vunpack.c.l.b16 %v1134
      %v5083 = vunpack.c.h.b16 %v1134
      %v5084 = vunpack.c.l.b16 %v1135
      %v5085 = vunpack.c.h.b16 %v1135
      %v5086 = vunpack.c.l.b16 %v1136
      %v5087 = vunpack.c.h.b16 %v1136
      %v5088 = vunpack.c.l.b16 %v1137
      %v5089 = vunpack.c.h.b16 %v1137
      %v5090 = vunpack.c.l.b16 %v1138
      %v5091 = vunpack.c.h.b16 %v1138
      %v5092 = vunpack.c.l.b16 %v1139
      %v5093 = vunpack.c.h.b16 %v1139
      %v5094 = vunpack.c.l.b16 %v1140
      %v5095 = vunpack.c.h.b16 %v1140
      %v5096 = vunpack.c.l.b16 %v1141
      %v5097 = vunpack.c.h.b16 %v1141
      %v5098 = vunpack.c.l.b16 %v1142
      %v5099 = vunpack.c.h.b16 %v1142
      %v5100 = vunpack.c.l.b16 %v1143
      %v5101 = vunpack.c.h.b16 %v1143
      %v5102 = vunpack.c.l.b16 %v1144
      %v5103 = vunpack.c.h.b16 %v1144
      %v5104 = vunpack.c.l.b16 %v1145
      %v5105 = vunpack.c.h.b16 %v1145
      %v5106 = vunpack.c.l.b16 %v1146
      %v5107 = vunpack.c.h.b16 %v1146
      %v5108 = vunpack.c.l.b16 %v1147
      %v5109 = vunpack.c.h.b16 %v1147
      %v5110 = vunpack.c.l.b16 %v1148
      %v5111 = vunpack.c.h.b16 %v1148
      %v5112 = vunpack.c.l.b16 %v1149
      %v5113 = vunpack.c.h.b16 %v1149
      %v5114 = vunpack.c.l.b16 %v1150
      %v5115 = vunpack.c.h.b16 %v1150
      %v5116 = vunpack.c.l.b16 %v1151
      %v5117 = vunpack.c.h.b16 %v1151
      %v5118 = vunpack.c.l.b16 %v1152
      %v5119 = vunpack.c.h.b16 %v1152
      %v5120 = vunpack.c.l.b16 %v1153
      %v5121 = vunpack.c.h.b16 %v1153
      %v5122 = vunpack.c.l.b16 %v1154
      %v5123 = vunpack.c.h.b16 %v1154
      %v5124 = vunpack.c.l.b16 %v1155
      %v5125 = vunpack.c.h.b16 %v1155
      %v5126 = vunpack.c.l.b16 %v1156
      %v5127 = vunpack.c.h.b16 %v1156
      %v5128 = vunpack.c.l.b16 %v1157
      %v5129 = vunpack.c.h.b16 %v1157
      %v5130 = vunpack.c.l.b16 %v1158
      %v5131 = vunpack.c.h.b16 %v1158
      %v5132 = vunpack.c.l.b16 %v1159
      %v5133 = vunpack.c.h.b16 %v1159
      %v5134 = vunpack.c.l.b16 %v1160
      %v5135 = vunpack.c.h.b16 %v1160
      %v5136 = vunpack.c.l.b16 %v1161
      %v5137 = vunpack.c.h.b16 %v1161
      %v5138 = vunpack.c.l.b16 %v1162
      %v5139 = vunpack.c.h.b16 %v1162
      %v5140 = vunpack.c.l.b16 %v1163
      %v5141 = vunpack.c.h.b16 %v1163
      %v5142 = vunpack.c.l.b16 %v1164
      %v5143 = vunpack.c.h.b16 %v1164
      %v5144 = vunpack.c.l.b16 %v1165
      %v5145 = vunpack.c.h.b16 %v1165
      %v5146 = vunpack.c.l.b16 %v1166
      %v5147 = vunpack.c.h.b16 %v1166
      %v5148 = vunpack.c.l.b16 %v1167
      %v5149 = vunpack.c.h.b16 %v1167
      %v5150 = vunpack.c.l.b16 %v1168
      %v5151 = vunpack.c.h.b16 %v1168
      %v5152 = vunpack.c.l.b16 %v1169
      %v5153 = vunpack.c.h.b16 %v1169
      %v5154 = vunpack.c.l.b16 %v1170
      %v5155 = vunpack.c.h.b16 %v1170
      %v5156 = vunpack.c.l.b16 %v1171
      %v5157 = vunpack.c.h.b16 %v1171
      %v5158 = vunpack.c.l.b16 %v1172
      %v5159 = vunpack.c.h.b16 %v1172
      %v5160 = vunpack.c.l.b16 %v1173
      %v5161 = vunpack.c.h.b16 %v1173
      %v5162 = vunpack.c.l.b16 %v1174
      %v5163 = vunpack.c.h.b16 %v1174
      %v5164 = vunpack.c.l.b16 %v1175
      %v5165 = vunpack.c.h.b16 %v1175
      %v5166 = vunpack.c.l.b16 %v1176
      %v5167 = vunpack.c.h.b16 %v1176
      %v5168 = vunpack.c.l.b16 %v1177
      %v5169 = vunpack.c.h.b16 %v1177
      %v5170 = vunpack.c.l.b16 %v1178
      %v5171 = vunpack.c.h.b16 %v1178
      %v5172 = vunpack.c.l.b16 %v1179
      %v5173 = vunpack.c.h.b16 %v1179
      %v5174 = vunpack.c.l.b16 %v1180
      %v5175 = vunpack.c.h.b16 %v1180
      %v5176 = vunpack.c.l.b16 %v1181
      %v5177 = vunpack.c.h.b16 %v1181
      %v5178 = vunpack.c.l.b16 %v1182
      %v5179 = vunpack.c.h.b16 %v1182
      %v5180 = vunpack.c.l.b16 %v1183
      %v5181 = vunpack.c.h.b16 %v1183
      %v5182 = vunpack.c.l.b16 %v1184
      %v5183 = vunpack.c.h.b16 %v1184
      %v5184 = vunpack.c.l.b16 %v1185
      %v5185 = vunpack.c.h.b16 %v1185
      %v5186 = vunpack.c.l.b16 %v1186
      %v5187 = vunpack.c.h.b16 %v1186
      %v5188 = vunpack.c.l.b16 %v1187
      %v5189 = vunpack.c.h.b16 %v1187
      %v5190 = vunpack.c.l.b16 %v1188
      %v5191 = vunpack.c.h.b16 %v1188
      %v5192 = vunpack.c.l.b16 %v1189
      %v5193 = vunpack.c.h.b16 %v1189
      %v5194 = vunpack.c.l.b16 %v1190
      %v5195 = vunpack.c.h.b16 %v1190
      %v5196 = vunpack.c.l.b16 %v1191
      %v5197 = vunpack.c.h.b16 %v1191
      %v5198 = vunpack.c.l.b16 %v1192
      %v5199 = vunpack.c.h.b16 %v1192
      %v5200 = vunpack.c.l.b16 %v1193
      %v5201 = vunpack.c.h.b16 %v1193
      %v5202 = vunpack.c.l.b16 %v1194
      %v5203 = vunpack.c.h.b16 %v1194
      %v5204 = vunpack.c.l.b16 %v1195
      %v5205 = vunpack.c.h.b16 %v1195
      %v5206 = vunpack.c.l.b16 %v1196
      %v5207 = vunpack.c.h.b16 %v1196
      %v5208 = vunpack.c.l.b16 %v1197
      %v5209 = vunpack.c.h.b16 %v1197
      %v5210 = vunpack.c.l.b16 %v1198
      %v5211 = vunpack.c.h.b16 %v1198
      %v5212 = vunpack.c.l.b16 %v1199
      %v5213 = vunpack.c.h.b16 %v1199
      %v5214 = vunpack.c.l.b16 %v1200
      %v5215 = vunpack.c.h.b16 %v1200
      %v5216 = vunpack.c.l.b16 %v1201
      %v5217 = vunpack.c.h.b16 %v1201
      %v5218 = vunpack.c.l.b16 %v1202
      %v5219 = vunpack.c.h.b16 %v1202
      %v5220 = vunpack.c.l.b16 %v1203
      %v5221 = vunpack.c.h.b16 %v1203
      %v5222 = vunpack.c.l.b16 %v1204
      %v5223 = vunpack.c.h.b16 %v1204
      %v5224 = vunpack.c.l.b16 %v1205
      %v5225 = vunpack.c.h.b16 %v1205
      %v5226 = vunpack.c.l.b16 %v1206
      %v5227 = vunpack.c.h.b16 %v1206
      %v5228 = vunpack.c.l.b16 %v1207
      %v5229 = vunpack.c.h.b16 %v1207
      %v5230 = vunpack.c.l.b16 %v1208
      %v5231 = vunpack.c.h.b16 %v1208
      %v5232 = vunpack.c.l.b16 %v1209
      %v5233 = vunpack.c.h.b16 %v1209
      %v5234 = vunpack.c.l.b16 %v1210
      %v5235 = vunpack.c.h.b16 %v1210
      %v5236 = vunpack.c.l.b16 %v1211
      %v5237 = vunpack.c.h.b16 %v1211
      %v5238 = vunpack.c.l.b16 %v1212
      %v5239 = vunpack.c.h.b16 %v1212
      %v5240 = vunpack.c.l.b16 %v1213
      %v5241 = vunpack.c.h.b16 %v1213
      %v5242 = vunpack.c.l.b16 %v1214
      %v5243 = vunpack.c.h.b16 %v1214
      %v5244 = vunpack.c.l.b16 %v1215
      %v5245 = vunpack.c.h.b16 %v1215
      %v5246 = vunpack.c.l.b16 %v1216
      %v5247 = vunpack.c.h.b16 %v1216
      %v5248 = vunpack.c.l.b16 %v1217
      %v5249 = vunpack.c.h.b16 %v1217
      %v5250 = vunpack.c.l.b16 %v1218
      %v5251 = vunpack.c.h.b16 %v1218
      %v5252 = vunpack.c.l.b16 %v1219
      %v5253 = vunpack.c.h.b16 %v1219
      %v5254 = vunpack.c.l.b16 %v1220
      %v5255 = vunpack.c.h.b16 %v1220
      %v5256 = vunpack.c.l.b16 %v1221
      %v5257 = vunpack.c.h.b16 %v1221
      %v5258 = vunpack.c.l.b16 %v1222
      %v5259 = vunpack.c.h.b16 %v1222
      %v5260 = vunpack.c.l.b16 %v1223
      %v5261 = vunpack.c.h.b16 %v1223
      %v5262 = vunpack.c.l.b16 %v1224
      %v5263 = vunpack.c.h.b16 %v1224
      %v5264 = vunpack.c.l.b16 %v1225
      %v5265 = vunpack.c.h.b16 %v1225
      %v5266 = vunpack.c.l.b16 %v1226
      %v5267 = vunpack.c.h.b16 %v1226
      %v5268 = vunpack.c.l.b16 %v1227
      %v5269 = vunpack.c.h.b16 %v1227
      %v5270 = vunpack.c.l.b16 %v1228
      %v5271 = vunpack.c.h.b16 %v1228
      %v5272 = vunpack.c.l.b16 %v1229
      %v5273 = vunpack.c.h.b16 %v1229
      %v5274 = vunpack.c.l.b16 %v1230
      %v5275 = vunpack.c.h.b16 %v1230
      %v5276 = vunpack.c.l.b16 %v1231
      %v5277 = vunpack.c.h.b16 %v1231
      %v5278 = vunpack.c.l.b16 %v1232
      %v5279 = vunpack.c.h.b16 %v1232
      %v5280 = vunpack.c.l.b16 %v1233
      %v5281 = vunpack.c.h.b16 %v1233
      %v5282 = vunpack.c.l.b16 %v1234
      %v5283 = vunpack.c.h.b16 %v1234
      %v5284 = vunpack.c.l.b16 %v1235
      %v5285 = vunpack.c.h.b16 %v1235
      %v5286 = vunpack.c.l.b16 %v1236
      %v5287 = vunpack.c.h.b16 %v1236
      %v5288 = vunpack.c.l.b16 %v1237
      %v5289 = vunpack.c.h.b16 %v1237
      %v5290 = vunpack.c.l.b16 %v1238
      %v5291 = vunpack.c.h.b16 %v1238
      %v5292 = vunpack.c.l.b16 %v1239
      %v5293 = vunpack.c.h.b16 %v1239
      %v5294 = vunpack.c.l.b16 %v1240
      %v5295 = vunpack.c.h.b16 %v1240
      %v5296 = vunpack.c.l.b16 %v1241
      %v5297 = vunpack.c.h.b16 %v1241
      %v5298 = vunpack.c.l.b16 %v1242
      %v5299 = vunpack.c.h.b16 %v1242
      %v5300 = vunpack.c.l.b16 %v1243
      %v5301 = vunpack.c.h.b16 %v1243
      %v5302 = vunpack.c.l.b16 %v1244
      %v5303 = vunpack.c.h.b16 %v1244
      %v5304 = vunpack.c.l.b16 %v1245
      %v5305 = vunpack.c.h.b16 %v1245
      %v5306 = vunpack.c.l.b16 %v1246
      %v5307 = vunpack.c.h.b16 %v1246
      %v5308 = vunpack.c.l.b16 %v1247
      %v5309 = vunpack.c.h.b16 %v1247
      %v5310 = vunpack.c.l.b16 %v1248
      %v5311 = vunpack.c.h.b16 %v1248
      %v5312 = vunpack.c.l.b16 %v1249
      %v5313 = vunpack.c.h.b16 %v1249
      %v5314 = vunpack.c.l.b16 %v1250
      %v5315 = vunpack.c.h.b16 %v1250
      %v5316 = vunpack.c.l.b16 %v1251
      %v5317 = vunpack.c.h.b16 %v1251
      %v5318 = vunpack.c.l.b16 %v1252
      %v5319 = vunpack.c.h.b16 %v1252
      %v5320 = vunpack.c.l.b16 %v1253
      %v5321 = vunpack.c.h.b16 %v1253
      %v5322 = vunpack.c.l.b16 %v1254
      %v5323 = vunpack.c.h.b16 %v1254
      %v5324 = vunpack.c.l.b16 %v1255
      %v5325 = vunpack.c.h.b16 %v1255
      %v5326 = vunpack.c.l.b16 %v1256
      %v5327 = vunpack.c.h.b16 %v1256
      %v5328 = vunpack.c.l.b16 %v1257
      %v5329 = vunpack.c.h.b16 %v1257
      %v5330 = vunpack.c.l.b16 %v1258
      %v5331 = vunpack.c.h.b16 %v1258
      %v5332 = vunpack.c.l.b16 %v1259
      %v5333 = vunpack.c.h.b16 %v1259
      %v5334 = vunpack.c.l.b16 %v1260
      %v5335 = vunpack.c.h.b16 %v1260
      %v5336 = vunpack.c.l.b16 %v1261
      %v5337 = vunpack.c.h.b16 %v1261
      %v5338 = vunpack.c.l.b16 %v1262
      %v5339 = vunpack.c.h.b16 %v1262
      %v5340 = vunpack.c.l.b16 %v1263
      %v5341 = vunpack.c.h.b16 %v1263
      %v5342 = vunpack.c.l.b16 %v1264
      %v5343 = vunpack.c.h.b16 %v1264
      %v5344 = vunpack.c.l.b16 %v1265
      %v5345 = vunpack.c.h.b16 %v1265
      %v5346 = vunpack.c.l.b16 %v1266
      %v5347 = vunpack.c.h.b16 %v1266
      %v5348 = vunpack.c.l.b16 %v1267
      %v5349 = vunpack.c.h.b16 %v1267
      %v5350 = vunpack.c.l.b16 %v1268
      %v5351 = vunpack.c.h.b16 %v1268
      %v5352 = vunpack.c.l.b16 %v1269
      %v5353 = vunpack.c.h.b16 %v1269
      %v5354 = vunpack.c.l.b16 %v1270
      %v5355 = vunpack.c.h.b16 %v1270
      %v5356 = vunpack.c.l.b16 %v1271
      %v5357 = vunpack.c.h.b16 %v1271
      %v5358 = vunpack.c.l.b16 %v1272
      %v5359 = vunpack.c.h.b16 %v1272
      %v5360 = vunpack.c.l.b16 %v1273
      %v5361 = vunpack.c.h.b16 %v1273
      %v5362 = vunpack.c.l.b16 %v1274
      %v5363 = vunpack.c.h.b16 %v1274
      %v5364 = vunpack.c.l.b16 %v1275
      %v5365 = vunpack.c.h.b16 %v1275
      %v5366 = vunpack.c.l.b16 %v1276
      %v5367 = vunpack.c.h.b16 %v1276
      %v5368 = vunpack.c.l.b16 %v1277
      %v5369 = vunpack.c.h.b16 %v1277
      %v5370 = vunpack.c.l.b16 %v1278
      %v5371 = vunpack.c.h.b16 %v1278
      %v5372 = vunpack.c.l.b16 %v1279
      %v5373 = vunpack.c.h.b16 %v1279
      %v5374 = vunpack.c.l.b16 %v1280
      %v5375 = vunpack.c.h.b16 %v1280
      %v5376 = vunpack.c.l.b16 %v1281
      %v5377 = vunpack.c.h.b16 %v1281
      %v5378 = vunpack.c.l.b16 %v1282
      %v5379 = vunpack.c.h.b16 %v1282
      %v5380 = vunpack.c.l.b16 %v1283
      %v5381 = vunpack.c.h.b16 %v1283
      %v5382 = vunpack.c.l.b16 %v1284
      %v5383 = vunpack.c.h.b16 %v1284
      %v5384 = vunpack.c.l.b16 %v1285
      %v5385 = vunpack.c.h.b16 %v1285
      %v5386 = vunpack.c.l.b16 %v1286
      %v5387 = vunpack.c.h.b16 %v1286
      %v5388 = vunpack.c.l.b16 %v1287
      %v5389 = vunpack.c.h.b16 %v1287
      %v5390 = vunpack.c.l.b16 %v1288
      %v5391 = vunpack.c.h.b16 %v1288
      %v5392 = vunpack.c.l.b16 %v1289
      %v5393 = vunpack.c.h.b16 %v1289
      %v5394 = vunpack.c.l.b16 %v1290
      %v5395 = vunpack.c.h.b16 %v1290
      %v5396 = vunpack.c.l.b16 %v1291
      %v5397 = vunpack.c.h.b16 %v1291
      %v5398 = vunpack.c.l.b16 %v1292
      %v5399 = vunpack.c.h.b16 %v1292
      %v5400 = vunpack.c.l.b16 %v1293
      %v5401 = vunpack.c.h.b16 %v1293
      %v5402 = vunpack.c.l.b16 %v1294
      %v5403 = vunpack.c.h.b16 %v1294
      %v5404 = vunpack.c.l.b16 %v1295
      %v5405 = vunpack.c.h.b16 %v1295
      %v5406 = vunpack.c.l.b16 %v1296
      %v5407 = vunpack.c.h.b16 %v1296
      %v5408 = vunpack.c.l.b16 %v1297
      %v5409 = vunpack.c.h.b16 %v1297
      %v5410 = vunpack.c.l.b16 %v1298
      %v5411 = vunpack.c.h.b16 %v1298
      %v5412 = vunpack.c.l.b16 %v1299
      %v5413 = vunpack.c.h.b16 %v1299
      %v5414 = vunpack.c.l.b16 %v1300
      %v5415 = vunpack.c.h.b16 %v1300
      %v5416 = vunpack.c.l.b16 %v1301
      %v5417 = vunpack.c.h.b16 %v1301
      %v5418 = vunpack.c.l.b16 %v1302
      %v5419 = vunpack.c.h.b16 %v1302
      %v5420 = vunpack.c.l.b16 %v1303
      %v5421 = vunpack.c.h.b16 %v1303
      %v5422 = vpack.c.b16 %v4402, %v4398
      %v5423 = vpack.c.b16 %v4403, %v4399
      %v5424 = vpack.c.b16 %v4404, %v4400
      %v5425 = vpack.c.b16 %v4405, %v4401
      %v5426 = vpack.c.b16 %v4410, %v4406
      %v5427 = vpack.c.b16 %v4411, %v4407
      %v5428 = vpack.c.b16 %v4412, %v4408
      %v5429 = vpack.c.b16 %v4413, %v4409
      %v5430 = vpack.c.b16 %v4418, %v4414
      %v5431 = vpack.c.b16 %v4419, %v4415
      %v5432 = vpack.c.b16 %v4420, %v4416
      %v5433 = vpack.c.b16 %v4421, %v4417
      %v5434 = vpack.c.b16 %v4426, %v4422
      %v5435 = vpack.c.b16 %v4427, %v4423
      %v5436 = vpack.c.b16 %v4428, %v4424
      %v5437 = vpack.c.b16 %v4429, %v4425
      %v5438 = vpack.c.b16 %v4434, %v4430
      %v5439 = vpack.c.b16 %v4435, %v4431
      %v5440 = vpack.c.b16 %v4436, %v4432
      %v5441 = vpack.c.b16 %v4437, %v4433
      %v5442 = vpack.c.b16 %v4442, %v4438
      %v5443 = vpack.c.b16 %v4443, %v4439
      %v5444 = vpack.c.b16 %v4444, %v4440
      %v5445 = vpack.c.b16 %v4445, %v4441
      %v5446 = vpack.c.b16 %v4450, %v4446
      %v5447 = vpack.c.b16 %v4451, %v4447
      %v5448 = vpack.c.b16 %v4452, %v4448
      %v5449 = vpack.c.b16 %v4453, %v4449
      %v5450 = vpack.c.b16 %v4458, %v4454
      %v5451 = vpack.c.b16 %v4459, %v4455
      %v5452 = vpack.c.b16 %v4460, %v4456
      %v5453 = vpack.c.b16 %v4461, %v4457
      %v5454 = vpack.c.b16 %v4466, %v4462
      %v5455 = vpack.c.b16 %v4467, %v4463
      %v5456 = vpack.c.b16 %v4468, %v4464
      %v5457 = vpack.c.b16 %v4469, %v4465
      %v5458 = vpack.c.b16 %v4474, %v4470
      %v5459 = vpack.c.b16 %v4475, %v4471
      %v5460 = vpack.c.b16 %v4476, %v4472
      %v5461 = vpack.c.b16 %v4477, %v4473
      %v5462 = vpack.c.b16 %v4482, %v4478
      %v5463 = vpack.c.b16 %v4483, %v4479
      %v5464 = vpack.c.b16 %v4484, %v4480
      %v5465 = vpack.c.b16 %v4485, %v4481
      %v5466 = vpack.c.b16 %v4490, %v4486
      %v5467 = vpack.c.b16 %v4491, %v4487
      %v5468 = vpack.c.b16 %v4492, %v4488
      %v5469 = vpack.c.b16 %v4493, %v4489
      %v5470 = vpack.c.b16 %v4498, %v4494
      %v5471 = vpack.c.b16 %v4499, %v4495
      %v5472 = vpack.c.b16 %v4500, %v4496
      %v5473 = vpack.c.b16 %v4501, %v4497
      %v5474 = vpack.c.b16 %v4506, %v4502
      %v5475 = vpack.c.b16 %v4507, %v4503
      %v5476 = vpack.c.b16 %v4508, %v4504
      %v5477 = vpack.c.b16 %v4509, %v4505
      %v5478 = vpack.c.b16 %v4514, %v4510
      %v5479 = vpack.c.b16 %v4515, %v4511
      %v5480 = vpack.c.b16 %v4516, %v4512
      %v5481 = vpack.c.b16 %v4517, %v4513
      %v5482 = vpack.c.b16 %v4522, %v4518
      %v5483 = vpack.c.b16 %v4523, %v4519
      %v5484 = vpack.c.b16 %v4524, %v4520
      %v5485 = vpack.c.b16 %v4525, %v4521
      %v5486 = vpack.c.b16 %v4530, %v4526
      %v5487 = vpack.c.b16 %v4531, %v4527
      %v5488 = vpack.c.b16 %v4532, %v4528
      %v5489 = vpack.c.b16 %v4533, %v4529
      %v5490 = vpack.c.b16 %v4538, %v4534
      %v5491 = vpack.c.b16 %v4539, %v4535
      %v5492 = vpack.c.b16 %v4540, %v4536
      %v5493 = vpack.c.b16 %v4541, %v4537
      %v5494 = vpack.c.b16 %v4546, %v4542
      %v5495 = vpack.c.b16 %v4547, %v4543
      %v5496 = vpack.c.b16 %v4548, %v4544
      %v5497 = vpack.c.b16 %v4549, %v4545
      %v5498 = vpack.c.b16 %v4554, %v4550
      %v5499 = vpack.c.b16 %v4555, %v4551
      %v5500 = vpack.c.b16 %v4556, %v4552
      %v5501 = vpack.c.b16 %v4557, %v4553
      %v5502 = vpack.c.b16 %v4562, %v4558
      %v5503 = vpack.c.b16 %v4563, %v4559
      %v5504 = vpack.c.b16 %v4564, %v4560
      %v5505 = vpack.c.b16 %v4565, %v4561
      %v5506 = vpack.c.b16 %v4570, %v4566
      %v5507 = vpack.c.b16 %v4571, %v4567
      %v5508 = vpack.c.b16 %v4572, %v4568
      %v5509 = vpack.c.b16 %v4573, %v4569
      %v5510 = vpack.c.b16 %v4578, %v4574
      %v5511 = vpack.c.b16 %v4579, %v4575
      %v5512 = vpack.c.b16 %v4580, %v4576
      %v5513 = vpack.c.b16 %v4581, %v4577
      %v5514 = vpack.c.b16 %v4586, %v4582
      %v5515 = vpack.c.b16 %v4587, %v4583
      %v5516 = vpack.c.b16 %v4588, %v4584
      %v5517 = vpack.c.b16 %v4589, %v4585
      %v5518 = vpack.c.b16 %v4594, %v4590
      %v5519 = vpack.c.b16 %v4595, %v4591
      %v5520 = vpack.c.b16 %v4596, %v4592
      %v5521 = vpack.c.b16 %v4597, %v4593
      %v5522 = vpack.c.b16 %v4602, %v4598
      %v5523 = vpack.c.b16 %v4603, %v4599
      %v5524 = vpack.c.b16 %v4604, %v4600
      %v5525 = vpack.c.b16 %v4605, %v4601
      %v5526 = vpack.c.b16 %v4610, %v4606
      %v5527 = vpack.c.b16 %v4611, %v4607
      %v5528 = vpack.c.b16 %v4612, %v4608
      %v5529 = vpack.c.b16 %v4613, %v4609
      %v5530 = vpack.c.b16 %v4618, %v4614
      %v5531 = vpack.c.b16 %v4619, %v4615
      %v5532 = vpack.c.b16 %v4620, %v4616
      %v5533 = vpack.c.b16 %v4621, %v4617
      %v5534 = vpack.c.b16 %v4626, %v4622
      %v5535 = vpack.c.b16 %v4627, %v4623
      %v5536 = vpack.c.b16 %v4628, %v4624
      %v5537 = vpack.c.b16 %v4629, %v4625
      %v5538 = vpack.c.b16 %v4634, %v4630
      %v5539 = vpack.c.b16 %v4635, %v4631
      %v5540 = vpack.c.b16 %v4636, %v4632
      %v5541 = vpack.c.b16 %v4637, %v4633
      %v5542 = vpack.c.b16 %v4642, %v4638
      %v5543 = vpack.c.b16 %v4643, %v4639
      %v5544 = vpack.c.b16 %v4644, %v4640
      %v5545 = vpack.c.b16 %v4645, %v4641
      %v5546 = vpack.c.b16 %v4650, %v4646
      %v5547 = vpack.c.b16 %v4651, %v4647
      %v5548 = vpack.c.b16 %v4652, %v4648
      %v5549 = vpack.c.b16 %v4653, %v4649
      %v5550 = vpack.c.b16 %v4658, %v4654
      %v5551 = vpack.c.b16 %v4659, %v4655
      %v5552 = vpack.c.b16 %v4660, %v4656
      %v5553 = vpack.c.b16 %v4661, %v4657
      %v5554 = vpack.c.b16 %v4666, %v4662
      %v5555 = vpack.c.b16 %v4667, %v4663
      %v5556 = vpack.c.b16 %v4668, %v4664
      %v5557 = vpack.c.b16 %v4669, %v4665
      %v5558 = vpack.c.b16 %v4674, %v4670
      %v5559 = vpack.c.b16 %v4675, %v4671
      %v5560 = vpack.c.b16 %v4676, %v4672
      %v5561 = vpack.c.b16 %v4677, %v4673
      %v5562 = vpack.c.b16 %v4682, %v4678
      %v5563 = vpack.c.b16 %v4683, %v4679
      %v5564 = vpack.c.b16 %v4684, %v4680
      %v5565 = vpack.c.b16 %v4685, %v4681
      %v5566 = vpack.c.b16 %v4690, %v4686
      %v5567 = vpack.c.b16 %v4691, %v4687
      %v5568 = vpack.c.b16 %v4692, %v4688
      %v5569 = vpack.c.b16 %v4693, %v4689
      %v5570 = vpack.c.b16 %v4698, %v4694
      %v5571 = vpack.c.b16 %v4699, %v4695
      %v5572 = vpack.c.b16 %v4700, %v4696
      %v5573 = vpack.c.b16 %v4701, %v4697
      %v5574 = vpack.c.b16 %v4706, %v4702
      %v5575 = vpack.c.b16 %v4707, %v4703
      %v5576 = vpack.c.b16 %v4708, %v4704
      %v5577 = vpack.c.b16 %v4709, %v4705
      %v5578 = vpack.c.b16 %v4714, %v4710
      %v5579 = vpack.c.b16 %v4715, %v4711
      %v5580 = vpack.c.b16 %v4716, %v4712
      %v5581 = vpack.c.b16 %v4717, %v4713
      %v5582 = vpack.c.b16 %v4722, %v4718
      %v5583 = vpack.c.b16 %v4723, %v4719
      %v5584 = vpack.c.b16 %v4724, %v4720
      %v5585 = vpack.c.b16 %v4725, %v4721
      %v5586 = vpack.c.b16 %v4730, %v4726
      %v5587 = vpack.c.b16 %v4731, %v4727
      %v5588 = vpack.c.b16 %v4732, %v4728
      %v5589 = vpack.c.b16 %v4733, %v4729
      %v5590 = vpack.c.b16 %v4738, %v4734
      %v5591 = vpack.c.b16 %v4739, %v4735
      %v5592 = vpack.c.b16 %v4740, %v4736
      %v5593 = vpack.c.b16 %v4741, %v4737
      %v5594 = vpack.c.b16 %v4746, %v4742
      %v5595 = vpack.c.b16 %v4747, %v4743
      %v5596 = vpack.c.b16 %v4748, %v4744
      %v5597 = vpack.c.b16 %v4749, %v4745
      %v5598 = vpack.c.b16 %v4754, %v4750
      %v5599 = vpack.c.b16 %v4755, %v4751
      %v5600 = vpack.c.b16 %v4756, %v4752
      %v5601 = vpack.c.b16 %v4757, %v4753
      %v5602 = vpack.c.b16 %v4762, %v4758
      %v5603 = vpack.c.b16 %v4763, %v4759
      %v5604 = vpack.c.b16 %v4764, %v4760
      %v5605 = vpack.c.b16 %v4765, %v4761
      %v5606 = vpack.c.b16 %v4770, %v4766
      %v5607 = vpack.c.b16 %v4771, %v4767
      %v5608 = vpack.c.b16 %v4772, %v4768
      %v5609 = vpack.c.b16 %v4773, %v4769
      %v5610 = vpack.c.b16 %v4778, %v4774
      %v5611 = vpack.c.b16 %v4779, %v4775
      %v5612 = vpack.c.b16 %v4780, %v4776
      %v5613 = vpack.c.b16 %v4781, %v4777
      %v5614 = vpack.c.b16 %v4786, %v4782
      %v5615 = vpack.c.b16 %v4787, %v4783
      %v5616 = vpack.c.b16 %v4788, %v4784
      %v5617 = vpack.c.b16 %v4789, %v4785
      %v5618 = vpack.c.b16 %v4794, %v4790
      %v5619 = vpack.c.b16 %v4795, %v4791
      %v5620 = vpack.c.b16 %v4796, %v4792
      %v5621 = vpack.c.b16 %v4797, %v4793
      %v5622 = vpack.c.b16 %v4802, %v4798
      %v5623 = vpack.c.b16 %v4803, %v4799
      %v5624 = vpack.c.b16 %v4804, %v4800
      %v5625 = vpack.c.b16 %v4805, %v4801
      %v5626 = vpack.c.b16 %v4810, %v4806
      %v5627 = vpack.c.b16 %v4811, %v4807
      %v5628 = vpack.c.b16 %v4812, %v4808
      %v5629 = vpack.c.b16 %v4813, %v4809
      %v5630 = vpack.c.b16 %v4818, %v4814
      %v5631 = vpack.c.b16 %v4819, %v4815
      %v5632 = vpack.c.b16 %v4820, %v4816
      %v5633 = vpack.c.b16 %v4821, %v4817
      %v5634 = vpack.c.b16 %v4826, %v4822
      %v5635 = vpack.c.b16 %v4827, %v4823
      %v5636 = vpack.c.b16 %v4828, %v4824
      %v5637 = vpack.c.b16 %v4829, %v4825
      %v5638 = vpack.c.b16 %v4834, %v4830
      %v5639 = vpack.c.b16 %v4835, %v4831
      %v5640 = vpack.c.b16 %v4836, %v4832
      %v5641 = vpack.c.b16 %v4837, %v4833
      %v5642 = vpack.c.b16 %v4842, %v4838
      %v5643 = vpack.c.b16 %v4843, %v4839
      %v5644 = vpack.c.b16 %v4844, %v4840
      %v5645 = vpack.c.b16 %v4845, %v4841
      %v5646 = vpack.c.b16 %v4850, %v4846
      %v5647 = vpack.c.b16 %v4851, %v4847
      %v5648 = vpack.c.b16 %v4852, %v4848
      %v5649 = vpack.c.b16 %v4853, %v4849
      %v5650 = vpack.c.b16 %v4858, %v4854
      %v5651 = vpack.c.b16 %v4859, %v4855
      %v5652 = vpack.c.b16 %v4860, %v4856
      %v5653 = vpack.c.b16 %v4861, %v4857
      %v5654 = vpack.c.b16 %v4866, %v4862
      %v5655 = vpack.c.b16 %v4867, %v4863
      %v5656 = vpack.c.b16 %v4868, %v4864
      %v5657 = vpack.c.b16 %v4869, %v4865
      %v5658 = vpack.c.b16 %v4874, %v4870
      %v5659 = vpack.c.b16 %v4875, %v4871
      %v5660 = vpack.c.b16 %v4876, %v4872
      %v5661 = vpack.c.b16 %v4877, %v4873
      %v5662 = vpack.c.b16 %v4882, %v4878
      %v5663 = vpack.c.b16 %v4883, %v4879
      %v5664 = vpack.c.b16 %v4884, %v4880
      %v5665 = vpack.c.b16 %v4885, %v4881
      %v5666 = vpack.c.b16 %v4890, %v4886
      %v5667 = vpack.c.b16 %v4891, %v4887
      %v5668 = vpack.c.b16 %v4892, %v4888
      %v5669 = vpack.c.b16 %v4893, %v4889
      %v5670 = vpack.c.b16 %v4898, %v4894
      %v5671 = vpack.c.b16 %v4899, %v4895
      %v5672 = vpack.c.b16 %v4900, %v4896
      %v5673 = vpack.c.b16 %v4901, %v4897
      %v5674 = vpack.c.b16 %v4906, %v4902
      %v5675 = vpack.c.b16 %v4907, %v4903
      %v5676 = vpack.c.b16 %v4908, %v4904
      %v5677 = vpack.c.b16 %v4909, %v4905
      %v5678 = vpack.c.b16 %v4914, %v4910
      %v5679 = vpack.c.b16 %v4915, %v4911
      %v5680 = vpack.c.b16 %v4916, %v4912
      %v5681 = vpack.c.b16 %v4917, %v4913
      %v5682 = vpack.c.b16 %v4922, %v4918
      %v5683 = vpack.c.b16 %v4923, %v4919
      %v5684 = vpack.c.b16 %v4924, %v4920
      %v5685 = vpack.c.b16 %v4925, %v4921
      %v5686 = vpack.c.b16 %v4930, %v4926
      %v5687 = vpack.c.b16 %v4931, %v4927
      %v5688 = vpack.c.b16 %v4932, %v4928
      %v5689 = vpack.c.b16 %v4933, %v4929
      %v5690 = vpack.c.b16 %v4938, %v4934
      %v5691 = vpack.c.b16 %v4939, %v4935
      %v5692 = vpack.c.b16 %v4940, %v4936
      %v5693 = vpack.c.b16 %v4941, %v4937
      %v5694 = vpack.c.b16 %v4946, %v4942
      %v5695 = vpack.c.b16 %v4947, %v4943
      %v5696 = vpack.c.b16 %v4948, %v4944
      %v5697 = vpack.c.b16 %v4949, %v4945
      %v5698 = vpack.c.b16 %v4954, %v4950
      %v5699 = vpack.c.b16 %v4955, %v4951
      %v5700 = vpack.c.b16 %v4956, %v4952
      %v5701 = vpack.c.b16 %v4957, %v4953
      %v5702 = vpack.c.b16 %v4962, %v4958
      %v5703 = vpack.c.b16 %v4963, %v4959
      %v5704 = vpack.c.b16 %v4964, %v4960
      %v5705 = vpack.c.b16 %v4965, %v4961
      %v5706 = vpack.c.b16 %v4970, %v4966
      %v5707 = vpack.c.b16 %v4971, %v4967
      %v5708 = vpack.c.b16 %v4972, %v4968
      %v5709 = vpack.c.b16 %v4973, %v4969
      %v5710 = vpack.c.b16 %v4978, %v4974
      %v5711 = vpack.c.b16 %v4979, %v4975
      %v5712 = vpack.c.b16 %v4980, %v4976
      %v5713 = vpack.c.b16 %v4981, %v4977
      %v5714 = vpack.c.b16 %v4986, %v4982
      %v5715 = vpack.c.b16 %v4987, %v4983
      %v5716 = vpack.c.b16 %v4988, %v4984
      %v5717 = vpack.c.b16 %v4989, %v4985
      %v5718 = vpack.c.b16 %v4994, %v4990
      %v5719 = vpack.c.b16 %v4995, %v4991
      %v5720 = vpack.c.b16 %v4996, %v4992
      %v5721 = vpack.c.b16 %v4997, %v4993
      %v5722 = vpack.c.b16 %v5002, %v4998
      %v5723 = vpack.c.b16 %v5003, %v4999
      %v5724 = vpack.c.b16 %v5004, %v5000
      %v5725 = vpack.c.b16 %v5005, %v5001
      %v5726 = vpack.c.b16 %v5010, %v5006
      %v5727 = vpack.c.b16 %v5011, %v5007
      %v5728 = vpack.c.b16 %v5012, %v5008
      %v5729 = vpack.c.b16 %v5013, %v5009
      %v5730 = vpack.c.b16 %v5018, %v5014
      %v5731 = vpack.c.b16 %v5019, %v5015
      %v5732 = vpack.c.b16 %v5020, %v5016
      %v5733 = vpack.c.b16 %v5021, %v5017
      %v5734 = vpack.c.b16 %v5026, %v5022
      %v5735 = vpack.c.b16 %v5027, %v5023
      %v5736 = vpack.c.b16 %v5028, %v5024
      %v5737 = vpack.c.b16 %v5029, %v5025
      %v5738 = vpack.c.b16 %v5034, %v5030
      %v5739 = vpack.c.b16 %v5035, %v5031
      %v5740 = vpack.c.b16 %v5036, %v5032
      %v5741 = vpack.c.b16 %v5037, %v5033
      %v5742 = vpack.c.b16 %v5042, %v5038
      %v5743 = vpack.c.b16 %v5043, %v5039
      %v5744 = vpack.c.b16 %v5044, %v5040
      %v5745 = vpack.c.b16 %v5045, %v5041
      %v5746 = vpack.c.b16 %v5050, %v5046
      %v5747 = vpack.c.b16 %v5051, %v5047
      %v5748 = vpack.c.b16 %v5052, %v5048
      %v5749 = vpack.c.b16 %v5053, %v5049
      %v5750 = vpack.c.b16 %v5058, %v5054
      %v5751 = vpack.c.b16 %v5059, %v5055
      %v5752 = vpack.c.b16 %v5060, %v5056
      %v5753 = vpack.c.b16 %v5061, %v5057
      %v5754 = vpack.c.b16 %v5066, %v5062
      %v5755 = vpack.c.b16 %v5067, %v5063
      %v5756 = vpack.c.b16 %v5068, %v5064
      %v5757 = vpack.c.b16 %v5069, %v5065
      %v5758 = vpack.c.b16 %v5074, %v5070
      %v5759 = vpack.c.b16 %v5075, %v5071
      %v5760 = vpack.c.b16 %v5076, %v5072
      %v5761 = vpack.c.b16 %v5077, %v5073
      %v5762 = vpack.c.b16 %v5082, %v5078
      %v5763 = vpack.c.b16 %v5083, %v5079
      %v5764 = vpack.c.b16 %v5084, %v5080
      %v5765 = vpack.c.b16 %v5085, %v5081
      %v5766 = vpack.c.b16 %v5090, %v5086
      %v5767 = vpack.c.b16 %v5091, %v5087
      %v5768 = vpack.c.b16 %v5092, %v5088
      %v5769 = vpack.c.b16 %v5093, %v5089
      %v5770 = vpack.c.b16 %v5098, %v5094
      %v5771 = vpack.c.b16 %v5099, %v5095
      %v5772 = vpack.c.b16 %v5100, %v5096
      %v5773 = vpack.c.b16 %v5101, %v5097
      %v5774 = vpack.c.b16 %v5106, %v5102
      %v5775 = vpack.c.b16 %v5107, %v5103
      %v5776 = vpack.c.b16 %v5108, %v5104
      %v5777 = vpack.c.b16 %v5109, %v5105
      %v5778 = vpack.c.b16 %v5114, %v5110
      %v5779 = vpack.c.b16 %v5115, %v5111
      %v5780 = vpack.c.b16 %v5116, %v5112
      %v5781 = vpack.c.b16 %v5117, %v5113
      %v5782 = vpack.c.b16 %v5122, %v5118
      %v5783 = vpack.c.b16 %v5123, %v5119
      %v5784 = vpack.c.b16 %v5124, %v5120
      %v5785 = vpack.c.b16 %v5125, %v5121
      %v5786 = vpack.c.b16 %v5130, %v5126
      %v5787 = vpack.c.b16 %v5131, %v5127
      %v5788 = vpack.c.b16 %v5132, %v5128
      %v5789 = vpack.c.b16 %v5133, %v5129
      %v5790 = vpack.c.b16 %v5138, %v5134
      %v5791 = vpack.c.b16 %v5139, %v5135
      %v5792 = vpack.c.b16 %v5140, %v5136
      %v5793 = vpack.c.b16 %v5141, %v5137
      %v5794 = vpack.c.b16 %v5146, %v5142
      %v5795 = vpack.c.b16 %v5147, %v5143
      %v5796 = vpack.c.b16 %v5148, %v5144
      %v5797 = vpack.c.b16 %v5149, %v5145
      %v5798 = vpack.c.b16 %v5154, %v5150
      %v5799 = vpack.c.b16 %v5155, %v5151
      %v5800 = vpack.c.b16 %v5156, %v5152
      %v5801 = vpack.c.b16 %v5157, %v5153
      %v5802 = vpack.c.b16 %v5162, %v5158
      %v5803 = vpack.c.b16 %v5163, %v5159
      %v5804 = vpack.c.b16 %v5164, %v5160
      %v5805 = vpack.c.b16 %v5165, %v5161
      %v5806 = vpack.c.b16 %v5170, %v5166
      %v5807 = vpack.c.b16 %v5171, %v5167
      %v5808 = vpack.c.b16 %v5172, %v5168
      %v5809 = vpack.c.b16 %v5173, %v5169
      %v5810 = vpack.c.b16 %v5178, %v5174
      %v5811 = vpack.c.b16 %v5179, %v5175
      %v5812 = vpack.c.b16 %v5180, %v5176
      %v5813 = vpack.c.b16 %v5181, %v5177
      %v5814 = vpack.c.b16 %v5186, %v5182
      %v5815 = vpack.c.b16 %v5187, %v5183
      %v5816 = vpack.c.b16 %v5188, %v5184
      %v5817 = vpack.c.b16 %v5189, %v5185
      %v5818 = vpack.c.b16 %v5194, %v5190
      %v5819 = vpack.c.b16 %v5195, %v5191
      %v5820 = vpack.c.b16 %v5196, %v5192
      %v5821 = vpack.c.b16 %v5197, %v5193
      %v5822 = vpack.c.b16 %v5202, %v5198
      %v5823 = vpack.c.b16 %v5203, %v5199
      %v5824 = vpack.c.b16 %v5204, %v5200
      %v5825 = vpack.c.b16 %v5205, %v5201
      %v5826 = vpack.c.b16 %v5210, %v5206
      %v5827 = vpack.c.b16 %v5211, %v5207
      %v5828 = vpack.c.b16 %v5212, %v5208
      %v5829 = vpack.c.b16 %v5213, %v5209
      %v5830 = vpack.c.b16 %v5218, %v5214
      %v5831 = vpack.c.b16 %v5219, %v5215
      %v5832 = vpack.c.b16 %v5220, %v5216
      %v5833 = vpack.c.b16 %v5221, %v5217
      %v5834 = vpack.c.b16 %v5226, %v5222
      %v5835 = vpack.c.b16 %v5227, %v5223
      %v5836 = vpack.c.b16 %v5228, %v5224
      %v5837 = vpack.c.b16 %v5229, %v5225
      %v5838 = vpack.c.b16 %v5234, %v5230
      %v5839 = vpack.c.b16 %v5235, %v5231
      %v5840 = vpack.c.b16 %v5236, %v5232
      %v5841 = vpack.c.b16 %v5237, %v5233
      %v5842 = vpack.c.b16 %v5242, %v5238
      %v5843 = vpack.c.b16 %v5243, %v5239
      %v5844 = vpack.c.b16 %v5244, %v5240
      %v5845 = vpack.c.b16 %v5245, %v5241
      %v5846 = vpack.c.b16 %v5250, %v5246
      %v5847 = vpack.c.b16 %v5251, %v5247
      %v5848 = vpack.c.b16 %v5252, %v5248
      %v5849 = vpack.c.b16 %v5253, %v5249
      %v5850 = vpack.c.b16 %v5258, %v5254
      %v5851 = vpack.c.b16 %v5259, %v5255
      %v5852 = vpack.c.b16 %v5260, %v5256
      %v5853 = vpack.c.b16 %v5261, %v5257
      %v5854 = vpack.c.b16 %v5266, %v5262
      %v5855 = vpack.c.b16 %v5267, %v5263
      %v5856 = vpack.c.b16 %v5268, %v5264
      %v5857 = vpack.c.b16 %v5269, %v5265
      %v5858 = vpack.c.b16 %v5274, %v5270
      %v5859 = vpack.c.b16 %v5275, %v5271
      %v5860 = vpack.c.b16 %v5276, %v5272
      %v5861 = vpack.c.b16 %v5277, %v5273
      %v5862 = vpack.c.b16 %v5282, %v5278
      %v5863 = vpack.c.b16 %v5283, %v5279
      %v5864 = vpack.c.b16 %v5284, %v5280
      %v5865 = vpack.c.b16 %v5285, %v5281
      %v5866 = vpack.c.b16 %v5290, %v5286
      %v5867 = vpack.c.b16 %v5291, %v5287
      %v5868 = vpack.c.b16 %v5292, %v5288
      %v5869 = vpack.c.b16 %v5293, %v5289
      %v5870 = vpack.c.b16 %v5298, %v5294
      %v5871 = vpack.c.b16 %v5299, %v5295
      %v5872 = vpack.c.b16 %v5300, %v5296
      %v5873 = vpack.c.b16 %v5301, %v5297
      %v5874 = vpack.c.b16 %v5306, %v5302
      %v5875 = vpack.c.b16 %v5307, %v5303
      %v5876 = vpack.c.b16 %v5308, %v5304
      %v5877 = vpack.c.b16 %v5309, %v5305
      %v5878 = vpack.c.b16 %v5314, %v5310
      %v5879 = vpack.c.b16 %v5315, %v5311
      %v5880 = vpack.c.b16 %v5316, %v5312
      %v5881 = vpack.c.b16 %v5317, %v5313
      %v5882 = vpack.c.b16 %v5322, %v5318
      %v5883 = vpack.c.b16 %v5323, %v5319
      %v5884 = vpack.c.b16 %v5324, %v5320
      %v5885 = vpack.c.b16 %v5325, %v5321
      %v5886 = vpack.c.b16 %v5330, %v5326
      %v5887 = vpack.c.b16 %v5331, %v5327
      %v5888 = vpack.c.b16 %v5332, %v5328
      %v5889 = vpack.c.b16 %v5333, %v5329
      %v5890 = vpack.c.b16 %v5338, %v5334
      %v5891 = vpack.c.b16 %v5339, %v5335
      %v5892 = vpack.c.b16 %v5340, %v5336
      %v5893 = vpack.c.b16 %v5341, %v5337
      %v5894 = vpack.c.b16 %v5346, %v5342
      %v5895 = vpack.c.b16 %v5347, %v5343
      %v5896 = vpack.c.b16 %v5348, %v5344
      %v5897 = vpack.c.b16 %v5349, %v5345
      %v5898 = vpack.c.b16 %v5354, %v5350
      %v5899 = vpack.c.b16 %v5355, %v5351
      %v5900 = vpack.c.b16 %v5356, %v5352
      %v5901 = vpack.c.b16 %v5357, %v5353
      %v5902 = vpack.c.b16 %v5362, %v5358
      %v5903 = vpack.c.b16 %v5363, %v5359
      %v5904 = vpack.c.b16 %v5364, %v5360
      %v5905 = vpack.c.b16 %v5365, %v5361
      %v5906 = vpack.c.b16 %v5370, %v5366
      %v5907 = vpack.c.b16 %v5371, %v5367
      %v5908 = vpack.c.b16 %v5372, %v5368
      %v5909 = vpack.c.b16 %v5373, %v5369
      %v5910 = vpack.c.b16 %v5378, %v5374
      %v5911 = vpack.c.b16 %v5379, %v5375
      %v5912 = vpack.c.b16 %v5380, %v5376
      %v5913 = vpack.c.b16 %v5381, %v5377
      %v5914 = vpack.c.b16 %v5386, %v5382
      %v5915 = vpack.c.b16 %v5387, %v5383
      %v5916 = vpack.c.b16 %v5388, %v5384
      %v5917 = vpack.c.b16 %v5389, %v5385
      %v5918 = vpack.c.b16 %v5394, %v5390
      %v5919 = vpack.c.b16 %v5395, %v5391
      %v5920 = vpack.c.b16 %v5396, %v5392
      %v5921 = vpack.c.b16 %v5397, %v5393
      %v5922 = vpack.c.b16 %v5402, %v5398
      %v5923 = vpack.c.b16 %v5403, %v5399
      %v5924 = vpack.c.b16 %v5404, %v5400
      %v5925 = vpack.c.b16 %v5405, %v5401
      %v5926 = vpack.c.b16 %v5410, %v5406
      %v5927 = vpack.c.b16 %v5411, %v5407
      %v5928 = vpack.c.b16 %v5412, %v5408
      %v5929 = vpack.c.b16 %v5413, %v5409
      %v5930 = vpack.c.b16 %v5418, %v5414
      %v5931 = vpack.c.b16 %v5419, %v5415
      %v5932 = vpack.c.b16 %v5420, %v5416
      %v5933 = vpack.c.b16 %v5421, %v5417
      %6446 = vmatprep.subr.bf16.mxu0 %v5423
      %6447 = vmatpush1.bf16.msra.mxu0 %v5422
      %6448 = vmatprep.subr.bf16.mxu0 %v5427
      %6449 = vmatpush1.bf16.msra.mxu0 %v5426
      %6450 = vmatprep.subr.bf16.mxu0 %v5431
      %6451 = vmatpush1.bf16.msra.mxu0 %v5430
      %6452 = vmatprep.subr.bf16.mxu0 %v5435
      %6453 = vmatpush1.bf16.msra.mxu0 %v5434
      %6454 = vmatprep.subr.bf16.mxu0 %v5439
      %6455 = vmatpush1.bf16.msra.mxu0 %v5438
      %6456 = vmatprep.subr.bf16.mxu0 %v5443
      %6457 = vmatpush1.bf16.msra.mxu0 %v5442
      %6458 = vmatprep.subr.bf16.mxu0 %v5447
      %6459 = vmatpush1.bf16.msra.mxu0 %v5446
      %6460 = vmatprep.subr.bf16.mxu0 %v5451
      %6461 = vmatpush1.bf16.msra.mxu0 %v5450
      %6462 = vmatprep.subr.bf16.mxu0 %v5455
      %6463 = vmatpush1.bf16.msra.mxu0 %v5454
      %6464 = vmatprep.subr.bf16.mxu0 %v5459
      %6465 = vmatpush1.bf16.msra.mxu0 %v5458
      %6466 = vmatprep.subr.bf16.mxu0 %v5463
      %6467 = vmatpush1.bf16.msra.mxu0 %v5462
      %6468 = vmatprep.subr.bf16.mxu0 %v5467
      %6469 = vmatpush1.bf16.msra.mxu0 %v5466
      %6470 = vmatprep.subr.bf16.mxu0 %v5471
      %6471 = vmatpush1.bf16.msra.mxu0 %v5470
      %6472 = vmatprep.subr.bf16.mxu0 %v5475
      %6473 = vmatpush1.bf16.msra.mxu0 %v5474
      %6474 = vmatprep.subr.bf16.mxu0 %v5479
      %6475 = vmatpush1.bf16.msra.mxu0 %v5478
      %6476 = vmatprep.subr.bf16.mxu0 %v5483
      %6477 = vmatpush1.bf16.msra.mxu0 %v5482
      %6478 = vmatprep.mubr.bf16.mxu0 %v2863
      %6479 = vmatmul.mubr.bf16.gmra.mrb[0].mxu0 %v2862
      %v6480 = vpop.f32.mrb[0].mxu0
      %v6481 = vadd.f32 %v1309, %v6480
      %v6482 = vpop.f32.mrb[0].mxu0
      %v6483 = vadd.f32 %v1313, %v6482
      %v6484 = vpop.f32.mrb[0].mxu0
      %v6485 = vadd.f32 %v1309, %v6484
      %v6486 = vpop.f32.mrb[0].mxu0
      %v6487 = vadd.f32 %v1313, %v6486
      %6488 = vmatprep.mubr.bf16.mxu0 %v2879
      %6489 = vmatmul.mubr.bf16.gmra.mrb[0].mxu0 %v2878
      %v6490 = vpop.f32.mrb[0].mxu0
      %v6491 = vadd.f32 %v1309, %v6490
      %v6492 = vpop.f32.mrb[0].mxu0
      %v6493 = vadd.f32 %v1313, %v6492
      %v6494 = vpop.f32.mrb[0].mxu0
      %v6495 = vadd.f32 %v1309, %v6494
      %v6496 = vpop.f32.mrb[0].mxu0
      %v6497 = vadd.f32 %v1313, %v6496
      %6498 = vmatprep.mubr.bf16.mxu0 %v2895
      %6499 = vmatmul.mubr.bf16.gmra.mrb[0].mxu0 %v2894
      %v6500 = vpop.f32.mrb[0].mxu0
      %v6501 = vadd.f32 %v1309, %v6500
      %v6502 = vpop.f32.mrb[0].mxu0
      %v6503 = vadd.f32 %v1313, %v6502
      %v6504 = vpop.f32.mrb[0].mxu0
      %v6505 = vadd.f32 %v1309, %v6504
      %v6506 = vpop.f32.mrb[0].mxu0
      %v6507 = vadd.f32 %v1313, %v6506
      %6508 = vmatprep.mubr.bf16.mxu0 %v2911
      %6509 = vmatmul.mubr.bf16.gmra.mrb[0].mxu0 %v2910
      %v6510 = vpop.f32.mrb[0].mxu0
      %v6511 = vadd.f32 %v1309, %v6510
      %v6512 = vpop.f32.mrb[0].mxu0
      %v6513 = vadd.f32 %v1313, %v6512
      %v6514 = vpop.f32.mrb[0].mxu0
      %v6515 = vadd.f32 %v1309, %v6514
      %v6516 = vpop.f32.mrb[0].mxu0
      %v6517 = vadd.f32 %v1313, %v6516
      %6518 = vmatprep.mubr.bf16.mxu0 %v2927
      %6519 = vmatmul.mubr.bf16.gmra.mrb[0].mxu0 %v2926
      %v6520 = vpop.f32.mrb[0].mxu0
      %v6521 = vadd.f32 %v1309, %v6520
      %v6522 = vpop.f32.mrb[0].mxu0
      %v6523 = vadd.f32 %v1313, %v6522
      %v6524 = vpop.f32.mrb[0].mxu0
      %v6525 = vadd.f32 %v1309, %v6524
      %v6526 = vpop.f32.mrb[0].mxu0
      %v6527 = vadd.f32 %v1313, %v6526
      %6528 = vmatprep.mubr.bf16.mxu0 %v2943
      %6529 = vmatmul.mubr.bf16.gmra.mrb[0].mxu0 %v2942
      %v6530 = vpop.f32.mrb[0].mxu0
      %v6531 = vadd.f32 %v1309, %v6530
      %v6532 = vpop.f32.mrb[0].mxu0
      %v6533 = vadd.f32 %v1313, %v6532
      %v6534 = vpop.f32.mrb[0].mxu0
      %v6535 = vadd.f32 %v1309, %v6534
      %v6536 = vpop.f32.mrb[0].mxu0
      %v6537 = vadd.f32 %v1313, %v6536
      %6538 = vmatprep.mubr.bf16.mxu0 %v2959
      %6539 = vmatmul.mubr.bf16.gmra.mrb[0].mxu0 %v2958
      %v6540 = vpop.f32.mrb[0].mxu0
      %v6541 = vadd.f32 %v1309, %v6540
      %v6542 = vpop.f32.mrb[0].mxu0
      %v6543 = vadd.f32 %v1313, %v6542
      %v6544 = vpop.f32.mrb[0].mxu0
      %v6545 = vadd.f32 %v1309, %v6544
      %v6546 = vpop.f32.mrb[0].mxu0
      %v6547 = vadd.f32 %v1313, %v6546
      %6548 = vmatprep.mubr.bf16.mxu0 %v2975
      %6549 = vmatmul.mubr.bf16.gmra.mrb[0].mxu0 %v2974
      %v6550 = vpop.f32.mrb[0].mxu0
      %v6551 = vadd.f32 %v1309, %v6550
      %v6552 = vpop.f32.mrb[0].mxu0
      %v6553 = vadd.f32 %v1313, %v6552
      %v6554 = vpop.f32.mrb[0].mxu0
      %v6555 = vadd.f32 %v1309, %v6554
      %v6556 = vpop.f32.mrb[0].mxu0
      %v6557 = vadd.f32 %v1313, %v6556
      %6558 = vmatprep.mubr.bf16.mxu0 %v2991
      %6559 = vmatmul.mubr.bf16.gmra.mrb[0].mxu0 %v2990
      %v6560 = vpop.f32.mrb[0].mxu0
      %v6561 = vadd.f32 %v1309, %v6560
      %v6562 = vpop.f32.mrb[0].mxu0
      %v6563 = vadd.f32 %v1313, %v6562
      %v6564 = vpop.f32.mrb[0].mxu0
      %v6565 = vadd.f32 %v1309, %v6564
      %v6566 = vpop.f32.mrb[0].mxu0
      %v6567 = vadd.f32 %v1313, %v6566
      %6568 = vmatprep.mubr.bf16.mxu0 %v3007
      %6569 = vmatmul.mubr.bf16.gmra.mrb[0].mxu0 %v3006
      %v6570 = vpop.f32.mrb[0].mxu0
      %v6571 = vadd.f32 %v1309, %v6570
      %v6572 = vpop.f32.mrb[0].mxu0
      %v6573 = vadd.f32 %v1313, %v6572
      %v6574 = vpop.f32.mrb[0].mxu0
      %v6575 = vadd.f32 %v1309, %v6574
      %v6576 = vpop.f32.mrb[0].mxu0
      %v6577 = vadd.f32 %v1313, %v6576
      %6578 = vmatprep.mubr.bf16.mxu0 %v3023
      %6579 = vmatmul.mubr.bf16.gmra.mrb[0].mxu0 %v3022
      %v6580 = vpop.f32.mrb[0].mxu0
      %v6581 = vadd.f32 %v1309, %v6580
      %v6582 = vpop.f32.mrb[0].mxu0
      %v6583 = vadd.f32 %v1313, %v6582
      %v6584 = vpop.f32.mrb[0].mxu0
      %v6585 = vadd.f32 %v1309, %v6584
      %v6586 = vpop.f32.mrb[0].mxu0
      %v6587 = vadd.f32 %v1313, %v6586
      %6588 = vmatprep.mubr.bf16.mxu0 %v3039
      %6589 = vmatmul.mubr.bf16.gmra.mrb[0].mxu0 %v3038
      %v6590 = vpop.f32.mrb[0].mxu0
      %v6591 = vadd.f32 %v1309, %v6590
      %v6592 = vpop.f32.mrb[0].mxu0
      %v6593 = vadd.f32 %v1313, %v6592
      %v6594 = vpop.f32.mrb[0].mxu0
      %v6595 = vadd.f32 %v1309, %v6594
      %v6596 = vpop.f32.mrb[0].mxu0
      %v6597 = vadd.f32 %v1313, %v6596
      %6598 = vmatprep.mubr.bf16.mxu0 %v3055
      %6599 = vmatmul.mubr.bf16.gmra.mrb[0].mxu0 %v3054
      %v6600 = vpop.f32.mrb[0].mxu0
      %v6601 = vadd.f32 %v1309, %v6600
      %v6602 = vpop.f32.mrb[0].mxu0
      %v6603 = vadd.f32 %v1313, %v6602
      %v6604 = vpop.f32.mrb[0].mxu0
      %v6605 = vadd.f32 %v1309, %v6604
      %v6606 = vpop.f32.mrb[0].mxu0
      %v6607 = vadd.f32 %v1313, %v6606
      %6608 = vmatprep.mubr.bf16.mxu0 %v3071
      %6609 = vmatmul.mubr.bf16.gmra.mrb[0].mxu0 %v3070
      %v6610 = vpop.f32.mrb[0].mxu0
      %v6611 = vadd.f32 %v1309, %v6610
      %v6612 = vpop.f32.mrb[0].mxu0
      %v6613 = vadd.f32 %v1313, %v6612
      %v6614 = vpop.f32.mrb[0].mxu0
      %v6615 = vadd.f32 %v1309, %v6614
      %v6616 = vpop.f32.mrb[0].mxu0
      %v6617 = vadd.f32 %v1313, %v6616
      %6618 = vmatprep.mubr.bf16.mxu0 %v3087
      %6619 = vmatmul.mubr.bf16.gmra.mrb[0].mxu0 %v3086
      %v6620 = vpop.f32.mrb[0].mxu0
      %v6621 = vadd.f32 %v1309, %v6620
      %v6622 = vpop.f32.mrb[0].mxu0
      %v6623 = vadd.f32 %v1313, %v6622
      %v6624 = vpop.f32.mrb[0].mxu0
      %v6625 = vadd.f32 %v1309, %v6624
      %v6626 = vpop.f32.mrb[0].mxu0
      %v6627 = vadd.f32 %v1313, %v6626
      %6628 = vmatprep.mubr.bf16.mxu0 %v3103
      %6629 = vmatmul.mubr.bf16.gmra.mrb[0].mxu0 %v3102
      %v6630 = vpop.f32.mrb[0].mxu0
      %v6631 = vadd.f32 %v1309, %v6630
      %v6632 = vpop.f32.mrb[0].mxu0
      %v6633 = vadd.f32 %v1313, %v6632
      %v6634 = vpop.f32.mrb[0].mxu0
      %v6635 = vadd.f32 %v1309, %v6634
      %v6636 = vpop.f32.mrb[0].mxu0
      %v6637 = vadd.f32 %v1313, %v6636
      %6638 = vmatprep.mubr.bf16.mxu0 %v3119
      %6639 = vmatmul.mubr.bf16.gmra.mrb[0].mxu0 %v3118
      %v6640 = vpop.f32.mrb[0].mxu0
      %v6641 = vadd.f32 %v1309, %v6640
      %v6642 = vpop.f32.mrb[0].mxu0
      %v6643 = vadd.f32 %v1313, %v6642
      %v6644 = vpop.f32.mrb[0].mxu0
      %v6645 = vadd.f32 %v1309, %v6644
      %v6646 = vpop.f32.mrb[0].mxu0
      %v6647 = vadd.f32 %v1313, %v6646
      %6648 = vmatprep.mubr.bf16.mxu0 %v3135
      %6649 = vmatmul.mubr.bf16.gmra.mrb[0].mxu0 %v3134
      %v6650 = vpop.f32.mrb[0].mxu0
      %v6651 = vadd.f32 %v1309, %v6650
      %v6652 = vpop.f32.mrb[0].mxu0
      %v6653 = vadd.f32 %v1313, %v6652
      %v6654 = vpop.f32.mrb[0].mxu0
      %v6655 = vadd.f32 %v1309, %v6654
      %v6656 = vpop.f32.mrb[0].mxu0
      %v6657 = vadd.f32 %v1313, %v6656
      %6658 = vmatprep.mubr.bf16.mxu0 %v3151
      %6659 = vmatmul.mubr.bf16.gmra.mrb[0].mxu0 %v3150
      %v6660 = vpop.f32.mrb[0].mxu0
      %v6661 = vadd.f32 %v1309, %v6660
      %v6662 = vpop.f32.mrb[0].mxu0
      %v6663 = vadd.f32 %v1313, %v6662
      %v6664 = vpop.f32.mrb[0].mxu0
      %v6665 = vadd.f32 %v1309, %v6664
      %v6666 = vpop.f32.mrb[0].mxu0
      %v6667 = vadd.f32 %v1313, %v6666
      %6668 = vmatprep.mubr.bf16.mxu0 %v3167
      %6669 = vmatmul.mubr.bf16.gmra.mrb[0].mxu0 %v3166
      %v6670 = vpop.f32.mrb[0].mxu0
      %v6671 = vadd.f32 %v1309, %v6670
      %v6672 = vpop.f32.mrb[0].mxu0
      %v6673 = vadd.f32 %v1313, %v6672
      %v6674 = vpop.f32.mrb[0].mxu0
      %v6675 = vadd.f32 %v1309, %v6674
      %v6676 = vpop.f32.mrb[0].mxu0
      %v6677 = vadd.f32 %v1313, %v6676
      %6678 = vmatprep.mubr.bf16.mxu0 %v3183
      %6679 = vmatmul.mubr.bf16.gmra.mrb[0].mxu0 %v3182
      %v6680 = vpop.f32.mrb[0].mxu0
      %v6681 = vadd.f32 %v1309, %v6680
      %v6682 = vpop.f32.mrb[0].mxu0
      %v6683 = vadd.f32 %v1313, %v6682
      %v6684 = vpop.f32.mrb[0].mxu0
      %v6685 = vadd.f32 %v1309, %v6684
      %v6686 = vpop.f32.mrb[0].mxu0
      %v6687 = vadd.f32 %v1313, %v6686
      %6688 = vmatprep.mubr.bf16.mxu0 %v3199
      %6689 = vmatmul.mubr.bf16.gmra.mrb[0].mxu0 %v3198
      %v6690 = vpop.f32.mrb[0].mxu0
      %v6691 = vadd.f32 %v1309, %v6690
      %v6692 = vpop.f32.mrb[0].mxu0
      %v6693 = vadd.f32 %v1313, %v6692
      %v6694 = vpop.f32.mrb[0].mxu0
      %v6695 = vadd.f32 %v1309, %v6694
      %v6696 = vpop.f32.mrb[0].mxu0
      %v6697 = vadd.f32 %v1313, %v6696
      %6698 = vmatprep.mubr.bf16.mxu0 %v3215
      %6699 = vmatmul.mubr.bf16.gmra.mrb[0].mxu0 %v3214
      %v6700 = vpop.f32.mrb[0].mxu0
      %v6701 = vadd.f32 %v1309, %v6700
      %v6702 = vpop.f32.mrb[0].mxu0
      %v6703 = vadd.f32 %v1313, %v6702
      %v6704 = vpop.f32.mrb[0].mxu0
      %v6705 = vadd.f32 %v1309, %v6704
      %v6706 = vpop.f32.mrb[0].mxu0
      %v6707 = vadd.f32 %v1313, %v6706
      %6708 = vmatprep.mubr.bf16.mxu0 %v3231
      %6709 = vmatmul.mubr.bf16.gmra.mrb[0].mxu0 %v3230
      %v6710 = vpop.f32.mrb[0].mxu0
      %v6711 = vadd.f32 %v1309, %v6710
      %v6712 = vpop.f32.mrb[0].mxu0
      %v6713 = vadd.f32 %v1313, %v6712
      %v6714 = vpop.f32.mrb[0].mxu0
      %v6715 = vadd.f32 %v1309, %v6714
      %v6716 = vpop.f32.mrb[0].mxu0
      %v6717 = vadd.f32 %v1313, %v6716
      %6718 = vmatprep.mubr.bf16.mxu0 %v3247
      %6719 = vmatmul.mubr.bf16.gmra.mrb[0].mxu0 %v3246
      %v6720 = vpop.f32.mrb[0].mxu0
      %v6721 = vadd.f32 %v1309, %v6720
      %v6722 = vpop.f32.mrb[0].mxu0
      %v6723 = vadd.f32 %v1313, %v6722
      %v6724 = vpop.f32.mrb[0].mxu0
      %v6725 = vadd.f32 %v1309, %v6724
      %v6726 = vpop.f32.mrb[0].mxu0
      %v6727 = vadd.f32 %v1313, %v6726
      %6728 = vmatprep.mubr.bf16.mxu0 %v3263
      %6729 = vmatmul.mubr.bf16.gmra.mrb[0].mxu0 %v3262
      %v6730 = vpop.f32.mrb[0].mxu0
      %v6731 = vadd.f32 %v1309, %v6730
      %v6732 = vpop.f32.mrb[0].mxu0
      %v6733 = vadd.f32 %v1313, %v6732
      %v6734 = vpop.f32.mrb[0].mxu0
      %v6735 = vadd.f32 %v1309, %v6734
      %v6736 = vpop.f32.mrb[0].mxu0
      %v6737 = vadd.f32 %v1313, %v6736
      %6738 = vmatprep.mubr.bf16.mxu0 %v3279
      %6739 = vmatmul.mubr.bf16.gmra.mrb[0].mxu0 %v3278
      %v6740 = vpop.f32.mrb[0].mxu0
      %v6741 = vadd.f32 %v1309, %v6740
      %v6742 = vpop.f32.mrb[0].mxu0
      %v6743 = vadd.f32 %v1313, %v6742
      %v6744 = vpop.f32.mrb[0].mxu0
      %v6745 = vadd.f32 %v1309, %v6744
      %v6746 = vpop.f32.mrb[0].mxu0
      %v6747 = vadd.f32 %v1313, %v6746
      %6748 = vmatprep.mubr.bf16.mxu0 %v3295
      %6749 = vmatmul.mubr.bf16.gmra.mrb[0].mxu0 %v3294
      %v6750 = vpop.f32.mrb[0].mxu0
      %v6751 = vadd.f32 %v1309, %v6750
      %v6752 = vpop.f32.mrb[0].mxu0
      %v6753 = vadd.f32 %v1313, %v6752
      %v6754 = vpop.f32.mrb[0].mxu0
      %v6755 = vadd.f32 %v1309, %v6754
      %v6756 = vpop.f32.mrb[0].mxu0
      %v6757 = vadd.f32 %v1313, %v6756
      %6758 = vmatprep.mubr.bf16.mxu0 %v3311
      %6759 = vmatmul.mubr.bf16.gmra.mrb[0].mxu0 %v3310
      %v6760 = vpop.f32.mrb[0].mxu0
      %v6761 = vadd.f32 %v1309, %v6760
      %v6762 = vpop.f32.mrb[0].mxu0
      %v6763 = vadd.f32 %v1313, %v6762
      %v6764 = vpop.f32.mrb[0].mxu0
      %v6765 = vadd.f32 %v1309, %v6764
      %v6766 = vpop.f32.mrb[0].mxu0
      %v6767 = vadd.f32 %v1313, %v6766
      %6768 = vmatprep.mubr.bf16.mxu0 %v3327
      %6769 = vmatmul.mubr.bf16.gmra.mrb[0].mxu0 %v3326
      %v6770 = vpop.f32.mrb[0].mxu0
      %v6771 = vadd.f32 %v1309, %v6770
      %v6772 = vpop.f32.mrb[0].mxu0
      %v6773 = vadd.f32 %v1313, %v6772
      %v6774 = vpop.f32.mrb[0].mxu0
      %v6775 = vadd.f32 %v1309, %v6774
      %v6776 = vpop.f32.mrb[0].mxu0
      %v6777 = vadd.f32 %v1313, %v6776
      %6778 = vmatprep.mubr.bf16.mxu0 %v3343
      %6779 = vmatmul.mubr.bf16.gmra.mrb[0].mxu0 %v3342
      %v6780 = vpop.f32.mrb[0].mxu0
      %v6781 = vadd.f32 %v1309, %v6780
      %v6782 = vpop.f32.mrb[0].mxu0
      %v6783 = vadd.f32 %v1313, %v6782
      %v6784 = vpop.f32.mrb[0].mxu0
      %v6785 = vadd.f32 %v1309, %v6784
      %v6786 = vpop.f32.mrb[0].mxu0
      %v6787 = vadd.f32 %v1313, %v6786
      %6788 = vmatprep.mubr.bf16.mxu0 %v3359
      %6789 = vmatmul.mubr.bf16.gmra.mrb[0].mxu0 %v3358
      %v6790 = vpop.f32.mrb[0].mxu0
      %v6791 = vadd.f32 %v1309, %v6790
      %v6792 = vpop.f32.mrb[0].mxu0
      %v6793 = vadd.f32 %v1313, %v6792
      %v6794 = vpop.f32.mrb[0].mxu0
      %v6795 = vadd.f32 %v1309, %v6794
      %v6796 = vpop.f32.mrb[0].mxu0
      %v6797 = vadd.f32 %v1313, %v6796
      %6798 = vdwg.mxu0
      %6799 = vmatprep.subr.bf16.mxu0 %v5487
      %6800 = vmatpush1.bf16.msra.mxu0 %v5486
      %6801 = vmatprep.subr.bf16.mxu0 %v5491
      %6802 = vmatpush1.bf16.msra.mxu0 %v5490
      %6803 = vmatprep.subr.bf16.mxu0 %v5495
      %6804 = vmatpush1.bf16.msra.mxu0 %v5494
      %6805 = vmatprep.subr.bf16.mxu0 %v5499
      %6806 = vmatpush1.bf16.msra.mxu0 %v5498
      %6807 = vmatprep.subr.bf16.mxu0 %v5503
      %6808 = vmatpush1.bf16.msra.mxu0 %v5502
      %6809 = vmatprep.subr.bf16.mxu0 %v5507
      %6810 = vmatpush1.bf16.msra.mxu0 %v5506
      %6811 = vmatprep.subr.bf16.mxu0 %v5511
      %6812 = vmatpush1.bf16.msra.mxu0 %v5510
      %6813 = vmatprep.subr.bf16.mxu0 %v5515
      %6814 = vmatpush1.bf16.msra.mxu0 %v5514
      %6815 = vmatprep.subr.bf16.mxu0 %v5519
      %6816 = vmatpush1.bf16.msra.mxu0 %v5518
      %6817 = vmatprep.subr.bf16.mxu0 %v5523
      %6818 = vmatpush1.bf16.msra.mxu0 %v5522
      %6819 = vmatprep.subr.bf16.mxu0 %v5527
      %6820 = vmatpush1.bf16.msra.mxu0 %v5526
      %6821 = vmatprep.subr.bf16.mxu0 %v5531
      %6822 = vmatpush1.bf16.msra.mxu0 %v5530
      %6823 = vmatprep.subr.bf16.mxu0 %v5535
      %6824 = vmatpush1.bf16.msra.mxu0 %v5534
      %6825 = vmatprep.subr.bf16.mxu0 %v5539
      %6826 = vmatpush1.bf16.msra.mxu0 %v5538
      %6827 = vmatprep.subr.bf16.mxu0 %v5543
      %6828 = vmatpush1.bf16.msra.mxu0 %v5542
      %6829 = vmatprep.subr.bf16.mxu0 %v5547
      %6830 = vmatpush1.bf16.msra.mxu0 %v5546
      %6831 = vmatprep.mubr.bf16.mxu0 %v2865
      %6832 = vmatmul.mubr.bf16.gmra.mrb[0].mxu0 %v2864
      %v6833 = vpop.f32.mrb[0].mxu0
      %v6834 = vadd.f32 %v6481, %v6833
      %v6835 = vpop.f32.mrb[0].mxu0
      %v6836 = vadd.f32 %v6483, %v6835
      %v6837 = vpop.f32.mrb[0].mxu0
      %v6838 = vadd.f32 %v6485, %v6837
      %v6839 = vpop.f32.mrb[0].mxu0
      %v6840 = vadd.f32 %v6487, %v6839
      %6841 = vmatprep.mubr.bf16.mxu0 %v2881
      %6842 = vmatmul.mubr.bf16.gmra.mrb[0].mxu0 %v2880
      %v6843 = vpop.f32.mrb[0].mxu0
      %v6844 = vadd.f32 %v6491, %v6843
      %v6845 = vpop.f32.mrb[0].mxu0
      %v6846 = vadd.f32 %v6493, %v6845
      %v6847 = vpop.f32.mrb[0].mxu0
      %v6848 = vadd.f32 %v6495, %v6847
      %v6849 = vpop.f32.mrb[0].mxu0
      %v6850 = vadd.f32 %v6497, %v6849
      %6851 = vmatprep.mubr.bf16.mxu0 %v2897
      %6852 = vmatmul.mubr.bf16.gmra.mrb[0].mxu0 %v2896
      %v6853 = vpop.f32.mrb[0].mxu0
      %v6854 = vadd.f32 %v6501, %v6853
      %v6855 = vpop.f32.mrb[0].mxu0
      %v6856 = vadd.f32 %v6503, %v6855
      %v6857 = vpop.f32.mrb[0].mxu0
      %v6858 = vadd.f32 %v6505, %v6857
      %v6859 = vpop.f32.mrb[0].mxu0
      %v6860 = vadd.f32 %v6507, %v6859
      %6861 = vmatprep.mubr.bf16.mxu0 %v2913
      %6862 = vmatmul.mubr.bf16.gmra.mrb[0].mxu0 %v2912
      %v6863 = vpop.f32.mrb[0].mxu0
      %v6864 = vadd.f32 %v6511, %v6863
      %v6865 = vpop.f32.mrb[0].mxu0
      %v6866 = vadd.f32 %v6513, %v6865
      %v6867 = vpop.f32.mrb[0].mxu0
      %v6868 = vadd.f32 %v6515, %v6867
      %v6869 = vpop.f32.mrb[0].mxu0
      %v6870 = vadd.f32 %v6517, %v6869
      %6871 = vmatprep.mubr.bf16.mxu0 %v2929
      %6872 = vmatmul.mubr.bf16.gmra.mrb[0].mxu0 %v2928
      %v6873 = vpop.f32.mrb[0].mxu0
      %v6874 = vadd.f32 %v6521, %v6873
      %v6875 = vpop.f32.mrb[0].mxu0
      %v6876 = vadd.f32 %v6523, %v6875
      %v6877 = vpop.f32.mrb[0].mxu0
      %v6878 = vadd.f32 %v6525, %v6877
      %v6879 = vpop.f32.mrb[0].mxu0
      %v6880 = vadd.f32 %v6527, %v6879
      %6881 = vmatprep.mubr.bf16.mxu0 %v2945
      %6882 = vmatmul.mubr.bf16.gmra.mrb[0].mxu0 %v2944
      %v6883 = vpop.f32.mrb[0].mxu0
      %v6884 = vadd.f32 %v6531, %v6883
      %v6885 = vpop.f32.mrb[0].mxu0
      %v6886 = vadd.f32 %v6533, %v6885
      %v6887 = vpop.f32.mrb[0].mxu0
      %v6888 = vadd.f32 %v6535, %v6887
      %v6889 = vpop.f32.mrb[0].mxu0
      %v6890 = vadd.f32 %v6537, %v6889
      %6891 = vmatprep.mubr.bf16.mxu0 %v2961
      %6892 = vmatmul.mubr.bf16.gmra.mrb[0].mxu0 %v2960
      %v6893 = vpop.f32.mrb[0].mxu0
      %v6894 = vadd.f32 %v6541, %v6893
      %v6895 = vpop.f32.mrb[0].mxu0
      %v6896 = vadd.f32 %v6543, %v6895
      %v6897 = vpop.f32.mrb[0].mxu0
      %v6898 = vadd.f32 %v6545, %v6897
      %v6899 = vpop.f32.mrb[0].mxu0
      %v6900 = vadd.f32 %v6547, %v6899
      %6901 = vmatprep.mubr.bf16.mxu0 %v2977
      %6902 = vmatmul.mubr.bf16.gmra.mrb[0].mxu0 %v2976
      %v6903 = vpop.f32.mrb[0].mxu0
      %v6904 = vadd.f32 %v6551, %v6903
      %v6905 = vpop.f32.mrb[0].mxu0
      %v6906 = vadd.f32 %v6553, %v6905
      %v6907 = vpop.f32.mrb[0].mxu0
      %v6908 = vadd.f32 %v6555, %v6907
      %v6909 = vpop.f32.mrb[0].mxu0
      %v6910 = vadd.f32 %v6557, %v6909
      %6911 = vmatprep.mubr.bf16.mxu0 %v2993
      %6912 = vmatmul.mubr.bf16.gmra.mrb[0].mxu0 %v2992
      %v6913 = vpop.f32.mrb[0].mxu0
      %v6914 = vadd.f32 %v6561, %v6913
      %v6915 = vpop.f32.mrb[0].mxu0
      %v6916 = vadd.f32 %v6563, %v6915
      %v6917 = vpop.f32.mrb[0].mxu0
      %v6918 = vadd.f32 %v6565, %v6917
      %v6919 = vpop.f32.mrb[0].mxu0
      %v6920 = vadd.f32 %v6567, %v6919
      %6921 = vmatprep.mubr.bf16.mxu0 %v3009
      %6922 = vmatmul.mubr.bf16.gmra.mrb[0].mxu0 %v3008
      %v6923 = vpop.f32.mrb[0].mxu0
      %v6924 = vadd.f32 %v6571, %v6923
      %v6925 = vpop.f32.mrb[0].mxu0
      %v6926 = vadd.f32 %v6573, %v6925
      %v6927 = vpop.f32.mrb[0].mxu0
      %v6928 = vadd.f32 %v6575, %v6927
      %v6929 = vpop.f32.mrb[0].mxu0
      %v6930 = vadd.f32 %v6577, %v6929
      %6931 = vmatprep.mubr.bf16.mxu0 %v3025
      %6932 = vmatmul.mubr.bf16.gmra.mrb[0].mxu0 %v3024
      %v6933 = vpop.f32.mrb[0].mxu0
      %v6934 = vadd.f32 %v6581, %v6933
      %v6935 = vpop.f32.mrb[0].mxu0
      %v6936 = vadd.f32 %v6583, %v6935
      %v6937 = vpop.f32.mrb[0].mxu0
      %v6938 = vadd.f32 %v6585, %v6937
      %v6939 = vpop.f32.mrb[0].mxu0
      %v6940 = vadd.f32 %v6587, %v6939
      %6941 = vmatprep.mubr.bf16.mxu0 %v3041
      %6942 = vmatmul.mubr.bf16.gmra.mrb[0].mxu0 %v3040
      %v6943 = vpop.f32.mrb[0].mxu0
      %v6944 = vadd.f32 %v6591, %v6943
      %v6945 = vpop.f32.mrb[0].mxu0
      %v6946 = vadd.f32 %v6593, %v6945
      %v6947 = vpop.f32.mrb[0].mxu0
      %v6948 = vadd.f32 %v6595, %v6947
      %v6949 = vpop.f32.mrb[0].mxu0
      %v6950 = vadd.f32 %v6597, %v6949
      %6951 = vmatprep.mubr.bf16.mxu0 %v3057
      %6952 = vmatmul.mubr.bf16.gmra.mrb[0].mxu0 %v3056
      %v6953 = vpop.f32.mrb[0].mxu0
      %v6954 = vadd.f32 %v6601, %v6953
      %v6955 = vpop.f32.mrb[0].mxu0
      %v6956 = vadd.f32 %v6603, %v6955
      %v6957 = vpop.f32.mrb[0].mxu0
      %v6958 = vadd.f32 %v6605, %v6957
      %v6959 = vpop.f32.mrb[0].mxu0
      %v6960 = vadd.f32 %v6607, %v6959
      %6961 = vmatprep.mubr.bf16.mxu0 %v3073
      %6962 = vmatmul.mubr.bf16.gmra.mrb[0].mxu0 %v3072
      %v6963 = vpop.f32.mrb[0].mxu0
      %v6964 = vadd.f32 %v6611, %v6963
      %v6965 = vpop.f32.mrb[0].mxu0
      %v6966 = vadd.f32 %v6613, %v6965
      %v6967 = vpop.f32.mrb[0].mxu0
      %v6968 = vadd.f32 %v6615, %v6967
      %v6969 = vpop.f32.mrb[0].mxu0
      %v6970 = vadd.f32 %v6617, %v6969
      %6971 = vmatprep.mubr.bf16.mxu0 %v3089
      %6972 = vmatmul.mubr.bf16.gmra.mrb[0].mxu0 %v3088
      %v6973 = vpop.f32.mrb[0].mxu0
      %v6974 = vadd.f32 %v6621, %v6973
      %v6975 = vpop.f32.mrb[0].mxu0
      %v6976 = vadd.f32 %v6623, %v6975
      %v6977 = vpop.f32.mrb[0].mxu0
      %v6978 = vadd.f32 %v6625, %v6977
      %v6979 = vpop.f32.mrb[0].mxu0
      %v6980 = vadd.f32 %v6627, %v6979
      %6981 = vmatprep.mubr.bf16.mxu0 %v3105
      %6982 = vmatmul.mubr.bf16.gmra.mrb[0].mxu0 %v3104
      %v6983 = vpop.f32.mrb[0].mxu0
      %v6984 = vadd.f32 %v6631, %v6983
      %v6985 = vpop.f32.mrb[0].mxu0
      %v6986 = vadd.f32 %v6633, %v6985
      %v6987 = vpop.f32.mrb[0].mxu0
      %v6988 = vadd.f32 %v6635, %v6987
      %v6989 = vpop.f32.mrb[0].mxu0
      %v6990 = vadd.f32 %v6637, %v6989
      %6991 = vmatprep.mubr.bf16.mxu0 %v3121
      %6992 = vmatmul.mubr.bf16.gmra.mrb[0].mxu0 %v3120
      %v6993 = vpop.f32.mrb[0].mxu0
      %v6994 = vadd.f32 %v6641, %v6993
      %v6995 = vpop.f32.mrb[0].mxu0
      %v6996 = vadd.f32 %v6643, %v6995
      %v6997 = vpop.f32.mrb[0].mxu0
      %v6998 = vadd.f32 %v6645, %v6997
      %v6999 = vpop.f32.mrb[0].mxu0
      %v7000 = vadd.f32 %v6647, %v6999
      %7001 = vmatprep.mubr.bf16.mxu0 %v3137
      %7002 = vmatmul.mubr.bf16.gmra.mrb[0].mxu0 %v3136
      %v7003 = vpop.f32.mrb[0].mxu0
      %v7004 = vadd.f32 %v6651, %v7003
      %v7005 = vpop.f32.mrb[0].mxu0
      %v7006 = vadd.f32 %v6653, %v7005
      %v7007 = vpop.f32.mrb[0].mxu0
      %v7008 = vadd.f32 %v6655, %v7007
      %v7009 = vpop.f32.mrb[0].mxu0
      %v7010 = vadd.f32 %v6657, %v7009
      %7011 = vmatprep.mubr.bf16.mxu0 %v3153
      %7012 = vmatmul.mubr.bf16.gmra.mrb[0].mxu0 %v3152
      %v7013 = vpop.f32.mrb[0].mxu0
      %v7014 = vadd.f32 %v6661, %v7013
      %v7015 = vpop.f32.mrb[0].mxu0
      %v7016 = vadd.f32 %v6663, %v7015
      %v7017 = vpop.f32.mrb[0].mxu0
      %v7018 = vadd.f32 %v6665, %v7017
      %v7019 = vpop.f32.mrb[0].mxu0
      %v7020 = vadd.f32 %v6667, %v7019
      %7021 = vmatprep.mubr.bf16.mxu0 %v3169
      %7022 = vmatmul.mubr.bf16.gmra.mrb[0].mxu0 %v3168
      %v7023 = vpop.f32.mrb[0].mxu0
      %v7024 = vadd.f32 %v6671, %v7023
      %v7025 = vpop.f32.mrb[0].mxu0
      %v7026 = vadd.f32 %v6673, %v7025
      %v7027 = vpop.f32.mrb[0].mxu0
      %v7028 = vadd.f32 %v6675, %v7027
      %v7029 = vpop.f32.mrb[0].mxu0
      %v7030 = vadd.f32 %v6677, %v7029
      %7031 = vmatprep.mubr.bf16.mxu0 %v3185
      %7032 = vmatmul.mubr.bf16.gmra.mrb[0].mxu0 %v3184
      %v7033 = vpop.f32.mrb[0].mxu0
      %v7034 = vadd.f32 %v6681, %v7033
      %v7035 = vpop.f32.mrb[0].mxu0
      %v7036 = vadd.f32 %v6683, %v7035
      %v7037 = vpop.f32.mrb[0].mxu0
      %v7038 = vadd.f32 %v6685, %v7037
      %v7039 = vpop.f32.mrb[0].mxu0
      %v7040 = vadd.f32 %v6687, %v7039
      %7041 = vmatprep.mubr.bf16.mxu0 %v3201
      %7042 = vmatmul.mubr.bf16.gmra.mrb[0].mxu0 %v3200
      %v7043 = vpop.f32.mrb[0].mxu0
      %v7044 = vadd.f32 %v6691, %v7043
      %v7045 = vpop.f32.mrb[0].mxu0
      %v7046 = vadd.f32 %v6693, %v7045
      %v7047 = vpop.f32.mrb[0].mxu0
      %v7048 = vadd.f32 %v6695, %v7047
      %v7049 = vpop.f32.mrb[0].mxu0
      %v7050 = vadd.f32 %v6697, %v7049
      %7051 = vmatprep.mubr.bf16.mxu0 %v3217
      %7052 = vmatmul.mubr.bf16.gmra.mrb[0].mxu0 %v3216
      %v7053 = vpop.f32.mrb[0].mxu0
      %v7054 = vadd.f32 %v6701, %v7053
      %v7055 = vpop.f32.mrb[0].mxu0
      %v7056 = vadd.f32 %v6703, %v7055
      %v7057 = vpop.f32.mrb[0].mxu0
      %v7058 = vadd.f32 %v6705, %v7057
      %v7059 = vpop.f32.mrb[0].mxu0
      %v7060 = vadd.f32 %v6707, %v7059
      %7061 = vmatprep.mubr.bf16.mxu0 %v3233
      %7062 = vmatmul.mubr.bf16.gmra.mrb[0].mxu0 %v3232
      %v7063 = vpop.f32.mrb[0].mxu0
      %v7064 = vadd.f32 %v6711, %v7063
      %v7065 = vpop.f32.mrb[0].mxu0
      %v7066 = vadd.f32 %v6713, %v7065
      %v7067 = vpop.f32.mrb[0].mxu0
      %v7068 = vadd.f32 %v6715, %v7067
      %v7069 = vpop.f32.mrb[0].mxu0
      %v7070 = vadd.f32 %v6717, %v7069
      %7071 = vmatprep.mubr.bf16.mxu0 %v3249
      %7072 = vmatmul.mubr.bf16.gmra.mrb[0].mxu0 %v3248
      %v7073 = vpop.f32.mrb[0].mxu0
      %v7074 = vadd.f32 %v6721, %v7073
      %v7075 = vpop.f32.mrb[0].mxu0
      %v7076 = vadd.f32 %v6723, %v7075
      %v7077 = vpop.f32.mrb[0].mxu0
      %v7078 = vadd.f32 %v6725, %v7077
      %v7079 = vpop.f32.mrb[0].mxu0
      %v7080 = vadd.f32 %v6727, %v7079
      %7081 = vmatprep.mubr.bf16.mxu0 %v3265
      %7082 = vmatmul.mubr.bf16.gmra.mrb[0].mxu0 %v3264
      %v7083 = vpop.f32.mrb[0].mxu0
      %v7084 = vadd.f32 %v6731, %v7083
      %v7085 = vpop.f32.mrb[0].mxu0
      %v7086 = vadd.f32 %v6733, %v7085
      %v7087 = vpop.f32.mrb[0].mxu0
      %v7088 = vadd.f32 %v6735, %v7087
      %v7089 = vpop.f32.mrb[0].mxu0
      %v7090 = vadd.f32 %v6737, %v7089
      %7091 = vmatprep.mubr.bf16.mxu0 %v3281
      %7092 = vmatmul.mubr.bf16.gmra.mrb[0].mxu0 %v3280
      %v7093 = vpop.f32.mrb[0].mxu0
      %v7094 = vadd.f32 %v6741, %v7093
      %v7095 = vpop.f32.mrb[0].mxu0
      %v7096 = vadd.f32 %v6743, %v7095
      %v7097 = vpop.f32.mrb[0].mxu0
      %v7098 = vadd.f32 %v6745, %v7097
      %v7099 = vpop.f32.mrb[0].mxu0
      %v7100 = vadd.f32 %v6747, %v7099
      %7101 = vmatprep.mubr.bf16.mxu0 %v3297
      %7102 = vmatmul.mubr.bf16.gmra.mrb[0].mxu0 %v3296
      %v7103 = vpop.f32.mrb[0].mxu0
      %v7104 = vadd.f32 %v6751, %v7103
      %v7105 = vpop.f32.mrb[0].mxu0
      %v7106 = vadd.f32 %v6753, %v7105
      %v7107 = vpop.f32.mrb[0].mxu0
      %v7108 = vadd.f32 %v6755, %v7107
      %v7109 = vpop.f32.mrb[0].mxu0
      %v7110 = vadd.f32 %v6757, %v7109
      %7111 = vmatprep.mubr.bf16.mxu0 %v3313
      %7112 = vmatmul.mubr.bf16.gmra.mrb[0].mxu0 %v3312
      %v7113 = vpop.f32.mrb[0].mxu0
      %v7114 = vadd.f32 %v6761, %v7113
      %v7115 = vpop.f32.mrb[0].mxu0
      %v7116 = vadd.f32 %v6763, %v7115
      %v7117 = vpop.f32.mrb[0].mxu0
      %v7118 = vadd.f32 %v6765, %v7117
      %v7119 = vpop.f32.mrb[0].mxu0
      %v7120 = vadd.f32 %v6767, %v7119
      %7121 = vmatprep.mubr.bf16.mxu0 %v3329
      %7122 = vmatmul.mubr.bf16.gmra.mrb[0].mxu0 %v3328
      %v7123 = vpop.f32.mrb[0].mxu0
      %v7124 = vadd.f32 %v6771, %v7123
      %v7125 = vpop.f32.mrb[0].mxu0
      %v7126 = vadd.f32 %v6773, %v7125
      %v7127 = vpop.f32.mrb[0].mxu0
      %v7128 = vadd.f32 %v6775, %v7127
      %v7129 = vpop.f32.mrb[0].mxu0
      %v7130 = vadd.f32 %v6777, %v7129
      %7131 = vmatprep.mubr.bf16.mxu0 %v3345
      %7132 = vmatmul.mubr.bf16.gmra.mrb[0].mxu0 %v3344
      %v7133 = vpop.f32.mrb[0].mxu0
      %v7134 = vadd.f32 %v6781, %v7133
      %v7135 = vpop.f32.mrb[0].mxu0
      %v7136 = vadd.f32 %v6783, %v7135
      %v7137 = vpop.f32.mrb[0].mxu0
      %v7138 = vadd.f32 %v6785, %v7137
      %v7139 = vpop.f32.mrb[0].mxu0
      %v7140 = vadd.f32 %v6787, %v7139
      %7141 = vmatprep.mubr.bf16.mxu0 %v3361
      %7142 = vmatmul.mubr.bf16.gmra.mrb[0].mxu0 %v3360
      %v7143 = vpop.f32.mrb[0].mxu0
      %v7144 = vadd.f32 %v6791, %v7143
      %v7145 = vpop.f32.mrb[0].mxu0
      %v7146 = vadd.f32 %v6793, %v7145
      %v7147 = vpop.f32.mrb[0].mxu0
      %v7148 = vadd.f32 %v6795, %v7147
      %v7149 = vpop.f32.mrb[0].mxu0
      %v7150 = vadd.f32 %v6797, %v7149
      %7151 = vdwg.mxu0
      %7152 = vmatprep.subr.bf16.mxu0 %v5551
      %7153 = vmatpush1.bf16.msra.mxu0 %v5550
      %7154 = vmatprep.subr.bf16.mxu0 %v5555
      %7155 = vmatpush1.bf16.msra.mxu0 %v5554
      %7156 = vmatprep.subr.bf16.mxu0 %v5559
      %7157 = vmatpush1.bf16.msra.mxu0 %v5558
      %7158 = vmatprep.subr.bf16.mxu0 %v5563
      %7159 = vmatpush1.bf16.msra.mxu0 %v5562
      %7160 = vmatprep.subr.bf16.mxu0 %v5567
      %7161 = vmatpush1.bf16.msra.mxu0 %v5566
      %7162 = vmatprep.subr.bf16.mxu0 %v5571
      %7163 = vmatpush1.bf16.msra.mxu0 %v5570
      %7164 = vmatprep.subr.bf16.mxu0 %v5575
      %7165 = vmatpush1.bf16.msra.mxu0 %v5574
      %7166 = vmatprep.subr.bf16.mxu0 %v5579
      %7167 = vmatpush1.bf16.msra.mxu0 %v5578
      %7168 = vmatprep.subr.bf16.mxu0 %v5583
      %7169 = vmatpush1.bf16.msra.mxu0 %v5582
      %7170 = vmatprep.subr.bf16.mxu0 %v5587
      %7171 = vmatpush1.bf16.msra.mxu0 %v5586
      %7172 = vmatprep.subr.bf16.mxu0 %v5591
      %7173 = vmatpush1.bf16.msra.mxu0 %v5590
      %7174 = vmatprep.subr.bf16.mxu0 %v5595
      %7175 = vmatpush1.bf16.msra.mxu0 %v5594
      %7176 = vmatprep.subr.bf16.mxu0 %v5599
      %7177 = vmatpush1.bf16.msra.mxu0 %v5598
      %7178 = vmatprep.subr.bf16.mxu0 %v5603
      %7179 = vmatpush1.bf16.msra.mxu0 %v5602
      %7180 = vmatprep.subr.bf16.mxu0 %v5607
      %7181 = vmatpush1.bf16.msra.mxu0 %v5606
      %7182 = vmatprep.subr.bf16.mxu0 %v5611
      %7183 = vmatpush1.bf16.msra.mxu0 %v5610
      %7184 = vmatprep.mubr.bf16.mxu0 %v2867
      %7185 = vmatmul.mubr.bf16.gmra.mrb[0].mxu0 %v2866
      %v7186 = vpop.f32.mrb[0].mxu0
      %v7187 = vadd.f32 %v6834, %v7186
      %v7188 = vpop.f32.mrb[0].mxu0
      %v7189 = vadd.f32 %v6836, %v7188
      %v7190 = vpop.f32.mrb[0].mxu0
      %v7191 = vadd.f32 %v6838, %v7190
      %v7192 = vpop.f32.mrb[0].mxu0
      %v7193 = vadd.f32 %v6840, %v7192
      %7194 = vmatprep.mubr.bf16.mxu0 %v2883
      %7195 = vmatmul.mubr.bf16.gmra.mrb[0].mxu0 %v2882
      %v7196 = vpop.f32.mrb[0].mxu0
      %v7197 = vadd.f32 %v6844, %v7196
      %v7198 = vpop.f32.mrb[0].mxu0
      %v7199 = vadd.f32 %v6846, %v7198
      %v7200 = vpop.f32.mrb[0].mxu0
      %v7201 = vadd.f32 %v6848, %v7200
      %v7202 = vpop.f32.mrb[0].mxu0
      %v7203 = vadd.f32 %v6850, %v7202
      %7204 = vmatprep.mubr.bf16.mxu0 %v2899
      %7205 = vmatmul.mubr.bf16.gmra.mrb[0].mxu0 %v2898
      %v7206 = vpop.f32.mrb[0].mxu0
      %v7207 = vadd.f32 %v6854, %v7206
      %v7208 = vpop.f32.mrb[0].mxu0
      %v7209 = vadd.f32 %v6856, %v7208
      %v7210 = vpop.f32.mrb[0].mxu0
      %v7211 = vadd.f32 %v6858, %v7210
      %v7212 = vpop.f32.mrb[0].mxu0
      %v7213 = vadd.f32 %v6860, %v7212
      %7214 = vmatprep.mubr.bf16.mxu0 %v2915
      %7215 = vmatmul.mubr.bf16.gmra.mrb[0].mxu0 %v2914
      %v7216 = vpop.f32.mrb[0].mxu0
      %v7217 = vadd.f32 %v6864, %v7216
      %v7218 = vpop.f32.mrb[0].mxu0
      %v7219 = vadd.f32 %v6866, %v7218
      %v7220 = vpop.f32.mrb[0].mxu0
      %v7221 = vadd.f32 %v6868, %v7220
      %v7222 = vpop.f32.mrb[0].mxu0
      %v7223 = vadd.f32 %v6870, %v7222
      %7224 = vmatprep.mubr.bf16.mxu0 %v2931
      %7225 = vmatmul.mubr.bf16.gmra.mrb[0].mxu0 %v2930
      %v7226 = vpop.f32.mrb[0].mxu0
      %v7227 = vadd.f32 %v6874, %v7226
      %v7228 = vpop.f32.mrb[0].mxu0
      %v7229 = vadd.f32 %v6876, %v7228
      %v7230 = vpop.f32.mrb[0].mxu0
      %v7231 = vadd.f32 %v6878, %v7230
      %v7232 = vpop.f32.mrb[0].mxu0
      %v7233 = vadd.f32 %v6880, %v7232
      %7234 = vmatprep.mubr.bf16.mxu0 %v2947
      %7235 = vmatmul.mubr.bf16.gmra.mrb[0].mxu0 %v2946
      %v7236 = vpop.f32.mrb[0].mxu0
      %v7237 = vadd.f32 %v6884, %v7236
      %v7238 = vpop.f32.mrb[0].mxu0
      %v7239 = vadd.f32 %v6886, %v7238
      %v7240 = vpop.f32.mrb[0].mxu0
      %v7241 = vadd.f32 %v6888, %v7240
      %v7242 = vpop.f32.mrb[0].mxu0
      %v7243 = vadd.f32 %v6890, %v7242
      %7244 = vmatprep.mubr.bf16.mxu0 %v2963
      %7245 = vmatmul.mubr.bf16.gmra.mrb[0].mxu0 %v2962
      %v7246 = vpop.f32.mrb[0].mxu0
      %v7247 = vadd.f32 %v6894, %v7246
      %v7248 = vpop.f32.mrb[0].mxu0
      %v7249 = vadd.f32 %v6896, %v7248
      %v7250 = vpop.f32.mrb[0].mxu0
      %v7251 = vadd.f32 %v6898, %v7250
      %v7252 = vpop.f32.mrb[0].mxu0
      %v7253 = vadd.f32 %v6900, %v7252
      %7254 = vmatprep.mubr.bf16.mxu0 %v2979
      %7255 = vmatmul.mubr.bf16.gmra.mrb[0].mxu0 %v2978
      %v7256 = vpop.f32.mrb[0].mxu0
      %v7257 = vadd.f32 %v6904, %v7256
      %v7258 = vpop.f32.mrb[0].mxu0
      %v7259 = vadd.f32 %v6906, %v7258
      %v7260 = vpop.f32.mrb[0].mxu0
      %v7261 = vadd.f32 %v6908, %v7260
      %v7262 = vpop.f32.mrb[0].mxu0
      %v7263 = vadd.f32 %v6910, %v7262
      %7264 = vmatprep.mubr.bf16.mxu0 %v2995
      %7265 = vmatmul.mubr.bf16.gmra.mrb[0].mxu0 %v2994
      %v7266 = vpop.f32.mrb[0].mxu0
      %v7267 = vadd.f32 %v6914, %v7266
      %v7268 = vpop.f32.mrb[0].mxu0
      %v7269 = vadd.f32 %v6916, %v7268
      %v7270 = vpop.f32.mrb[0].mxu0
      %v7271 = vadd.f32 %v6918, %v7270
      %v7272 = vpop.f32.mrb[0].mxu0
      %v7273 = vadd.f32 %v6920, %v7272
      %7274 = vmatprep.mubr.bf16.mxu0 %v3011
      %7275 = vmatmul.mubr.bf16.gmra.mrb[0].mxu0 %v3010
      %v7276 = vpop.f32.mrb[0].mxu0
      %v7277 = vadd.f32 %v6924, %v7276
      %v7278 = vpop.f32.mrb[0].mxu0
      %v7279 = vadd.f32 %v6926, %v7278
      %v7280 = vpop.f32.mrb[0].mxu0
      %v7281 = vadd.f32 %v6928, %v7280
      %v7282 = vpop.f32.mrb[0].mxu0
      %v7283 = vadd.f32 %v6930, %v7282
      %7284 = vmatprep.mubr.bf16.mxu0 %v3027
      %7285 = vmatmul.mubr.bf16.gmra.mrb[0].mxu0 %v3026
      %v7286 = vpop.f32.mrb[0].mxu0
      %v7287 = vadd.f32 %v6934, %v7286
      %v7288 = vpop.f32.mrb[0].mxu0
      %v7289 = vadd.f32 %v6936, %v7288
      %v7290 = vpop.f32.mrb[0].mxu0
      %v7291 = vadd.f32 %v6938, %v7290
      %v7292 = vpop.f32.mrb[0].mxu0
      %v7293 = vadd.f32 %v6940, %v7292
      %7294 = vmatprep.mubr.bf16.mxu0 %v3043
      %7295 = vmatmul.mubr.bf16.gmra.mrb[0].mxu0 %v3042
      %v7296 = vpop.f32.mrb[0].mxu0
      %v7297 = vadd.f32 %v6944, %v7296
      %v7298 = vpop.f32.mrb[0].mxu0
      %v7299 = vadd.f32 %v6946, %v7298
      %v7300 = vpop.f32.mrb[0].mxu0
      %v7301 = vadd.f32 %v6948, %v7300
      %v7302 = vpop.f32.mrb[0].mxu0
      %v7303 = vadd.f32 %v6950, %v7302
      %7304 = vmatprep.mubr.bf16.mxu0 %v3059
      %7305 = vmatmul.mubr.bf16.gmra.mrb[0].mxu0 %v3058
      %v7306 = vpop.f32.mrb[0].mxu0
      %v7307 = vadd.f32 %v6954, %v7306
      %v7308 = vpop.f32.mrb[0].mxu0
      %v7309 = vadd.f32 %v6956, %v7308
      %v7310 = vpop.f32.mrb[0].mxu0
      %v7311 = vadd.f32 %v6958, %v7310
      %v7312 = vpop.f32.mrb[0].mxu0
      %v7313 = vadd.f32 %v6960, %v7312
      %7314 = vmatprep.mubr.bf16.mxu0 %v3075
      %7315 = vmatmul.mubr.bf16.gmra.mrb[0].mxu0 %v3074
      %v7316 = vpop.f32.mrb[0].mxu0
      %v7317 = vadd.f32 %v6964, %v7316
      %v7318 = vpop.f32.mrb[0].mxu0
      %v7319 = vadd.f32 %v6966, %v7318
      %v7320 = vpop.f32.mrb[0].mxu0
      %v7321 = vadd.f32 %v6968, %v7320
      %v7322 = vpop.f32.mrb[0].mxu0
      %v7323 = vadd.f32 %v6970, %v7322
      %7324 = vmatprep.mubr.bf16.mxu0 %v3091
      %7325 = vmatmul.mubr.bf16.gmra.mrb[0].mxu0 %v3090
      %v7326 = vpop.f32.mrb[0].mxu0
      %v7327 = vadd.f32 %v6974, %v7326
      %v7328 = vpop.f32.mrb[0].mxu0
      %v7329 = vadd.f32 %v6976, %v7328
      %v7330 = vpop.f32.mrb[0].mxu0
      %v7331 = vadd.f32 %v6978, %v7330
      %v7332 = vpop.f32.mrb[0].mxu0
      %v7333 = vadd.f32 %v6980, %v7332
      %7334 = vmatprep.mubr.bf16.mxu0 %v3107
      %7335 = vmatmul.mubr.bf16.gmra.mrb[0].mxu0 %v3106
      %v7336 = vpop.f32.mrb[0].mxu0
      %v7337 = vadd.f32 %v6984, %v7336
      %v7338 = vpop.f32.mrb[0].mxu0
      %v7339 = vadd.f32 %v6986, %v7338
      %v7340 = vpop.f32.mrb[0].mxu0
      %v7341 = vadd.f32 %v6988, %v7340
      %v7342 = vpop.f32.mrb[0].mxu0
      %v7343 = vadd.f32 %v6990, %v7342
      %7344 = vmatprep.mubr.bf16.mxu0 %v3123
      %7345 = vmatmul.mubr.bf16.gmra.mrb[0].mxu0 %v3122
      %v7346 = vpop.f32.mrb[0].mxu0
      %v7347 = vadd.f32 %v6994, %v7346
      %v7348 = vpop.f32.mrb[0].mxu0
      %v7349 = vadd.f32 %v6996, %v7348
      %v7350 = vpop.f32.mrb[0].mxu0
      %v7351 = vadd.f32 %v6998, %v7350
      %v7352 = vpop.f32.mrb[0].mxu0
      %v7353 = vadd.f32 %v7000, %v7352
      %7354 = vmatprep.mubr.bf16.mxu0 %v3139
      %7355 = vmatmul.mubr.bf16.gmra.mrb[0].mxu0 %v3138
      %v7356 = vpop.f32.mrb[0].mxu0
      %v7357 = vadd.f32 %v7004, %v7356
      %v7358 = vpop.f32.mrb[0].mxu0
      %v7359 = vadd.f32 %v7006, %v7358
      %v7360 = vpop.f32.mrb[0].mxu0
      %v7361 = vadd.f32 %v7008, %v7360
      %v7362 = vpop.f32.mrb[0].mxu0
      %v7363 = vadd.f32 %v7010, %v7362
      %7364 = vmatprep.mubr.bf16.mxu0 %v3155
      %7365 = vmatmul.mubr.bf16.gmra.mrb[0].mxu0 %v3154
      %v7366 = vpop.f32.mrb[0].mxu0
      %v7367 = vadd.f32 %v7014, %v7366
      %v7368 = vpop.f32.mrb[0].mxu0
      %v7369 = vadd.f32 %v7016, %v7368
      %v7370 = vpop.f32.mrb[0].mxu0
      %v7371 = vadd.f32 %v7018, %v7370
      %v7372 = vpop.f32.mrb[0].mxu0
      %v7373 = vadd.f32 %v7020, %v7372
      %7374 = vmatprep.mubr.bf16.mxu0 %v3171
      %7375 = vmatmul.mubr.bf16.gmra.mrb[0].mxu0 %v3170
      %v7376 = vpop.f32.mrb[0].mxu0
      %v7377 = vadd.f32 %v7024, %v7376
      %v7378 = vpop.f32.mrb[0].mxu0
      %v7379 = vadd.f32 %v7026, %v7378
      %v7380 = vpop.f32.mrb[0].mxu0
      %v7381 = vadd.f32 %v7028, %v7380
      %v7382 = vpop.f32.mrb[0].mxu0
      %v7383 = vadd.f32 %v7030, %v7382
      %7384 = vmatprep.mubr.bf16.mxu0 %v3187
      %7385 = vmatmul.mubr.bf16.gmra.mrb[0].mxu0 %v3186
      %v7386 = vpop.f32.mrb[0].mxu0
      %v7387 = vadd.f32 %v7034, %v7386
      %v7388 = vpop.f32.mrb[0].mxu0
      %v7389 = vadd.f32 %v7036, %v7388
      %v7390 = vpop.f32.mrb[0].mxu0
      %v7391 = vadd.f32 %v7038, %v7390
      %v7392 = vpop.f32.mrb[0].mxu0
      %v7393 = vadd.f32 %v7040, %v7392
      %7394 = vmatprep.mubr.bf16.mxu0 %v3203
      %7395 = vmatmul.mubr.bf16.gmra.mrb[0].mxu0 %v3202
      %v7396 = vpop.f32.mrb[0].mxu0
      %v7397 = vadd.f32 %v7044, %v7396
      %v7398 = vpop.f32.mrb[0].mxu0
      %v7399 = vadd.f32 %v7046, %v7398
      %v7400 = vpop.f32.mrb[0].mxu0
      %v7401 = vadd.f32 %v7048, %v7400
      %v7402 = vpop.f32.mrb[0].mxu0
      %v7403 = vadd.f32 %v7050, %v7402
      %7404 = vmatprep.mubr.bf16.mxu0 %v3219
      %7405 = vmatmul.mubr.bf16.gmra.mrb[0].mxu0 %v3218
      %v7406 = vpop.f32.mrb[0].mxu0
      %v7407 = vadd.f32 %v7054, %v7406
      %v7408 = vpop.f32.mrb[0].mxu0
      %v7409 = vadd.f32 %v7056, %v7408
      %v7410 = vpop.f32.mrb[0].mxu0
      %v7411 = vadd.f32 %v7058, %v7410
      %v7412 = vpop.f32.mrb[0].mxu0
      %v7413 = vadd.f32 %v7060, %v7412
      %7414 = vmatprep.mubr.bf16.mxu0 %v3235
      %7415 = vmatmul.mubr.bf16.gmra.mrb[0].mxu0 %v3234
      %v7416 = vpop.f32.mrb[0].mxu0
      %v7417 = vadd.f32 %v7064, %v7416
      %v7418 = vpop.f32.mrb[0].mxu0
      %v7419 = vadd.f32 %v7066, %v7418
      %v7420 = vpop.f32.mrb[0].mxu0
      %v7421 = vadd.f32 %v7068, %v7420
      %v7422 = vpop.f32.mrb[0].mxu0
      %v7423 = vadd.f32 %v7070, %v7422
      %7424 = vmatprep.mubr.bf16.mxu0 %v3251
      %7425 = vmatmul.mubr.bf16.gmra.mrb[0].mxu0 %v3250
      %v7426 = vpop.f32.mrb[0].mxu0
      %v7427 = vadd.f32 %v7074, %v7426
      %v7428 = vpop.f32.mrb[0].mxu0
      %v7429 = vadd.f32 %v7076, %v7428
      %v7430 = vpop.f32.mrb[0].mxu0
      %v7431 = vadd.f32 %v7078, %v7430
      %v7432 = vpop.f32.mrb[0].mxu0
      %v7433 = vadd.f32 %v7080, %v7432
      %7434 = vmatprep.mubr.bf16.mxu0 %v3267
      %7435 = vmatmul.mubr.bf16.gmra.mrb[0].mxu0 %v3266
      %v7436 = vpop.f32.mrb[0].mxu0
      %v7437 = vadd.f32 %v7084, %v7436
      %v7438 = vpop.f32.mrb[0].mxu0
      %v7439 = vadd.f32 %v7086, %v7438
      %v7440 = vpop.f32.mrb[0].mxu0
      %v7441 = vadd.f32 %v7088, %v7440
      %v7442 = vpop.f32.mrb[0].mxu0
      %v7443 = vadd.f32 %v7090, %v7442
      %7444 = vmatprep.mubr.bf16.mxu0 %v3283
      %7445 = vmatmul.mubr.bf16.gmra.mrb[0].mxu0 %v3282
      %v7446 = vpop.f32.mrb[0].mxu0
      %v7447 = vadd.f32 %v7094, %v7446
      %v7448 = vpop.f32.mrb[0].mxu0
      %v7449 = vadd.f32 %v7096, %v7448
      %v7450 = vpop.f32.mrb[0].mxu0
      %v7451 = vadd.f32 %v7098, %v7450
      %v7452 = vpop.f32.mrb[0].mxu0
      %v7453 = vadd.f32 %v7100, %v7452
      %7454 = vmatprep.mubr.bf16.mxu0 %v3299
      %7455 = vmatmul.mubr.bf16.gmra.mrb[0].mxu0 %v3298
      %v7456 = vpop.f32.mrb[0].mxu0
      %v7457 = vadd.f32 %v7104, %v7456
      %v7458 = vpop.f32.mrb[0].mxu0
      %v7459 = vadd.f32 %v7106, %v7458
      %v7460 = vpop.f32.mrb[0].mxu0
      %v7461 = vadd.f32 %v7108, %v7460
      %v7462 = vpop.f32.mrb[0].mxu0
      %v7463 = vadd.f32 %v7110, %v7462
      %7464 = vmatprep.mubr.bf16.mxu0 %v3315
      %7465 = vmatmul.mubr.bf16.gmra.mrb[0].mxu0 %v3314
      %v7466 = vpop.f32.mrb[0].mxu0
      %v7467 = vadd.f32 %v7114, %v7466
      %v7468 = vpop.f32.mrb[0].mxu0
      %v7469 = vadd.f32 %v7116, %v7468
      %v7470 = vpop.f32.mrb[0].mxu0
      %v7471 = vadd.f32 %v7118, %v7470
      %v7472 = vpop.f32.mrb[0].mxu0
      %v7473 = vadd.f32 %v7120, %v7472
      %7474 = vmatprep.mubr.bf16.mxu0 %v3331
      %7475 = vmatmul.mubr.bf16.gmra.mrb[0].mxu0 %v3330
      %v7476 = vpop.f32.mrb[0].mxu0
      %v7477 = vadd.f32 %v7124, %v7476
      %v7478 = vpop.f32.mrb[0].mxu0
      %v7479 = vadd.f32 %v7126, %v7478
      %v7480 = vpop.f32.mrb[0].mxu0
      %v7481 = vadd.f32 %v7128, %v7480
      %v7482 = vpop.f32.mrb[0].mxu0
      %v7483 = vadd.f32 %v7130, %v7482
      %7484 = vmatprep.mubr.bf16.mxu0 %v3347
      %7485 = vmatmul.mubr.bf16.gmra.mrb[0].mxu0 %v3346
      %v7486 = vpop.f32.mrb[0].mxu0
      %v7487 = vadd.f32 %v7134, %v7486
      %v7488 = vpop.f32.mrb[0].mxu0
      %v7489 = vadd.f32 %v7136, %v7488
      %v7490 = vpop.f32.mrb[0].mxu0
      %v7491 = vadd.f32 %v7138, %v7490
      %v7492 = vpop.f32.mrb[0].mxu0
      %v7493 = vadd.f32 %v7140, %v7492
      %7494 = vmatprep.mubr.bf16.mxu0 %v3363
      %7495 = vmatmul.mubr.bf16.gmra.mrb[0].mxu0 %v3362
      %v7496 = vpop.f32.mrb[0].mxu0
      %v7497 = vadd.f32 %v7144, %v7496
      %v7498 = vpop.f32.mrb[0].mxu0
      %v7499 = vadd.f32 %v7146, %v7498
      %v7500 = vpop.f32.mrb[0].mxu0
      %v7501 = vadd.f32 %v7148, %v7500
      %v7502 = vpop.f32.mrb[0].mxu0
      %v7503 = vadd.f32 %v7150, %v7502
      %7504 = vdwg.mxu0
      %7505 = vmatprep.subr.bf16.mxu0 %v5615
      %7506 = vmatpush1.bf16.msra.mxu0 %v5614
      %7507 = vmatprep.subr.bf16.mxu0 %v5619
      %7508 = vmatpush1.bf16.msra.mxu0 %v5618
      %7509 = vmatprep.subr.bf16.mxu0 %v5623
      %7510 = vmatpush1.bf16.msra.mxu0 %v5622
      %7511 = vmatprep.subr.bf16.mxu0 %v5627
      %7512 = vmatpush1.bf16.msra.mxu0 %v5626
      %7513 = vmatprep.subr.bf16.mxu0 %v5631
      %7514 = vmatpush1.bf16.msra.mxu0 %v5630
      %7515 = vmatprep.subr.bf16.mxu0 %v5635
      %7516 = vmatpush1.bf16.msra.mxu0 %v5634
      %7517 = vmatprep.subr.bf16.mxu0 %v5639
      %7518 = vmatpush1.bf16.msra.mxu0 %v5638
      %7519 = vmatprep.subr.bf16.mxu0 %v5643
      %7520 = vmatpush1.bf16.msra.mxu0 %v5642
      %7521 = vmatprep.subr.bf16.mxu0 %v5647
      %7522 = vmatpush1.bf16.msra.mxu0 %v5646
      %7523 = vmatprep.subr.bf16.mxu0 %v5651
      %7524 = vmatpush1.bf16.msra.mxu0 %v5650
      %7525 = vmatprep.subr.bf16.mxu0 %v5655
      %7526 = vmatpush1.bf16.msra.mxu0 %v5654
      %7527 = vmatprep.subr.bf16.mxu0 %v5659
      %7528 = vmatpush1.bf16.msra.mxu0 %v5658
      %7529 = vmatprep.subr.bf16.mxu0 %v5663
      %7530 = vmatpush1.bf16.msra.mxu0 %v5662
      %7531 = vmatprep.subr.bf16.mxu0 %v5667
      %7532 = vmatpush1.bf16.msra.mxu0 %v5666
      %7533 = vmatprep.subr.bf16.mxu0 %v5671
      %7534 = vmatpush1.bf16.msra.mxu0 %v5670
      %7535 = vmatprep.subr.bf16.mxu0 %v5675
      %7536 = vmatpush1.bf16.msra.mxu0 %v5674
      %7537 = vmatprep.mubr.bf16.mxu0 %v2869
      %7538 = vmatmul.mubr.bf16.gmra.mrb[0].mxu0 %v2868
      %v7539 = vpop.f32.mrb[0].mxu0
      %v7540 = vadd.f32 %v7187, %v7539
      %v7541 = vpop.f32.mrb[0].mxu0
      %v7542 = vadd.f32 %v7189, %v7541
      %v7543 = vpop.f32.mrb[0].mxu0
      %v7544 = vadd.f32 %v7191, %v7543
      %v7545 = vpop.f32.mrb[0].mxu0
      %v7546 = vadd.f32 %v7193, %v7545
      %7547 = vmatprep.mubr.bf16.mxu0 %v2885
      %7548 = vmatmul.mubr.bf16.gmra.mrb[0].mxu0 %v2884
      %v7549 = vpop.f32.mrb[0].mxu0
      %v7550 = vadd.f32 %v7197, %v7549
      %v7551 = vpop.f32.mrb[0].mxu0
      %v7552 = vadd.f32 %v7199, %v7551
      %v7553 = vpop.f32.mrb[0].mxu0
      %v7554 = vadd.f32 %v7201, %v7553
      %v7555 = vpop.f32.mrb[0].mxu0
      %v7556 = vadd.f32 %v7203, %v7555
      %7557 = vmatprep.mubr.bf16.mxu0 %v2901
      %7558 = vmatmul.mubr.bf16.gmra.mrb[0].mxu0 %v2900
      %v7559 = vpop.f32.mrb[0].mxu0
      %v7560 = vadd.f32 %v7207, %v7559
      %v7561 = vpop.f32.mrb[0].mxu0
      %v7562 = vadd.f32 %v7209, %v7561
      %v7563 = vpop.f32.mrb[0].mxu0
      %v7564 = vadd.f32 %v7211, %v7563
      %v7565 = vpop.f32.mrb[0].mxu0
      %v7566 = vadd.f32 %v7213, %v7565
      %7567 = vmatprep.mubr.bf16.mxu0 %v2917
      %7568 = vmatmul.mubr.bf16.gmra.mrb[0].mxu0 %v2916
      %v7569 = vpop.f32.mrb[0].mxu0
      %v7570 = vadd.f32 %v7217, %v7569
      %v7571 = vpop.f32.mrb[0].mxu0
      %v7572 = vadd.f32 %v7219, %v7571
      %v7573 = vpop.f32.mrb[0].mxu0
      %v7574 = vadd.f32 %v7221, %v7573
      %v7575 = vpop.f32.mrb[0].mxu0
      %v7576 = vadd.f32 %v7223, %v7575
      %7577 = vmatprep.mubr.bf16.mxu0 %v2933
      %7578 = vmatmul.mubr.bf16.gmra.mrb[0].mxu0 %v2932
      %v7579 = vpop.f32.mrb[0].mxu0
      %v7580 = vadd.f32 %v7227, %v7579
      %v7581 = vpop.f32.mrb[0].mxu0
      %v7582 = vadd.f32 %v7229, %v7581
      %v7583 = vpop.f32.mrb[0].mxu0
      %v7584 = vadd.f32 %v7231, %v7583
      %v7585 = vpop.f32.mrb[0].mxu0
      %v7586 = vadd.f32 %v7233, %v7585
      %7587 = vmatprep.mubr.bf16.mxu0 %v2949
      %7588 = vmatmul.mubr.bf16.gmra.mrb[0].mxu0 %v2948
      %v7589 = vpop.f32.mrb[0].mxu0
      %v7590 = vadd.f32 %v7237, %v7589
      %v7591 = vpop.f32.mrb[0].mxu0
      %v7592 = vadd.f32 %v7239, %v7591
      %v7593 = vpop.f32.mrb[0].mxu0
      %v7594 = vadd.f32 %v7241, %v7593
      %v7595 = vpop.f32.mrb[0].mxu0
      %v7596 = vadd.f32 %v7243, %v7595
      %7597 = vmatprep.mubr.bf16.mxu0 %v2965
      %7598 = vmatmul.mubr.bf16.gmra.mrb[0].mxu0 %v2964
      %v7599 = vpop.f32.mrb[0].mxu0
      %v7600 = vadd.f32 %v7247, %v7599
      %v7601 = vpop.f32.mrb[0].mxu0
      %v7602 = vadd.f32 %v7249, %v7601
      %v7603 = vpop.f32.mrb[0].mxu0
      %v7604 = vadd.f32 %v7251, %v7603
      %v7605 = vpop.f32.mrb[0].mxu0
      %v7606 = vadd.f32 %v7253, %v7605
      %7607 = vmatprep.mubr.bf16.mxu0 %v2981
      %7608 = vmatmul.mubr.bf16.gmra.mrb[0].mxu0 %v2980
      %v7609 = vpop.f32.mrb[0].mxu0
      %v7610 = vadd.f32 %v7257, %v7609
      %v7611 = vpop.f32.mrb[0].mxu0
      %v7612 = vadd.f32 %v7259, %v7611
      %v7613 = vpop.f32.mrb[0].mxu0
      %v7614 = vadd.f32 %v7261, %v7613
      %v7615 = vpop.f32.mrb[0].mxu0
      %v7616 = vadd.f32 %v7263, %v7615
      %7617 = vmatprep.mubr.bf16.mxu0 %v2997
      %7618 = vmatmul.mubr.bf16.gmra.mrb[0].mxu0 %v2996
      %v7619 = vpop.f32.mrb[0].mxu0
      %v7620 = vadd.f32 %v7267, %v7619
      %v7621 = vpop.f32.mrb[0].mxu0
      %v7622 = vadd.f32 %v7269, %v7621
      %v7623 = vpop.f32.mrb[0].mxu0
      %v7624 = vadd.f32 %v7271, %v7623
      %v7625 = vpop.f32.mrb[0].mxu0
      %v7626 = vadd.f32 %v7273, %v7625
      %7627 = vmatprep.mubr.bf16.mxu0 %v3013
      %7628 = vmatmul.mubr.bf16.gmra.mrb[0].mxu0 %v3012
      %v7629 = vpop.f32.mrb[0].mxu0
      %v7630 = vadd.f32 %v7277, %v7629
      %v7631 = vpop.f32.mrb[0].mxu0
      %v7632 = vadd.f32 %v7279, %v7631
      %v7633 = vpop.f32.mrb[0].mxu0
      %v7634 = vadd.f32 %v7281, %v7633
      %v7635 = vpop.f32.mrb[0].mxu0
      %v7636 = vadd.f32 %v7283, %v7635
      %7637 = vmatprep.mubr.bf16.mxu0 %v3029
      %7638 = vmatmul.mubr.bf16.gmra.mrb[0].mxu0 %v3028
      %v7639 = vpop.f32.mrb[0].mxu0
      %v7640 = vadd.f32 %v7287, %v7639
      %v7641 = vpop.f32.mrb[0].mxu0
      %v7642 = vadd.f32 %v7289, %v7641
      %v7643 = vpop.f32.mrb[0].mxu0
      %v7644 = vadd.f32 %v7291, %v7643
      %v7645 = vpop.f32.mrb[0].mxu0
      %v7646 = vadd.f32 %v7293, %v7645
      %7647 = vmatprep.mubr.bf16.mxu0 %v3045
      %7648 = vmatmul.mubr.bf16.gmra.mrb[0].mxu0 %v3044
      %v7649 = vpop.f32.mrb[0].mxu0
      %v7650 = vadd.f32 %v7297, %v7649
      %v7651 = vpop.f32.mrb[0].mxu0
      %v7652 = vadd.f32 %v7299, %v7651
      %v7653 = vpop.f32.mrb[0].mxu0
      %v7654 = vadd.f32 %v7301, %v7653
      %v7655 = vpop.f32.mrb[0].mxu0
      %v7656 = vadd.f32 %v7303, %v7655
      %7657 = vmatprep.mubr.bf16.mxu0 %v3061
      %7658 = vmatmul.mubr.bf16.gmra.mrb[0].mxu0 %v3060
      %v7659 = vpop.f32.mrb[0].mxu0
      %v7660 = vadd.f32 %v7307, %v7659
      %v7661 = vpop.f32.mrb[0].mxu0
      %v7662 = vadd.f32 %v7309, %v7661
      %v7663 = vpop.f32.mrb[0].mxu0
      %v7664 = vadd.f32 %v7311, %v7663
      %v7665 = vpop.f32.mrb[0].mxu0
      %v7666 = vadd.f32 %v7313, %v7665
      %7667 = vmatprep.mubr.bf16.mxu0 %v3077
      %7668 = vmatmul.mubr.bf16.gmra.mrb[0].mxu0 %v3076
      %v7669 = vpop.f32.mrb[0].mxu0
      %v7670 = vadd.f32 %v7317, %v7669
      %v7671 = vpop.f32.mrb[0].mxu0
      %v7672 = vadd.f32 %v7319, %v7671
      %v7673 = vpop.f32.mrb[0].mxu0
      %v7674 = vadd.f32 %v7321, %v7673
      %v7675 = vpop.f32.mrb[0].mxu0
      %v7676 = vadd.f32 %v7323, %v7675
      %7677 = vmatprep.mubr.bf16.mxu0 %v3093
      %7678 = vmatmul.mubr.bf16.gmra.mrb[0].mxu0 %v3092
      %v7679 = vpop.f32.mrb[0].mxu0
      %v7680 = vadd.f32 %v7327, %v7679
      %v7681 = vpop.f32.mrb[0].mxu0
      %v7682 = vadd.f32 %v7329, %v7681
      %v7683 = vpop.f32.mrb[0].mxu0
      %v7684 = vadd.f32 %v7331, %v7683
      %v7685 = vpop.f32.mrb[0].mxu0
      %v7686 = vadd.f32 %v7333, %v7685
      %7687 = vmatprep.mubr.bf16.mxu0 %v3109
      %7688 = vmatmul.mubr.bf16.gmra.mrb[0].mxu0 %v3108
      %v7689 = vpop.f32.mrb[0].mxu0
      %v7690 = vadd.f32 %v7337, %v7689
      %v7691 = vpop.f32.mrb[0].mxu0
      %v7692 = vadd.f32 %v7339, %v7691
      %v7693 = vpop.f32.mrb[0].mxu0
      %v7694 = vadd.f32 %v7341, %v7693
      %v7695 = vpop.f32.mrb[0].mxu0
      %v7696 = vadd.f32 %v7343, %v7695
      %7697 = vmatprep.mubr.bf16.mxu0 %v3125
      %7698 = vmatmul.mubr.bf16.gmra.mrb[0].mxu0 %v3124
      %v7699 = vpop.f32.mrb[0].mxu0
      %v7700 = vadd.f32 %v7347, %v7699
      %v7701 = vpop.f32.mrb[0].mxu0
      %v7702 = vadd.f32 %v7349, %v7701
      %v7703 = vpop.f32.mrb[0].mxu0
      %v7704 = vadd.f32 %v7351, %v7703
      %v7705 = vpop.f32.mrb[0].mxu0
      %v7706 = vadd.f32 %v7353, %v7705
      %7707 = vmatprep.mubr.bf16.mxu0 %v3141
      %7708 = vmatmul.mubr.bf16.gmra.mrb[0].mxu0 %v3140
      %v7709 = vpop.f32.mrb[0].mxu0
      %v7710 = vadd.f32 %v7357, %v7709
      %v7711 = vpop.f32.mrb[0].mxu0
      %v7712 = vadd.f32 %v7359, %v7711
      %v7713 = vpop.f32.mrb[0].mxu0
      %v7714 = vadd.f32 %v7361, %v7713
      %v7715 = vpop.f32.mrb[0].mxu0
      %v7716 = vadd.f32 %v7363, %v7715
      %7717 = vmatprep.mubr.bf16.mxu0 %v3157
      %7718 = vmatmul.mubr.bf16.gmra.mrb[0].mxu0 %v3156
      %v7719 = vpop.f32.mrb[0].mxu0
      %v7720 = vadd.f32 %v7367, %v7719
      %v7721 = vpop.f32.mrb[0].mxu0
      %v7722 = vadd.f32 %v7369, %v7721
      %v7723 = vpop.f32.mrb[0].mxu0
      %v7724 = vadd.f32 %v7371, %v7723
      %v7725 = vpop.f32.mrb[0].mxu0
      %v7726 = vadd.f32 %v7373, %v7725
      %7727 = vmatprep.mubr.bf16.mxu0 %v3173
      %7728 = vmatmul.mubr.bf16.gmra.mrb[0].mxu0 %v3172
      %v7729 = vpop.f32.mrb[0].mxu0
      %v7730 = vadd.f32 %v7377, %v7729
      %v7731 = vpop.f32.mrb[0].mxu0
      %v7732 = vadd.f32 %v7379, %v7731
      %v7733 = vpop.f32.mrb[0].mxu0
      %v7734 = vadd.f32 %v7381, %v7733
      %v7735 = vpop.f32.mrb[0].mxu0
      %v7736 = vadd.f32 %v7383, %v7735
      %7737 = vmatprep.mubr.bf16.mxu0 %v3189
      %7738 = vmatmul.mubr.bf16.gmra.mrb[0].mxu0 %v3188
      %v7739 = vpop.f32.mrb[0].mxu0
      %v7740 = vadd.f32 %v7387, %v7739
      %v7741 = vpop.f32.mrb[0].mxu0
      %v7742 = vadd.f32 %v7389, %v7741
      %v7743 = vpop.f32.mrb[0].mxu0
      %v7744 = vadd.f32 %v7391, %v7743
      %v7745 = vpop.f32.mrb[0].mxu0
      %v7746 = vadd.f32 %v7393, %v7745
      %7747 = vmatprep.mubr.bf16.mxu0 %v3205
      %7748 = vmatmul.mubr.bf16.gmra.mrb[0].mxu0 %v3204
      %v7749 = vpop.f32.mrb[0].mxu0
      %v7750 = vadd.f32 %v7397, %v7749
      %v7751 = vpop.f32.mrb[0].mxu0
      %v7752 = vadd.f32 %v7399, %v7751
      %v7753 = vpop.f32.mrb[0].mxu0
      %v7754 = vadd.f32 %v7401, %v7753
      %v7755 = vpop.f32.mrb[0].mxu0
      %v7756 = vadd.f32 %v7403, %v7755
      %7757 = vmatprep.mubr.bf16.mxu0 %v3221
      %7758 = vmatmul.mubr.bf16.gmra.mrb[0].mxu0 %v3220
      %v7759 = vpop.f32.mrb[0].mxu0
      %v7760 = vadd.f32 %v7407, %v7759
      %v7761 = vpop.f32.mrb[0].mxu0
      %v7762 = vadd.f32 %v7409, %v7761
      %v7763 = vpop.f32.mrb[0].mxu0
      %v7764 = vadd.f32 %v7411, %v7763
      %v7765 = vpop.f32.mrb[0].mxu0
      %v7766 = vadd.f32 %v7413, %v7765
      %7767 = vmatprep.mubr.bf16.mxu0 %v3237
      %7768 = vmatmul.mubr.bf16.gmra.mrb[0].mxu0 %v3236
      %v7769 = vpop.f32.mrb[0].mxu0
      %v7770 = vadd.f32 %v7417, %v7769
      %v7771 = vpop.f32.mrb[0].mxu0
      %v7772 = vadd.f32 %v7419, %v7771
      %v7773 = vpop.f32.mrb[0].mxu0
      %v7774 = vadd.f32 %v7421, %v7773
      %v7775 = vpop.f32.mrb[0].mxu0
      %v7776 = vadd.f32 %v7423, %v7775
      %7777 = vmatprep.mubr.bf16.mxu0 %v3253
      %7778 = vmatmul.mubr.bf16.gmra.mrb[0].mxu0 %v3252
      %v7779 = vpop.f32.mrb[0].mxu0
      %v7780 = vadd.f32 %v7427, %v7779
      %v7781 = vpop.f32.mrb[0].mxu0
      %v7782 = vadd.f32 %v7429, %v7781
      %v7783 = vpop.f32.mrb[0].mxu0
      %v7784 = vadd.f32 %v7431, %v7783
      %v7785 = vpop.f32.mrb[0].mxu0
      %v7786 = vadd.f32 %v7433, %v7785
      %7787 = vmatprep.mubr.bf16.mxu0 %v3269
      %7788 = vmatmul.mubr.bf16.gmra.mrb[0].mxu0 %v3268
      %v7789 = vpop.f32.mrb[0].mxu0
      %v7790 = vadd.f32 %v7437, %v7789
      %v7791 = vpop.f32.mrb[0].mxu0
      %v7792 = vadd.f32 %v7439, %v7791
      %v7793 = vpop.f32.mrb[0].mxu0
      %v7794 = vadd.f32 %v7441, %v7793
      %v7795 = vpop.f32.mrb[0].mxu0
      %v7796 = vadd.f32 %v7443, %v7795
      %7797 = vmatprep.mubr.bf16.mxu0 %v3285
      %7798 = vmatmul.mubr.bf16.gmra.mrb[0].mxu0 %v3284
      %v7799 = vpop.f32.mrb[0].mxu0
      %v7800 = vadd.f32 %v7447, %v7799
      %v7801 = vpop.f32.mrb[0].mxu0
      %v7802 = vadd.f32 %v7449, %v7801
      %v7803 = vpop.f32.mrb[0].mxu0
      %v7804 = vadd.f32 %v7451, %v7803
      %v7805 = vpop.f32.mrb[0].mxu0
      %v7806 = vadd.f32 %v7453, %v7805
      %7807 = vmatprep.mubr.bf16.mxu0 %v3301
      %7808 = vmatmul.mubr.bf16.gmra.mrb[0].mxu0 %v3300
      %v7809 = vpop.f32.mrb[0].mxu0
      %v7810 = vadd.f32 %v7457, %v7809
      %v7811 = vpop.f32.mrb[0].mxu0
      %v7812 = vadd.f32 %v7459, %v7811
      %v7813 = vpop.f32.mrb[0].mxu0
      %v7814 = vadd.f32 %v7461, %v7813
      %v7815 = vpop.f32.mrb[0].mxu0
      %v7816 = vadd.f32 %v7463, %v7815
      %7817 = vmatprep.mubr.bf16.mxu0 %v3317
      %7818 = vmatmul.mubr.bf16.gmra.mrb[0].mxu0 %v3316
      %v7819 = vpop.f32.mrb[0].mxu0
      %v7820 = vadd.f32 %v7467, %v7819
      %v7821 = vpop.f32.mrb[0].mxu0
      %v7822 = vadd.f32 %v7469, %v7821
      %v7823 = vpop.f32.mrb[0].mxu0
      %v7824 = vadd.f32 %v7471, %v7823
      %v7825 = vpop.f32.mrb[0].mxu0
      %v7826 = vadd.f32 %v7473, %v7825
      %7827 = vmatprep.mubr.bf16.mxu0 %v3333
      %7828 = vmatmul.mubr.bf16.gmra.mrb[0].mxu0 %v3332
      %v7829 = vpop.f32.mrb[0].mxu0
      %v7830 = vadd.f32 %v7477, %v7829
      %v7831 = vpop.f32.mrb[0].mxu0
      %v7832 = vadd.f32 %v7479, %v7831
      %v7833 = vpop.f32.mrb[0].mxu0
      %v7834 = vadd.f32 %v7481, %v7833
      %v7835 = vpop.f32.mrb[0].mxu0
      %v7836 = vadd.f32 %v7483, %v7835
      %7837 = vmatprep.mubr.bf16.mxu0 %v3349
      %7838 = vmatmul.mubr.bf16.gmra.mrb[0].mxu0 %v3348
      %v7839 = vpop.f32.mrb[0].mxu0
      %v7840 = vadd.f32 %v7487, %v7839
      %v7841 = vpop.f32.mrb[0].mxu0
      %v7842 = vadd.f32 %v7489, %v7841
      %v7843 = vpop.f32.mrb[0].mxu0
      %v7844 = vadd.f32 %v7491, %v7843
      %v7845 = vpop.f32.mrb[0].mxu0
      %v7846 = vadd.f32 %v7493, %v7845
      %7847 = vmatprep.mubr.bf16.mxu0 %v3365
      %7848 = vmatmul.mubr.bf16.gmra.mrb[0].mxu0 %v3364
      %v7849 = vpop.f32.mrb[0].mxu0
      %v7850 = vadd.f32 %v7497, %v7849
      %v7851 = vpop.f32.mrb[0].mxu0
      %v7852 = vadd.f32 %v7499, %v7851
      %v7853 = vpop.f32.mrb[0].mxu0
      %v7854 = vadd.f32 %v7501, %v7853
      %v7855 = vpop.f32.mrb[0].mxu0
      %v7856 = vadd.f32 %v7503, %v7855
      %7857 = vdwg.mxu0
      %7858 = vmatprep.subr.bf16.mxu0 %v5679
      %7859 = vmatpush1.bf16.msra.mxu0 %v5678
      %7860 = vmatprep.subr.bf16.mxu0 %v5683
      %7861 = vmatpush1.bf16.msra.mxu0 %v5682
      %7862 = vmatprep.subr.bf16.mxu0 %v5687
      %7863 = vmatpush1.bf16.msra.mxu0 %v5686
      %7864 = vmatprep.subr.bf16.mxu0 %v5691
      %7865 = vmatpush1.bf16.msra.mxu0 %v5690
      %7866 = vmatprep.subr.bf16.mxu0 %v5695
      %7867 = vmatpush1.bf16.msra.mxu0 %v5694
      %7868 = vmatprep.subr.bf16.mxu0 %v5699
      %7869 = vmatpush1.bf16.msra.mxu0 %v5698
      %7870 = vmatprep.subr.bf16.mxu0 %v5703
      %7871 = vmatpush1.bf16.msra.mxu0 %v5702
      %7872 = vmatprep.subr.bf16.mxu0 %v5707
      %7873 = vmatpush1.bf16.msra.mxu0 %v5706
      %7874 = vmatprep.subr.bf16.mxu0 %v5711
      %7875 = vmatpush1.bf16.msra.mxu0 %v5710
      %7876 = vmatprep.subr.bf16.mxu0 %v5715
      %7877 = vmatpush1.bf16.msra.mxu0 %v5714
      %7878 = vmatprep.subr.bf16.mxu0 %v5719
      %7879 = vmatpush1.bf16.msra.mxu0 %v5718
      %7880 = vmatprep.subr.bf16.mxu0 %v5723
      %7881 = vmatpush1.bf16.msra.mxu0 %v5722
      %7882 = vmatprep.subr.bf16.mxu0 %v5727
      %7883 = vmatpush1.bf16.msra.mxu0 %v5726
      %7884 = vmatprep.subr.bf16.mxu0 %v5731
      %7885 = vmatpush1.bf16.msra.mxu0 %v5730
      %7886 = vmatprep.subr.bf16.mxu0 %v5735
      %7887 = vmatpush1.bf16.msra.mxu0 %v5734
      %7888 = vmatprep.subr.bf16.mxu0 %v5739
      %7889 = vmatpush1.bf16.msra.mxu0 %v5738
      %7890 = vmatprep.mubr.bf16.mxu0 %v2871
      %7891 = vmatmul.mubr.bf16.gmra.mrb[0].mxu0 %v2870
      %v7892 = vpop.f32.mrb[0].mxu0
      %v7893 = vadd.f32 %v7540, %v7892
      %v7894 = vpop.f32.mrb[0].mxu0
      %v7895 = vadd.f32 %v7542, %v7894
      %v7896 = vpop.f32.mrb[0].mxu0
      %v7897 = vadd.f32 %v7544, %v7896
      %v7898 = vpop.f32.mrb[0].mxu0
      %v7899 = vadd.f32 %v7546, %v7898
      %7900 = vmatprep.mubr.bf16.mxu0 %v2887
      %7901 = vmatmul.mubr.bf16.gmra.mrb[0].mxu0 %v2886
      %v7902 = vpop.f32.mrb[0].mxu0
      %v7903 = vadd.f32 %v7550, %v7902
      %v7904 = vpop.f32.mrb[0].mxu0
      %v7905 = vadd.f32 %v7552, %v7904
      %v7906 = vpop.f32.mrb[0].mxu0
      %v7907 = vadd.f32 %v7554, %v7906
      %v7908 = vpop.f32.mrb[0].mxu0
      %v7909 = vadd.f32 %v7556, %v7908
      %7910 = vmatprep.mubr.bf16.mxu0 %v2903
      %7911 = vmatmul.mubr.bf16.gmra.mrb[0].mxu0 %v2902
      %v7912 = vpop.f32.mrb[0].mxu0
      %v7913 = vadd.f32 %v7560, %v7912
      %v7914 = vpop.f32.mrb[0].mxu0
      %v7915 = vadd.f32 %v7562, %v7914
      %v7916 = vpop.f32.mrb[0].mxu0
      %v7917 = vadd.f32 %v7564, %v7916
      %v7918 = vpop.f32.mrb[0].mxu0
      %v7919 = vadd.f32 %v7566, %v7918
      %7920 = vmatprep.mubr.bf16.mxu0 %v2919
      %7921 = vmatmul.mubr.bf16.gmra.mrb[0].mxu0 %v2918
      %v7922 = vpop.f32.mrb[0].mxu0
      %v7923 = vadd.f32 %v7570, %v7922
      %v7924 = vpop.f32.mrb[0].mxu0
      %v7925 = vadd.f32 %v7572, %v7924
      %v7926 = vpop.f32.mrb[0].mxu0
      %v7927 = vadd.f32 %v7574, %v7926
      %v7928 = vpop.f32.mrb[0].mxu0
      %v7929 = vadd.f32 %v7576, %v7928
      %7930 = vmatprep.mubr.bf16.mxu0 %v2935
      %7931 = vmatmul.mubr.bf16.gmra.mrb[0].mxu0 %v2934
      %v7932 = vpop.f32.mrb[0].mxu0
      %v7933 = vadd.f32 %v7580, %v7932
      %v7934 = vpop.f32.mrb[0].mxu0
      %v7935 = vadd.f32 %v7582, %v7934
      %v7936 = vpop.f32.mrb[0].mxu0
      %v7937 = vadd.f32 %v7584, %v7936
      %v7938 = vpop.f32.mrb[0].mxu0
      %v7939 = vadd.f32 %v7586, %v7938
      %7940 = vmatprep.mubr.bf16.mxu0 %v2951
      %7941 = vmatmul.mubr.bf16.gmra.mrb[0].mxu0 %v2950
      %v7942 = vpop.f32.mrb[0].mxu0
      %v7943 = vadd.f32 %v7590, %v7942
      %v7944 = vpop.f32.mrb[0].mxu0
      %v7945 = vadd.f32 %v7592, %v7944
      %v7946 = vpop.f32.mrb[0].mxu0
      %v7947 = vadd.f32 %v7594, %v7946
      %v7948 = vpop.f32.mrb[0].mxu0
      %v7949 = vadd.f32 %v7596, %v7948
      %7950 = vmatprep.mubr.bf16.mxu0 %v2967
      %7951 = vmatmul.mubr.bf16.gmra.mrb[0].mxu0 %v2966
      %v7952 = vpop.f32.mrb[0].mxu0
      %v7953 = vadd.f32 %v7600, %v7952
      %v7954 = vpop.f32.mrb[0].mxu0
      %v7955 = vadd.f32 %v7602, %v7954
      %v7956 = vpop.f32.mrb[0].mxu0
      %v7957 = vadd.f32 %v7604, %v7956
      %v7958 = vpop.f32.mrb[0].mxu0
      %v7959 = vadd.f32 %v7606, %v7958
      %7960 = vmatprep.mubr.bf16.mxu0 %v2983
      %7961 = vmatmul.mubr.bf16.gmra.mrb[0].mxu0 %v2982
      %v7962 = vpop.f32.mrb[0].mxu0
      %v7963 = vadd.f32 %v7610, %v7962
      %v7964 = vpop.f32.mrb[0].mxu0
      %v7965 = vadd.f32 %v7612, %v7964
      %v7966 = vpop.f32.mrb[0].mxu0
      %v7967 = vadd.f32 %v7614, %v7966
      %v7968 = vpop.f32.mrb[0].mxu0
      %v7969 = vadd.f32 %v7616, %v7968
      %7970 = vmatprep.mubr.bf16.mxu0 %v2999
      %7971 = vmatmul.mubr.bf16.gmra.mrb[0].mxu0 %v2998
      %v7972 = vpop.f32.mrb[0].mxu0
      %v7973 = vadd.f32 %v7620, %v7972
      %v7974 = vpop.f32.mrb[0].mxu0
      %v7975 = vadd.f32 %v7622, %v7974
      %v7976 = vpop.f32.mrb[0].mxu0
      %v7977 = vadd.f32 %v7624, %v7976
      %v7978 = vpop.f32.mrb[0].mxu0
      %v7979 = vadd.f32 %v7626, %v7978
      %7980 = vmatprep.mubr.bf16.mxu0 %v3015
      %7981 = vmatmul.mubr.bf16.gmra.mrb[0].mxu0 %v3014
      %v7982 = vpop.f32.mrb[0].mxu0
      %v7983 = vadd.f32 %v7630, %v7982
      %v7984 = vpop.f32.mrb[0].mxu0
      %v7985 = vadd.f32 %v7632, %v7984
      %v7986 = vpop.f32.mrb[0].mxu0
      %v7987 = vadd.f32 %v7634, %v7986
      %v7988 = vpop.f32.mrb[0].mxu0
      %v7989 = vadd.f32 %v7636, %v7988
      %7990 = vmatprep.mubr.bf16.mxu0 %v3031
      %7991 = vmatmul.mubr.bf16.gmra.mrb[0].mxu0 %v3030
      %v7992 = vpop.f32.mrb[0].mxu0
      %v7993 = vadd.f32 %v7640, %v7992
      %v7994 = vpop.f32.mrb[0].mxu0
      %v7995 = vadd.f32 %v7642, %v7994
      %v7996 = vpop.f32.mrb[0].mxu0
      %v7997 = vadd.f32 %v7644, %v7996
      %v7998 = vpop.f32.mrb[0].mxu0
      %v7999 = vadd.f32 %v7646, %v7998
      %8000 = vmatprep.mubr.bf16.mxu0 %v3047
      %8001 = vmatmul.mubr.bf16.gmra.mrb[0].mxu0 %v3046
      %v8002 = vpop.f32.mrb[0].mxu0
      %v8003 = vadd.f32 %v7650, %v8002
      %v8004 = vpop.f32.mrb[0].mxu0
      %v8005 = vadd.f32 %v7652, %v8004
      %v8006 = vpop.f32.mrb[0].mxu0
      %v8007 = vadd.f32 %v7654, %v8006
      %v8008 = vpop.f32.mrb[0].mxu0
      %v8009 = vadd.f32 %v7656, %v8008
      %8010 = vmatprep.mubr.bf16.mxu0 %v3063
      %8011 = vmatmul.mubr.bf16.gmra.mrb[0].mxu0 %v3062
      %v8012 = vpop.f32.mrb[0].mxu0
      %v8013 = vadd.f32 %v7660, %v8012
      %v8014 = vpop.f32.mrb[0].mxu0
      %v8015 = vadd.f32 %v7662, %v8014
      %v8016 = vpop.f32.mrb[0].mxu0
      %v8017 = vadd.f32 %v7664, %v8016
      %v8018 = vpop.f32.mrb[0].mxu0
      %v8019 = vadd.f32 %v7666, %v8018
      %8020 = vmatprep.mubr.bf16.mxu0 %v3079
      %8021 = vmatmul.mubr.bf16.gmra.mrb[0].mxu0 %v3078
      %v8022 = vpop.f32.mrb[0].mxu0
      %v8023 = vadd.f32 %v7670, %v8022
      %v8024 = vpop.f32.mrb[0].mxu0
      %v8025 = vadd.f32 %v7672, %v8024
      %v8026 = vpop.f32.mrb[0].mxu0
      %v8027 = vadd.f32 %v7674, %v8026
      %v8028 = vpop.f32.mrb[0].mxu0
      %v8029 = vadd.f32 %v7676, %v8028
      %8030 = vmatprep.mubr.bf16.mxu0 %v3095
      %8031 = vmatmul.mubr.bf16.gmra.mrb[0].mxu0 %v3094
      %v8032 = vpop.f32.mrb[0].mxu0
      %v8033 = vadd.f32 %v7680, %v8032
      %v8034 = vpop.f32.mrb[0].mxu0
      %v8035 = vadd.f32 %v7682, %v8034
      %v8036 = vpop.f32.mrb[0].mxu0
      %v8037 = vadd.f32 %v7684, %v8036
      %v8038 = vpop.f32.mrb[0].mxu0
      %v8039 = vadd.f32 %v7686, %v8038
      %8040 = vmatprep.mubr.bf16.mxu0 %v3111
      %8041 = vmatmul.mubr.bf16.gmra.mrb[0].mxu0 %v3110
      %v8042 = vpop.f32.mrb[0].mxu0
      %v8043 = vadd.f32 %v7690, %v8042
      %v8044 = vpop.f32.mrb[0].mxu0
      %v8045 = vadd.f32 %v7692, %v8044
      %v8046 = vpop.f32.mrb[0].mxu0
      %v8047 = vadd.f32 %v7694, %v8046
      %v8048 = vpop.f32.mrb[0].mxu0
      %v8049 = vadd.f32 %v7696, %v8048
      %8050 = vmatprep.mubr.bf16.mxu0 %v3127
      %8051 = vmatmul.mubr.bf16.gmra.mrb[0].mxu0 %v3126
      %v8052 = vpop.f32.mrb[0].mxu0
      %v8053 = vadd.f32 %v7700, %v8052
      %v8054 = vpop.f32.mrb[0].mxu0
      %v8055 = vadd.f32 %v7702, %v8054
      %v8056 = vpop.f32.mrb[0].mxu0
      %v8057 = vadd.f32 %v7704, %v8056
      %v8058 = vpop.f32.mrb[0].mxu0
      %v8059 = vadd.f32 %v7706, %v8058
      %8060 = vmatprep.mubr.bf16.mxu0 %v3143
      %8061 = vmatmul.mubr.bf16.gmra.mrb[0].mxu0 %v3142
      %v8062 = vpop.f32.mrb[0].mxu0
      %v8063 = vadd.f32 %v7710, %v8062
      %v8064 = vpop.f32.mrb[0].mxu0
      %v8065 = vadd.f32 %v7712, %v8064
      %v8066 = vpop.f32.mrb[0].mxu0
      %v8067 = vadd.f32 %v7714, %v8066
      %v8068 = vpop.f32.mrb[0].mxu0
      %v8069 = vadd.f32 %v7716, %v8068
      %8070 = vmatprep.mubr.bf16.mxu0 %v3159
      %8071 = vmatmul.mubr.bf16.gmra.mrb[0].mxu0 %v3158
      %v8072 = vpop.f32.mrb[0].mxu0
      %v8073 = vadd.f32 %v7720, %v8072
      %v8074 = vpop.f32.mrb[0].mxu0
      %v8075 = vadd.f32 %v7722, %v8074
      %v8076 = vpop.f32.mrb[0].mxu0
      %v8077 = vadd.f32 %v7724, %v8076
      %v8078 = vpop.f32.mrb[0].mxu0
      %v8079 = vadd.f32 %v7726, %v8078
      %8080 = vmatprep.mubr.bf16.mxu0 %v3175
      %8081 = vmatmul.mubr.bf16.gmra.mrb[0].mxu0 %v3174
      %v8082 = vpop.f32.mrb[0].mxu0
      %v8083 = vadd.f32 %v7730, %v8082
      %v8084 = vpop.f32.mrb[0].mxu0
      %v8085 = vadd.f32 %v7732, %v8084
      %v8086 = vpop.f32.mrb[0].mxu0
      %v8087 = vadd.f32 %v7734, %v8086
      %v8088 = vpop.f32.mrb[0].mxu0
      %v8089 = vadd.f32 %v7736, %v8088
      %8090 = vmatprep.mubr.bf16.mxu0 %v3191
      %8091 = vmatmul.mubr.bf16.gmra.mrb[0].mxu0 %v3190
      %v8092 = vpop.f32.mrb[0].mxu0
      %v8093 = vadd.f32 %v7740, %v8092
      %v8094 = vpop.f32.mrb[0].mxu0
      %v8095 = vadd.f32 %v7742, %v8094
      %v8096 = vpop.f32.mrb[0].mxu0
      %v8097 = vadd.f32 %v7744, %v8096
      %v8098 = vpop.f32.mrb[0].mxu0
      %v8099 = vadd.f32 %v7746, %v8098
      %8100 = vmatprep.mubr.bf16.mxu0 %v3207
      %8101 = vmatmul.mubr.bf16.gmra.mrb[0].mxu0 %v3206
      %v8102 = vpop.f32.mrb[0].mxu0
      %v8103 = vadd.f32 %v7750, %v8102
      %v8104 = vpop.f32.mrb[0].mxu0
      %v8105 = vadd.f32 %v7752, %v8104
      %v8106 = vpop.f32.mrb[0].mxu0
      %v8107 = vadd.f32 %v7754, %v8106
      %v8108 = vpop.f32.mrb[0].mxu0
      %v8109 = vadd.f32 %v7756, %v8108
      %8110 = vmatprep.mubr.bf16.mxu0 %v3223
      %8111 = vmatmul.mubr.bf16.gmra.mrb[0].mxu0 %v3222
      %v8112 = vpop.f32.mrb[0].mxu0
      %v8113 = vadd.f32 %v7760, %v8112
      %v8114 = vpop.f32.mrb[0].mxu0
      %v8115 = vadd.f32 %v7762, %v8114
      %v8116 = vpop.f32.mrb[0].mxu0
      %v8117 = vadd.f32 %v7764, %v8116
      %v8118 = vpop.f32.mrb[0].mxu0
      %v8119 = vadd.f32 %v7766, %v8118
      %8120 = vmatprep.mubr.bf16.mxu0 %v3239
      %8121 = vmatmul.mubr.bf16.gmra.mrb[0].mxu0 %v3238
      %v8122 = vpop.f32.mrb[0].mxu0
      %v8123 = vadd.f32 %v7770, %v8122
      %v8124 = vpop.f32.mrb[0].mxu0
      %v8125 = vadd.f32 %v7772, %v8124
      %v8126 = vpop.f32.mrb[0].mxu0
      %v8127 = vadd.f32 %v7774, %v8126
      %v8128 = vpop.f32.mrb[0].mxu0
      %v8129 = vadd.f32 %v7776, %v8128
      %8130 = vmatprep.mubr.bf16.mxu0 %v3255
      %8131 = vmatmul.mubr.bf16.gmra.mrb[0].mxu0 %v3254
      %v8132 = vpop.f32.mrb[0].mxu0
      %v8133 = vadd.f32 %v7780, %v8132
      %v8134 = vpop.f32.mrb[0].mxu0
      %v8135 = vadd.f32 %v7782, %v8134
      %v8136 = vpop.f32.mrb[0].mxu0
      %v8137 = vadd.f32 %v7784, %v8136
      %v8138 = vpop.f32.mrb[0].mxu0
      %v8139 = vadd.f32 %v7786, %v8138
      %8140 = vmatprep.mubr.bf16.mxu0 %v3271
      %8141 = vmatmul.mubr.bf16.gmra.mrb[0].mxu0 %v3270
      %v8142 = vpop.f32.mrb[0].mxu0
      %v8143 = vadd.f32 %v7790, %v8142
      %v8144 = vpop.f32.mrb[0].mxu0
      %v8145 = vadd.f32 %v7792, %v8144
      %v8146 = vpop.f32.mrb[0].mxu0
      %v8147 = vadd.f32 %v7794, %v8146
      %v8148 = vpop.f32.mrb[0].mxu0
      %v8149 = vadd.f32 %v7796, %v8148
      %8150 = vmatprep.mubr.bf16.mxu0 %v3287
      %8151 = vmatmul.mubr.bf16.gmra.mrb[0].mxu0 %v3286
      %v8152 = vpop.f32.mrb[0].mxu0
      %v8153 = vadd.f32 %v7800, %v8152
      %v8154 = vpop.f32.mrb[0].mxu0
      %v8155 = vadd.f32 %v7802, %v8154
      %v8156 = vpop.f32.mrb[0].mxu0
      %v8157 = vadd.f32 %v7804, %v8156
      %v8158 = vpop.f32.mrb[0].mxu0
      %v8159 = vadd.f32 %v7806, %v8158
      %8160 = vmatprep.mubr.bf16.mxu0 %v3303
      %8161 = vmatmul.mubr.bf16.gmra.mrb[0].mxu0 %v3302
      %v8162 = vpop.f32.mrb[0].mxu0
      %v8163 = vadd.f32 %v7810, %v8162
      %v8164 = vpop.f32.mrb[0].mxu0
      %v8165 = vadd.f32 %v7812, %v8164
      %v8166 = vpop.f32.mrb[0].mxu0
      %v8167 = vadd.f32 %v7814, %v8166
      %v8168 = vpop.f32.mrb[0].mxu0
      %v8169 = vadd.f32 %v7816, %v8168
      %8170 = vmatprep.mubr.bf16.mxu0 %v3319
      %8171 = vmatmul.mubr.bf16.gmra.mrb[0].mxu0 %v3318
      %v8172 = vpop.f32.mrb[0].mxu0
      %v8173 = vadd.f32 %v7820, %v8172
      %v8174 = vpop.f32.mrb[0].mxu0
      %v8175 = vadd.f32 %v7822, %v8174
      %v8176 = vpop.f32.mrb[0].mxu0
      %v8177 = vadd.f32 %v7824, %v8176
      %v8178 = vpop.f32.mrb[0].mxu0
      %v8179 = vadd.f32 %v7826, %v8178
      %8180 = vmatprep.mubr.bf16.mxu0 %v3335
      %8181 = vmatmul.mubr.bf16.gmra.mrb[0].mxu0 %v3334
      %v8182 = vpop.f32.mrb[0].mxu0
      %v8183 = vadd.f32 %v7830, %v8182
      %v8184 = vpop.f32.mrb[0].mxu0
      %v8185 = vadd.f32 %v7832, %v8184
      %v8186 = vpop.f32.mrb[0].mxu0
      %v8187 = vadd.f32 %v7834, %v8186
      %v8188 = vpop.f32.mrb[0].mxu0
      %v8189 = vadd.f32 %v7836, %v8188
      %8190 = vmatprep.mubr.bf16.mxu0 %v3351
      %8191 = vmatmul.mubr.bf16.gmra.mrb[0].mxu0 %v3350
      %v8192 = vpop.f32.mrb[0].mxu0
      %v8193 = vadd.f32 %v7840, %v8192
      %v8194 = vpop.f32.mrb[0].mxu0
      %v8195 = vadd.f32 %v7842, %v8194
      %v8196 = vpop.f32.mrb[0].mxu0
      %v8197 = vadd.f32 %v7844, %v8196
      %v8198 = vpop.f32.mrb[0].mxu0
      %v8199 = vadd.f32 %v7846, %v8198
      %8200 = vmatprep.mubr.bf16.mxu0 %v3367
      %8201 = vmatmul.mubr.bf16.gmra.mrb[0].mxu0 %v3366
      %v8202 = vpop.f32.mrb[0].mxu0
      %v8203 = vadd.f32 %v7850, %v8202
      %v8204 = vpop.f32.mrb[0].mxu0
      %v8205 = vadd.f32 %v7852, %v8204
      %v8206 = vpop.f32.mrb[0].mxu0
      %v8207 = vadd.f32 %v7854, %v8206
      %v8208 = vpop.f32.mrb[0].mxu0
      %v8209 = vadd.f32 %v7856, %v8208
      %8210 = vdwg.mxu0
      %8211 = vmatprep.subr.bf16.mxu0 %v5743
      %8212 = vmatpush1.bf16.msra.mxu0 %v5742
      %8213 = vmatprep.subr.bf16.mxu0 %v5747
      %8214 = vmatpush1.bf16.msra.mxu0 %v5746
      %8215 = vmatprep.subr.bf16.mxu0 %v5751
      %8216 = vmatpush1.bf16.msra.mxu0 %v5750
      %8217 = vmatprep.subr.bf16.mxu0 %v5755
      %8218 = vmatpush1.bf16.msra.mxu0 %v5754
      %8219 = vmatprep.subr.bf16.mxu0 %v5759
      %8220 = vmatpush1.bf16.msra.mxu0 %v5758
      %8221 = vmatprep.subr.bf16.mxu0 %v5763
      %8222 = vmatpush1.bf16.msra.mxu0 %v5762
      %8223 = vmatprep.subr.bf16.mxu0 %v5767
      %8224 = vmatpush1.bf16.msra.mxu0 %v5766
      %8225 = vmatprep.subr.bf16.mxu0 %v5771
      %8226 = vmatpush1.bf16.msra.mxu0 %v5770
      %8227 = vmatprep.subr.bf16.mxu0 %v5775
      %8228 = vmatpush1.bf16.msra.mxu0 %v5774
      %8229 = vmatprep.subr.bf16.mxu0 %v5779
      %8230 = vmatpush1.bf16.msra.mxu0 %v5778
      %8231 = vmatprep.subr.bf16.mxu0 %v5783
      %8232 = vmatpush1.bf16.msra.mxu0 %v5782
      %8233 = vmatprep.subr.bf16.mxu0 %v5787
      %8234 = vmatpush1.bf16.msra.mxu0 %v5786
      %8235 = vmatprep.subr.bf16.mxu0 %v5791
      %8236 = vmatpush1.bf16.msra.mxu0 %v5790
      %8237 = vmatprep.subr.bf16.mxu0 %v5795
      %8238 = vmatpush1.bf16.msra.mxu0 %v5794
      %8239 = vmatprep.subr.bf16.mxu0 %v5799
      %8240 = vmatpush1.bf16.msra.mxu0 %v5798
      %8241 = vmatprep.subr.bf16.mxu0 %v5803
      %8242 = vmatpush1.bf16.msra.mxu0 %v5802
      %8243 = vmatprep.mubr.bf16.mxu0 %v2873
      %8244 = vmatmul.mubr.bf16.gmra.mrb[0].mxu0 %v2872
      %v8245 = vpop.f32.mrb[0].mxu0
      %v8246 = vadd.f32 %v7893, %v8245
      %v8247 = vpop.f32.mrb[0].mxu0
      %v8248 = vadd.f32 %v7895, %v8247
      %v8249 = vpop.f32.mrb[0].mxu0
      %v8250 = vadd.f32 %v7897, %v8249
      %v8251 = vpop.f32.mrb[0].mxu0
      %v8252 = vadd.f32 %v7899, %v8251
      %8253 = vmatprep.mubr.bf16.mxu0 %v2889
      %8254 = vmatmul.mubr.bf16.gmra.mrb[0].mxu0 %v2888
      %v8255 = vpop.f32.mrb[0].mxu0
      %v8256 = vadd.f32 %v7903, %v8255
      %v8257 = vpop.f32.mrb[0].mxu0
      %v8258 = vadd.f32 %v7905, %v8257
      %v8259 = vpop.f32.mrb[0].mxu0
      %v8260 = vadd.f32 %v7907, %v8259
      %v8261 = vpop.f32.mrb[0].mxu0
      %v8262 = vadd.f32 %v7909, %v8261
      %8263 = vmatprep.mubr.bf16.mxu0 %v2905
      %8264 = vmatmul.mubr.bf16.gmra.mrb[0].mxu0 %v2904
      %v8265 = vpop.f32.mrb[0].mxu0
      %v8266 = vadd.f32 %v7913, %v8265
      %v8267 = vpop.f32.mrb[0].mxu0
      %v8268 = vadd.f32 %v7915, %v8267
      %v8269 = vpop.f32.mrb[0].mxu0
      %v8270 = vadd.f32 %v7917, %v8269
      %v8271 = vpop.f32.mrb[0].mxu0
      %v8272 = vadd.f32 %v7919, %v8271
      %8273 = vmatprep.mubr.bf16.mxu0 %v2921
      %8274 = vmatmul.mubr.bf16.gmra.mrb[0].mxu0 %v2920
      %v8275 = vpop.f32.mrb[0].mxu0
      %v8276 = vadd.f32 %v7923, %v8275
      %v8277 = vpop.f32.mrb[0].mxu0
      %v8278 = vadd.f32 %v7925, %v8277
      %v8279 = vpop.f32.mrb[0].mxu0
      %v8280 = vadd.f32 %v7927, %v8279
      %v8281 = vpop.f32.mrb[0].mxu0
      %v8282 = vadd.f32 %v7929, %v8281
      %8283 = vmatprep.mubr.bf16.mxu0 %v2937
      %8284 = vmatmul.mubr.bf16.gmra.mrb[0].mxu0 %v2936
      %v8285 = vpop.f32.mrb[0].mxu0
      %v8286 = vadd.f32 %v7933, %v8285
      %v8287 = vpop.f32.mrb[0].mxu0
      %v8288 = vadd.f32 %v7935, %v8287
      %v8289 = vpop.f32.mrb[0].mxu0
      %v8290 = vadd.f32 %v7937, %v8289
      %v8291 = vpop.f32.mrb[0].mxu0
      %v8292 = vadd.f32 %v7939, %v8291
      %8293 = vmatprep.mubr.bf16.mxu0 %v2953
      %8294 = vmatmul.mubr.bf16.gmra.mrb[0].mxu0 %v2952
      %v8295 = vpop.f32.mrb[0].mxu0
      %v8296 = vadd.f32 %v7943, %v8295
      %v8297 = vpop.f32.mrb[0].mxu0
      %v8298 = vadd.f32 %v7945, %v8297
      %v8299 = vpop.f32.mrb[0].mxu0
      %v8300 = vadd.f32 %v7947, %v8299
      %v8301 = vpop.f32.mrb[0].mxu0
      %v8302 = vadd.f32 %v7949, %v8301
      %8303 = vmatprep.mubr.bf16.mxu0 %v2969
      %8304 = vmatmul.mubr.bf16.gmra.mrb[0].mxu0 %v2968
      %v8305 = vpop.f32.mrb[0].mxu0
      %v8306 = vadd.f32 %v7953, %v8305
      %v8307 = vpop.f32.mrb[0].mxu0
      %v8308 = vadd.f32 %v7955, %v8307
      %v8309 = vpop.f32.mrb[0].mxu0
      %v8310 = vadd.f32 %v7957, %v8309
      %v8311 = vpop.f32.mrb[0].mxu0
      %v8312 = vadd.f32 %v7959, %v8311
      %8313 = vmatprep.mubr.bf16.mxu0 %v2985
      %8314 = vmatmul.mubr.bf16.gmra.mrb[0].mxu0 %v2984
      %v8315 = vpop.f32.mrb[0].mxu0
      %v8316 = vadd.f32 %v7963, %v8315
      %v8317 = vpop.f32.mrb[0].mxu0
      %v8318 = vadd.f32 %v7965, %v8317
      %v8319 = vpop.f32.mrb[0].mxu0
      %v8320 = vadd.f32 %v7967, %v8319
      %v8321 = vpop.f32.mrb[0].mxu0
      %v8322 = vadd.f32 %v7969, %v8321
      %8323 = vmatprep.mubr.bf16.mxu0 %v3001
      %8324 = vmatmul.mubr.bf16.gmra.mrb[0].mxu0 %v3000
      %v8325 = vpop.f32.mrb[0].mxu0
      %v8326 = vadd.f32 %v7973, %v8325
      %v8327 = vpop.f32.mrb[0].mxu0
      %v8328 = vadd.f32 %v7975, %v8327
      %v8329 = vpop.f32.mrb[0].mxu0
      %v8330 = vadd.f32 %v7977, %v8329
      %v8331 = vpop.f32.mrb[0].mxu0
      %v8332 = vadd.f32 %v7979, %v8331
      %8333 = vmatprep.mubr.bf16.mxu0 %v3017
      %8334 = vmatmul.mubr.bf16.gmra.mrb[0].mxu0 %v3016
      %v8335 = vpop.f32.mrb[0].mxu0
      %v8336 = vadd.f32 %v7983, %v8335
      %v8337 = vpop.f32.mrb[0].mxu0
      %v8338 = vadd.f32 %v7985, %v8337
      %v8339 = vpop.f32.mrb[0].mxu0
      %v8340 = vadd.f32 %v7987, %v8339
      %v8341 = vpop.f32.mrb[0].mxu0
      %v8342 = vadd.f32 %v7989, %v8341
      %8343 = vmatprep.mubr.bf16.mxu0 %v3033
      %8344 = vmatmul.mubr.bf16.gmra.mrb[0].mxu0 %v3032
      %v8345 = vpop.f32.mrb[0].mxu0
      %v8346 = vadd.f32 %v7993, %v8345
      %v8347 = vpop.f32.mrb[0].mxu0
      %v8348 = vadd.f32 %v7995, %v8347
      %v8349 = vpop.f32.mrb[0].mxu0
      %v8350 = vadd.f32 %v7997, %v8349
      %v8351 = vpop.f32.mrb[0].mxu0
      %v8352 = vadd.f32 %v7999, %v8351
      %8353 = vmatprep.mubr.bf16.mxu0 %v3049
      %8354 = vmatmul.mubr.bf16.gmra.mrb[0].mxu0 %v3048
      %v8355 = vpop.f32.mrb[0].mxu0
      %v8356 = vadd.f32 %v8003, %v8355
      %v8357 = vpop.f32.mrb[0].mxu0
      %v8358 = vadd.f32 %v8005, %v8357
      %v8359 = vpop.f32.mrb[0].mxu0
      %v8360 = vadd.f32 %v8007, %v8359
      %v8361 = vpop.f32.mrb[0].mxu0
      %v8362 = vadd.f32 %v8009, %v8361
      %8363 = vmatprep.mubr.bf16.mxu0 %v3065
      %8364 = vmatmul.mubr.bf16.gmra.mrb[0].mxu0 %v3064
      %v8365 = vpop.f32.mrb[0].mxu0
      %v8366 = vadd.f32 %v8013, %v8365
      %v8367 = vpop.f32.mrb[0].mxu0
      %v8368 = vadd.f32 %v8015, %v8367
      %v8369 = vpop.f32.mrb[0].mxu0
      %v8370 = vadd.f32 %v8017, %v8369
      %v8371 = vpop.f32.mrb[0].mxu0
      %v8372 = vadd.f32 %v8019, %v8371
      %8373 = vmatprep.mubr.bf16.mxu0 %v3081
      %8374 = vmatmul.mubr.bf16.gmra.mrb[0].mxu0 %v3080
      %v8375 = vpop.f32.mrb[0].mxu0
      %v8376 = vadd.f32 %v8023, %v8375
      %v8377 = vpop.f32.mrb[0].mxu0
      %v8378 = vadd.f32 %v8025, %v8377
      %v8379 = vpop.f32.mrb[0].mxu0
      %v8380 = vadd.f32 %v8027, %v8379
      %v8381 = vpop.f32.mrb[0].mxu0
      %v8382 = vadd.f32 %v8029, %v8381
      %8383 = vmatprep.mubr.bf16.mxu0 %v3097
      %8384 = vmatmul.mubr.bf16.gmra.mrb[0].mxu0 %v3096
      %v8385 = vpop.f32.mrb[0].mxu0
      %v8386 = vadd.f32 %v8033, %v8385
      %v8387 = vpop.f32.mrb[0].mxu0
      %v8388 = vadd.f32 %v8035, %v8387
      %v8389 = vpop.f32.mrb[0].mxu0
      %v8390 = vadd.f32 %v8037, %v8389
      %v8391 = vpop.f32.mrb[0].mxu0
      %v8392 = vadd.f32 %v8039, %v8391
      %8393 = vmatprep.mubr.bf16.mxu0 %v3113
      %8394 = vmatmul.mubr.bf16.gmra.mrb[0].mxu0 %v3112
      %v8395 = vpop.f32.mrb[0].mxu0
      %v8396 = vadd.f32 %v8043, %v8395
      %v8397 = vpop.f32.mrb[0].mxu0
      %v8398 = vadd.f32 %v8045, %v8397
      %v8399 = vpop.f32.mrb[0].mxu0
      %v8400 = vadd.f32 %v8047, %v8399
      %v8401 = vpop.f32.mrb[0].mxu0
      %v8402 = vadd.f32 %v8049, %v8401
      %8403 = vmatprep.mubr.bf16.mxu0 %v3129
      %8404 = vmatmul.mubr.bf16.gmra.mrb[0].mxu0 %v3128
      %v8405 = vpop.f32.mrb[0].mxu0
      %v8406 = vadd.f32 %v8053, %v8405
      %v8407 = vpop.f32.mrb[0].mxu0
      %v8408 = vadd.f32 %v8055, %v8407
      %v8409 = vpop.f32.mrb[0].mxu0
      %v8410 = vadd.f32 %v8057, %v8409
      %v8411 = vpop.f32.mrb[0].mxu0
      %v8412 = vadd.f32 %v8059, %v8411
      %8413 = vmatprep.mubr.bf16.mxu0 %v3145
      %8414 = vmatmul.mubr.bf16.gmra.mrb[0].mxu0 %v3144
      %v8415 = vpop.f32.mrb[0].mxu0
      %v8416 = vadd.f32 %v8063, %v8415
      %v8417 = vpop.f32.mrb[0].mxu0
      %v8418 = vadd.f32 %v8065, %v8417
      %v8419 = vpop.f32.mrb[0].mxu0
      %v8420 = vadd.f32 %v8067, %v8419
      %v8421 = vpop.f32.mrb[0].mxu0
      %v8422 = vadd.f32 %v8069, %v8421
      %8423 = vmatprep.mubr.bf16.mxu0 %v3161
      %8424 = vmatmul.mubr.bf16.gmra.mrb[0].mxu0 %v3160
      %v8425 = vpop.f32.mrb[0].mxu0
      %v8426 = vadd.f32 %v8073, %v8425
      %v8427 = vpop.f32.mrb[0].mxu0
      %v8428 = vadd.f32 %v8075, %v8427
      %v8429 = vpop.f32.mrb[0].mxu0
      %v8430 = vadd.f32 %v8077, %v8429
      %v8431 = vpop.f32.mrb[0].mxu0
      %v8432 = vadd.f32 %v8079, %v8431
      %8433 = vmatprep.mubr.bf16.mxu0 %v3177
      %8434 = vmatmul.mubr.bf16.gmra.mrb[0].mxu0 %v3176
      %v8435 = vpop.f32.mrb[0].mxu0
      %v8436 = vadd.f32 %v8083, %v8435
      %v8437 = vpop.f32.mrb[0].mxu0
      %v8438 = vadd.f32 %v8085, %v8437
      %v8439 = vpop.f32.mrb[0].mxu0
      %v8440 = vadd.f32 %v8087, %v8439
      %v8441 = vpop.f32.mrb[0].mxu0
      %v8442 = vadd.f32 %v8089, %v8441
      %8443 = vmatprep.mubr.bf16.mxu0 %v3193
      %8444 = vmatmul.mubr.bf16.gmra.mrb[0].mxu0 %v3192
      %v8445 = vpop.f32.mrb[0].mxu0
      %v8446 = vadd.f32 %v8093, %v8445
      %v8447 = vpop.f32.mrb[0].mxu0
      %v8448 = vadd.f32 %v8095, %v8447
      %v8449 = vpop.f32.mrb[0].mxu0
      %v8450 = vadd.f32 %v8097, %v8449
      %v8451 = vpop.f32.mrb[0].mxu0
      %v8452 = vadd.f32 %v8099, %v8451
      %8453 = vmatprep.mubr.bf16.mxu0 %v3209
      %8454 = vmatmul.mubr.bf16.gmra.mrb[0].mxu0 %v3208
      %v8455 = vpop.f32.mrb[0].mxu0
      %v8456 = vadd.f32 %v8103, %v8455
      %v8457 = vpop.f32.mrb[0].mxu0
      %v8458 = vadd.f32 %v8105, %v8457
      %v8459 = vpop.f32.mrb[0].mxu0
      %v8460 = vadd.f32 %v8107, %v8459
      %v8461 = vpop.f32.mrb[0].mxu0
      %v8462 = vadd.f32 %v8109, %v8461
      %8463 = vmatprep.mubr.bf16.mxu0 %v3225
      %8464 = vmatmul.mubr.bf16.gmra.mrb[0].mxu0 %v3224
      %v8465 = vpop.f32.mrb[0].mxu0
      %v8466 = vadd.f32 %v8113, %v8465
      %v8467 = vpop.f32.mrb[0].mxu0
      %v8468 = vadd.f32 %v8115, %v8467
      %v8469 = vpop.f32.mrb[0].mxu0
      %v8470 = vadd.f32 %v8117, %v8469
      %v8471 = vpop.f32.mrb[0].mxu0
      %v8472 = vadd.f32 %v8119, %v8471
      %8473 = vmatprep.mubr.bf16.mxu0 %v3241
      %8474 = vmatmul.mubr.bf16.gmra.mrb[0].mxu0 %v3240
      %v8475 = vpop.f32.mrb[0].mxu0
      %v8476 = vadd.f32 %v8123, %v8475
      %v8477 = vpop.f32.mrb[0].mxu0
      %v8478 = vadd.f32 %v8125, %v8477
      %v8479 = vpop.f32.mrb[0].mxu0
      %v8480 = vadd.f32 %v8127, %v8479
      %v8481 = vpop.f32.mrb[0].mxu0
      %v8482 = vadd.f32 %v8129, %v8481
      %8483 = vmatprep.mubr.bf16.mxu0 %v3257
      %8484 = vmatmul.mubr.bf16.gmra.mrb[0].mxu0 %v3256
      %v8485 = vpop.f32.mrb[0].mxu0
      %v8486 = vadd.f32 %v8133, %v8485
      %v8487 = vpop.f32.mrb[0].mxu0
      %v8488 = vadd.f32 %v8135, %v8487
      %v8489 = vpop.f32.mrb[0].mxu0
      %v8490 = vadd.f32 %v8137, %v8489
      %v8491 = vpop.f32.mrb[0].mxu0
      %v8492 = vadd.f32 %v8139, %v8491
      %8493 = vmatprep.mubr.bf16.mxu0 %v3273
      %8494 = vmatmul.mubr.bf16.gmra.mrb[0].mxu0 %v3272
      %v8495 = vpop.f32.mrb[0].mxu0
      %v8496 = vadd.f32 %v8143, %v8495
      %v8497 = vpop.f32.mrb[0].mxu0
      %v8498 = vadd.f32 %v8145, %v8497
      %v8499 = vpop.f32.mrb[0].mxu0
      %v8500 = vadd.f32 %v8147, %v8499
      %v8501 = vpop.f32.mrb[0].mxu0
      %v8502 = vadd.f32 %v8149, %v8501
      %8503 = vmatprep.mubr.bf16.mxu0 %v3289
      %8504 = vmatmul.mubr.bf16.gmra.mrb[0].mxu0 %v3288
      %v8505 = vpop.f32.mrb[0].mxu0
      %v8506 = vadd.f32 %v8153, %v8505
      %v8507 = vpop.f32.mrb[0].mxu0
      %v8508 = vadd.f32 %v8155, %v8507
      %v8509 = vpop.f32.mrb[0].mxu0
      %v8510 = vadd.f32 %v8157, %v8509
      %v8511 = vpop.f32.mrb[0].mxu0
      %v8512 = vadd.f32 %v8159, %v8511
      %8513 = vmatprep.mubr.bf16.mxu0 %v3305
      %8514 = vmatmul.mubr.bf16.gmra.mrb[0].mxu0 %v3304
      %v8515 = vpop.f32.mrb[0].mxu0
      %v8516 = vadd.f32 %v8163, %v8515
      %v8517 = vpop.f32.mrb[0].mxu0
      %v8518 = vadd.f32 %v8165, %v8517
      %v8519 = vpop.f32.mrb[0].mxu0
      %v8520 = vadd.f32 %v8167, %v8519
      %v8521 = vpop.f32.mrb[0].mxu0
      %v8522 = vadd.f32 %v8169, %v8521
      %8523 = vmatprep.mubr.bf16.mxu0 %v3321
      %8524 = vmatmul.mubr.bf16.gmra.mrb[0].mxu0 %v3320
      %v8525 = vpop.f32.mrb[0].mxu0
      %v8526 = vadd.f32 %v8173, %v8525
      %v8527 = vpop.f32.mrb[0].mxu0
      %v8528 = vadd.f32 %v8175, %v8527
      %v8529 = vpop.f32.mrb[0].mxu0
      %v8530 = vadd.f32 %v8177, %v8529
      %v8531 = vpop.f32.mrb[0].mxu0
      %v8532 = vadd.f32 %v8179, %v8531
      %8533 = vmatprep.mubr.bf16.mxu0 %v3337
      %8534 = vmatmul.mubr.bf16.gmra.mrb[0].mxu0 %v3336
      %v8535 = vpop.f32.mrb[0].mxu0
      %v8536 = vadd.f32 %v8183, %v8535
      %v8537 = vpop.f32.mrb[0].mxu0
      %v8538 = vadd.f32 %v8185, %v8537
      %v8539 = vpop.f32.mrb[0].mxu0
      %v8540 = vadd.f32 %v8187, %v8539
      %v8541 = vpop.f32.mrb[0].mxu0
      %v8542 = vadd.f32 %v8189, %v8541
      %8543 = vmatprep.mubr.bf16.mxu0 %v3353
      %8544 = vmatmul.mubr.bf16.gmra.mrb[0].mxu0 %v3352
      %v8545 = vpop.f32.mrb[0].mxu0
      %v8546 = vadd.f32 %v8193, %v8545
      %v8547 = vpop.f32.mrb[0].mxu0
      %v8548 = vadd.f32 %v8195, %v8547
      %v8549 = vpop.f32.mrb[0].mxu0
      %v8550 = vadd.f32 %v8197, %v8549
      %v8551 = vpop.f32.mrb[0].mxu0
      %v8552 = vadd.f32 %v8199, %v8551
      %8553 = vmatprep.mubr.bf16.mxu0 %v3369
      %8554 = vmatmul.mubr.bf16.gmra.mrb[0].mxu0 %v3368
      %v8555 = vpop.f32.mrb[0].mxu0
      %v8556 = vadd.f32 %v8203, %v8555
      %v8557 = vpop.f32.mrb[0].mxu0
      %v8558 = vadd.f32 %v8205, %v8557
      %v8559 = vpop.f32.mrb[0].mxu0
      %v8560 = vadd.f32 %v8207, %v8559
      %v8561 = vpop.f32.mrb[0].mxu0
      %v8562 = vadd.f32 %v8209, %v8561
      %8563 = vdwg.mxu0
      %8564 = vmatprep.subr.bf16.mxu0 %v5807
      %8565 = vmatpush1.bf16.msra.mxu0 %v5806
      %8566 = vmatprep.subr.bf16.mxu0 %v5811
      %8567 = vmatpush1.bf16.msra.mxu0 %v5810
      %8568 = vmatprep.subr.bf16.mxu0 %v5815
      %8569 = vmatpush1.bf16.msra.mxu0 %v5814
      %8570 = vmatprep.subr.bf16.mxu0 %v5819
      %8571 = vmatpush1.bf16.msra.mxu0 %v5818
      %8572 = vmatprep.subr.bf16.mxu0 %v5823
      %8573 = vmatpush1.bf16.msra.mxu0 %v5822
      %8574 = vmatprep.subr.bf16.mxu0 %v5827
      %8575 = vmatpush1.bf16.msra.mxu0 %v5826
      %8576 = vmatprep.subr.bf16.mxu0 %v5831
      %8577 = vmatpush1.bf16.msra.mxu0 %v5830
      %8578 = vmatprep.subr.bf16.mxu0 %v5835
      %8579 = vmatpush1.bf16.msra.mxu0 %v5834
      %8580 = vmatprep.subr.bf16.mxu0 %v5839
      %8581 = vmatpush1.bf16.msra.mxu0 %v5838
      %8582 = vmatprep.subr.bf16.mxu0 %v5843
      %8583 = vmatpush1.bf16.msra.mxu0 %v5842
      %8584 = vmatprep.subr.bf16.mxu0 %v5847
      %8585 = vmatpush1.bf16.msra.mxu0 %v5846
      %8586 = vmatprep.subr.bf16.mxu0 %v5851
      %8587 = vmatpush1.bf16.msra.mxu0 %v5850
      %8588 = vmatprep.subr.bf16.mxu0 %v5855
      %8589 = vmatpush1.bf16.msra.mxu0 %v5854
      %8590 = vmatprep.subr.bf16.mxu0 %v5859
      %8591 = vmatpush1.bf16.msra.mxu0 %v5858
      %8592 = vmatprep.subr.bf16.mxu0 %v5863
      %8593 = vmatpush1.bf16.msra.mxu0 %v5862
      %8594 = vmatprep.subr.bf16.mxu0 %v5867
      %8595 = vmatpush1.bf16.msra.mxu0 %v5866
      %8596 = vmatprep.mubr.bf16.mxu0 %v2875
      %8597 = vmatmul.mubr.bf16.gmra.mrb[0].mxu0 %v2874
      %v8598 = vpop.f32.mrb[0].mxu0
      %v8599 = vadd.f32 %v8246, %v8598
      %v8600 = vpop.f32.mrb[0].mxu0
      %v8601 = vadd.f32 %v8248, %v8600
      %v8602 = vpop.f32.mrb[0].mxu0
      %v8603 = vadd.f32 %v8250, %v8602
      %v8604 = vpop.f32.mrb[0].mxu0
      %v8605 = vadd.f32 %v8252, %v8604
      %8606 = vmatprep.mubr.bf16.mxu0 %v2891
      %8607 = vmatmul.mubr.bf16.gmra.mrb[0].mxu0 %v2890
      %v8608 = vpop.f32.mrb[0].mxu0
      %v8609 = vadd.f32 %v8256, %v8608
      %v8610 = vpop.f32.mrb[0].mxu0
      %v8611 = vadd.f32 %v8258, %v8610
      %v8612 = vpop.f32.mrb[0].mxu0
      %v8613 = vadd.f32 %v8260, %v8612
      %v8614 = vpop.f32.mrb[0].mxu0
      %v8615 = vadd.f32 %v8262, %v8614
      %8616 = vmatprep.mubr.bf16.mxu0 %v2907
      %8617 = vmatmul.mubr.bf16.gmra.mrb[0].mxu0 %v2906
      %v8618 = vpop.f32.mrb[0].mxu0
      %v8619 = vadd.f32 %v8266, %v8618
      %v8620 = vpop.f32.mrb[0].mxu0
      %v8621 = vadd.f32 %v8268, %v8620
      %v8622 = vpop.f32.mrb[0].mxu0
      %v8623 = vadd.f32 %v8270, %v8622
      %v8624 = vpop.f32.mrb[0].mxu0
      %v8625 = vadd.f32 %v8272, %v8624
      %8626 = vmatprep.mubr.bf16.mxu0 %v2923
      %8627 = vmatmul.mubr.bf16.gmra.mrb[0].mxu0 %v2922
      %v8628 = vpop.f32.mrb[0].mxu0
      %v8629 = vadd.f32 %v8276, %v8628
      %v8630 = vpop.f32.mrb[0].mxu0
      %v8631 = vadd.f32 %v8278, %v8630
      %v8632 = vpop.f32.mrb[0].mxu0
      %v8633 = vadd.f32 %v8280, %v8632
      %v8634 = vpop.f32.mrb[0].mxu0
      %v8635 = vadd.f32 %v8282, %v8634
      %8636 = vmatprep.mubr.bf16.mxu0 %v2939
      %8637 = vmatmul.mubr.bf16.gmra.mrb[0].mxu0 %v2938
      %v8638 = vpop.f32.mrb[0].mxu0
      %v8639 = vadd.f32 %v8286, %v8638
      %v8640 = vpop.f32.mrb[0].mxu0
      %v8641 = vadd.f32 %v8288, %v8640
      %v8642 = vpop.f32.mrb[0].mxu0
      %v8643 = vadd.f32 %v8290, %v8642
      %v8644 = vpop.f32.mrb[0].mxu0
      %v8645 = vadd.f32 %v8292, %v8644
      %8646 = vmatprep.mubr.bf16.mxu0 %v2955
      %8647 = vmatmul.mubr.bf16.gmra.mrb[0].mxu0 %v2954
      %v8648 = vpop.f32.mrb[0].mxu0
      %v8649 = vadd.f32 %v8296, %v8648
      %v8650 = vpop.f32.mrb[0].mxu0
      %v8651 = vadd.f32 %v8298, %v8650
      %v8652 = vpop.f32.mrb[0].mxu0
      %v8653 = vadd.f32 %v8300, %v8652
      %v8654 = vpop.f32.mrb[0].mxu0
      %v8655 = vadd.f32 %v8302, %v8654
      %8656 = vmatprep.mubr.bf16.mxu0 %v2971
      %8657 = vmatmul.mubr.bf16.gmra.mrb[0].mxu0 %v2970
      %v8658 = vpop.f32.mrb[0].mxu0
      %v8659 = vadd.f32 %v8306, %v8658
      %v8660 = vpop.f32.mrb[0].mxu0
      %v8661 = vadd.f32 %v8308, %v8660
      %v8662 = vpop.f32.mrb[0].mxu0
      %v8663 = vadd.f32 %v8310, %v8662
      %v8664 = vpop.f32.mrb[0].mxu0
      %v8665 = vadd.f32 %v8312, %v8664
      %8666 = vmatprep.mubr.bf16.mxu0 %v2987
      %8667 = vmatmul.mubr.bf16.gmra.mrb[0].mxu0 %v2986
      %v8668 = vpop.f32.mrb[0].mxu0
      %v8669 = vadd.f32 %v8316, %v8668
      %v8670 = vpop.f32.mrb[0].mxu0
      %v8671 = vadd.f32 %v8318, %v8670
      %v8672 = vpop.f32.mrb[0].mxu0
      %v8673 = vadd.f32 %v8320, %v8672
      %v8674 = vpop.f32.mrb[0].mxu0
      %v8675 = vadd.f32 %v8322, %v8674
      %8676 = vmatprep.mubr.bf16.mxu0 %v3003
      %8677 = vmatmul.mubr.bf16.gmra.mrb[0].mxu0 %v3002
      %v8678 = vpop.f32.mrb[0].mxu0
      %v8679 = vadd.f32 %v8326, %v8678
      %v8680 = vpop.f32.mrb[0].mxu0
      %v8681 = vadd.f32 %v8328, %v8680
      %v8682 = vpop.f32.mrb[0].mxu0
      %v8683 = vadd.f32 %v8330, %v8682
      %v8684 = vpop.f32.mrb[0].mxu0
      %v8685 = vadd.f32 %v8332, %v8684
      %8686 = vmatprep.mubr.bf16.mxu0 %v3019
      %8687 = vmatmul.mubr.bf16.gmra.mrb[0].mxu0 %v3018
      %v8688 = vpop.f32.mrb[0].mxu0
      %v8689 = vadd.f32 %v8336, %v8688
      %v8690 = vpop.f32.mrb[0].mxu0
      %v8691 = vadd.f32 %v8338, %v8690
      %v8692 = vpop.f32.mrb[0].mxu0
      %v8693 = vadd.f32 %v8340, %v8692
      %v8694 = vpop.f32.mrb[0].mxu0
      %v8695 = vadd.f32 %v8342, %v8694
      %8696 = vmatprep.mubr.bf16.mxu0 %v3035
      %8697 = vmatmul.mubr.bf16.gmra.mrb[0].mxu0 %v3034
      %v8698 = vpop.f32.mrb[0].mxu0
      %v8699 = vadd.f32 %v8346, %v8698
      %v8700 = vpop.f32.mrb[0].mxu0
      %v8701 = vadd.f32 %v8348, %v8700
      %v8702 = vpop.f32.mrb[0].mxu0
      %v8703 = vadd.f32 %v8350, %v8702
      %v8704 = vpop.f32.mrb[0].mxu0
      %v8705 = vadd.f32 %v8352, %v8704
      %8706 = vmatprep.mubr.bf16.mxu0 %v3051
      %8707 = vmatmul.mubr.bf16.gmra.mrb[0].mxu0 %v3050
      %v8708 = vpop.f32.mrb[0].mxu0
      %v8709 = vadd.f32 %v8356, %v8708
      %v8710 = vpop.f32.mrb[0].mxu0
      %v8711 = vadd.f32 %v8358, %v8710
      %v8712 = vpop.f32.mrb[0].mxu0
      %v8713 = vadd.f32 %v8360, %v8712
      %v8714 = vpop.f32.mrb[0].mxu0
      %v8715 = vadd.f32 %v8362, %v8714
      %8716 = vmatprep.mubr.bf16.mxu0 %v3067
      %8717 = vmatmul.mubr.bf16.gmra.mrb[0].mxu0 %v3066
      %v8718 = vpop.f32.mrb[0].mxu0
      %v8719 = vadd.f32 %v8366, %v8718
      %v8720 = vpop.f32.mrb[0].mxu0
      %v8721 = vadd.f32 %v8368, %v8720
      %v8722 = vpop.f32.mrb[0].mxu0
      %v8723 = vadd.f32 %v8370, %v8722
      %v8724 = vpop.f32.mrb[0].mxu0
      %v8725 = vadd.f32 %v8372, %v8724
      %8726 = vmatprep.mubr.bf16.mxu0 %v3083
      %8727 = vmatmul.mubr.bf16.gmra.mrb[0].mxu0 %v3082
      %v8728 = vpop.f32.mrb[0].mxu0
      %v8729 = vadd.f32 %v8376, %v8728
      %v8730 = vpop.f32.mrb[0].mxu0
      %v8731 = vadd.f32 %v8378, %v8730
      %v8732 = vpop.f32.mrb[0].mxu0
      %v8733 = vadd.f32 %v8380, %v8732
      %v8734 = vpop.f32.mrb[0].mxu0
      %v8735 = vadd.f32 %v8382, %v8734
      %8736 = vmatprep.mubr.bf16.mxu0 %v3099
      %8737 = vmatmul.mubr.bf16.gmra.mrb[0].mxu0 %v3098
      %v8738 = vpop.f32.mrb[0].mxu0
      %v8739 = vadd.f32 %v8386, %v8738
      %v8740 = vpop.f32.mrb[0].mxu0
      %v8741 = vadd.f32 %v8388, %v8740
      %v8742 = vpop.f32.mrb[0].mxu0
      %v8743 = vadd.f32 %v8390, %v8742
      %v8744 = vpop.f32.mrb[0].mxu0
      %v8745 = vadd.f32 %v8392, %v8744
      %8746 = vmatprep.mubr.bf16.mxu0 %v3115
      %8747 = vmatmul.mubr.bf16.gmra.mrb[0].mxu0 %v3114
      %v8748 = vpop.f32.mrb[0].mxu0
      %v8749 = vadd.f32 %v8396, %v8748
      %v8750 = vpop.f32.mrb[0].mxu0
      %v8751 = vadd.f32 %v8398, %v8750
      %v8752 = vpop.f32.mrb[0].mxu0
      %v8753 = vadd.f32 %v8400, %v8752
      %v8754 = vpop.f32.mrb[0].mxu0
      %v8755 = vadd.f32 %v8402, %v8754
      %8756 = vmatprep.mubr.bf16.mxu0 %v3131
      %8757 = vmatmul.mubr.bf16.gmra.mrb[0].mxu0 %v3130
      %v8758 = vpop.f32.mrb[0].mxu0
      %v8759 = vadd.f32 %v8406, %v8758
      %v8760 = vpop.f32.mrb[0].mxu0
      %v8761 = vadd.f32 %v8408, %v8760
      %v8762 = vpop.f32.mrb[0].mxu0
      %v8763 = vadd.f32 %v8410, %v8762
      %v8764 = vpop.f32.mrb[0].mxu0
      %v8765 = vadd.f32 %v8412, %v8764
      %8766 = vmatprep.mubr.bf16.mxu0 %v3147
      %8767 = vmatmul.mubr.bf16.gmra.mrb[0].mxu0 %v3146
      %v8768 = vpop.f32.mrb[0].mxu0
      %v8769 = vadd.f32 %v8416, %v8768
      %v8770 = vpop.f32.mrb[0].mxu0
      %v8771 = vadd.f32 %v8418, %v8770
      %v8772 = vpop.f32.mrb[0].mxu0
      %v8773 = vadd.f32 %v8420, %v8772
      %v8774 = vpop.f32.mrb[0].mxu0
      %v8775 = vadd.f32 %v8422, %v8774
      %8776 = vmatprep.mubr.bf16.mxu0 %v3163
      %8777 = vmatmul.mubr.bf16.gmra.mrb[0].mxu0 %v3162
      %v8778 = vpop.f32.mrb[0].mxu0
      %v8779 = vadd.f32 %v8426, %v8778
      %v8780 = vpop.f32.mrb[0].mxu0
      %v8781 = vadd.f32 %v8428, %v8780
      %v8782 = vpop.f32.mrb[0].mxu0
      %v8783 = vadd.f32 %v8430, %v8782
      %v8784 = vpop.f32.mrb[0].mxu0
      %v8785 = vadd.f32 %v8432, %v8784
      %8786 = vmatprep.mubr.bf16.mxu0 %v3179
      %8787 = vmatmul.mubr.bf16.gmra.mrb[0].mxu0 %v3178
      %v8788 = vpop.f32.mrb[0].mxu0
      %v8789 = vadd.f32 %v8436, %v8788
      %v8790 = vpop.f32.mrb[0].mxu0
      %v8791 = vadd.f32 %v8438, %v8790
      %v8792 = vpop.f32.mrb[0].mxu0
      %v8793 = vadd.f32 %v8440, %v8792
      %v8794 = vpop.f32.mrb[0].mxu0
      %v8795 = vadd.f32 %v8442, %v8794
      %8796 = vmatprep.mubr.bf16.mxu0 %v3195
      %8797 = vmatmul.mubr.bf16.gmra.mrb[0].mxu0 %v3194
      %v8798 = vpop.f32.mrb[0].mxu0
      %v8799 = vadd.f32 %v8446, %v8798
      %v8800 = vpop.f32.mrb[0].mxu0
      %v8801 = vadd.f32 %v8448, %v8800
      %v8802 = vpop.f32.mrb[0].mxu0
      %v8803 = vadd.f32 %v8450, %v8802
      %v8804 = vpop.f32.mrb[0].mxu0
      %v8805 = vadd.f32 %v8452, %v8804
      %8806 = vmatprep.mubr.bf16.mxu0 %v3211
      %8807 = vmatmul.mubr.bf16.gmra.mrb[0].mxu0 %v3210
      %v8808 = vpop.f32.mrb[0].mxu0
      %v8809 = vadd.f32 %v8456, %v8808
      %v8810 = vpop.f32.mrb[0].mxu0
      %v8811 = vadd.f32 %v8458, %v8810
      %v8812 = vpop.f32.mrb[0].mxu0
      %v8813 = vadd.f32 %v8460, %v8812
      %v8814 = vpop.f32.mrb[0].mxu0
      %v8815 = vadd.f32 %v8462, %v8814
      %8816 = vmatprep.mubr.bf16.mxu0 %v3227
      %8817 = vmatmul.mubr.bf16.gmra.mrb[0].mxu0 %v3226
      %v8818 = vpop.f32.mrb[0].mxu0
      %v8819 = vadd.f32 %v8466, %v8818
      %v8820 = vpop.f32.mrb[0].mxu0
      %v8821 = vadd.f32 %v8468, %v8820
      %v8822 = vpop.f32.mrb[0].mxu0
      %v8823 = vadd.f32 %v8470, %v8822
      %v8824 = vpop.f32.mrb[0].mxu0
      %v8825 = vadd.f32 %v8472, %v8824
      %8826 = vmatprep.mubr.bf16.mxu0 %v3243
      %8827 = vmatmul.mubr.bf16.gmra.mrb[0].mxu0 %v3242
      %v8828 = vpop.f32.mrb[0].mxu0
      %v8829 = vadd.f32 %v8476, %v8828
      %v8830 = vpop.f32.mrb[0].mxu0
      %v8831 = vadd.f32 %v8478, %v8830
      %v8832 = vpop.f32.mrb[0].mxu0
      %v8833 = vadd.f32 %v8480, %v8832
      %v8834 = vpop.f32.mrb[0].mxu0
      %v8835 = vadd.f32 %v8482, %v8834
      %8836 = vmatprep.mubr.bf16.mxu0 %v3259
      %8837 = vmatmul.mubr.bf16.gmra.mrb[0].mxu0 %v3258
      %v8838 = vpop.f32.mrb[0].mxu0
      %v8839 = vadd.f32 %v8486, %v8838
      %v8840 = vpop.f32.mrb[0].mxu0
      %v8841 = vadd.f32 %v8488, %v8840
      %v8842 = vpop.f32.mrb[0].mxu0
      %v8843 = vadd.f32 %v8490, %v8842
      %v8844 = vpop.f32.mrb[0].mxu0
      %v8845 = vadd.f32 %v8492, %v8844
      %8846 = vmatprep.mubr.bf16.mxu0 %v3275
      %8847 = vmatmul.mubr.bf16.gmra.mrb[0].mxu0 %v3274
      %v8848 = vpop.f32.mrb[0].mxu0
      %v8849 = vadd.f32 %v8496, %v8848
      %v8850 = vpop.f32.mrb[0].mxu0
      %v8851 = vadd.f32 %v8498, %v8850
      %v8852 = vpop.f32.mrb[0].mxu0
      %v8853 = vadd.f32 %v8500, %v8852
      %v8854 = vpop.f32.mrb[0].mxu0
      %v8855 = vadd.f32 %v8502, %v8854
      %8856 = vmatprep.mubr.bf16.mxu0 %v3291
      %8857 = vmatmul.mubr.bf16.gmra.mrb[0].mxu0 %v3290
      %v8858 = vpop.f32.mrb[0].mxu0
      %v8859 = vadd.f32 %v8506, %v8858
      %v8860 = vpop.f32.mrb[0].mxu0
      %v8861 = vadd.f32 %v8508, %v8860
      %v8862 = vpop.f32.mrb[0].mxu0
      %v8863 = vadd.f32 %v8510, %v8862
      %v8864 = vpop.f32.mrb[0].mxu0
      %v8865 = vadd.f32 %v8512, %v8864
      %8866 = vmatprep.mubr.bf16.mxu0 %v3307
      %8867 = vmatmul.mubr.bf16.gmra.mrb[0].mxu0 %v3306
      %v8868 = vpop.f32.mrb[0].mxu0
      %v8869 = vadd.f32 %v8516, %v8868
      %v8870 = vpop.f32.mrb[0].mxu0
      %v8871 = vadd.f32 %v8518, %v8870
      %v8872 = vpop.f32.mrb[0].mxu0
      %v8873 = vadd.f32 %v8520, %v8872
      %v8874 = vpop.f32.mrb[0].mxu0
      %v8875 = vadd.f32 %v8522, %v8874
      %8876 = vmatprep.mubr.bf16.mxu0 %v3323
      %8877 = vmatmul.mubr.bf16.gmra.mrb[0].mxu0 %v3322
      %v8878 = vpop.f32.mrb[0].mxu0
      %v8879 = vadd.f32 %v8526, %v8878
      %v8880 = vpop.f32.mrb[0].mxu0
      %v8881 = vadd.f32 %v8528, %v8880
      %v8882 = vpop.f32.mrb[0].mxu0
      %v8883 = vadd.f32 %v8530, %v8882
      %v8884 = vpop.f32.mrb[0].mxu0
      %v8885 = vadd.f32 %v8532, %v8884
      %8886 = vmatprep.mubr.bf16.mxu0 %v3339
      %8887 = vmatmul.mubr.bf16.gmra.mrb[0].mxu0 %v3338
      %v8888 = vpop.f32.mrb[0].mxu0
      %v8889 = vadd.f32 %v8536, %v8888
      %v8890 = vpop.f32.mrb[0].mxu0
      %v8891 = vadd.f32 %v8538, %v8890
      %v8892 = vpop.f32.mrb[0].mxu0
      %v8893 = vadd.f32 %v8540, %v8892
      %v8894 = vpop.f32.mrb[0].mxu0
      %v8895 = vadd.f32 %v8542, %v8894
      %8896 = vmatprep.mubr.bf16.mxu0 %v3355
      %8897 = vmatmul.mubr.bf16.gmra.mrb[0].mxu0 %v3354
      %v8898 = vpop.f32.mrb[0].mxu0
      %v8899 = vadd.f32 %v8546, %v8898
      %v8900 = vpop.f32.mrb[0].mxu0
      %v8901 = vadd.f32 %v8548, %v8900
      %v8902 = vpop.f32.mrb[0].mxu0
      %v8903 = vadd.f32 %v8550, %v8902
      %v8904 = vpop.f32.mrb[0].mxu0
      %v8905 = vadd.f32 %v8552, %v8904
      %8906 = vmatprep.mubr.bf16.mxu0 %v3371
      %8907 = vmatmul.mubr.bf16.gmra.mrb[0].mxu0 %v3370
      %v8908 = vpop.f32.mrb[0].mxu0
      %v8909 = vadd.f32 %v8556, %v8908
      %v8910 = vpop.f32.mrb[0].mxu0
      %v8911 = vadd.f32 %v8558, %v8910
      %v8912 = vpop.f32.mrb[0].mxu0
      %v8913 = vadd.f32 %v8560, %v8912
      %v8914 = vpop.f32.mrb[0].mxu0
      %v8915 = vadd.f32 %v8562, %v8914
      %8916 = vdwg.mxu0
      %8917 = vmatprep.subr.bf16.mxu0 %v5871
      %8918 = vmatpush1.bf16.msra.mxu0 %v5870
      %8919 = vmatprep.subr.bf16.mxu0 %v5875
      %8920 = vmatpush1.bf16.msra.mxu0 %v5874
      %8921 = vmatprep.subr.bf16.mxu0 %v5879
      %8922 = vmatpush1.bf16.msra.mxu0 %v5878
      %8923 = vmatprep.subr.bf16.mxu0 %v5883
      %8924 = vmatpush1.bf16.msra.mxu0 %v5882
      %8925 = vmatprep.subr.bf16.mxu0 %v5887
      %8926 = vmatpush1.bf16.msra.mxu0 %v5886
      %8927 = vmatprep.subr.bf16.mxu0 %v5891
      %8928 = vmatpush1.bf16.msra.mxu0 %v5890
      %8929 = vmatprep.subr.bf16.mxu0 %v5895
      %8930 = vmatpush1.bf16.msra.mxu0 %v5894
      %8931 = vmatprep.subr.bf16.mxu0 %v5899
      %8932 = vmatpush1.bf16.msra.mxu0 %v5898
      %8933 = vmatprep.subr.bf16.mxu0 %v5903
      %8934 = vmatpush1.bf16.msra.mxu0 %v5902
      %8935 = vmatprep.subr.bf16.mxu0 %v5907
      %8936 = vmatpush1.bf16.msra.mxu0 %v5906
      %8937 = vmatprep.subr.bf16.mxu0 %v5911
      %8938 = vmatpush1.bf16.msra.mxu0 %v5910
      %8939 = vmatprep.subr.bf16.mxu0 %v5915
      %8940 = vmatpush1.bf16.msra.mxu0 %v5914
      %8941 = vmatprep.subr.bf16.mxu0 %v5919
      %8942 = vmatpush1.bf16.msra.mxu0 %v5918
      %8943 = vmatprep.subr.bf16.mxu0 %v5923
      %8944 = vmatpush1.bf16.msra.mxu0 %v5922
      %8945 = vmatprep.subr.bf16.mxu0 %v5927
      %8946 = vmatpush1.bf16.msra.mxu0 %v5926
      %8947 = vmatprep.subr.bf16.mxu0 %v5931
      %8948 = vmatpush1.bf16.msra.mxu0 %v5930
      %8949 = vmatprep.mubr.bf16.mxu0 %v2877
      %8950 = vmatmul.mubr.bf16.gmra.mrb[0].mxu0 %v2876
      %v8951 = vpop.f32.mrb[0].mxu0
      %v8952 = vadd.f32 %v8599, %v8951
      %v8953 = vpop.f32.mrb[0].mxu0
      %v8954 = vadd.f32 %v8601, %v8953
      %v8955 = vpop.f32.mrb[0].mxu0
      %v8956 = vadd.f32 %v8603, %v8955
      %v8957 = vpop.f32.mrb[0].mxu0
      %v8958 = vadd.f32 %v8605, %v8957
      %8959 = vmatprep.mubr.bf16.mxu0 %v2893
      %8960 = vmatmul.mubr.bf16.gmra.mrb[0].mxu0 %v2892
      %v8961 = vpop.f32.mrb[0].mxu0
      %v8962 = vadd.f32 %v8609, %v8961
      %v8963 = vpop.f32.mrb[0].mxu0
      %v8964 = vadd.f32 %v8611, %v8963
      %v8965 = vpop.f32.mrb[0].mxu0
      %v8966 = vadd.f32 %v8613, %v8965
      %v8967 = vpop.f32.mrb[0].mxu0
      %v8968 = vadd.f32 %v8615, %v8967
      %8969 = vmatprep.mubr.bf16.mxu0 %v2909
      %8970 = vmatmul.mubr.bf16.gmra.mrb[0].mxu0 %v2908
      %v8971 = vpop.f32.mrb[0].mxu0
      %v8972 = vadd.f32 %v8619, %v8971
      %v8973 = vpop.f32.mrb[0].mxu0
      %v8974 = vadd.f32 %v8621, %v8973
      %v8975 = vpop.f32.mrb[0].mxu0
      %v8976 = vadd.f32 %v8623, %v8975
      %v8977 = vpop.f32.mrb[0].mxu0
      %v8978 = vadd.f32 %v8625, %v8977
      %8979 = vmatprep.mubr.bf16.mxu0 %v2925
      %8980 = vmatmul.mubr.bf16.gmra.mrb[0].mxu0 %v2924
      %v8981 = vpop.f32.mrb[0].mxu0
      %v8982 = vadd.f32 %v8629, %v8981
      %v8983 = vpop.f32.mrb[0].mxu0
      %v8984 = vadd.f32 %v8631, %v8983
      %v8985 = vpop.f32.mrb[0].mxu0
      %v8986 = vadd.f32 %v8633, %v8985
      %v8987 = vpop.f32.mrb[0].mxu0
      %v8988 = vadd.f32 %v8635, %v8987
      %8989 = vmatprep.mubr.bf16.mxu0 %v2941
      %8990 = vmatmul.mubr.bf16.gmra.mrb[0].mxu0 %v2940
      %v8991 = vpop.f32.mrb[0].mxu0
      %v8992 = vadd.f32 %v8639, %v8991
      %v8993 = vpop.f32.mrb[0].mxu0
      %v8994 = vadd.f32 %v8641, %v8993
      %v8995 = vpop.f32.mrb[0].mxu0
      %v8996 = vadd.f32 %v8643, %v8995
      %v8997 = vpop.f32.mrb[0].mxu0
      %v8998 = vadd.f32 %v8645, %v8997
      %8999 = vmatprep.mubr.bf16.mxu0 %v2957
      %9000 = vmatmul.mubr.bf16.gmra.mrb[0].mxu0 %v2956
      %v9001 = vpop.f32.mrb[0].mxu0
      %v9002 = vadd.f32 %v8649, %v9001
      %v9003 = vpop.f32.mrb[0].mxu0
      %v9004 = vadd.f32 %v8651, %v9003
      %v9005 = vpop.f32.mrb[0].mxu0
      %v9006 = vadd.f32 %v8653, %v9005
      %v9007 = vpop.f32.mrb[0].mxu0
      %v9008 = vadd.f32 %v8655, %v9007
      %9009 = vmatprep.mubr.bf16.mxu0 %v2973
      %9010 = vmatmul.mubr.bf16.gmra.mrb[0].mxu0 %v2972
      %v9011 = vpop.f32.mrb[0].mxu0
      %v9012 = vadd.f32 %v8659, %v9011
      %v9013 = vpop.f32.mrb[0].mxu0
      %v9014 = vadd.f32 %v8661, %v9013
      %v9015 = vpop.f32.mrb[0].mxu0
      %v9016 = vadd.f32 %v8663, %v9015
      %v9017 = vpop.f32.mrb[0].mxu0
      %v9018 = vadd.f32 %v8665, %v9017
      %9019 = vmatprep.mubr.bf16.mxu0 %v2989
      %9020 = vmatmul.mubr.bf16.gmra.mrb[0].mxu0 %v2988
      %v9021 = vpop.f32.mrb[0].mxu0
      %v9022 = vadd.f32 %v8669, %v9021
      %v9023 = vpop.f32.mrb[0].mxu0
      %v9024 = vadd.f32 %v8671, %v9023
      %v9025 = vpop.f32.mrb[0].mxu0
      %v9026 = vadd.f32 %v8673, %v9025
      %v9027 = vpop.f32.mrb[0].mxu0
      %v9028 = vadd.f32 %v8675, %v9027
      %9029 = vmatprep.mubr.bf16.mxu0 %v3005
      %9030 = vmatmul.mubr.bf16.gmra.mrb[0].mxu0 %v3004
      %v9031 = vpop.f32.mrb[0].mxu0
      %v9032 = vadd.f32 %v8679, %v9031
      %v9033 = vpop.f32.mrb[0].mxu0
      %v9034 = vadd.f32 %v8681, %v9033
      %v9035 = vpop.f32.mrb[0].mxu0
      %v9036 = vadd.f32 %v8683, %v9035
      %v9037 = vpop.f32.mrb[0].mxu0
      %v9038 = vadd.f32 %v8685, %v9037
      %9039 = vmatprep.mubr.bf16.mxu0 %v3021
      %9040 = vmatmul.mubr.bf16.gmra.mrb[0].mxu0 %v3020
      %v9041 = vpop.f32.mrb[0].mxu0
      %v9042 = vadd.f32 %v8689, %v9041
      %v9043 = vpop.f32.mrb[0].mxu0
      %v9044 = vadd.f32 %v8691, %v9043
      %v9045 = vpop.f32.mrb[0].mxu0
      %v9046 = vadd.f32 %v8693, %v9045
      %v9047 = vpop.f32.mrb[0].mxu0
      %v9048 = vadd.f32 %v8695, %v9047
      %9049 = vmatprep.mubr.bf16.mxu0 %v3037
      %9050 = vmatmul.mubr.bf16.gmra.mrb[0].mxu0 %v3036
      %v9051 = vpop.f32.mrb[0].mxu0
      %v9052 = vadd.f32 %v8699, %v9051
      %v9053 = vpop.f32.mrb[0].mxu0
      %v9054 = vadd.f32 %v8701, %v9053
      %v9055 = vpop.f32.mrb[0].mxu0
      %v9056 = vadd.f32 %v8703, %v9055
      %v9057 = vpop.f32.mrb[0].mxu0
      %v9058 = vadd.f32 %v8705, %v9057
      %9059 = vmatprep.mubr.bf16.mxu0 %v3053
      %9060 = vmatmul.mubr.bf16.gmra.mrb[0].mxu0 %v3052
      %v9061 = vpop.f32.mrb[0].mxu0
      %v9062 = vadd.f32 %v8709, %v9061
      %v9063 = vpop.f32.mrb[0].mxu0
      %v9064 = vadd.f32 %v8711, %v9063
      %v9065 = vpop.f32.mrb[0].mxu0
      %v9066 = vadd.f32 %v8713, %v9065
      %v9067 = vpop.f32.mrb[0].mxu0
      %v9068 = vadd.f32 %v8715, %v9067
      %9069 = vmatprep.mubr.bf16.mxu0 %v3069
      %9070 = vmatmul.mubr.bf16.gmra.mrb[0].mxu0 %v3068
      %v9071 = vpop.f32.mrb[0].mxu0
      %v9072 = vadd.f32 %v8719, %v9071
      %v9073 = vpop.f32.mrb[0].mxu0
      %v9074 = vadd.f32 %v8721, %v9073
      %v9075 = vpop.f32.mrb[0].mxu0
      %v9076 = vadd.f32 %v8723, %v9075
      %v9077 = vpop.f32.mrb[0].mxu0
      %v9078 = vadd.f32 %v8725, %v9077
      %9079 = vmatprep.mubr.bf16.mxu0 %v3085
      %9080 = vmatmul.mubr.bf16.gmra.mrb[0].mxu0 %v3084
      %v9081 = vpop.f32.mrb[0].mxu0
      %v9082 = vadd.f32 %v8729, %v9081
      %v9083 = vpop.f32.mrb[0].mxu0
      %v9084 = vadd.f32 %v8731, %v9083
      %v9085 = vpop.f32.mrb[0].mxu0
      %v9086 = vadd.f32 %v8733, %v9085
      %v9087 = vpop.f32.mrb[0].mxu0
      %v9088 = vadd.f32 %v8735, %v9087
      %9089 = vmatprep.mubr.bf16.mxu0 %v3101
      %9090 = vmatmul.mubr.bf16.gmra.mrb[0].mxu0 %v3100
      %v9091 = vpop.f32.mrb[0].mxu0
      %v9092 = vadd.f32 %v8739, %v9091
      %v9093 = vpop.f32.mrb[0].mxu0
      %v9094 = vadd.f32 %v8741, %v9093
      %v9095 = vpop.f32.mrb[0].mxu0
      %v9096 = vadd.f32 %v8743, %v9095
      %v9097 = vpop.f32.mrb[0].mxu0
      %v9098 = vadd.f32 %v8745, %v9097
      %9099 = vmatprep.mubr.bf16.mxu0 %v3117
      %9100 = vmatmul.mubr.bf16.gmra.mrb[0].mxu0 %v3116
      %v9101 = vpop.f32.mrb[0].mxu0
      %v9102 = vadd.f32 %v8749, %v9101
      %v9103 = vpop.f32.mrb[0].mxu0
      %v9104 = vadd.f32 %v8751, %v9103
      %v9105 = vpop.f32.mrb[0].mxu0
      %v9106 = vadd.f32 %v8753, %v9105
      %v9107 = vpop.f32.mrb[0].mxu0
      %v9108 = vadd.f32 %v8755, %v9107
      %9109 = vmatprep.mubr.bf16.mxu0 %v3133
      %9110 = vmatmul.mubr.bf16.gmra.mrb[0].mxu0 %v3132
      %v9111 = vpop.f32.mrb[0].mxu0
      %v9112 = vadd.f32 %v8759, %v9111
      %v9113 = vpop.f32.mrb[0].mxu0
      %v9114 = vadd.f32 %v8761, %v9113
      %v9115 = vpop.f32.mrb[0].mxu0
      %v9116 = vadd.f32 %v8763, %v9115
      %v9117 = vpop.f32.mrb[0].mxu0
      %v9118 = vadd.f32 %v8765, %v9117
      %9119 = vmatprep.mubr.bf16.mxu0 %v3149
      %9120 = vmatmul.mubr.bf16.gmra.mrb[0].mxu0 %v3148
      %v9121 = vpop.f32.mrb[0].mxu0
      %v9122 = vadd.f32 %v8769, %v9121
      %v9123 = vpop.f32.mrb[0].mxu0
      %v9124 = vadd.f32 %v8771, %v9123
      %v9125 = vpop.f32.mrb[0].mxu0
      %v9126 = vadd.f32 %v8773, %v9125
      %v9127 = vpop.f32.mrb[0].mxu0
      %v9128 = vadd.f32 %v8775, %v9127
      %9129 = vmatprep.mubr.bf16.mxu0 %v3165
      %9130 = vmatmul.mubr.bf16.gmra.mrb[0].mxu0 %v3164
      %v9131 = vpop.f32.mrb[0].mxu0
      %v9132 = vadd.f32 %v8779, %v9131
      %v9133 = vpop.f32.mrb[0].mxu0
      %v9134 = vadd.f32 %v8781, %v9133
      %v9135 = vpop.f32.mrb[0].mxu0
      %v9136 = vadd.f32 %v8783, %v9135
      %v9137 = vpop.f32.mrb[0].mxu0
      %v9138 = vadd.f32 %v8785, %v9137
      %9139 = vmatprep.mubr.bf16.mxu0 %v3181
      %9140 = vmatmul.mubr.bf16.gmra.mrb[0].mxu0 %v3180
      %v9141 = vpop.f32.mrb[0].mxu0
      %v9142 = vadd.f32 %v8789, %v9141
      %v9143 = vpop.f32.mrb[0].mxu0
      %v9144 = vadd.f32 %v8791, %v9143
      %v9145 = vpop.f32.mrb[0].mxu0
      %v9146 = vadd.f32 %v8793, %v9145
      %v9147 = vpop.f32.mrb[0].mxu0
      %v9148 = vadd.f32 %v8795, %v9147
      %9149 = vmatprep.mubr.bf16.mxu0 %v3197
      %9150 = vmatmul.mubr.bf16.gmra.mrb[0].mxu0 %v3196
      %v9151 = vpop.f32.mrb[0].mxu0
      %v9152 = vadd.f32 %v8799, %v9151
      %v9153 = vpop.f32.mrb[0].mxu0
      %v9154 = vadd.f32 %v8801, %v9153
      %v9155 = vpop.f32.mrb[0].mxu0
      %v9156 = vadd.f32 %v8803, %v9155
      %v9157 = vpop.f32.mrb[0].mxu0
      %v9158 = vadd.f32 %v8805, %v9157
      %9159 = vmatprep.mubr.bf16.mxu0 %v3213
      %9160 = vmatmul.mubr.bf16.gmra.mrb[0].mxu0 %v3212
      %v9161 = vpop.f32.mrb[0].mxu0
      %v9162 = vadd.f32 %v8809, %v9161
      %v9163 = vpop.f32.mrb[0].mxu0
      %v9164 = vadd.f32 %v8811, %v9163
      %v9165 = vpop.f32.mrb[0].mxu0
      %v9166 = vadd.f32 %v8813, %v9165
      %v9167 = vpop.f32.mrb[0].mxu0
      %v9168 = vadd.f32 %v8815, %v9167
      %9169 = vmatprep.mubr.bf16.mxu0 %v3229
      %9170 = vmatmul.mubr.bf16.gmra.mrb[0].mxu0 %v3228
      %v9171 = vpop.f32.mrb[0].mxu0
      %v9172 = vadd.f32 %v8819, %v9171
      %v9173 = vpop.f32.mrb[0].mxu0
      %v9174 = vadd.f32 %v8821, %v9173
      %v9175 = vpop.f32.mrb[0].mxu0
      %v9176 = vadd.f32 %v8823, %v9175
      %v9177 = vpop.f32.mrb[0].mxu0
      %v9178 = vadd.f32 %v8825, %v9177
      %9179 = vmatprep.mubr.bf16.mxu0 %v3245
      %9180 = vmatmul.mubr.bf16.gmra.mrb[0].mxu0 %v3244
      %v9181 = vpop.f32.mrb[0].mxu0
      %v9182 = vadd.f32 %v8829, %v9181
      %v9183 = vpop.f32.mrb[0].mxu0
      %v9184 = vadd.f32 %v8831, %v9183
      %v9185 = vpop.f32.mrb[0].mxu0
      %v9186 = vadd.f32 %v8833, %v9185
      %v9187 = vpop.f32.mrb[0].mxu0
      %v9188 = vadd.f32 %v8835, %v9187
      %9189 = vmatprep.mubr.bf16.mxu0 %v3261
      %9190 = vmatmul.mubr.bf16.gmra.mrb[0].mxu0 %v3260
      %v9191 = vpop.f32.mrb[0].mxu0
      %v9192 = vadd.f32 %v8839, %v9191
      %v9193 = vpop.f32.mrb[0].mxu0
      %v9194 = vadd.f32 %v8841, %v9193
      %v9195 = vpop.f32.mrb[0].mxu0
      %v9196 = vadd.f32 %v8843, %v9195
      %v9197 = vpop.f32.mrb[0].mxu0
      %v9198 = vadd.f32 %v8845, %v9197
      %9199 = vmatprep.mubr.bf16.mxu0 %v3277
      %9200 = vmatmul.mubr.bf16.gmra.mrb[0].mxu0 %v3276
      %v9201 = vpop.f32.mrb[0].mxu0
      %v9202 = vadd.f32 %v8849, %v9201
      %v9203 = vpop.f32.mrb[0].mxu0
      %v9204 = vadd.f32 %v8851, %v9203
      %v9205 = vpop.f32.mrb[0].mxu0
      %v9206 = vadd.f32 %v8853, %v9205
      %v9207 = vpop.f32.mrb[0].mxu0
      %v9208 = vadd.f32 %v8855, %v9207
      %9209 = vmatprep.mubr.bf16.mxu0 %v3293
      %9210 = vmatmul.mubr.bf16.gmra.mrb[0].mxu0 %v3292
      %v9211 = vpop.f32.mrb[0].mxu0
      %v9212 = vadd.f32 %v8859, %v9211
      %v9213 = vpop.f32.mrb[0].mxu0
      %v9214 = vadd.f32 %v8861, %v9213
      %v9215 = vpop.f32.mrb[0].mxu0
      %v9216 = vadd.f32 %v8863, %v9215
      %v9217 = vpop.f32.mrb[0].mxu0
      %v9218 = vadd.f32 %v8865, %v9217
      %9219 = vmatprep.mubr.bf16.mxu0 %v3309
      %9220 = vmatmul.mubr.bf16.gmra.mrb[0].mxu0 %v3308
      %v9221 = vpop.f32.mrb[0].mxu0
      %v9222 = vadd.f32 %v8869, %v9221
      %v9223 = vpop.f32.mrb[0].mxu0
      %v9224 = vadd.f32 %v8871, %v9223
      %v9225 = vpop.f32.mrb[0].mxu0
      %v9226 = vadd.f32 %v8873, %v9225
      %v9227 = vpop.f32.mrb[0].mxu0
      %v9228 = vadd.f32 %v8875, %v9227
      %9229 = vmatprep.mubr.bf16.mxu0 %v3325
      %9230 = vmatmul.mubr.bf16.gmra.mrb[0].mxu0 %v3324
      %v9231 = vpop.f32.mrb[0].mxu0
      %v9232 = vadd.f32 %v8879, %v9231
      %v9233 = vpop.f32.mrb[0].mxu0
      %v9234 = vadd.f32 %v8881, %v9233
      %v9235 = vpop.f32.mrb[0].mxu0
      %v9236 = vadd.f32 %v8883, %v9235
      %v9237 = vpop.f32.mrb[0].mxu0
      %v9238 = vadd.f32 %v8885, %v9237
      %9239 = vmatprep.mubr.bf16.mxu0 %v3341
      %9240 = vmatmul.mubr.bf16.gmra.mrb[0].mxu0 %v3340
      %v9241 = vpop.f32.mrb[0].mxu0
      %v9242 = vadd.f32 %v8889, %v9241
      %v9243 = vpop.f32.mrb[0].mxu0
      %v9244 = vadd.f32 %v8891, %v9243
      %v9245 = vpop.f32.mrb[0].mxu0
      %v9246 = vadd.f32 %v8893, %v9245
      %v9247 = vpop.f32.mrb[0].mxu0
      %v9248 = vadd.f32 %v8895, %v9247
      %9249 = vmatprep.mubr.bf16.mxu0 %v3357
      %9250 = vmatmul.mubr.bf16.gmra.mrb[0].mxu0 %v3356
      %v9251 = vpop.f32.mrb[0].mxu0
      %v9252 = vadd.f32 %v8899, %v9251
      %v9253 = vpop.f32.mrb[0].mxu0
      %v9254 = vadd.f32 %v8901, %v9253
      %v9255 = vpop.f32.mrb[0].mxu0
      %v9256 = vadd.f32 %v8903, %v9255
      %v9257 = vpop.f32.mrb[0].mxu0
      %v9258 = vadd.f32 %v8905, %v9257
      %9259 = vmatprep.mubr.bf16.mxu0 %v3373
      %9260 = vmatmul.mubr.bf16.gmra.mrb[0].mxu0 %v3372
      %v9261 = vpop.f32.mrb[0].mxu0
      %v9262 = vadd.f32 %v8909, %v9261
      %v9263 = vpop.f32.mrb[0].mxu0
      %v9264 = vadd.f32 %v8911, %v9263
      %v9265 = vpop.f32.mrb[0].mxu0
      %v9266 = vadd.f32 %v8913, %v9265
      %v9267 = vpop.f32.mrb[0].mxu0
      %v9268 = vadd.f32 %v8915, %v9267
      %9269 = vdwg.mxu0
      %9270 = vmatprep.subr.bf16.mxu0 %v5425
      %9271 = vmatpush1.bf16.msra.mxu0 %v5424
      %9272 = vmatprep.subr.bf16.mxu0 %v5429
      %9273 = vmatpush1.bf16.msra.mxu0 %v5428
      %9274 = vmatprep.subr.bf16.mxu0 %v5433
      %9275 = vmatpush1.bf16.msra.mxu0 %v5432
      %9276 = vmatprep.subr.bf16.mxu0 %v5437
      %9277 = vmatpush1.bf16.msra.mxu0 %v5436
      %9278 = vmatprep.subr.bf16.mxu0 %v5441
      %9279 = vmatpush1.bf16.msra.mxu0 %v5440
      %9280 = vmatprep.subr.bf16.mxu0 %v5445
      %9281 = vmatpush1.bf16.msra.mxu0 %v5444
      %9282 = vmatprep.subr.bf16.mxu0 %v5449
      %9283 = vmatpush1.bf16.msra.mxu0 %v5448
      %9284 = vmatprep.subr.bf16.mxu0 %v5453
      %9285 = vmatpush1.bf16.msra.mxu0 %v5452
      %9286 = vmatprep.subr.bf16.mxu0 %v5457
      %9287 = vmatpush1.bf16.msra.mxu0 %v5456
      %9288 = vmatprep.subr.bf16.mxu0 %v5461
      %9289 = vmatpush1.bf16.msra.mxu0 %v5460
      %9290 = vmatprep.subr.bf16.mxu0 %v5465
      %9291 = vmatpush1.bf16.msra.mxu0 %v5464
      %9292 = vmatprep.subr.bf16.mxu0 %v5469
      %9293 = vmatpush1.bf16.msra.mxu0 %v5468
      %9294 = vmatprep.subr.bf16.mxu0 %v5473
      %9295 = vmatpush1.bf16.msra.mxu0 %v5472
      %9296 = vmatprep.subr.bf16.mxu0 %v5477
      %9297 = vmatpush1.bf16.msra.mxu0 %v5476
      %9298 = vmatprep.subr.bf16.mxu0 %v5481
      %9299 = vmatpush1.bf16.msra.mxu0 %v5480
      %9300 = vmatprep.subr.bf16.mxu0 %v5485
      %9301 = vmatpush1.bf16.msra.mxu0 %v5484
      %9302 = vmatprep.mubr.bf16.mxu0 %v2863
      %9303 = vmatmul.mubr.bf16.gmra.mrb[0].mxu0 %v2862
      %v9304 = vpop.f32.mrb[0].mxu0
      %v9305 = vadd.f32 %v1317, %v9304
      %v9306 = vpop.f32.mrb[0].mxu0
      %v9307 = vadd.f32 %v1321, %v9306
      %v9308 = vpop.f32.mrb[0].mxu0
      %v9309 = vadd.f32 %v1317, %v9308
      %v9310 = vpop.f32.mrb[0].mxu0
      %v9311 = vadd.f32 %v1321, %v9310
      %9312 = vmatprep.mubr.bf16.mxu0 %v2879
      %9313 = vmatmul.mubr.bf16.gmra.mrb[0].mxu0 %v2878
      %v9314 = vpop.f32.mrb[0].mxu0
      %v9315 = vadd.f32 %v1317, %v9314
      %v9316 = vpop.f32.mrb[0].mxu0
      %v9317 = vadd.f32 %v1321, %v9316
      %v9318 = vpop.f32.mrb[0].mxu0
      %v9319 = vadd.f32 %v1317, %v9318
      %v9320 = vpop.f32.mrb[0].mxu0
      %v9321 = vadd.f32 %v1321, %v9320
      %9322 = vmatprep.mubr.bf16.mxu0 %v2895
      %9323 = vmatmul.mubr.bf16.gmra.mrb[0].mxu0 %v2894
      %v9324 = vpop.f32.mrb[0].mxu0
      %v9325 = vadd.f32 %v1317, %v9324
      %v9326 = vpop.f32.mrb[0].mxu0
      %v9327 = vadd.f32 %v1321, %v9326
      %v9328 = vpop.f32.mrb[0].mxu0
      %v9329 = vadd.f32 %v1317, %v9328
      %v9330 = vpop.f32.mrb[0].mxu0
      %v9331 = vadd.f32 %v1321, %v9330
      %9332 = vmatprep.mubr.bf16.mxu0 %v2911
      %9333 = vmatmul.mubr.bf16.gmra.mrb[0].mxu0 %v2910
      %v9334 = vpop.f32.mrb[0].mxu0
      %v9335 = vadd.f32 %v1317, %v9334
      %v9336 = vpop.f32.mrb[0].mxu0
      %v9337 = vadd.f32 %v1321, %v9336
      %v9338 = vpop.f32.mrb[0].mxu0
      %v9339 = vadd.f32 %v1317, %v9338
      %v9340 = vpop.f32.mrb[0].mxu0
      %v9341 = vadd.f32 %v1321, %v9340
      %9342 = vmatprep.mubr.bf16.mxu0 %v2927
      %9343 = vmatmul.mubr.bf16.gmra.mrb[0].mxu0 %v2926
      %v9344 = vpop.f32.mrb[0].mxu0
      %v9345 = vadd.f32 %v1317, %v9344
      %v9346 = vpop.f32.mrb[0].mxu0
      %v9347 = vadd.f32 %v1321, %v9346
      %v9348 = vpop.f32.mrb[0].mxu0
      %v9349 = vadd.f32 %v1317, %v9348
      %v9350 = vpop.f32.mrb[0].mxu0
      %v9351 = vadd.f32 %v1321, %v9350
      %9352 = vmatprep.mubr.bf16.mxu0 %v2943
      %9353 = vmatmul.mubr.bf16.gmra.mrb[0].mxu0 %v2942
      %v9354 = vpop.f32.mrb[0].mxu0
      %v9355 = vadd.f32 %v1317, %v9354
      %v9356 = vpop.f32.mrb[0].mxu0
      %v9357 = vadd.f32 %v1321, %v9356
      %v9358 = vpop.f32.mrb[0].mxu0
      %v9359 = vadd.f32 %v1317, %v9358
      %v9360 = vpop.f32.mrb[0].mxu0
      %v9361 = vadd.f32 %v1321, %v9360
      %9362 = vmatprep.mubr.bf16.mxu0 %v2959
      %9363 = vmatmul.mubr.bf16.gmra.mrb[0].mxu0 %v2958
      %v9364 = vpop.f32.mrb[0].mxu0
      %v9365 = vadd.f32 %v1317, %v9364
      %v9366 = vpop.f32.mrb[0].mxu0
      %v9367 = vadd.f32 %v1321, %v9366
      %v9368 = vpop.f32.mrb[0].mxu0
      %v9369 = vadd.f32 %v1317, %v9368
      %v9370 = vpop.f32.mrb[0].mxu0
      %v9371 = vadd.f32 %v1321, %v9370
      %9372 = vmatprep.mubr.bf16.mxu0 %v2975
      %9373 = vmatmul.mubr.bf16.gmra.mrb[0].mxu0 %v2974
      %v9374 = vpop.f32.mrb[0].mxu0
      %v9375 = vadd.f32 %v1317, %v9374
      %v9376 = vpop.f32.mrb[0].mxu0
      %v9377 = vadd.f32 %v1321, %v9376
      %v9378 = vpop.f32.mrb[0].mxu0
      %v9379 = vadd.f32 %v1317, %v9378
      %v9380 = vpop.f32.mrb[0].mxu0
      %v9381 = vadd.f32 %v1321, %v9380
      %9382 = vmatprep.mubr.bf16.mxu0 %v2991
      %9383 = vmatmul.mubr.bf16.gmra.mrb[0].mxu0 %v2990
      %v9384 = vpop.f32.mrb[0].mxu0
      %v9385 = vadd.f32 %v1317, %v9384
      %v9386 = vpop.f32.mrb[0].mxu0
      %v9387 = vadd.f32 %v1321, %v9386
      %v9388 = vpop.f32.mrb[0].mxu0
      %v9389 = vadd.f32 %v1317, %v9388
      %v9390 = vpop.f32.mrb[0].mxu0
      %v9391 = vadd.f32 %v1321, %v9390
      %9392 = vmatprep.mubr.bf16.mxu0 %v3007
      %9393 = vmatmul.mubr.bf16.gmra.mrb[0].mxu0 %v3006
      %v9394 = vpop.f32.mrb[0].mxu0
      %v9395 = vadd.f32 %v1317, %v9394
      %v9396 = vpop.f32.mrb[0].mxu0
      %v9397 = vadd.f32 %v1321, %v9396
      %v9398 = vpop.f32.mrb[0].mxu0
      %v9399 = vadd.f32 %v1317, %v9398
      %v9400 = vpop.f32.mrb[0].mxu0
      %v9401 = vadd.f32 %v1321, %v9400
      %9402 = vmatprep.mubr.bf16.mxu0 %v3023
      %9403 = vmatmul.mubr.bf16.gmra.mrb[0].mxu0 %v3022
      %v9404 = vpop.f32.mrb[0].mxu0
      %v9405 = vadd.f32 %v1317, %v9404
      %v9406 = vpop.f32.mrb[0].mxu0
      %v9407 = vadd.f32 %v1321, %v9406
      %v9408 = vpop.f32.mrb[0].mxu0
      %v9409 = vadd.f32 %v1317, %v9408
      %v9410 = vpop.f32.mrb[0].mxu0
      %v9411 = vadd.f32 %v1321, %v9410
      %9412 = vmatprep.mubr.bf16.mxu0 %v3039
      %9413 = vmatmul.mubr.bf16.gmra.mrb[0].mxu0 %v3038
      %v9414 = vpop.f32.mrb[0].mxu0
      %v9415 = vadd.f32 %v1317, %v9414
      %v9416 = vpop.f32.mrb[0].mxu0
      %v9417 = vadd.f32 %v1321, %v9416
      %v9418 = vpop.f32.mrb[0].mxu0
      %v9419 = vadd.f32 %v1317, %v9418
      %v9420 = vpop.f32.mrb[0].mxu0
      %v9421 = vadd.f32 %v1321, %v9420
      %9422 = vmatprep.mubr.bf16.mxu0 %v3055
      %9423 = vmatmul.mubr.bf16.gmra.mrb[0].mxu0 %v3054
      %v9424 = vpop.f32.mrb[0].mxu0
      %v9425 = vadd.f32 %v1317, %v9424
      %v9426 = vpop.f32.mrb[0].mxu0
      %v9427 = vadd.f32 %v1321, %v9426
      %v9428 = vpop.f32.mrb[0].mxu0
      %v9429 = vadd.f32 %v1317, %v9428
      %v9430 = vpop.f32.mrb[0].mxu0
      %v9431 = vadd.f32 %v1321, %v9430
      %9432 = vmatprep.mubr.bf16.mxu0 %v3071
      %9433 = vmatmul.mubr.bf16.gmra.mrb[0].mxu0 %v3070
      %v9434 = vpop.f32.mrb[0].mxu0
      %v9435 = vadd.f32 %v1317, %v9434
      %v9436 = vpop.f32.mrb[0].mxu0
      %v9437 = vadd.f32 %v1321, %v9436
      %v9438 = vpop.f32.mrb[0].mxu0
      %v9439 = vadd.f32 %v1317, %v9438
      %v9440 = vpop.f32.mrb[0].mxu0
      %v9441 = vadd.f32 %v1321, %v9440
      %9442 = vmatprep.mubr.bf16.mxu0 %v3087
      %9443 = vmatmul.mubr.bf16.gmra.mrb[0].mxu0 %v3086
      %v9444 = vpop.f32.mrb[0].mxu0
      %v9445 = vadd.f32 %v1317, %v9444
      %v9446 = vpop.f32.mrb[0].mxu0
      %v9447 = vadd.f32 %v1321, %v9446
      %v9448 = vpop.f32.mrb[0].mxu0
      %v9449 = vadd.f32 %v1317, %v9448
      %v9450 = vpop.f32.mrb[0].mxu0
      %v9451 = vadd.f32 %v1321, %v9450
      %9452 = vmatprep.mubr.bf16.mxu0 %v3103
      %9453 = vmatmul.mubr.bf16.gmra.mrb[0].mxu0 %v3102
      %v9454 = vpop.f32.mrb[0].mxu0
      %v9455 = vadd.f32 %v1317, %v9454
      %v9456 = vpop.f32.mrb[0].mxu0
      %v9457 = vadd.f32 %v1321, %v9456
      %v9458 = vpop.f32.mrb[0].mxu0
      %v9459 = vadd.f32 %v1317, %v9458
      %v9460 = vpop.f32.mrb[0].mxu0
      %v9461 = vadd.f32 %v1321, %v9460
      %9462 = vmatprep.mubr.bf16.mxu0 %v3119
      %9463 = vmatmul.mubr.bf16.gmra.mrb[0].mxu0 %v3118
      %v9464 = vpop.f32.mrb[0].mxu0
      %v9465 = vadd.f32 %v1317, %v9464
      %v9466 = vpop.f32.mrb[0].mxu0
      %v9467 = vadd.f32 %v1321, %v9466
      %v9468 = vpop.f32.mrb[0].mxu0
      %v9469 = vadd.f32 %v1317, %v9468
      %v9470 = vpop.f32.mrb[0].mxu0
      %v9471 = vadd.f32 %v1321, %v9470
      %9472 = vmatprep.mubr.bf16.mxu0 %v3135
      %9473 = vmatmul.mubr.bf16.gmra.mrb[0].mxu0 %v3134
      %v9474 = vpop.f32.mrb[0].mxu0
      %v9475 = vadd.f32 %v1317, %v9474
      %v9476 = vpop.f32.mrb[0].mxu0
      %v9477 = vadd.f32 %v1321, %v9476
      %v9478 = vpop.f32.mrb[0].mxu0
      %v9479 = vadd.f32 %v1317, %v9478
      %v9480 = vpop.f32.mrb[0].mxu0
      %v9481 = vadd.f32 %v1321, %v9480
      %9482 = vmatprep.mubr.bf16.mxu0 %v3151
      %9483 = vmatmul.mubr.bf16.gmra.mrb[0].mxu0 %v3150
      %v9484 = vpop.f32.mrb[0].mxu0
      %v9485 = vadd.f32 %v1317, %v9484
      %v9486 = vpop.f32.mrb[0].mxu0
      %v9487 = vadd.f32 %v1321, %v9486
      %v9488 = vpop.f32.mrb[0].mxu0
      %v9489 = vadd.f32 %v1317, %v9488
      %v9490 = vpop.f32.mrb[0].mxu0
      %v9491 = vadd.f32 %v1321, %v9490
      %9492 = vmatprep.mubr.bf16.mxu0 %v3167
      %9493 = vmatmul.mubr.bf16.gmra.mrb[0].mxu0 %v3166
      %v9494 = vpop.f32.mrb[0].mxu0
      %v9495 = vadd.f32 %v1317, %v9494
      %v9496 = vpop.f32.mrb[0].mxu0
      %v9497 = vadd.f32 %v1321, %v9496
      %v9498 = vpop.f32.mrb[0].mxu0
      %v9499 = vadd.f32 %v1317, %v9498
      %v9500 = vpop.f32.mrb[0].mxu0
      %v9501 = vadd.f32 %v1321, %v9500
      %9502 = vmatprep.mubr.bf16.mxu0 %v3183
      %9503 = vmatmul.mubr.bf16.gmra.mrb[0].mxu0 %v3182
      %v9504 = vpop.f32.mrb[0].mxu0
      %v9505 = vadd.f32 %v1317, %v9504
      %v9506 = vpop.f32.mrb[0].mxu0
      %v9507 = vadd.f32 %v1321, %v9506
      %v9508 = vpop.f32.mrb[0].mxu0
      %v9509 = vadd.f32 %v1317, %v9508
      %v9510 = vpop.f32.mrb[0].mxu0
      %v9511 = vadd.f32 %v1321, %v9510
      %9512 = vmatprep.mubr.bf16.mxu0 %v3199
      %9513 = vmatmul.mubr.bf16.gmra.mrb[0].mxu0 %v3198
      %v9514 = vpop.f32.mrb[0].mxu0
      %v9515 = vadd.f32 %v1317, %v9514
      %v9516 = vpop.f32.mrb[0].mxu0
      %v9517 = vadd.f32 %v1321, %v9516
      %v9518 = vpop.f32.mrb[0].mxu0
      %v9519 = vadd.f32 %v1317, %v9518
      %v9520 = vpop.f32.mrb[0].mxu0
      %v9521 = vadd.f32 %v1321, %v9520
      %9522 = vmatprep.mubr.bf16.mxu0 %v3215
      %9523 = vmatmul.mubr.bf16.gmra.mrb[0].mxu0 %v3214
      %v9524 = vpop.f32.mrb[0].mxu0
      %v9525 = vadd.f32 %v1317, %v9524
      %v9526 = vpop.f32.mrb[0].mxu0
      %v9527 = vadd.f32 %v1321, %v9526
      %v9528 = vpop.f32.mrb[0].mxu0
      %v9529 = vadd.f32 %v1317, %v9528
      %v9530 = vpop.f32.mrb[0].mxu0
      %v9531 = vadd.f32 %v1321, %v9530
      %9532 = vmatprep.mubr.bf16.mxu0 %v3231
      %9533 = vmatmul.mubr.bf16.gmra.mrb[0].mxu0 %v3230
      %v9534 = vpop.f32.mrb[0].mxu0
      %v9535 = vadd.f32 %v1317, %v9534
      %v9536 = vpop.f32.mrb[0].mxu0
      %v9537 = vadd.f32 %v1321, %v9536
      %v9538 = vpop.f32.mrb[0].mxu0
      %v9539 = vadd.f32 %v1317, %v9538
      %v9540 = vpop.f32.mrb[0].mxu0
      %v9541 = vadd.f32 %v1321, %v9540
      %9542 = vmatprep.mubr.bf16.mxu0 %v3247
      %9543 = vmatmul.mubr.bf16.gmra.mrb[0].mxu0 %v3246
      %v9544 = vpop.f32.mrb[0].mxu0
      %v9545 = vadd.f32 %v1317, %v9544
      %v9546 = vpop.f32.mrb[0].mxu0
      %v9547 = vadd.f32 %v1321, %v9546
      %v9548 = vpop.f32.mrb[0].mxu0
      %v9549 = vadd.f32 %v1317, %v9548
      %v9550 = vpop.f32.mrb[0].mxu0
      %v9551 = vadd.f32 %v1321, %v9550
      %9552 = vmatprep.mubr.bf16.mxu0 %v3263
      %9553 = vmatmul.mubr.bf16.gmra.mrb[0].mxu0 %v3262
      %v9554 = vpop.f32.mrb[0].mxu0
      %v9555 = vadd.f32 %v1317, %v9554
      %v9556 = vpop.f32.mrb[0].mxu0
      %v9557 = vadd.f32 %v1321, %v9556
      %v9558 = vpop.f32.mrb[0].mxu0
      %v9559 = vadd.f32 %v1317, %v9558
      %v9560 = vpop.f32.mrb[0].mxu0
      %v9561 = vadd.f32 %v1321, %v9560
      %9562 = vmatprep.mubr.bf16.mxu0 %v3279
      %9563 = vmatmul.mubr.bf16.gmra.mrb[0].mxu0 %v3278
      %v9564 = vpop.f32.mrb[0].mxu0
      %v9565 = vadd.f32 %v1317, %v9564
      %v9566 = vpop.f32.mrb[0].mxu0
      %v9567 = vadd.f32 %v1321, %v9566
      %v9568 = vpop.f32.mrb[0].mxu0
      %v9569 = vadd.f32 %v1317, %v9568
      %v9570 = vpop.f32.mrb[0].mxu0
      %v9571 = vadd.f32 %v1321, %v9570
      %9572 = vmatprep.mubr.bf16.mxu0 %v3295
      %9573 = vmatmul.mubr.bf16.gmra.mrb[0].mxu0 %v3294
      %v9574 = vpop.f32.mrb[0].mxu0
      %v9575 = vadd.f32 %v1317, %v9574
      %v9576 = vpop.f32.mrb[0].mxu0
      %v9577 = vadd.f32 %v1321, %v9576
      %v9578 = vpop.f32.mrb[0].mxu0
      %v9579 = vadd.f32 %v1317, %v9578
      %v9580 = vpop.f32.mrb[0].mxu0
      %v9581 = vadd.f32 %v1321, %v9580
      %9582 = vmatprep.mubr.bf16.mxu0 %v3311
      %9583 = vmatmul.mubr.bf16.gmra.mrb[0].mxu0 %v3310
      %v9584 = vpop.f32.mrb[0].mxu0
      %v9585 = vadd.f32 %v1317, %v9584
      %v9586 = vpop.f32.mrb[0].mxu0
      %v9587 = vadd.f32 %v1321, %v9586
      %v9588 = vpop.f32.mrb[0].mxu0
      %v9589 = vadd.f32 %v1317, %v9588
      %v9590 = vpop.f32.mrb[0].mxu0
      %v9591 = vadd.f32 %v1321, %v9590
      %9592 = vmatprep.mubr.bf16.mxu0 %v3327
      %9593 = vmatmul.mubr.bf16.gmra.mrb[0].mxu0 %v3326
      %v9594 = vpop.f32.mrb[0].mxu0
      %v9595 = vadd.f32 %v1317, %v9594
      %v9596 = vpop.f32.mrb[0].mxu0
      %v9597 = vadd.f32 %v1321, %v9596
      %v9598 = vpop.f32.mrb[0].mxu0
      %v9599 = vadd.f32 %v1317, %v9598
      %v9600 = vpop.f32.mrb[0].mxu0
      %v9601 = vadd.f32 %v1321, %v9600
      %9602 = vmatprep.mubr.bf16.mxu0 %v3343
      %9603 = vmatmul.mubr.bf16.gmra.mrb[0].mxu0 %v3342
      %v9604 = vpop.f32.mrb[0].mxu0
      %v9605 = vadd.f32 %v1317, %v9604
      %v9606 = vpop.f32.mrb[0].mxu0
      %v9607 = vadd.f32 %v1321, %v9606
      %v9608 = vpop.f32.mrb[0].mxu0
      %v9609 = vadd.f32 %v1317, %v9608
      %v9610 = vpop.f32.mrb[0].mxu0
      %v9611 = vadd.f32 %v1321, %v9610
      %9612 = vmatprep.mubr.bf16.mxu0 %v3359
      %9613 = vmatmul.mubr.bf16.gmra.mrb[0].mxu0 %v3358
      %v9614 = vpop.f32.mrb[0].mxu0
      %v9615 = vadd.f32 %v1317, %v9614
      %v9616 = vpop.f32.mrb[0].mxu0
      %v9617 = vadd.f32 %v1321, %v9616
      %v9618 = vpop.f32.mrb[0].mxu0
      %v9619 = vadd.f32 %v1317, %v9618
      %v9620 = vpop.f32.mrb[0].mxu0
      %v9621 = vadd.f32 %v1321, %v9620
      %9622 = vdwg.mxu0
      %9623 = vmatprep.subr.bf16.mxu0 %v5489
      %9624 = vmatpush1.bf16.msra.mxu0 %v5488
      %9625 = vmatprep.subr.bf16.mxu0 %v5493
      %9626 = vmatpush1.bf16.msra.mxu0 %v5492
      %9627 = vmatprep.subr.bf16.mxu0 %v5497
      %9628 = vmatpush1.bf16.msra.mxu0 %v5496
      %9629 = vmatprep.subr.bf16.mxu0 %v5501
      %9630 = vmatpush1.bf16.msra.mxu0 %v5500
      %9631 = vmatprep.subr.bf16.mxu0 %v5505
      %9632 = vmatpush1.bf16.msra.mxu0 %v5504
      %9633 = vmatprep.subr.bf16.mxu0 %v5509
      %9634 = vmatpush1.bf16.msra.mxu0 %v5508
      %9635 = vmatprep.subr.bf16.mxu0 %v5513
      %9636 = vmatpush1.bf16.msra.mxu0 %v5512
      %9637 = vmatprep.subr.bf16.mxu0 %v5517
      %9638 = vmatpush1.bf16.msra.mxu0 %v5516
      %9639 = vmatprep.subr.bf16.mxu0 %v5521
      %9640 = vmatpush1.bf16.msra.mxu0 %v5520
      %9641 = vmatprep.subr.bf16.mxu0 %v5525
      %9642 = vmatpush1.bf16.msra.mxu0 %v5524
      %9643 = vmatprep.subr.bf16.mxu0 %v5529
      %9644 = vmatpush1.bf16.msra.mxu0 %v5528
      %9645 = vmatprep.subr.bf16.mxu0 %v5533
      %9646 = vmatpush1.bf16.msra.mxu0 %v5532
      %9647 = vmatprep.subr.bf16.mxu0 %v5537
      %9648 = vmatpush1.bf16.msra.mxu0 %v5536
      %9649 = vmatprep.subr.bf16.mxu0 %v5541
      %9650 = vmatpush1.bf16.msra.mxu0 %v5540
      %9651 = vmatprep.subr.bf16.mxu0 %v5545
      %9652 = vmatpush1.bf16.msra.mxu0 %v5544
      %9653 = vmatprep.subr.bf16.mxu0 %v5549
      %9654 = vmatpush1.bf16.msra.mxu0 %v5548
      %9655 = vmatprep.mubr.bf16.mxu0 %v2865
      %9656 = vmatmul.mubr.bf16.gmra.mrb[0].mxu0 %v2864
      %v9657 = vpop.f32.mrb[0].mxu0
      %v9658 = vadd.f32 %v9305, %v9657
      %v9659 = vpop.f32.mrb[0].mxu0
      %v9660 = vadd.f32 %v9307, %v9659
      %v9661 = vpop.f32.mrb[0].mxu0
      %v9662 = vadd.f32 %v9309, %v9661
      %v9663 = vpop.f32.mrb[0].mxu0
      %v9664 = vadd.f32 %v9311, %v9663
      %9665 = vmatprep.mubr.bf16.mxu0 %v2881
      %9666 = vmatmul.mubr.bf16.gmra.mrb[0].mxu0 %v2880
      %v9667 = vpop.f32.mrb[0].mxu0
      %v9668 = vadd.f32 %v9315, %v9667
      %v9669 = vpop.f32.mrb[0].mxu0
      %v9670 = vadd.f32 %v9317, %v9669
      %v9671 = vpop.f32.mrb[0].mxu0
      %v9672 = vadd.f32 %v9319, %v9671
      %v9673 = vpop.f32.mrb[0].mxu0
      %v9674 = vadd.f32 %v9321, %v9673
      %9675 = vmatprep.mubr.bf16.mxu0 %v2897
      %9676 = vmatmul.mubr.bf16.gmra.mrb[0].mxu0 %v2896
      %v9677 = vpop.f32.mrb[0].mxu0
      %v9678 = vadd.f32 %v9325, %v9677
      %v9679 = vpop.f32.mrb[0].mxu0
      %v9680 = vadd.f32 %v9327, %v9679
      %v9681 = vpop.f32.mrb[0].mxu0
      %v9682 = vadd.f32 %v9329, %v9681
      %v9683 = vpop.f32.mrb[0].mxu0
      %v9684 = vadd.f32 %v9331, %v9683
      %9685 = vmatprep.mubr.bf16.mxu0 %v2913
      %9686 = vmatmul.mubr.bf16.gmra.mrb[0].mxu0 %v2912
      %v9687 = vpop.f32.mrb[0].mxu0
      %v9688 = vadd.f32 %v9335, %v9687
      %v9689 = vpop.f32.mrb[0].mxu0
      %v9690 = vadd.f32 %v9337, %v9689
      %v9691 = vpop.f32.mrb[0].mxu0
      %v9692 = vadd.f32 %v9339, %v9691
      %v9693 = vpop.f32.mrb[0].mxu0
      %v9694 = vadd.f32 %v9341, %v9693
      %9695 = vmatprep.mubr.bf16.mxu0 %v2929
      %9696 = vmatmul.mubr.bf16.gmra.mrb[0].mxu0 %v2928
      %v9697 = vpop.f32.mrb[0].mxu0
      %v9698 = vadd.f32 %v9345, %v9697
      %v9699 = vpop.f32.mrb[0].mxu0
      %v9700 = vadd.f32 %v9347, %v9699
      %v9701 = vpop.f32.mrb[0].mxu0
      %v9702 = vadd.f32 %v9349, %v9701
      %v9703 = vpop.f32.mrb[0].mxu0
      %v9704 = vadd.f32 %v9351, %v9703
      %9705 = vmatprep.mubr.bf16.mxu0 %v2945
      %9706 = vmatmul.mubr.bf16.gmra.mrb[0].mxu0 %v2944
      %v9707 = vpop.f32.mrb[0].mxu0
      %v9708 = vadd.f32 %v9355, %v9707
      %v9709 = vpop.f32.mrb[0].mxu0
      %v9710 = vadd.f32 %v9357, %v9709
      %v9711 = vpop.f32.mrb[0].mxu0
      %v9712 = vadd.f32 %v9359, %v9711
      %v9713 = vpop.f32.mrb[0].mxu0
      %v9714 = vadd.f32 %v9361, %v9713
      %9715 = vmatprep.mubr.bf16.mxu0 %v2961
      %9716 = vmatmul.mubr.bf16.gmra.mrb[0].mxu0 %v2960
      %v9717 = vpop.f32.mrb[0].mxu0
      %v9718 = vadd.f32 %v9365, %v9717
      %v9719 = vpop.f32.mrb[0].mxu0
      %v9720 = vadd.f32 %v9367, %v9719
      %v9721 = vpop.f32.mrb[0].mxu0
      %v9722 = vadd.f32 %v9369, %v9721
      %v9723 = vpop.f32.mrb[0].mxu0
      %v9724 = vadd.f32 %v9371, %v9723
      %9725 = vmatprep.mubr.bf16.mxu0 %v2977
      %9726 = vmatmul.mubr.bf16.gmra.mrb[0].mxu0 %v2976
      %v9727 = vpop.f32.mrb[0].mxu0
      %v9728 = vadd.f32 %v9375, %v9727
      %v9729 = vpop.f32.mrb[0].mxu0
      %v9730 = vadd.f32 %v9377, %v9729
      %v9731 = vpop.f32.mrb[0].mxu0
      %v9732 = vadd.f32 %v9379, %v9731
      %v9733 = vpop.f32.mrb[0].mxu0
      %v9734 = vadd.f32 %v9381, %v9733
      %9735 = vmatprep.mubr.bf16.mxu0 %v2993
      %9736 = vmatmul.mubr.bf16.gmra.mrb[0].mxu0 %v2992
      %v9737 = vpop.f32.mrb[0].mxu0
      %v9738 = vadd.f32 %v9385, %v9737
      %v9739 = vpop.f32.mrb[0].mxu0
      %v9740 = vadd.f32 %v9387, %v9739
      %v9741 = vpop.f32.mrb[0].mxu0
      %v9742 = vadd.f32 %v9389, %v9741
      %v9743 = vpop.f32.mrb[0].mxu0
      %v9744 = vadd.f32 %v9391, %v9743
      %9745 = vmatprep.mubr.bf16.mxu0 %v3009
      %9746 = vmatmul.mubr.bf16.gmra.mrb[0].mxu0 %v3008
      %v9747 = vpop.f32.mrb[0].mxu0
      %v9748 = vadd.f32 %v9395, %v9747
      %v9749 = vpop.f32.mrb[0].mxu0
      %v9750 = vadd.f32 %v9397, %v9749
      %v9751 = vpop.f32.mrb[0].mxu0
      %v9752 = vadd.f32 %v9399, %v9751
      %v9753 = vpop.f32.mrb[0].mxu0
      %v9754 = vadd.f32 %v9401, %v9753
      %9755 = vmatprep.mubr.bf16.mxu0 %v3025
      %9756 = vmatmul.mubr.bf16.gmra.mrb[0].mxu0 %v3024
      %v9757 = vpop.f32.mrb[0].mxu0
      %v9758 = vadd.f32 %v9405, %v9757
      %v9759 = vpop.f32.mrb[0].mxu0
      %v9760 = vadd.f32 %v9407, %v9759
      %v9761 = vpop.f32.mrb[0].mxu0
      %v9762 = vadd.f32 %v9409, %v9761
      %v9763 = vpop.f32.mrb[0].mxu0
      %v9764 = vadd.f32 %v9411, %v9763
      %9765 = vmatprep.mubr.bf16.mxu0 %v3041
      %9766 = vmatmul.mubr.bf16.gmra.mrb[0].mxu0 %v3040
      %v9767 = vpop.f32.mrb[0].mxu0
      %v9768 = vadd.f32 %v9415, %v9767
      %v9769 = vpop.f32.mrb[0].mxu0
      %v9770 = vadd.f32 %v9417, %v9769
      %v9771 = vpop.f32.mrb[0].mxu0
      %v9772 = vadd.f32 %v9419, %v9771
      %v9773 = vpop.f32.mrb[0].mxu0
      %v9774 = vadd.f32 %v9421, %v9773
      %9775 = vmatprep.mubr.bf16.mxu0 %v3057
      %9776 = vmatmul.mubr.bf16.gmra.mrb[0].mxu0 %v3056
      %v9777 = vpop.f32.mrb[0].mxu0
      %v9778 = vadd.f32 %v9425, %v9777
      %v9779 = vpop.f32.mrb[0].mxu0
      %v9780 = vadd.f32 %v9427, %v9779
      %v9781 = vpop.f32.mrb[0].mxu0
      %v9782 = vadd.f32 %v9429, %v9781
      %v9783 = vpop.f32.mrb[0].mxu0
      %v9784 = vadd.f32 %v9431, %v9783
      %9785 = vmatprep.mubr.bf16.mxu0 %v3073
      %9786 = vmatmul.mubr.bf16.gmra.mrb[0].mxu0 %v3072
      %v9787 = vpop.f32.mrb[0].mxu0
      %v9788 = vadd.f32 %v9435, %v9787
      %v9789 = vpop.f32.mrb[0].mxu0
      %v9790 = vadd.f32 %v9437, %v9789
      %v9791 = vpop.f32.mrb[0].mxu0
      %v9792 = vadd.f32 %v9439, %v9791
      %v9793 = vpop.f32.mrb[0].mxu0
      %v9794 = vadd.f32 %v9441, %v9793
      %9795 = vmatprep.mubr.bf16.mxu0 %v3089
      %9796 = vmatmul.mubr.bf16.gmra.mrb[0].mxu0 %v3088
      %v9797 = vpop.f32.mrb[0].mxu0
      %v9798 = vadd.f32 %v9445, %v9797
      %v9799 = vpop.f32.mrb[0].mxu0
      %v9800 = vadd.f32 %v9447, %v9799
      %v9801 = vpop.f32.mrb[0].mxu0
      %v9802 = vadd.f32 %v9449, %v9801
      %v9803 = vpop.f32.mrb[0].mxu0
      %v9804 = vadd.f32 %v9451, %v9803
      %9805 = vmatprep.mubr.bf16.mxu0 %v3105
      %9806 = vmatmul.mubr.bf16.gmra.mrb[0].mxu0 %v3104
      %v9807 = vpop.f32.mrb[0].mxu0
      %v9808 = vadd.f32 %v9455, %v9807
      %v9809 = vpop.f32.mrb[0].mxu0
      %v9810 = vadd.f32 %v9457, %v9809
      %v9811 = vpop.f32.mrb[0].mxu0
      %v9812 = vadd.f32 %v9459, %v9811
      %v9813 = vpop.f32.mrb[0].mxu0
      %v9814 = vadd.f32 %v9461, %v9813
      %9815 = vmatprep.mubr.bf16.mxu0 %v3121
      %9816 = vmatmul.mubr.bf16.gmra.mrb[0].mxu0 %v3120
      %v9817 = vpop.f32.mrb[0].mxu0
      %v9818 = vadd.f32 %v9465, %v9817
      %v9819 = vpop.f32.mrb[0].mxu0
      %v9820 = vadd.f32 %v9467, %v9819
      %v9821 = vpop.f32.mrb[0].mxu0
      %v9822 = vadd.f32 %v9469, %v9821
      %v9823 = vpop.f32.mrb[0].mxu0
      %v9824 = vadd.f32 %v9471, %v9823
      %9825 = vmatprep.mubr.bf16.mxu0 %v3137
      %9826 = vmatmul.mubr.bf16.gmra.mrb[0].mxu0 %v3136
      %v9827 = vpop.f32.mrb[0].mxu0
      %v9828 = vadd.f32 %v9475, %v9827
      %v9829 = vpop.f32.mrb[0].mxu0
      %v9830 = vadd.f32 %v9477, %v9829
      %v9831 = vpop.f32.mrb[0].mxu0
      %v9832 = vadd.f32 %v9479, %v9831
      %v9833 = vpop.f32.mrb[0].mxu0
      %v9834 = vadd.f32 %v9481, %v9833
      %9835 = vmatprep.mubr.bf16.mxu0 %v3153
      %9836 = vmatmul.mubr.bf16.gmra.mrb[0].mxu0 %v3152
      %v9837 = vpop.f32.mrb[0].mxu0
      %v9838 = vadd.f32 %v9485, %v9837
      %v9839 = vpop.f32.mrb[0].mxu0
      %v9840 = vadd.f32 %v9487, %v9839
      %v9841 = vpop.f32.mrb[0].mxu0
      %v9842 = vadd.f32 %v9489, %v9841
      %v9843 = vpop.f32.mrb[0].mxu0
      %v9844 = vadd.f32 %v9491, %v9843
      %9845 = vmatprep.mubr.bf16.mxu0 %v3169
      %9846 = vmatmul.mubr.bf16.gmra.mrb[0].mxu0 %v3168
      %v9847 = vpop.f32.mrb[0].mxu0
      %v9848 = vadd.f32 %v9495, %v9847
      %v9849 = vpop.f32.mrb[0].mxu0
      %v9850 = vadd.f32 %v9497, %v9849
      %v9851 = vpop.f32.mrb[0].mxu0
      %v9852 = vadd.f32 %v9499, %v9851
      %v9853 = vpop.f32.mrb[0].mxu0
      %v9854 = vadd.f32 %v9501, %v9853
      %9855 = vmatprep.mubr.bf16.mxu0 %v3185
      %9856 = vmatmul.mubr.bf16.gmra.mrb[0].mxu0 %v3184
      %v9857 = vpop.f32.mrb[0].mxu0
      %v9858 = vadd.f32 %v9505, %v9857
      %v9859 = vpop.f32.mrb[0].mxu0
      %v9860 = vadd.f32 %v9507, %v9859
      %v9861 = vpop.f32.mrb[0].mxu0
      %v9862 = vadd.f32 %v9509, %v9861
      %v9863 = vpop.f32.mrb[0].mxu0
      %v9864 = vadd.f32 %v9511, %v9863
      %9865 = vmatprep.mubr.bf16.mxu0 %v3201
      %9866 = vmatmul.mubr.bf16.gmra.mrb[0].mxu0 %v3200
      %v9867 = vpop.f32.mrb[0].mxu0
      %v9868 = vadd.f32 %v9515, %v9867
      %v9869 = vpop.f32.mrb[0].mxu0
      %v9870 = vadd.f32 %v9517, %v9869
      %v9871 = vpop.f32.mrb[0].mxu0
      %v9872 = vadd.f32 %v9519, %v9871
      %v9873 = vpop.f32.mrb[0].mxu0
      %v9874 = vadd.f32 %v9521, %v9873
      %9875 = vmatprep.mubr.bf16.mxu0 %v3217
      %9876 = vmatmul.mubr.bf16.gmra.mrb[0].mxu0 %v3216
      %v9877 = vpop.f32.mrb[0].mxu0
      %v9878 = vadd.f32 %v9525, %v9877
      %v9879 = vpop.f32.mrb[0].mxu0
      %v9880 = vadd.f32 %v9527, %v9879
      %v9881 = vpop.f32.mrb[0].mxu0
      %v9882 = vadd.f32 %v9529, %v9881
      %v9883 = vpop.f32.mrb[0].mxu0
      %v9884 = vadd.f32 %v9531, %v9883
      %9885 = vmatprep.mubr.bf16.mxu0 %v3233
      %9886 = vmatmul.mubr.bf16.gmra.mrb[0].mxu0 %v3232
      %v9887 = vpop.f32.mrb[0].mxu0
      %v9888 = vadd.f32 %v9535, %v9887
      %v9889 = vpop.f32.mrb[0].mxu0
      %v9890 = vadd.f32 %v9537, %v9889
      %v9891 = vpop.f32.mrb[0].mxu0
      %v9892 = vadd.f32 %v9539, %v9891
      %v9893 = vpop.f32.mrb[0].mxu0
      %v9894 = vadd.f32 %v9541, %v9893
      %9895 = vmatprep.mubr.bf16.mxu0 %v3249
      %9896 = vmatmul.mubr.bf16.gmra.mrb[0].mxu0 %v3248
      %v9897 = vpop.f32.mrb[0].mxu0
      %v9898 = vadd.f32 %v9545, %v9897
      %v9899 = vpop.f32.mrb[0].mxu0
      %v9900 = vadd.f32 %v9547, %v9899
      %v9901 = vpop.f32.mrb[0].mxu0
      %v9902 = vadd.f32 %v9549, %v9901
      %v9903 = vpop.f32.mrb[0].mxu0
      %v9904 = vadd.f32 %v9551, %v9903
      %9905 = vmatprep.mubr.bf16.mxu0 %v3265
      %9906 = vmatmul.mubr.bf16.gmra.mrb[0].mxu0 %v3264
      %v9907 = vpop.f32.mrb[0].mxu0
      %v9908 = vadd.f32 %v9555, %v9907
      %v9909 = vpop.f32.mrb[0].mxu0
      %v9910 = vadd.f32 %v9557, %v9909
      %v9911 = vpop.f32.mrb[0].mxu0
      %v9912 = vadd.f32 %v9559, %v9911
      %v9913 = vpop.f32.mrb[0].mxu0
      %v9914 = vadd.f32 %v9561, %v9913
      %9915 = vmatprep.mubr.bf16.mxu0 %v3281
      %9916 = vmatmul.mubr.bf16.gmra.mrb[0].mxu0 %v3280
      %v9917 = vpop.f32.mrb[0].mxu0
      %v9918 = vadd.f32 %v9565, %v9917
      %v9919 = vpop.f32.mrb[0].mxu0
      %v9920 = vadd.f32 %v9567, %v9919
      %v9921 = vpop.f32.mrb[0].mxu0
      %v9922 = vadd.f32 %v9569, %v9921
      %v9923 = vpop.f32.mrb[0].mxu0
      %v9924 = vadd.f32 %v9571, %v9923
      %9925 = vmatprep.mubr.bf16.mxu0 %v3297
      %9926 = vmatmul.mubr.bf16.gmra.mrb[0].mxu0 %v3296
      %v9927 = vpop.f32.mrb[0].mxu0
      %v9928 = vadd.f32 %v9575, %v9927
      %v9929 = vpop.f32.mrb[0].mxu0
      %v9930 = vadd.f32 %v9577, %v9929
      %v9931 = vpop.f32.mrb[0].mxu0
      %v9932 = vadd.f32 %v9579, %v9931
      %v9933 = vpop.f32.mrb[0].mxu0
      %v9934 = vadd.f32 %v9581, %v9933
      %9935 = vmatprep.mubr.bf16.mxu0 %v3313
      %9936 = vmatmul.mubr.bf16.gmra.mrb[0].mxu0 %v3312
      %v9937 = vpop.f32.mrb[0].mxu0
      %v9938 = vadd.f32 %v9585, %v9937
      %v9939 = vpop.f32.mrb[0].mxu0
      %v9940 = vadd.f32 %v9587, %v9939
      %v9941 = vpop.f32.mrb[0].mxu0
      %v9942 = vadd.f32 %v9589, %v9941
      %v9943 = vpop.f32.mrb[0].mxu0
      %v9944 = vadd.f32 %v9591, %v9943
      %9945 = vmatprep.mubr.bf16.mxu0 %v3329
      %9946 = vmatmul.mubr.bf16.gmra.mrb[0].mxu0 %v3328
      %v9947 = vpop.f32.mrb[0].mxu0
      %v9948 = vadd.f32 %v9595, %v9947
      %v9949 = vpop.f32.mrb[0].mxu0
      %v9950 = vadd.f32 %v9597, %v9949
      %v9951 = vpop.f32.mrb[0].mxu0
      %v9952 = vadd.f32 %v9599, %v9951
      %v9953 = vpop.f32.mrb[0].mxu0
      %v9954 = vadd.f32 %v9601, %v9953
      %9955 = vmatprep.mubr.bf16.mxu0 %v3345
      %9956 = vmatmul.mubr.bf16.gmra.mrb[0].mxu0 %v3344
      %v9957 = vpop.f32.mrb[0].mxu0
      %v9958 = vadd.f32 %v9605, %v9957
      %v9959 = vpop.f32.mrb[0].mxu0
      %v9960 = vadd.f32 %v9607, %v9959
      %v9961 = vpop.f32.mrb[0].mxu0
      %v9962 = vadd.f32 %v9609, %v9961
      %v9963 = vpop.f32.mrb[0].mxu0
      %v9964 = vadd.f32 %v9611, %v9963
      %9965 = vmatprep.mubr.bf16.mxu0 %v3361
      %9966 = vmatmul.mubr.bf16.gmra.mrb[0].mxu0 %v3360
      %v9967 = vpop.f32.mrb[0].mxu0
      %v9968 = vadd.f32 %v9615, %v9967
      %v9969 = vpop.f32.mrb[0].mxu0
      %v9970 = vadd.f32 %v9617, %v9969
      %v9971 = vpop.f32.mrb[0].mxu0
      %v9972 = vadd.f32 %v9619, %v9971
      %v9973 = vpop.f32.mrb[0].mxu0
      %v9974 = vadd.f32 %v9621, %v9973
      %9975 = vdwg.mxu0
      %9976 = vmatprep.subr.bf16.mxu0 %v5553
      %9977 = vmatpush1.bf16.msra.mxu0 %v5552
      %9978 = vmatprep.subr.bf16.mxu0 %v5557
      %9979 = vmatpush1.bf16.msra.mxu0 %v5556
      %9980 = vmatprep.subr.bf16.mxu0 %v5561
      %9981 = vmatpush1.bf16.msra.mxu0 %v5560
      %9982 = vmatprep.subr.bf16.mxu0 %v5565
      %9983 = vmatpush1.bf16.msra.mxu0 %v5564
      %9984 = vmatprep.subr.bf16.mxu0 %v5569
      %9985 = vmatpush1.bf16.msra.mxu0 %v5568
      %9986 = vmatprep.subr.bf16.mxu0 %v5573
      %9987 = vmatpush1.bf16.msra.mxu0 %v5572
      %9988 = vmatprep.subr.bf16.mxu0 %v5577
      %9989 = vmatpush1.bf16.msra.mxu0 %v5576
      %9990 = vmatprep.subr.bf16.mxu0 %v5581
      %9991 = vmatpush1.bf16.msra.mxu0 %v5580
      %9992 = vmatprep.subr.bf16.mxu0 %v5585
      %9993 = vmatpush1.bf16.msra.mxu0 %v5584
      %9994 = vmatprep.subr.bf16.mxu0 %v5589
      %9995 = vmatpush1.bf16.msra.mxu0 %v5588
      %9996 = vmatprep.subr.bf16.mxu0 %v5593
      %9997 = vmatpush1.bf16.msra.mxu0 %v5592
      %9998 = vmatprep.subr.bf16.mxu0 %v5597
      %9999 = vmatpush1.bf16.msra.mxu0 %v5596
      %10000 = vmatprep.subr.bf16.mxu0 %v5601
      %10001 = vmatpush1.bf16.msra.mxu0 %v5600
      %10002 = vmatprep.subr.bf16.mxu0 %v5605
      %10003 = vmatpush1.bf16.msra.mxu0 %v5604
      %10004 = vmatprep.subr.bf16.mxu0 %v5609
      %10005 = vmatpush1.bf16.msra.mxu0 %v5608
      %10006 = vmatprep.subr.bf16.mxu0 %v5613
      %10007 = vmatpush1.bf16.msra.mxu0 %v5612
      %10008 = vmatprep.mubr.bf16.mxu0 %v2867
      %10009 = vmatmul.mubr.bf16.gmra.mrb[0].mxu0 %v2866
      %v10010 = vpop.f32.mrb[0].mxu0
      %v10011 = vadd.f32 %v9658, %v10010
      %v10012 = vpop.f32.mrb[0].mxu0
      %v10013 = vadd.f32 %v9660, %v10012
      %v10014 = vpop.f32.mrb[0].mxu0
      %v10015 = vadd.f32 %v9662, %v10014
      %v10016 = vpop.f32.mrb[0].mxu0
      %v10017 = vadd.f32 %v9664, %v10016
      %10018 = vmatprep.mubr.bf16.mxu0 %v2883
      %10019 = vmatmul.mubr.bf16.gmra.mrb[0].mxu0 %v2882
      %v10020 = vpop.f32.mrb[0].mxu0
      %v10021 = vadd.f32 %v9668, %v10020
      %v10022 = vpop.f32.mrb[0].mxu0
      %v10023 = vadd.f32 %v9670, %v10022
      %v10024 = vpop.f32.mrb[0].mxu0
      %v10025 = vadd.f32 %v9672, %v10024
      %v10026 = vpop.f32.mrb[0].mxu0
      %v10027 = vadd.f32 %v9674, %v10026
      %10028 = vmatprep.mubr.bf16.mxu0 %v2899
      %10029 = vmatmul.mubr.bf16.gmra.mrb[0].mxu0 %v2898
      %v10030 = vpop.f32.mrb[0].mxu0
      %v10031 = vadd.f32 %v9678, %v10030
      %v10032 = vpop.f32.mrb[0].mxu0
      %v10033 = vadd.f32 %v9680, %v10032
      %v10034 = vpop.f32.mrb[0].mxu0
      %v10035 = vadd.f32 %v9682, %v10034
      %v10036 = vpop.f32.mrb[0].mxu0
      %v10037 = vadd.f32 %v9684, %v10036
      %10038 = vmatprep.mubr.bf16.mxu0 %v2915
      %10039 = vmatmul.mubr.bf16.gmra.mrb[0].mxu0 %v2914
      %v10040 = vpop.f32.mrb[0].mxu0
      %v10041 = vadd.f32 %v9688, %v10040
      %v10042 = vpop.f32.mrb[0].mxu0
      %v10043 = vadd.f32 %v9690, %v10042
      %v10044 = vpop.f32.mrb[0].mxu0
      %v10045 = vadd.f32 %v9692, %v10044
      %v10046 = vpop.f32.mrb[0].mxu0
      %v10047 = vadd.f32 %v9694, %v10046
      %10048 = vmatprep.mubr.bf16.mxu0 %v2931
      %10049 = vmatmul.mubr.bf16.gmra.mrb[0].mxu0 %v2930
      %v10050 = vpop.f32.mrb[0].mxu0
      %v10051 = vadd.f32 %v9698, %v10050
      %v10052 = vpop.f32.mrb[0].mxu0
      %v10053 = vadd.f32 %v9700, %v10052
      %v10054 = vpop.f32.mrb[0].mxu0
      %v10055 = vadd.f32 %v9702, %v10054
      %v10056 = vpop.f32.mrb[0].mxu0
      %v10057 = vadd.f32 %v9704, %v10056
      %10058 = vmatprep.mubr.bf16.mxu0 %v2947
      %10059 = vmatmul.mubr.bf16.gmra.mrb[0].mxu0 %v2946
      %v10060 = vpop.f32.mrb[0].mxu0
      %v10061 = vadd.f32 %v9708, %v10060
      %v10062 = vpop.f32.mrb[0].mxu0
      %v10063 = vadd.f32 %v9710, %v10062
      %v10064 = vpop.f32.mrb[0].mxu0
      %v10065 = vadd.f32 %v9712, %v10064
      %v10066 = vpop.f32.mrb[0].mxu0
      %v10067 = vadd.f32 %v9714, %v10066
      %10068 = vmatprep.mubr.bf16.mxu0 %v2963
      %10069 = vmatmul.mubr.bf16.gmra.mrb[0].mxu0 %v2962
      %v10070 = vpop.f32.mrb[0].mxu0
      %v10071 = vadd.f32 %v9718, %v10070
      %v10072 = vpop.f32.mrb[0].mxu0
      %v10073 = vadd.f32 %v9720, %v10072
      %v10074 = vpop.f32.mrb[0].mxu0
      %v10075 = vadd.f32 %v9722, %v10074
      %v10076 = vpop.f32.mrb[0].mxu0
      %v10077 = vadd.f32 %v9724, %v10076
      %10078 = vmatprep.mubr.bf16.mxu0 %v2979
      %10079 = vmatmul.mubr.bf16.gmra.mrb[0].mxu0 %v2978
      %v10080 = vpop.f32.mrb[0].mxu0
      %v10081 = vadd.f32 %v9728, %v10080
      %v10082 = vpop.f32.mrb[0].mxu0
      %v10083 = vadd.f32 %v9730, %v10082
      %v10084 = vpop.f32.mrb[0].mxu0
      %v10085 = vadd.f32 %v9732, %v10084
      %v10086 = vpop.f32.mrb[0].mxu0
      %v10087 = vadd.f32 %v9734, %v10086
      %10088 = vmatprep.mubr.bf16.mxu0 %v2995
      %10089 = vmatmul.mubr.bf16.gmra.mrb[0].mxu0 %v2994
      %v10090 = vpop.f32.mrb[0].mxu0
      %v10091 = vadd.f32 %v9738, %v10090
      %v10092 = vpop.f32.mrb[0].mxu0
      %v10093 = vadd.f32 %v9740, %v10092
      %v10094 = vpop.f32.mrb[0].mxu0
      %v10095 = vadd.f32 %v9742, %v10094
      %v10096 = vpop.f32.mrb[0].mxu0
      %v10097 = vadd.f32 %v9744, %v10096
      %10098 = vmatprep.mubr.bf16.mxu0 %v3011
      %10099 = vmatmul.mubr.bf16.gmra.mrb[0].mxu0 %v3010
      %v10100 = vpop.f32.mrb[0].mxu0
      %v10101 = vadd.f32 %v9748, %v10100
      %v10102 = vpop.f32.mrb[0].mxu0
      %v10103 = vadd.f32 %v9750, %v10102
      %v10104 = vpop.f32.mrb[0].mxu0
      %v10105 = vadd.f32 %v9752, %v10104
      %v10106 = vpop.f32.mrb[0].mxu0
      %v10107 = vadd.f32 %v9754, %v10106
      %10108 = vmatprep.mubr.bf16.mxu0 %v3027
      %10109 = vmatmul.mubr.bf16.gmra.mrb[0].mxu0 %v3026
      %v10110 = vpop.f32.mrb[0].mxu0
      %v10111 = vadd.f32 %v9758, %v10110
      %v10112 = vpop.f32.mrb[0].mxu0
      %v10113 = vadd.f32 %v9760, %v10112
      %v10114 = vpop.f32.mrb[0].mxu0
      %v10115 = vadd.f32 %v9762, %v10114
      %v10116 = vpop.f32.mrb[0].mxu0
      %v10117 = vadd.f32 %v9764, %v10116
      %10118 = vmatprep.mubr.bf16.mxu0 %v3043
      %10119 = vmatmul.mubr.bf16.gmra.mrb[0].mxu0 %v3042
      %v10120 = vpop.f32.mrb[0].mxu0
      %v10121 = vadd.f32 %v9768, %v10120
      %v10122 = vpop.f32.mrb[0].mxu0
      %v10123 = vadd.f32 %v9770, %v10122
      %v10124 = vpop.f32.mrb[0].mxu0
      %v10125 = vadd.f32 %v9772, %v10124
      %v10126 = vpop.f32.mrb[0].mxu0
      %v10127 = vadd.f32 %v9774, %v10126
      %10128 = vmatprep.mubr.bf16.mxu0 %v3059
      %10129 = vmatmul.mubr.bf16.gmra.mrb[0].mxu0 %v3058
      %v10130 = vpop.f32.mrb[0].mxu0
      %v10131 = vadd.f32 %v9778, %v10130
      %v10132 = vpop.f32.mrb[0].mxu0
      %v10133 = vadd.f32 %v9780, %v10132
      %v10134 = vpop.f32.mrb[0].mxu0
      %v10135 = vadd.f32 %v9782, %v10134
      %v10136 = vpop.f32.mrb[0].mxu0
      %v10137 = vadd.f32 %v9784, %v10136
      %10138 = vmatprep.mubr.bf16.mxu0 %v3075
      %10139 = vmatmul.mubr.bf16.gmra.mrb[0].mxu0 %v3074
      %v10140 = vpop.f32.mrb[0].mxu0
      %v10141 = vadd.f32 %v9788, %v10140
      %v10142 = vpop.f32.mrb[0].mxu0
      %v10143 = vadd.f32 %v9790, %v10142
      %v10144 = vpop.f32.mrb[0].mxu0
      %v10145 = vadd.f32 %v9792, %v10144
      %v10146 = vpop.f32.mrb[0].mxu0
      %v10147 = vadd.f32 %v9794, %v10146
      %10148 = vmatprep.mubr.bf16.mxu0 %v3091
      %10149 = vmatmul.mubr.bf16.gmra.mrb[0].mxu0 %v3090
      %v10150 = vpop.f32.mrb[0].mxu0
      %v10151 = vadd.f32 %v9798, %v10150
      %v10152 = vpop.f32.mrb[0].mxu0
      %v10153 = vadd.f32 %v9800, %v10152
      %v10154 = vpop.f32.mrb[0].mxu0
      %v10155 = vadd.f32 %v9802, %v10154
      %v10156 = vpop.f32.mrb[0].mxu0
      %v10157 = vadd.f32 %v9804, %v10156
      %10158 = vmatprep.mubr.bf16.mxu0 %v3107
      %10159 = vmatmul.mubr.bf16.gmra.mrb[0].mxu0 %v3106
      %v10160 = vpop.f32.mrb[0].mxu0
      %v10161 = vadd.f32 %v9808, %v10160
      %v10162 = vpop.f32.mrb[0].mxu0
      %v10163 = vadd.f32 %v9810, %v10162
      %v10164 = vpop.f32.mrb[0].mxu0
      %v10165 = vadd.f32 %v9812, %v10164
      %v10166 = vpop.f32.mrb[0].mxu0
      %v10167 = vadd.f32 %v9814, %v10166
      %10168 = vmatprep.mubr.bf16.mxu0 %v3123
      %10169 = vmatmul.mubr.bf16.gmra.mrb[0].mxu0 %v3122
      %v10170 = vpop.f32.mrb[0].mxu0
      %v10171 = vadd.f32 %v9818, %v10170
      %v10172 = vpop.f32.mrb[0].mxu0
      %v10173 = vadd.f32 %v9820, %v10172
      %v10174 = vpop.f32.mrb[0].mxu0
      %v10175 = vadd.f32 %v9822, %v10174
      %v10176 = vpop.f32.mrb[0].mxu0
      %v10177 = vadd.f32 %v9824, %v10176
      %10178 = vmatprep.mubr.bf16.mxu0 %v3139
      %10179 = vmatmul.mubr.bf16.gmra.mrb[0].mxu0 %v3138
      %v10180 = vpop.f32.mrb[0].mxu0
      %v10181 = vadd.f32 %v9828, %v10180
      %v10182 = vpop.f32.mrb[0].mxu0
      %v10183 = vadd.f32 %v9830, %v10182
      %v10184 = vpop.f32.mrb[0].mxu0
      %v10185 = vadd.f32 %v9832, %v10184
      %v10186 = vpop.f32.mrb[0].mxu0
      %v10187 = vadd.f32 %v9834, %v10186
      %10188 = vmatprep.mubr.bf16.mxu0 %v3155
      %10189 = vmatmul.mubr.bf16.gmra.mrb[0].mxu0 %v3154
      %v10190 = vpop.f32.mrb[0].mxu0
      %v10191 = vadd.f32 %v9838, %v10190
      %v10192 = vpop.f32.mrb[0].mxu0
      %v10193 = vadd.f32 %v9840, %v10192
      %v10194 = vpop.f32.mrb[0].mxu0
      %v10195 = vadd.f32 %v9842, %v10194
      %v10196 = vpop.f32.mrb[0].mxu0
      %v10197 = vadd.f32 %v9844, %v10196
      %10198 = vmatprep.mubr.bf16.mxu0 %v3171
      %10199 = vmatmul.mubr.bf16.gmra.mrb[0].mxu0 %v3170
      %v10200 = vpop.f32.mrb[0].mxu0
      %v10201 = vadd.f32 %v9848, %v10200
      %v10202 = vpop.f32.mrb[0].mxu0
      %v10203 = vadd.f32 %v9850, %v10202
      %v10204 = vpop.f32.mrb[0].mxu0
      %v10205 = vadd.f32 %v9852, %v10204
      %v10206 = vpop.f32.mrb[0].mxu0
      %v10207 = vadd.f32 %v9854, %v10206
      %10208 = vmatprep.mubr.bf16.mxu0 %v3187
      %10209 = vmatmul.mubr.bf16.gmra.mrb[0].mxu0 %v3186
      %v10210 = vpop.f32.mrb[0].mxu0
      %v10211 = vadd.f32 %v9858, %v10210
      %v10212 = vpop.f32.mrb[0].mxu0
      %v10213 = vadd.f32 %v9860, %v10212
      %v10214 = vpop.f32.mrb[0].mxu0
      %v10215 = vadd.f32 %v9862, %v10214
      %v10216 = vpop.f32.mrb[0].mxu0
      %v10217 = vadd.f32 %v9864, %v10216
      %10218 = vmatprep.mubr.bf16.mxu0 %v3203
      %10219 = vmatmul.mubr.bf16.gmra.mrb[0].mxu0 %v3202
      %v10220 = vpop.f32.mrb[0].mxu0
      %v10221 = vadd.f32 %v9868, %v10220
      %v10222 = vpop.f32.mrb[0].mxu0
      %v10223 = vadd.f32 %v9870, %v10222
      %v10224 = vpop.f32.mrb[0].mxu0
      %v10225 = vadd.f32 %v9872, %v10224
      %v10226 = vpop.f32.mrb[0].mxu0
      %v10227 = vadd.f32 %v9874, %v10226
      %10228 = vmatprep.mubr.bf16.mxu0 %v3219
      %10229 = vmatmul.mubr.bf16.gmra.mrb[0].mxu0 %v3218
      %v10230 = vpop.f32.mrb[0].mxu0
      %v10231 = vadd.f32 %v9878, %v10230
      %v10232 = vpop.f32.mrb[0].mxu0
      %v10233 = vadd.f32 %v9880, %v10232
      %v10234 = vpop.f32.mrb[0].mxu0
      %v10235 = vadd.f32 %v9882, %v10234
      %v10236 = vpop.f32.mrb[0].mxu0
      %v10237 = vadd.f32 %v9884, %v10236
      %10238 = vmatprep.mubr.bf16.mxu0 %v3235
      %10239 = vmatmul.mubr.bf16.gmra.mrb[0].mxu0 %v3234
      %v10240 = vpop.f32.mrb[0].mxu0
      %v10241 = vadd.f32 %v9888, %v10240
      %v10242 = vpop.f32.mrb[0].mxu0
      %v10243 = vadd.f32 %v9890, %v10242
      %v10244 = vpop.f32.mrb[0].mxu0
      %v10245 = vadd.f32 %v9892, %v10244
      %v10246 = vpop.f32.mrb[0].mxu0
      %v10247 = vadd.f32 %v9894, %v10246
      %10248 = vmatprep.mubr.bf16.mxu0 %v3251
      %10249 = vmatmul.mubr.bf16.gmra.mrb[0].mxu0 %v3250
      %v10250 = vpop.f32.mrb[0].mxu0
      %v10251 = vadd.f32 %v9898, %v10250
      %v10252 = vpop.f32.mrb[0].mxu0
      %v10253 = vadd.f32 %v9900, %v10252
      %v10254 = vpop.f32.mrb[0].mxu0
      %v10255 = vadd.f32 %v9902, %v10254
      %v10256 = vpop.f32.mrb[0].mxu0
      %v10257 = vadd.f32 %v9904, %v10256
      %10258 = vmatprep.mubr.bf16.mxu0 %v3267
      %10259 = vmatmul.mubr.bf16.gmra.mrb[0].mxu0 %v3266
      %v10260 = vpop.f32.mrb[0].mxu0
      %v10261 = vadd.f32 %v9908, %v10260
      %v10262 = vpop.f32.mrb[0].mxu0
      %v10263 = vadd.f32 %v9910, %v10262
      %v10264 = vpop.f32.mrb[0].mxu0
      %v10265 = vadd.f32 %v9912, %v10264
      %v10266 = vpop.f32.mrb[0].mxu0
      %v10267 = vadd.f32 %v9914, %v10266
      %10268 = vmatprep.mubr.bf16.mxu0 %v3283
      %10269 = vmatmul.mubr.bf16.gmra.mrb[0].mxu0 %v3282
      %v10270 = vpop.f32.mrb[0].mxu0
      %v10271 = vadd.f32 %v9918, %v10270
      %v10272 = vpop.f32.mrb[0].mxu0
      %v10273 = vadd.f32 %v9920, %v10272
      %v10274 = vpop.f32.mrb[0].mxu0
      %v10275 = vadd.f32 %v9922, %v10274
      %v10276 = vpop.f32.mrb[0].mxu0
      %v10277 = vadd.f32 %v9924, %v10276
      %10278 = vmatprep.mubr.bf16.mxu0 %v3299
      %10279 = vmatmul.mubr.bf16.gmra.mrb[0].mxu0 %v3298
      %v10280 = vpop.f32.mrb[0].mxu0
      %v10281 = vadd.f32 %v9928, %v10280
      %v10282 = vpop.f32.mrb[0].mxu0
      %v10283 = vadd.f32 %v9930, %v10282
      %v10284 = vpop.f32.mrb[0].mxu0
      %v10285 = vadd.f32 %v9932, %v10284
      %v10286 = vpop.f32.mrb[0].mxu0
      %v10287 = vadd.f32 %v9934, %v10286
      %10288 = vmatprep.mubr.bf16.mxu0 %v3315
      %10289 = vmatmul.mubr.bf16.gmra.mrb[0].mxu0 %v3314
      %v10290 = vpop.f32.mrb[0].mxu0
      %v10291 = vadd.f32 %v9938, %v10290
      %v10292 = vpop.f32.mrb[0].mxu0
      %v10293 = vadd.f32 %v9940, %v10292
      %v10294 = vpop.f32.mrb[0].mxu0
      %v10295 = vadd.f32 %v9942, %v10294
      %v10296 = vpop.f32.mrb[0].mxu0
      %v10297 = vadd.f32 %v9944, %v10296
      %10298 = vmatprep.mubr.bf16.mxu0 %v3331
      %10299 = vmatmul.mubr.bf16.gmra.mrb[0].mxu0 %v3330
      %v10300 = vpop.f32.mrb[0].mxu0
      %v10301 = vadd.f32 %v9948, %v10300
      %v10302 = vpop.f32.mrb[0].mxu0
      %v10303 = vadd.f32 %v9950, %v10302
      %v10304 = vpop.f32.mrb[0].mxu0
      %v10305 = vadd.f32 %v9952, %v10304
      %v10306 = vpop.f32.mrb[0].mxu0
      %v10307 = vadd.f32 %v9954, %v10306
      %10308 = vmatprep.mubr.bf16.mxu0 %v3347
      %10309 = vmatmul.mubr.bf16.gmra.mrb[0].mxu0 %v3346
      %v10310 = vpop.f32.mrb[0].mxu0
      %v10311 = vadd.f32 %v9958, %v10310
      %v10312 = vpop.f32.mrb[0].mxu0
      %v10313 = vadd.f32 %v9960, %v10312
      %v10314 = vpop.f32.mrb[0].mxu0
      %v10315 = vadd.f32 %v9962, %v10314
      %v10316 = vpop.f32.mrb[0].mxu0
      %v10317 = vadd.f32 %v9964, %v10316
      %10318 = vmatprep.mubr.bf16.mxu0 %v3363
      %10319 = vmatmul.mubr.bf16.gmra.mrb[0].mxu0 %v3362
      %v10320 = vpop.f32.mrb[0].mxu0
      %v10321 = vadd.f32 %v9968, %v10320
      %v10322 = vpop.f32.mrb[0].mxu0
      %v10323 = vadd.f32 %v9970, %v10322
      %v10324 = vpop.f32.mrb[0].mxu0
      %v10325 = vadd.f32 %v9972, %v10324
      %v10326 = vpop.f32.mrb[0].mxu0
      %v10327 = vadd.f32 %v9974, %v10326
      %10328 = vdwg.mxu0
      %10329 = vmatprep.subr.bf16.mxu0 %v5617
      %10330 = vmatpush1.bf16.msra.mxu0 %v5616
      %10331 = vmatprep.subr.bf16.mxu0 %v5621
      %10332 = vmatpush1.bf16.msra.mxu0 %v5620
      %10333 = vmatprep.subr.bf16.mxu0 %v5625
      %10334 = vmatpush1.bf16.msra.mxu0 %v5624
      %10335 = vmatprep.subr.bf16.mxu0 %v5629
      %10336 = vmatpush1.bf16.msra.mxu0 %v5628
      %10337 = vmatprep.subr.bf16.mxu0 %v5633
      %10338 = vmatpush1.bf16.msra.mxu0 %v5632
      %10339 = vmatprep.subr.bf16.mxu0 %v5637
      %10340 = vmatpush1.bf16.msra.mxu0 %v5636
      %10341 = vmatprep.subr.bf16.mxu0 %v5641
      %10342 = vmatpush1.bf16.msra.mxu0 %v5640
      %10343 = vmatprep.subr.bf16.mxu0 %v5645
      %10344 = vmatpush1.bf16.msra.mxu0 %v5644
      %10345 = vmatprep.subr.bf16.mxu0 %v5649
      %10346 = vmatpush1.bf16.msra.mxu0 %v5648
      %10347 = vmatprep.subr.bf16.mxu0 %v5653
      %10348 = vmatpush1.bf16.msra.mxu0 %v5652
      %10349 = vmatprep.subr.bf16.mxu0 %v5657
      %10350 = vmatpush1.bf16.msra.mxu0 %v5656
      %10351 = vmatprep.subr.bf16.mxu0 %v5661
      %10352 = vmatpush1.bf16.msra.mxu0 %v5660
      %10353 = vmatprep.subr.bf16.mxu0 %v5665
      %10354 = vmatpush1.bf16.msra.mxu0 %v5664
      %10355 = vmatprep.subr.bf16.mxu0 %v5669
      %10356 = vmatpush1.bf16.msra.mxu0 %v5668
      %10357 = vmatprep.subr.bf16.mxu0 %v5673
      %10358 = vmatpush1.bf16.msra.mxu0 %v5672
      %10359 = vmatprep.subr.bf16.mxu0 %v5677
      %10360 = vmatpush1.bf16.msra.mxu0 %v5676
      %10361 = vmatprep.mubr.bf16.mxu0 %v2869
      %10362 = vmatmul.mubr.bf16.gmra.mrb[0].mxu0 %v2868
      %v10363 = vpop.f32.mrb[0].mxu0
      %v10364 = vadd.f32 %v10011, %v10363
      %v10365 = vpop.f32.mrb[0].mxu0
      %v10366 = vadd.f32 %v10013, %v10365
      %v10367 = vpop.f32.mrb[0].mxu0
      %v10368 = vadd.f32 %v10015, %v10367
      %v10369 = vpop.f32.mrb[0].mxu0
      %v10370 = vadd.f32 %v10017, %v10369
      %10371 = vmatprep.mubr.bf16.mxu0 %v2885
      %10372 = vmatmul.mubr.bf16.gmra.mrb[0].mxu0 %v2884
      %v10373 = vpop.f32.mrb[0].mxu0
      %v10374 = vadd.f32 %v10021, %v10373
      %v10375 = vpop.f32.mrb[0].mxu0
      %v10376 = vadd.f32 %v10023, %v10375
      %v10377 = vpop.f32.mrb[0].mxu0
      %v10378 = vadd.f32 %v10025, %v10377
      %v10379 = vpop.f32.mrb[0].mxu0
      %v10380 = vadd.f32 %v10027, %v10379
      %10381 = vmatprep.mubr.bf16.mxu0 %v2901
      %10382 = vmatmul.mubr.bf16.gmra.mrb[0].mxu0 %v2900
      %v10383 = vpop.f32.mrb[0].mxu0
      %v10384 = vadd.f32 %v10031, %v10383
      %v10385 = vpop.f32.mrb[0].mxu0
      %v10386 = vadd.f32 %v10033, %v10385
      %v10387 = vpop.f32.mrb[0].mxu0
      %v10388 = vadd.f32 %v10035, %v10387
      %v10389 = vpop.f32.mrb[0].mxu0
      %v10390 = vadd.f32 %v10037, %v10389
      %10391 = vmatprep.mubr.bf16.mxu0 %v2917
      %10392 = vmatmul.mubr.bf16.gmra.mrb[0].mxu0 %v2916
      %v10393 = vpop.f32.mrb[0].mxu0
      %v10394 = vadd.f32 %v10041, %v10393
      %v10395 = vpop.f32.mrb[0].mxu0
      %v10396 = vadd.f32 %v10043, %v10395
      %v10397 = vpop.f32.mrb[0].mxu0
      %v10398 = vadd.f32 %v10045, %v10397
      %v10399 = vpop.f32.mrb[0].mxu0
      %v10400 = vadd.f32 %v10047, %v10399
      %10401 = vmatprep.mubr.bf16.mxu0 %v2933
      %10402 = vmatmul.mubr.bf16.gmra.mrb[0].mxu0 %v2932
      %v10403 = vpop.f32.mrb[0].mxu0
      %v10404 = vadd.f32 %v10051, %v10403
      %v10405 = vpop.f32.mrb[0].mxu0
      %v10406 = vadd.f32 %v10053, %v10405
      %v10407 = vpop.f32.mrb[0].mxu0
      %v10408 = vadd.f32 %v10055, %v10407
      %v10409 = vpop.f32.mrb[0].mxu0
      %v10410 = vadd.f32 %v10057, %v10409
      %10411 = vmatprep.mubr.bf16.mxu0 %v2949
      %10412 = vmatmul.mubr.bf16.gmra.mrb[0].mxu0 %v2948
      %v10413 = vpop.f32.mrb[0].mxu0
      %v10414 = vadd.f32 %v10061, %v10413
      %v10415 = vpop.f32.mrb[0].mxu0
      %v10416 = vadd.f32 %v10063, %v10415
      %v10417 = vpop.f32.mrb[0].mxu0
      %v10418 = vadd.f32 %v10065, %v10417
      %v10419 = vpop.f32.mrb[0].mxu0
      %v10420 = vadd.f32 %v10067, %v10419
      %10421 = vmatprep.mubr.bf16.mxu0 %v2965
      %10422 = vmatmul.mubr.bf16.gmra.mrb[0].mxu0 %v2964
      %v10423 = vpop.f32.mrb[0].mxu0
      %v10424 = vadd.f32 %v10071, %v10423
      %v10425 = vpop.f32.mrb[0].mxu0
      %v10426 = vadd.f32 %v10073, %v10425
      %v10427 = vpop.f32.mrb[0].mxu0
      %v10428 = vadd.f32 %v10075, %v10427
      %v10429 = vpop.f32.mrb[0].mxu0
      %v10430 = vadd.f32 %v10077, %v10429
      %10431 = vmatprep.mubr.bf16.mxu0 %v2981
      %10432 = vmatmul.mubr.bf16.gmra.mrb[0].mxu0 %v2980
      %v10433 = vpop.f32.mrb[0].mxu0
      %v10434 = vadd.f32 %v10081, %v10433
      %v10435 = vpop.f32.mrb[0].mxu0
      %v10436 = vadd.f32 %v10083, %v10435
      %v10437 = vpop.f32.mrb[0].mxu0
      %v10438 = vadd.f32 %v10085, %v10437
      %v10439 = vpop.f32.mrb[0].mxu0
      %v10440 = vadd.f32 %v10087, %v10439
      %10441 = vmatprep.mubr.bf16.mxu0 %v2997
      %10442 = vmatmul.mubr.bf16.gmra.mrb[0].mxu0 %v2996
      %v10443 = vpop.f32.mrb[0].mxu0
      %v10444 = vadd.f32 %v10091, %v10443
      %v10445 = vpop.f32.mrb[0].mxu0
      %v10446 = vadd.f32 %v10093, %v10445
      %v10447 = vpop.f32.mrb[0].mxu0
      %v10448 = vadd.f32 %v10095, %v10447
      %v10449 = vpop.f32.mrb[0].mxu0
      %v10450 = vadd.f32 %v10097, %v10449
      %10451 = vmatprep.mubr.bf16.mxu0 %v3013
      %10452 = vmatmul.mubr.bf16.gmra.mrb[0].mxu0 %v3012
      %v10453 = vpop.f32.mrb[0].mxu0
      %v10454 = vadd.f32 %v10101, %v10453
      %v10455 = vpop.f32.mrb[0].mxu0
      %v10456 = vadd.f32 %v10103, %v10455
      %v10457 = vpop.f32.mrb[0].mxu0
      %v10458 = vadd.f32 %v10105, %v10457
      %v10459 = vpop.f32.mrb[0].mxu0
      %v10460 = vadd.f32 %v10107, %v10459
      %10461 = vmatprep.mubr.bf16.mxu0 %v3029
      %10462 = vmatmul.mubr.bf16.gmra.mrb[0].mxu0 %v3028
      %v10463 = vpop.f32.mrb[0].mxu0
      %v10464 = vadd.f32 %v10111, %v10463
      %v10465 = vpop.f32.mrb[0].mxu0
      %v10466 = vadd.f32 %v10113, %v10465
      %v10467 = vpop.f32.mrb[0].mxu0
      %v10468 = vadd.f32 %v10115, %v10467
      %v10469 = vpop.f32.mrb[0].mxu0
      %v10470 = vadd.f32 %v10117, %v10469
      %10471 = vmatprep.mubr.bf16.mxu0 %v3045
      %10472 = vmatmul.mubr.bf16.gmra.mrb[0].mxu0 %v3044
      %v10473 = vpop.f32.mrb[0].mxu0
      %v10474 = vadd.f32 %v10121, %v10473
      %v10475 = vpop.f32.mrb[0].mxu0
      %v10476 = vadd.f32 %v10123, %v10475
      %v10477 = vpop.f32.mrb[0].mxu0
      %v10478 = vadd.f32 %v10125, %v10477
      %v10479 = vpop.f32.mrb[0].mxu0
      %v10480 = vadd.f32 %v10127, %v10479
      %10481 = vmatprep.mubr.bf16.mxu0 %v3061
      %10482 = vmatmul.mubr.bf16.gmra.mrb[0].mxu0 %v3060
      %v10483 = vpop.f32.mrb[0].mxu0
      %v10484 = vadd.f32 %v10131, %v10483
      %v10485 = vpop.f32.mrb[0].mxu0
      %v10486 = vadd.f32 %v10133, %v10485
      %v10487 = vpop.f32.mrb[0].mxu0
      %v10488 = vadd.f32 %v10135, %v10487
      %v10489 = vpop.f32.mrb[0].mxu0
      %v10490 = vadd.f32 %v10137, %v10489
      %10491 = vmatprep.mubr.bf16.mxu0 %v3077
      %10492 = vmatmul.mubr.bf16.gmra.mrb[0].mxu0 %v3076
      %v10493 = vpop.f32.mrb[0].mxu0
      %v10494 = vadd.f32 %v10141, %v10493
      %v10495 = vpop.f32.mrb[0].mxu0
      %v10496 = vadd.f32 %v10143, %v10495
      %v10497 = vpop.f32.mrb[0].mxu0
      %v10498 = vadd.f32 %v10145, %v10497
      %v10499 = vpop.f32.mrb[0].mxu0
      %v10500 = vadd.f32 %v10147, %v10499
      %10501 = vmatprep.mubr.bf16.mxu0 %v3093
      %10502 = vmatmul.mubr.bf16.gmra.mrb[0].mxu0 %v3092
      %v10503 = vpop.f32.mrb[0].mxu0
      %v10504 = vadd.f32 %v10151, %v10503
      %v10505 = vpop.f32.mrb[0].mxu0
      %v10506 = vadd.f32 %v10153, %v10505
      %v10507 = vpop.f32.mrb[0].mxu0
      %v10508 = vadd.f32 %v10155, %v10507
      %v10509 = vpop.f32.mrb[0].mxu0
      %v10510 = vadd.f32 %v10157, %v10509
      %10511 = vmatprep.mubr.bf16.mxu0 %v3109
      %10512 = vmatmul.mubr.bf16.gmra.mrb[0].mxu0 %v3108
      %v10513 = vpop.f32.mrb[0].mxu0
      %v10514 = vadd.f32 %v10161, %v10513
      %v10515 = vpop.f32.mrb[0].mxu0
      %v10516 = vadd.f32 %v10163, %v10515
      %v10517 = vpop.f32.mrb[0].mxu0
      %v10518 = vadd.f32 %v10165, %v10517
      %v10519 = vpop.f32.mrb[0].mxu0
      %v10520 = vadd.f32 %v10167, %v10519
      %10521 = vmatprep.mubr.bf16.mxu0 %v3125
      %10522 = vmatmul.mubr.bf16.gmra.mrb[0].mxu0 %v3124
      %v10523 = vpop.f32.mrb[0].mxu0
      %v10524 = vadd.f32 %v10171, %v10523
      %v10525 = vpop.f32.mrb[0].mxu0
      %v10526 = vadd.f32 %v10173, %v10525
      %v10527 = vpop.f32.mrb[0].mxu0
      %v10528 = vadd.f32 %v10175, %v10527
      %v10529 = vpop.f32.mrb[0].mxu0
      %v10530 = vadd.f32 %v10177, %v10529
      %10531 = vmatprep.mubr.bf16.mxu0 %v3141
      %10532 = vmatmul.mubr.bf16.gmra.mrb[0].mxu0 %v3140
      %v10533 = vpop.f32.mrb[0].mxu0
      %v10534 = vadd.f32 %v10181, %v10533
      %v10535 = vpop.f32.mrb[0].mxu0
      %v10536 = vadd.f32 %v10183, %v10535
      %v10537 = vpop.f32.mrb[0].mxu0
      %v10538 = vadd.f32 %v10185, %v10537
      %v10539 = vpop.f32.mrb[0].mxu0
      %v10540 = vadd.f32 %v10187, %v10539
      %10541 = vmatprep.mubr.bf16.mxu0 %v3157
      %10542 = vmatmul.mubr.bf16.gmra.mrb[0].mxu0 %v3156
      %v10543 = vpop.f32.mrb[0].mxu0
      %v10544 = vadd.f32 %v10191, %v10543
      %v10545 = vpop.f32.mrb[0].mxu0
      %v10546 = vadd.f32 %v10193, %v10545
      %v10547 = vpop.f32.mrb[0].mxu0
      %v10548 = vadd.f32 %v10195, %v10547
      %v10549 = vpop.f32.mrb[0].mxu0
      %v10550 = vadd.f32 %v10197, %v10549
      %10551 = vmatprep.mubr.bf16.mxu0 %v3173
      %10552 = vmatmul.mubr.bf16.gmra.mrb[0].mxu0 %v3172
      %v10553 = vpop.f32.mrb[0].mxu0
      %v10554 = vadd.f32 %v10201, %v10553
      %v10555 = vpop.f32.mrb[0].mxu0
      %v10556 = vadd.f32 %v10203, %v10555
      %v10557 = vpop.f32.mrb[0].mxu0
      %v10558 = vadd.f32 %v10205, %v10557
      %v10559 = vpop.f32.mrb[0].mxu0
      %v10560 = vadd.f32 %v10207, %v10559
      %10561 = vmatprep.mubr.bf16.mxu0 %v3189
      %10562 = vmatmul.mubr.bf16.gmra.mrb[0].mxu0 %v3188
      %v10563 = vpop.f32.mrb[0].mxu0
      %v10564 = vadd.f32 %v10211, %v10563
      %v10565 = vpop.f32.mrb[0].mxu0
      %v10566 = vadd.f32 %v10213, %v10565
      %v10567 = vpop.f32.mrb[0].mxu0
      %v10568 = vadd.f32 %v10215, %v10567
      %v10569 = vpop.f32.mrb[0].mxu0
      %v10570 = vadd.f32 %v10217, %v10569
      %10571 = vmatprep.mubr.bf16.mxu0 %v3205
      %10572 = vmatmul.mubr.bf16.gmra.mrb[0].mxu0 %v3204
      %v10573 = vpop.f32.mrb[0].mxu0
      %v10574 = vadd.f32 %v10221, %v10573
      %v10575 = vpop.f32.mrb[0].mxu0
      %v10576 = vadd.f32 %v10223, %v10575
      %v10577 = vpop.f32.mrb[0].mxu0
      %v10578 = vadd.f32 %v10225, %v10577
      %v10579 = vpop.f32.mrb[0].mxu0
      %v10580 = vadd.f32 %v10227, %v10579
      %10581 = vmatprep.mubr.bf16.mxu0 %v3221
      %10582 = vmatmul.mubr.bf16.gmra.mrb[0].mxu0 %v3220
      %v10583 = vpop.f32.mrb[0].mxu0
      %v10584 = vadd.f32 %v10231, %v10583
      %v10585 = vpop.f32.mrb[0].mxu0
      %v10586 = vadd.f32 %v10233, %v10585
      %v10587 = vpop.f32.mrb[0].mxu0
      %v10588 = vadd.f32 %v10235, %v10587
      %v10589 = vpop.f32.mrb[0].mxu0
      %v10590 = vadd.f32 %v10237, %v10589
      %10591 = vmatprep.mubr.bf16.mxu0 %v3237
      %10592 = vmatmul.mubr.bf16.gmra.mrb[0].mxu0 %v3236
      %v10593 = vpop.f32.mrb[0].mxu0
      %v10594 = vadd.f32 %v10241, %v10593
      %v10595 = vpop.f32.mrb[0].mxu0
      %v10596 = vadd.f32 %v10243, %v10595
      %v10597 = vpop.f32.mrb[0].mxu0
      %v10598 = vadd.f32 %v10245, %v10597
      %v10599 = vpop.f32.mrb[0].mxu0
      %v10600 = vadd.f32 %v10247, %v10599
      %10601 = vmatprep.mubr.bf16.mxu0 %v3253
      %10602 = vmatmul.mubr.bf16.gmra.mrb[0].mxu0 %v3252
      %v10603 = vpop.f32.mrb[0].mxu0
      %v10604 = vadd.f32 %v10251, %v10603
      %v10605 = vpop.f32.mrb[0].mxu0
      %v10606 = vadd.f32 %v10253, %v10605
      %v10607 = vpop.f32.mrb[0].mxu0
      %v10608 = vadd.f32 %v10255, %v10607
      %v10609 = vpop.f32.mrb[0].mxu0
      %v10610 = vadd.f32 %v10257, %v10609
      %10611 = vmatprep.mubr.bf16.mxu0 %v3269
      %10612 = vmatmul.mubr.bf16.gmra.mrb[0].mxu0 %v3268
      %v10613 = vpop.f32.mrb[0].mxu0
      %v10614 = vadd.f32 %v10261, %v10613
      %v10615 = vpop.f32.mrb[0].mxu0
      %v10616 = vadd.f32 %v10263, %v10615
      %v10617 = vpop.f32.mrb[0].mxu0
      %v10618 = vadd.f32 %v10265, %v10617
      %v10619 = vpop.f32.mrb[0].mxu0
      %v10620 = vadd.f32 %v10267, %v10619
      %10621 = vmatprep.mubr.bf16.mxu0 %v3285
      %10622 = vmatmul.mubr.bf16.gmra.mrb[0].mxu0 %v3284
      %v10623 = vpop.f32.mrb[0].mxu0
      %v10624 = vadd.f32 %v10271, %v10623
      %v10625 = vpop.f32.mrb[0].mxu0
      %v10626 = vadd.f32 %v10273, %v10625
      %v10627 = vpop.f32.mrb[0].mxu0
      %v10628 = vadd.f32 %v10275, %v10627
      %v10629 = vpop.f32.mrb[0].mxu0
      %v10630 = vadd.f32 %v10277, %v10629
      %10631 = vmatprep.mubr.bf16.mxu0 %v3301
      %10632 = vmatmul.mubr.bf16.gmra.mrb[0].mxu0 %v3300
      %v10633 = vpop.f32.mrb[0].mxu0
      %v10634 = vadd.f32 %v10281, %v10633
      %v10635 = vpop.f32.mrb[0].mxu0
      %v10636 = vadd.f32 %v10283, %v10635
      %v10637 = vpop.f32.mrb[0].mxu0
      %v10638 = vadd.f32 %v10285, %v10637
      %v10639 = vpop.f32.mrb[0].mxu0
      %v10640 = vadd.f32 %v10287, %v10639
      %10641 = vmatprep.mubr.bf16.mxu0 %v3317
      %10642 = vmatmul.mubr.bf16.gmra.mrb[0].mxu0 %v3316
      %v10643 = vpop.f32.mrb[0].mxu0
      %v10644 = vadd.f32 %v10291, %v10643
      %v10645 = vpop.f32.mrb[0].mxu0
      %v10646 = vadd.f32 %v10293, %v10645
      %v10647 = vpop.f32.mrb[0].mxu0
      %v10648 = vadd.f32 %v10295, %v10647
      %v10649 = vpop.f32.mrb[0].mxu0
      %v10650 = vadd.f32 %v10297, %v10649
      %10651 = vmatprep.mubr.bf16.mxu0 %v3333
      %10652 = vmatmul.mubr.bf16.gmra.mrb[0].mxu0 %v3332
      %v10653 = vpop.f32.mrb[0].mxu0
      %v10654 = vadd.f32 %v10301, %v10653
      %v10655 = vpop.f32.mrb[0].mxu0
      %v10656 = vadd.f32 %v10303, %v10655
      %v10657 = vpop.f32.mrb[0].mxu0
      %v10658 = vadd.f32 %v10305, %v10657
      %v10659 = vpop.f32.mrb[0].mxu0
      %v10660 = vadd.f32 %v10307, %v10659
      %10661 = vmatprep.mubr.bf16.mxu0 %v3349
      %10662 = vmatmul.mubr.bf16.gmra.mrb[0].mxu0 %v3348
      %v10663 = vpop.f32.mrb[0].mxu0
      %v10664 = vadd.f32 %v10311, %v10663
      %v10665 = vpop.f32.mrb[0].mxu0
      %v10666 = vadd.f32 %v10313, %v10665
      %v10667 = vpop.f32.mrb[0].mxu0
      %v10668 = vadd.f32 %v10315, %v10667
      %v10669 = vpop.f32.mrb[0].mxu0
      %v10670 = vadd.f32 %v10317, %v10669
      %10671 = vmatprep.mubr.bf16.mxu0 %v3365
      %10672 = vmatmul.mubr.bf16.gmra.mrb[0].mxu0 %v3364
      %v10673 = vpop.f32.mrb[0].mxu0
      %v10674 = vadd.f32 %v10321, %v10673
      %v10675 = vpop.f32.mrb[0].mxu0
      %v10676 = vadd.f32 %v10323, %v10675
      %v10677 = vpop.f32.mrb[0].mxu0
      %v10678 = vadd.f32 %v10325, %v10677
      %v10679 = vpop.f32.mrb[0].mxu0
      %v10680 = vadd.f32 %v10327, %v10679
      %10681 = vdwg.mxu0
      %10682 = vmatprep.subr.bf16.mxu0 %v5681
      %10683 = vmatpush1.bf16.msra.mxu0 %v5680
      %10684 = vmatprep.subr.bf16.mxu0 %v5685
      %10685 = vmatpush1.bf16.msra.mxu0 %v5684
      %10686 = vmatprep.subr.bf16.mxu0 %v5689
      %10687 = vmatpush1.bf16.msra.mxu0 %v5688
      %10688 = vmatprep.subr.bf16.mxu0 %v5693
      %10689 = vmatpush1.bf16.msra.mxu0 %v5692
      %10690 = vmatprep.subr.bf16.mxu0 %v5697
      %10691 = vmatpush1.bf16.msra.mxu0 %v5696
      %10692 = vmatprep.subr.bf16.mxu0 %v5701
      %10693 = vmatpush1.bf16.msra.mxu0 %v5700
      %10694 = vmatprep.subr.bf16.mxu0 %v5705
      %10695 = vmatpush1.bf16.msra.mxu0 %v5704
      %10696 = vmatprep.subr.bf16.mxu0 %v5709
      %10697 = vmatpush1.bf16.msra.mxu0 %v5708
      %10698 = vmatprep.subr.bf16.mxu0 %v5713
      %10699 = vmatpush1.bf16.msra.mxu0 %v5712
      %10700 = vmatprep.subr.bf16.mxu0 %v5717
      %10701 = vmatpush1.bf16.msra.mxu0 %v5716
      %10702 = vmatprep.subr.bf16.mxu0 %v5721
      %10703 = vmatpush1.bf16.msra.mxu0 %v5720
      %10704 = vmatprep.subr.bf16.mxu0 %v5725
      %10705 = vmatpush1.bf16.msra.mxu0 %v5724
      %10706 = vmatprep.subr.bf16.mxu0 %v5729
      %10707 = vmatpush1.bf16.msra.mxu0 %v5728
      %10708 = vmatprep.subr.bf16.mxu0 %v5733
      %10709 = vmatpush1.bf16.msra.mxu0 %v5732
      %10710 = vmatprep.subr.bf16.mxu0 %v5737
      %10711 = vmatpush1.bf16.msra.mxu0 %v5736
      %10712 = vmatprep.subr.bf16.mxu0 %v5741
      %10713 = vmatpush1.bf16.msra.mxu0 %v5740
      %10714 = vmatprep.mubr.bf16.mxu0 %v2871
      %10715 = vmatmul.mubr.bf16.gmra.mrb[0].mxu0 %v2870
      %v10716 = vpop.f32.mrb[0].mxu0
      %v10717 = vadd.f32 %v10364, %v10716
      %v10718 = vpop.f32.mrb[0].mxu0
      %v10719 = vadd.f32 %v10366, %v10718
      %v10720 = vpop.f32.mrb[0].mxu0
      %v10721 = vadd.f32 %v10368, %v10720
      %v10722 = vpop.f32.mrb[0].mxu0
      %v10723 = vadd.f32 %v10370, %v10722
      %10724 = vmatprep.mubr.bf16.mxu0 %v2887
      %10725 = vmatmul.mubr.bf16.gmra.mrb[0].mxu0 %v2886
      %v10726 = vpop.f32.mrb[0].mxu0
      %v10727 = vadd.f32 %v10374, %v10726
      %v10728 = vpop.f32.mrb[0].mxu0
      %v10729 = vadd.f32 %v10376, %v10728
      %v10730 = vpop.f32.mrb[0].mxu0
      %v10731 = vadd.f32 %v10378, %v10730
      %v10732 = vpop.f32.mrb[0].mxu0
      %v10733 = vadd.f32 %v10380, %v10732
      %10734 = vmatprep.mubr.bf16.mxu0 %v2903
      %10735 = vmatmul.mubr.bf16.gmra.mrb[0].mxu0 %v2902
      %v10736 = vpop.f32.mrb[0].mxu0
      %v10737 = vadd.f32 %v10384, %v10736
      %v10738 = vpop.f32.mrb[0].mxu0
      %v10739 = vadd.f32 %v10386, %v10738
      %v10740 = vpop.f32.mrb[0].mxu0
      %v10741 = vadd.f32 %v10388, %v10740
      %v10742 = vpop.f32.mrb[0].mxu0
      %v10743 = vadd.f32 %v10390, %v10742
      %10744 = vmatprep.mubr.bf16.mxu0 %v2919
      %10745 = vmatmul.mubr.bf16.gmra.mrb[0].mxu0 %v2918
      %v10746 = vpop.f32.mrb[0].mxu0
      %v10747 = vadd.f32 %v10394, %v10746
      %v10748 = vpop.f32.mrb[0].mxu0
      %v10749 = vadd.f32 %v10396, %v10748
      %v10750 = vpop.f32.mrb[0].mxu0
      %v10751 = vadd.f32 %v10398, %v10750
      %v10752 = vpop.f32.mrb[0].mxu0
      %v10753 = vadd.f32 %v10400, %v10752
      %10754 = vmatprep.mubr.bf16.mxu0 %v2935
      %10755 = vmatmul.mubr.bf16.gmra.mrb[0].mxu0 %v2934
      %v10756 = vpop.f32.mrb[0].mxu0
      %v10757 = vadd.f32 %v10404, %v10756
      %v10758 = vpop.f32.mrb[0].mxu0
      %v10759 = vadd.f32 %v10406, %v10758
      %v10760 = vpop.f32.mrb[0].mxu0
      %v10761 = vadd.f32 %v10408, %v10760
      %v10762 = vpop.f32.mrb[0].mxu0
      %v10763 = vadd.f32 %v10410, %v10762
      %10764 = vmatprep.mubr.bf16.mxu0 %v2951
      %10765 = vmatmul.mubr.bf16.gmra.mrb[0].mxu0 %v2950
      %v10766 = vpop.f32.mrb[0].mxu0
      %v10767 = vadd.f32 %v10414, %v10766
      %v10768 = vpop.f32.mrb[0].mxu0
      %v10769 = vadd.f32 %v10416, %v10768
      %v10770 = vpop.f32.mrb[0].mxu0
      %v10771 = vadd.f32 %v10418, %v10770
      %v10772 = vpop.f32.mrb[0].mxu0
      %v10773 = vadd.f32 %v10420, %v10772
      %10774 = vmatprep.mubr.bf16.mxu0 %v2967
      %10775 = vmatmul.mubr.bf16.gmra.mrb[0].mxu0 %v2966
      %v10776 = vpop.f32.mrb[0].mxu0
      %v10777 = vadd.f32 %v10424, %v10776
      %v10778 = vpop.f32.mrb[0].mxu0
      %v10779 = vadd.f32 %v10426, %v10778
      %v10780 = vpop.f32.mrb[0].mxu0
      %v10781 = vadd.f32 %v10428, %v10780
      %v10782 = vpop.f32.mrb[0].mxu0
      %v10783 = vadd.f32 %v10430, %v10782
      %10784 = vmatprep.mubr.bf16.mxu0 %v2983
      %10785 = vmatmul.mubr.bf16.gmra.mrb[0].mxu0 %v2982
      %v10786 = vpop.f32.mrb[0].mxu0
      %v10787 = vadd.f32 %v10434, %v10786
      %v10788 = vpop.f32.mrb[0].mxu0
      %v10789 = vadd.f32 %v10436, %v10788
      %v10790 = vpop.f32.mrb[0].mxu0
      %v10791 = vadd.f32 %v10438, %v10790
      %v10792 = vpop.f32.mrb[0].mxu0
      %v10793 = vadd.f32 %v10440, %v10792
      %10794 = vmatprep.mubr.bf16.mxu0 %v2999
      %10795 = vmatmul.mubr.bf16.gmra.mrb[0].mxu0 %v2998
      %v10796 = vpop.f32.mrb[0].mxu0
      %v10797 = vadd.f32 %v10444, %v10796
      %v10798 = vpop.f32.mrb[0].mxu0
      %v10799 = vadd.f32 %v10446, %v10798
      %v10800 = vpop.f32.mrb[0].mxu0
      %v10801 = vadd.f32 %v10448, %v10800
      %v10802 = vpop.f32.mrb[0].mxu0
      %v10803 = vadd.f32 %v10450, %v10802
      %10804 = vmatprep.mubr.bf16.mxu0 %v3015
      %10805 = vmatmul.mubr.bf16.gmra.mrb[0].mxu0 %v3014
      %v10806 = vpop.f32.mrb[0].mxu0
      %v10807 = vadd.f32 %v10454, %v10806
      %v10808 = vpop.f32.mrb[0].mxu0
      %v10809 = vadd.f32 %v10456, %v10808
      %v10810 = vpop.f32.mrb[0].mxu0
      %v10811 = vadd.f32 %v10458, %v10810
      %v10812 = vpop.f32.mrb[0].mxu0
      %v10813 = vadd.f32 %v10460, %v10812
      %10814 = vmatprep.mubr.bf16.mxu0 %v3031
      %10815 = vmatmul.mubr.bf16.gmra.mrb[0].mxu0 %v3030
      %v10816 = vpop.f32.mrb[0].mxu0
      %v10817 = vadd.f32 %v10464, %v10816
      %v10818 = vpop.f32.mrb[0].mxu0
      %v10819 = vadd.f32 %v10466, %v10818
      %v10820 = vpop.f32.mrb[0].mxu0
      %v10821 = vadd.f32 %v10468, %v10820
      %v10822 = vpop.f32.mrb[0].mxu0
      %v10823 = vadd.f32 %v10470, %v10822
      %10824 = vmatprep.mubr.bf16.mxu0 %v3047
      %10825 = vmatmul.mubr.bf16.gmra.mrb[0].mxu0 %v3046
      %v10826 = vpop.f32.mrb[0].mxu0
      %v10827 = vadd.f32 %v10474, %v10826
      %v10828 = vpop.f32.mrb[0].mxu0
      %v10829 = vadd.f32 %v10476, %v10828
      %v10830 = vpop.f32.mrb[0].mxu0
      %v10831 = vadd.f32 %v10478, %v10830
      %v10832 = vpop.f32.mrb[0].mxu0
      %v10833 = vadd.f32 %v10480, %v10832
      %10834 = vmatprep.mubr.bf16.mxu0 %v3063
      %10835 = vmatmul.mubr.bf16.gmra.mrb[0].mxu0 %v3062
      %v10836 = vpop.f32.mrb[0].mxu0
      %v10837 = vadd.f32 %v10484, %v10836
      %v10838 = vpop.f32.mrb[0].mxu0
      %v10839 = vadd.f32 %v10486, %v10838
      %v10840 = vpop.f32.mrb[0].mxu0
      %v10841 = vadd.f32 %v10488, %v10840
      %v10842 = vpop.f32.mrb[0].mxu0
      %v10843 = vadd.f32 %v10490, %v10842
      %10844 = vmatprep.mubr.bf16.mxu0 %v3079
      %10845 = vmatmul.mubr.bf16.gmra.mrb[0].mxu0 %v3078
      %v10846 = vpop.f32.mrb[0].mxu0
      %v10847 = vadd.f32 %v10494, %v10846
      %v10848 = vpop.f32.mrb[0].mxu0
      %v10849 = vadd.f32 %v10496, %v10848
      %v10850 = vpop.f32.mrb[0].mxu0
      %v10851 = vadd.f32 %v10498, %v10850
      %v10852 = vpop.f32.mrb[0].mxu0
      %v10853 = vadd.f32 %v10500, %v10852
      %10854 = vmatprep.mubr.bf16.mxu0 %v3095
      %10855 = vmatmul.mubr.bf16.gmra.mrb[0].mxu0 %v3094
      %v10856 = vpop.f32.mrb[0].mxu0
      %v10857 = vadd.f32 %v10504, %v10856
      %v10858 = vpop.f32.mrb[0].mxu0
      %v10859 = vadd.f32 %v10506, %v10858
      %v10860 = vpop.f32.mrb[0].mxu0
      %v10861 = vadd.f32 %v10508, %v10860
      %v10862 = vpop.f32.mrb[0].mxu0
      %v10863 = vadd.f32 %v10510, %v10862
      %10864 = vmatprep.mubr.bf16.mxu0 %v3111
      %10865 = vmatmul.mubr.bf16.gmra.mrb[0].mxu0 %v3110
      %v10866 = vpop.f32.mrb[0].mxu0
      %v10867 = vadd.f32 %v10514, %v10866
      %v10868 = vpop.f32.mrb[0].mxu0
      %v10869 = vadd.f32 %v10516, %v10868
      %v10870 = vpop.f32.mrb[0].mxu0
      %v10871 = vadd.f32 %v10518, %v10870
      %v10872 = vpop.f32.mrb[0].mxu0
      %v10873 = vadd.f32 %v10520, %v10872
      %10874 = vmatprep.mubr.bf16.mxu0 %v3127
      %10875 = vmatmul.mubr.bf16.gmra.mrb[0].mxu0 %v3126
      %v10876 = vpop.f32.mrb[0].mxu0
      %v10877 = vadd.f32 %v10524, %v10876
      %v10878 = vpop.f32.mrb[0].mxu0
      %v10879 = vadd.f32 %v10526, %v10878
      %v10880 = vpop.f32.mrb[0].mxu0
      %v10881 = vadd.f32 %v10528, %v10880
      %v10882 = vpop.f32.mrb[0].mxu0
      %v10883 = vadd.f32 %v10530, %v10882
      %10884 = vmatprep.mubr.bf16.mxu0 %v3143
      %10885 = vmatmul.mubr.bf16.gmra.mrb[0].mxu0 %v3142
      %v10886 = vpop.f32.mrb[0].mxu0
      %v10887 = vadd.f32 %v10534, %v10886
      %v10888 = vpop.f32.mrb[0].mxu0
      %v10889 = vadd.f32 %v10536, %v10888
      %v10890 = vpop.f32.mrb[0].mxu0
      %v10891 = vadd.f32 %v10538, %v10890
      %v10892 = vpop.f32.mrb[0].mxu0
      %v10893 = vadd.f32 %v10540, %v10892
      %10894 = vmatprep.mubr.bf16.mxu0 %v3159
      %10895 = vmatmul.mubr.bf16.gmra.mrb[0].mxu0 %v3158
      %v10896 = vpop.f32.mrb[0].mxu0
      %v10897 = vadd.f32 %v10544, %v10896
      %v10898 = vpop.f32.mrb[0].mxu0
      %v10899 = vadd.f32 %v10546, %v10898
      %v10900 = vpop.f32.mrb[0].mxu0
      %v10901 = vadd.f32 %v10548, %v10900
      %v10902 = vpop.f32.mrb[0].mxu0
      %v10903 = vadd.f32 %v10550, %v10902
      %10904 = vmatprep.mubr.bf16.mxu0 %v3175
      %10905 = vmatmul.mubr.bf16.gmra.mrb[0].mxu0 %v3174
      %v10906 = vpop.f32.mrb[0].mxu0
      %v10907 = vadd.f32 %v10554, %v10906
      %v10908 = vpop.f32.mrb[0].mxu0
      %v10909 = vadd.f32 %v10556, %v10908
      %v10910 = vpop.f32.mrb[0].mxu0
      %v10911 = vadd.f32 %v10558, %v10910
      %v10912 = vpop.f32.mrb[0].mxu0
      %v10913 = vadd.f32 %v10560, %v10912
      %10914 = vmatprep.mubr.bf16.mxu0 %v3191
      %10915 = vmatmul.mubr.bf16.gmra.mrb[0].mxu0 %v3190
      %v10916 = vpop.f32.mrb[0].mxu0
      %v10917 = vadd.f32 %v10564, %v10916
      %v10918 = vpop.f32.mrb[0].mxu0
      %v10919 = vadd.f32 %v10566, %v10918
      %v10920 = vpop.f32.mrb[0].mxu0
      %v10921 = vadd.f32 %v10568, %v10920
      %v10922 = vpop.f32.mrb[0].mxu0
      %v10923 = vadd.f32 %v10570, %v10922
      %10924 = vmatprep.mubr.bf16.mxu0 %v3207
      %10925 = vmatmul.mubr.bf16.gmra.mrb[0].mxu0 %v3206
      %v10926 = vpop.f32.mrb[0].mxu0
      %v10927 = vadd.f32 %v10574, %v10926
      %v10928 = vpop.f32.mrb[0].mxu0
      %v10929 = vadd.f32 %v10576, %v10928
      %v10930 = vpop.f32.mrb[0].mxu0
      %v10931 = vadd.f32 %v10578, %v10930
      %v10932 = vpop.f32.mrb[0].mxu0
      %v10933 = vadd.f32 %v10580, %v10932
      %10934 = vmatprep.mubr.bf16.mxu0 %v3223
      %10935 = vmatmul.mubr.bf16.gmra.mrb[0].mxu0 %v3222
      %v10936 = vpop.f32.mrb[0].mxu0
      %v10937 = vadd.f32 %v10584, %v10936
      %v10938 = vpop.f32.mrb[0].mxu0
      %v10939 = vadd.f32 %v10586, %v10938
      %v10940 = vpop.f32.mrb[0].mxu0
      %v10941 = vadd.f32 %v10588, %v10940
      %v10942 = vpop.f32.mrb[0].mxu0
      %v10943 = vadd.f32 %v10590, %v10942
      %10944 = vmatprep.mubr.bf16.mxu0 %v3239
      %10945 = vmatmul.mubr.bf16.gmra.mrb[0].mxu0 %v3238
      %v10946 = vpop.f32.mrb[0].mxu0
      %v10947 = vadd.f32 %v10594, %v10946
      %v10948 = vpop.f32.mrb[0].mxu0
      %v10949 = vadd.f32 %v10596, %v10948
      %v10950 = vpop.f32.mrb[0].mxu0
      %v10951 = vadd.f32 %v10598, %v10950
      %v10952 = vpop.f32.mrb[0].mxu0
      %v10953 = vadd.f32 %v10600, %v10952
      %10954 = vmatprep.mubr.bf16.mxu0 %v3255
      %10955 = vmatmul.mubr.bf16.gmra.mrb[0].mxu0 %v3254
      %v10956 = vpop.f32.mrb[0].mxu0
      %v10957 = vadd.f32 %v10604, %v10956
      %v10958 = vpop.f32.mrb[0].mxu0
      %v10959 = vadd.f32 %v10606, %v10958
      %v10960 = vpop.f32.mrb[0].mxu0
      %v10961 = vadd.f32 %v10608, %v10960
      %v10962 = vpop.f32.mrb[0].mxu0
      %v10963 = vadd.f32 %v10610, %v10962
      %10964 = vmatprep.mubr.bf16.mxu0 %v3271
      %10965 = vmatmul.mubr.bf16.gmra.mrb[0].mxu0 %v3270
      %v10966 = vpop.f32.mrb[0].mxu0
      %v10967 = vadd.f32 %v10614, %v10966
      %v10968 = vpop.f32.mrb[0].mxu0
      %v10969 = vadd.f32 %v10616, %v10968
      %v10970 = vpop.f32.mrb[0].mxu0
      %v10971 = vadd.f32 %v10618, %v10970
      %v10972 = vpop.f32.mrb[0].mxu0
      %v10973 = vadd.f32 %v10620, %v10972
      %10974 = vmatprep.mubr.bf16.mxu0 %v3287
      %10975 = vmatmul.mubr.bf16.gmra.mrb[0].mxu0 %v3286
      %v10976 = vpop.f32.mrb[0].mxu0
      %v10977 = vadd.f32 %v10624, %v10976
      %v10978 = vpop.f32.mrb[0].mxu0
      %v10979 = vadd.f32 %v10626, %v10978
      %v10980 = vpop.f32.mrb[0].mxu0
      %v10981 = vadd.f32 %v10628, %v10980
      %v10982 = vpop.f32.mrb[0].mxu0
      %v10983 = vadd.f32 %v10630, %v10982
      %10984 = vmatprep.mubr.bf16.mxu0 %v3303
      %10985 = vmatmul.mubr.bf16.gmra.mrb[0].mxu0 %v3302
      %v10986 = vpop.f32.mrb[0].mxu0
      %v10987 = vadd.f32 %v10634, %v10986
      %v10988 = vpop.f32.mrb[0].mxu0
      %v10989 = vadd.f32 %v10636, %v10988
      %v10990 = vpop.f32.mrb[0].mxu0
      %v10991 = vadd.f32 %v10638, %v10990
      %v10992 = vpop.f32.mrb[0].mxu0
      %v10993 = vadd.f32 %v10640, %v10992
      %10994 = vmatprep.mubr.bf16.mxu0 %v3319
      %10995 = vmatmul.mubr.bf16.gmra.mrb[0].mxu0 %v3318
      %v10996 = vpop.f32.mrb[0].mxu0
      %v10997 = vadd.f32 %v10644, %v10996
      %v10998 = vpop.f32.mrb[0].mxu0
      %v10999 = vadd.f32 %v10646, %v10998
      %v11000 = vpop.f32.mrb[0].mxu0
      %v11001 = vadd.f32 %v10648, %v11000
      %v11002 = vpop.f32.mrb[0].mxu0
      %v11003 = vadd.f32 %v10650, %v11002
      %11004 = vmatprep.mubr.bf16.mxu0 %v3335
      %11005 = vmatmul.mubr.bf16.gmra.mrb[0].mxu0 %v3334
      %v11006 = vpop.f32.mrb[0].mxu0
      %v11007 = vadd.f32 %v10654, %v11006
      %v11008 = vpop.f32.mrb[0].mxu0
      %v11009 = vadd.f32 %v10656, %v11008
      %v11010 = vpop.f32.mrb[0].mxu0
      %v11011 = vadd.f32 %v10658, %v11010
      %v11012 = vpop.f32.mrb[0].mxu0
      %v11013 = vadd.f32 %v10660, %v11012
      %11014 = vmatprep.mubr.bf16.mxu0 %v3351
      %11015 = vmatmul.mubr.bf16.gmra.mrb[0].mxu0 %v3350
      %v11016 = vpop.f32.mrb[0].mxu0
      %v11017 = vadd.f32 %v10664, %v11016
      %v11018 = vpop.f32.mrb[0].mxu0
      %v11019 = vadd.f32 %v10666, %v11018
      %v11020 = vpop.f32.mrb[0].mxu0
      %v11021 = vadd.f32 %v10668, %v11020
      %v11022 = vpop.f32.mrb[0].mxu0
      %v11023 = vadd.f32 %v10670, %v11022
      %11024 = vmatprep.mubr.bf16.mxu0 %v3367
      %11025 = vmatmul.mubr.bf16.gmra.mrb[0].mxu0 %v3366
      %v11026 = vpop.f32.mrb[0].mxu0
      %v11027 = vadd.f32 %v10674, %v11026
      %v11028 = vpop.f32.mrb[0].mxu0
      %v11029 = vadd.f32 %v10676, %v11028
      %v11030 = vpop.f32.mrb[0].mxu0
      %v11031 = vadd.f32 %v10678, %v11030
      %v11032 = vpop.f32.mrb[0].mxu0
      %v11033 = vadd.f32 %v10680, %v11032
      %11034 = vdwg.mxu0
      %11035 = vmatprep.subr.bf16.mxu0 %v5745
      %11036 = vmatpush1.bf16.msra.mxu0 %v5744
      %11037 = vmatprep.subr.bf16.mxu0 %v5749
      %11038 = vmatpush1.bf16.msra.mxu0 %v5748
      %11039 = vmatprep.subr.bf16.mxu0 %v5753
      %11040 = vmatpush1.bf16.msra.mxu0 %v5752
      %11041 = vmatprep.subr.bf16.mxu0 %v5757
      %11042 = vmatpush1.bf16.msra.mxu0 %v5756
      %11043 = vmatprep.subr.bf16.mxu0 %v5761
      %11044 = vmatpush1.bf16.msra.mxu0 %v5760
      %11045 = vmatprep.subr.bf16.mxu0 %v5765
      %11046 = vmatpush1.bf16.msra.mxu0 %v5764
      %11047 = vmatprep.subr.bf16.mxu0 %v5769
      %11048 = vmatpush1.bf16.msra.mxu0 %v5768
      %11049 = vmatprep.subr.bf16.mxu0 %v5773
      %11050 = vmatpush1.bf16.msra.mxu0 %v5772
      %11051 = vmatprep.subr.bf16.mxu0 %v5777
      %11052 = vmatpush1.bf16.msra.mxu0 %v5776
      %11053 = vmatprep.subr.bf16.mxu0 %v5781
      %11054 = vmatpush1.bf16.msra.mxu0 %v5780
      %11055 = vmatprep.subr.bf16.mxu0 %v5785
      %11056 = vmatpush1.bf16.msra.mxu0 %v5784
      %11057 = vmatprep.subr.bf16.mxu0 %v5789
      %11058 = vmatpush1.bf16.msra.mxu0 %v5788
      %11059 = vmatprep.subr.bf16.mxu0 %v5793
      %11060 = vmatpush1.bf16.msra.mxu0 %v5792
      %11061 = vmatprep.subr.bf16.mxu0 %v5797
      %11062 = vmatpush1.bf16.msra.mxu0 %v5796
      %11063 = vmatprep.subr.bf16.mxu0 %v5801
      %11064 = vmatpush1.bf16.msra.mxu0 %v5800
      %11065 = vmatprep.subr.bf16.mxu0 %v5805
      %11066 = vmatpush1.bf16.msra.mxu0 %v5804
      %11067 = vmatprep.mubr.bf16.mxu0 %v2873
      %11068 = vmatmul.mubr.bf16.gmra.mrb[0].mxu0 %v2872
      %v11069 = vpop.f32.mrb[0].mxu0
      %v11070 = vadd.f32 %v10717, %v11069
      %v11071 = vpop.f32.mrb[0].mxu0
      %v11072 = vadd.f32 %v10719, %v11071
      %v11073 = vpop.f32.mrb[0].mxu0
      %v11074 = vadd.f32 %v10721, %v11073
      %v11075 = vpop.f32.mrb[0].mxu0
      %v11076 = vadd.f32 %v10723, %v11075
      %11077 = vmatprep.mubr.bf16.mxu0 %v2889
      %11078 = vmatmul.mubr.bf16.gmra.mrb[0].mxu0 %v2888
      %v11079 = vpop.f32.mrb[0].mxu0
      %v11080 = vadd.f32 %v10727, %v11079
      %v11081 = vpop.f32.mrb[0].mxu0
      %v11082 = vadd.f32 %v10729, %v11081
      %v11083 = vpop.f32.mrb[0].mxu0
      %v11084 = vadd.f32 %v10731, %v11083
      %v11085 = vpop.f32.mrb[0].mxu0
      %v11086 = vadd.f32 %v10733, %v11085
      %11087 = vmatprep.mubr.bf16.mxu0 %v2905
      %11088 = vmatmul.mubr.bf16.gmra.mrb[0].mxu0 %v2904
      %v11089 = vpop.f32.mrb[0].mxu0
      %v11090 = vadd.f32 %v10737, %v11089
      %v11091 = vpop.f32.mrb[0].mxu0
      %v11092 = vadd.f32 %v10739, %v11091
      %v11093 = vpop.f32.mrb[0].mxu0
      %v11094 = vadd.f32 %v10741, %v11093
      %v11095 = vpop.f32.mrb[0].mxu0
      %v11096 = vadd.f32 %v10743, %v11095
      %11097 = vmatprep.mubr.bf16.mxu0 %v2921
      %11098 = vmatmul.mubr.bf16.gmra.mrb[0].mxu0 %v2920
      %v11099 = vpop.f32.mrb[0].mxu0
      %v11100 = vadd.f32 %v10747, %v11099
      %v11101 = vpop.f32.mrb[0].mxu0
      %v11102 = vadd.f32 %v10749, %v11101
      %v11103 = vpop.f32.mrb[0].mxu0
      %v11104 = vadd.f32 %v10751, %v11103
      %v11105 = vpop.f32.mrb[0].mxu0
      %v11106 = vadd.f32 %v10753, %v11105
      %11107 = vmatprep.mubr.bf16.mxu0 %v2937
      %11108 = vmatmul.mubr.bf16.gmra.mrb[0].mxu0 %v2936
      %v11109 = vpop.f32.mrb[0].mxu0
      %v11110 = vadd.f32 %v10757, %v11109
      %v11111 = vpop.f32.mrb[0].mxu0
      %v11112 = vadd.f32 %v10759, %v11111
      %v11113 = vpop.f32.mrb[0].mxu0
      %v11114 = vadd.f32 %v10761, %v11113
      %v11115 = vpop.f32.mrb[0].mxu0
      %v11116 = vadd.f32 %v10763, %v11115
      %11117 = vmatprep.mubr.bf16.mxu0 %v2953
      %11118 = vmatmul.mubr.bf16.gmra.mrb[0].mxu0 %v2952
      %v11119 = vpop.f32.mrb[0].mxu0
      %v11120 = vadd.f32 %v10767, %v11119
      %v11121 = vpop.f32.mrb[0].mxu0
      %v11122 = vadd.f32 %v10769, %v11121
      %v11123 = vpop.f32.mrb[0].mxu0
      %v11124 = vadd.f32 %v10771, %v11123
      %v11125 = vpop.f32.mrb[0].mxu0
      %v11126 = vadd.f32 %v10773, %v11125
      %11127 = vmatprep.mubr.bf16.mxu0 %v2969
      %11128 = vmatmul.mubr.bf16.gmra.mrb[0].mxu0 %v2968
      %v11129 = vpop.f32.mrb[0].mxu0
      %v11130 = vadd.f32 %v10777, %v11129
      %v11131 = vpop.f32.mrb[0].mxu0
      %v11132 = vadd.f32 %v10779, %v11131
      %v11133 = vpop.f32.mrb[0].mxu0
      %v11134 = vadd.f32 %v10781, %v11133
      %v11135 = vpop.f32.mrb[0].mxu0
      %v11136 = vadd.f32 %v10783, %v11135
      %11137 = vmatprep.mubr.bf16.mxu0 %v2985
      %11138 = vmatmul.mubr.bf16.gmra.mrb[0].mxu0 %v2984
      %v11139 = vpop.f32.mrb[0].mxu0
      %v11140 = vadd.f32 %v10787, %v11139
      %v11141 = vpop.f32.mrb[0].mxu0
      %v11142 = vadd.f32 %v10789, %v11141
      %v11143 = vpop.f32.mrb[0].mxu0
      %v11144 = vadd.f32 %v10791, %v11143
      %v11145 = vpop.f32.mrb[0].mxu0
      %v11146 = vadd.f32 %v10793, %v11145
      %11147 = vmatprep.mubr.bf16.mxu0 %v3001
      %11148 = vmatmul.mubr.bf16.gmra.mrb[0].mxu0 %v3000
      %v11149 = vpop.f32.mrb[0].mxu0
      %v11150 = vadd.f32 %v10797, %v11149
      %v11151 = vpop.f32.mrb[0].mxu0
      %v11152 = vadd.f32 %v10799, %v11151
      %v11153 = vpop.f32.mrb[0].mxu0
      %v11154 = vadd.f32 %v10801, %v11153
      %v11155 = vpop.f32.mrb[0].mxu0
      %v11156 = vadd.f32 %v10803, %v11155
      %11157 = vmatprep.mubr.bf16.mxu0 %v3017
      %11158 = vmatmul.mubr.bf16.gmra.mrb[0].mxu0 %v3016
      %v11159 = vpop.f32.mrb[0].mxu0
      %v11160 = vadd.f32 %v10807, %v11159
      %v11161 = vpop.f32.mrb[0].mxu0
      %v11162 = vadd.f32 %v10809, %v11161
      %v11163 = vpop.f32.mrb[0].mxu0
      %v11164 = vadd.f32 %v10811, %v11163
      %v11165 = vpop.f32.mrb[0].mxu0
      %v11166 = vadd.f32 %v10813, %v11165
      %11167 = vmatprep.mubr.bf16.mxu0 %v3033
      %11168 = vmatmul.mubr.bf16.gmra.mrb[0].mxu0 %v3032
      %v11169 = vpop.f32.mrb[0].mxu0
      %v11170 = vadd.f32 %v10817, %v11169
      %v11171 = vpop.f32.mrb[0].mxu0
      %v11172 = vadd.f32 %v10819, %v11171
      %v11173 = vpop.f32.mrb[0].mxu0
      %v11174 = vadd.f32 %v10821, %v11173
      %v11175 = vpop.f32.mrb[0].mxu0
      %v11176 = vadd.f32 %v10823, %v11175
      %11177 = vmatprep.mubr.bf16.mxu0 %v3049
      %11178 = vmatmul.mubr.bf16.gmra.mrb[0].mxu0 %v3048
      %v11179 = vpop.f32.mrb[0].mxu0
      %v11180 = vadd.f32 %v10827, %v11179
      %v11181 = vpop.f32.mrb[0].mxu0
      %v11182 = vadd.f32 %v10829, %v11181
      %v11183 = vpop.f32.mrb[0].mxu0
      %v11184 = vadd.f32 %v10831, %v11183
      %v11185 = vpop.f32.mrb[0].mxu0
      %v11186 = vadd.f32 %v10833, %v11185
      %11187 = vmatprep.mubr.bf16.mxu0 %v3065
      %11188 = vmatmul.mubr.bf16.gmra.mrb[0].mxu0 %v3064
      %v11189 = vpop.f32.mrb[0].mxu0
      %v11190 = vadd.f32 %v10837, %v11189
      %v11191 = vpop.f32.mrb[0].mxu0
      %v11192 = vadd.f32 %v10839, %v11191
      %v11193 = vpop.f32.mrb[0].mxu0
      %v11194 = vadd.f32 %v10841, %v11193
      %v11195 = vpop.f32.mrb[0].mxu0
      %v11196 = vadd.f32 %v10843, %v11195
      %11197 = vmatprep.mubr.bf16.mxu0 %v3081
      %11198 = vmatmul.mubr.bf16.gmra.mrb[0].mxu0 %v3080
      %v11199 = vpop.f32.mrb[0].mxu0
      %v11200 = vadd.f32 %v10847, %v11199
      %v11201 = vpop.f32.mrb[0].mxu0
      %v11202 = vadd.f32 %v10849, %v11201
      %v11203 = vpop.f32.mrb[0].mxu0
      %v11204 = vadd.f32 %v10851, %v11203
      %v11205 = vpop.f32.mrb[0].mxu0
      %v11206 = vadd.f32 %v10853, %v11205
      %11207 = vmatprep.mubr.bf16.mxu0 %v3097
      %11208 = vmatmul.mubr.bf16.gmra.mrb[0].mxu0 %v3096
      %v11209 = vpop.f32.mrb[0].mxu0
      %v11210 = vadd.f32 %v10857, %v11209
      %v11211 = vpop.f32.mrb[0].mxu0
      %v11212 = vadd.f32 %v10859, %v11211
      %v11213 = vpop.f32.mrb[0].mxu0
      %v11214 = vadd.f32 %v10861, %v11213
      %v11215 = vpop.f32.mrb[0].mxu0
      %v11216 = vadd.f32 %v10863, %v11215
      %11217 = vmatprep.mubr.bf16.mxu0 %v3113
      %11218 = vmatmul.mubr.bf16.gmra.mrb[0].mxu0 %v3112
      %v11219 = vpop.f32.mrb[0].mxu0
      %v11220 = vadd.f32 %v10867, %v11219
      %v11221 = vpop.f32.mrb[0].mxu0
      %v11222 = vadd.f32 %v10869, %v11221
      %v11223 = vpop.f32.mrb[0].mxu0
      %v11224 = vadd.f32 %v10871, %v11223
      %v11225 = vpop.f32.mrb[0].mxu0
      %v11226 = vadd.f32 %v10873, %v11225
      %11227 = vmatprep.mubr.bf16.mxu0 %v3129
      %11228 = vmatmul.mubr.bf16.gmra.mrb[0].mxu0 %v3128
      %v11229 = vpop.f32.mrb[0].mxu0
      %v11230 = vadd.f32 %v10877, %v11229
      %v11231 = vpop.f32.mrb[0].mxu0
      %v11232 = vadd.f32 %v10879, %v11231
      %v11233 = vpop.f32.mrb[0].mxu0
      %v11234 = vadd.f32 %v10881, %v11233
      %v11235 = vpop.f32.mrb[0].mxu0
      %v11236 = vadd.f32 %v10883, %v11235
      %11237 = vmatprep.mubr.bf16.mxu0 %v3145
      %11238 = vmatmul.mubr.bf16.gmra.mrb[0].mxu0 %v3144
      %v11239 = vpop.f32.mrb[0].mxu0
      %v11240 = vadd.f32 %v10887, %v11239
      %v11241 = vpop.f32.mrb[0].mxu0
      %v11242 = vadd.f32 %v10889, %v11241
      %v11243 = vpop.f32.mrb[0].mxu0
      %v11244 = vadd.f32 %v10891, %v11243
      %v11245 = vpop.f32.mrb[0].mxu0
      %v11246 = vadd.f32 %v10893, %v11245
      %11247 = vmatprep.mubr.bf16.mxu0 %v3161
      %11248 = vmatmul.mubr.bf16.gmra.mrb[0].mxu0 %v3160
      %v11249 = vpop.f32.mrb[0].mxu0
      %v11250 = vadd.f32 %v10897, %v11249
      %v11251 = vpop.f32.mrb[0].mxu0
      %v11252 = vadd.f32 %v10899, %v11251
      %v11253 = vpop.f32.mrb[0].mxu0
      %v11254 = vadd.f32 %v10901, %v11253
      %v11255 = vpop.f32.mrb[0].mxu0
      %v11256 = vadd.f32 %v10903, %v11255
      %11257 = vmatprep.mubr.bf16.mxu0 %v3177
      %11258 = vmatmul.mubr.bf16.gmra.mrb[0].mxu0 %v3176
      %v11259 = vpop.f32.mrb[0].mxu0
      %v11260 = vadd.f32 %v10907, %v11259
      %v11261 = vpop.f32.mrb[0].mxu0
      %v11262 = vadd.f32 %v10909, %v11261
      %v11263 = vpop.f32.mrb[0].mxu0
      %v11264 = vadd.f32 %v10911, %v11263
      %v11265 = vpop.f32.mrb[0].mxu0
      %v11266 = vadd.f32 %v10913, %v11265
      %11267 = vmatprep.mubr.bf16.mxu0 %v3193
      %11268 = vmatmul.mubr.bf16.gmra.mrb[0].mxu0 %v3192
      %v11269 = vpop.f32.mrb[0].mxu0
      %v11270 = vadd.f32 %v10917, %v11269
      %v11271 = vpop.f32.mrb[0].mxu0
      %v11272 = vadd.f32 %v10919, %v11271
      %v11273 = vpop.f32.mrb[0].mxu0
      %v11274 = vadd.f32 %v10921, %v11273
      %v11275 = vpop.f32.mrb[0].mxu0
      %v11276 = vadd.f32 %v10923, %v11275
      %11277 = vmatprep.mubr.bf16.mxu0 %v3209
      %11278 = vmatmul.mubr.bf16.gmra.mrb[0].mxu0 %v3208
      %v11279 = vpop.f32.mrb[0].mxu0
      %v11280 = vadd.f32 %v10927, %v11279
      %v11281 = vpop.f32.mrb[0].mxu0
      %v11282 = vadd.f32 %v10929, %v11281
      %v11283 = vpop.f32.mrb[0].mxu0
      %v11284 = vadd.f32 %v10931, %v11283
      %v11285 = vpop.f32.mrb[0].mxu0
      %v11286 = vadd.f32 %v10933, %v11285
      %11287 = vmatprep.mubr.bf16.mxu0 %v3225
      %11288 = vmatmul.mubr.bf16.gmra.mrb[0].mxu0 %v3224
      %v11289 = vpop.f32.mrb[0].mxu0
      %v11290 = vadd.f32 %v10937, %v11289
      %v11291 = vpop.f32.mrb[0].mxu0
      %v11292 = vadd.f32 %v10939, %v11291
      %v11293 = vpop.f32.mrb[0].mxu0
      %v11294 = vadd.f32 %v10941, %v11293
      %v11295 = vpop.f32.mrb[0].mxu0
      %v11296 = vadd.f32 %v10943, %v11295
      %11297 = vmatprep.mubr.bf16.mxu0 %v3241
      %11298 = vmatmul.mubr.bf16.gmra.mrb[0].mxu0 %v3240
      %v11299 = vpop.f32.mrb[0].mxu0
      %v11300 = vadd.f32 %v10947, %v11299
      %v11301 = vpop.f32.mrb[0].mxu0
      %v11302 = vadd.f32 %v10949, %v11301
      %v11303 = vpop.f32.mrb[0].mxu0
      %v11304 = vadd.f32 %v10951, %v11303
      %v11305 = vpop.f32.mrb[0].mxu0
      %v11306 = vadd.f32 %v10953, %v11305
      %11307 = vmatprep.mubr.bf16.mxu0 %v3257
      %11308 = vmatmul.mubr.bf16.gmra.mrb[0].mxu0 %v3256
      %v11309 = vpop.f32.mrb[0].mxu0
      %v11310 = vadd.f32 %v10957, %v11309
      %v11311 = vpop.f32.mrb[0].mxu0
      %v11312 = vadd.f32 %v10959, %v11311
      %v11313 = vpop.f32.mrb[0].mxu0
      %v11314 = vadd.f32 %v10961, %v11313
      %v11315 = vpop.f32.mrb[0].mxu0
      %v11316 = vadd.f32 %v10963, %v11315
      %11317 = vmatprep.mubr.bf16.mxu0 %v3273
      %11318 = vmatmul.mubr.bf16.gmra.mrb[0].mxu0 %v3272
      %v11319 = vpop.f32.mrb[0].mxu0
      %v11320 = vadd.f32 %v10967, %v11319
      %v11321 = vpop.f32.mrb[0].mxu0
      %v11322 = vadd.f32 %v10969, %v11321
      %v11323 = vpop.f32.mrb[0].mxu0
      %v11324 = vadd.f32 %v10971, %v11323
      %v11325 = vpop.f32.mrb[0].mxu0
      %v11326 = vadd.f32 %v10973, %v11325
      %11327 = vmatprep.mubr.bf16.mxu0 %v3289
      %11328 = vmatmul.mubr.bf16.gmra.mrb[0].mxu0 %v3288
      %v11329 = vpop.f32.mrb[0].mxu0
      %v11330 = vadd.f32 %v10977, %v11329
      %v11331 = vpop.f32.mrb[0].mxu0
      %v11332 = vadd.f32 %v10979, %v11331
      %v11333 = vpop.f32.mrb[0].mxu0
      %v11334 = vadd.f32 %v10981, %v11333
      %v11335 = vpop.f32.mrb[0].mxu0
      %v11336 = vadd.f32 %v10983, %v11335
      %11337 = vmatprep.mubr.bf16.mxu0 %v3305
      %11338 = vmatmul.mubr.bf16.gmra.mrb[0].mxu0 %v3304
      %v11339 = vpop.f32.mrb[0].mxu0
      %v11340 = vadd.f32 %v10987, %v11339
      %v11341 = vpop.f32.mrb[0].mxu0
      %v11342 = vadd.f32 %v10989, %v11341
      %v11343 = vpop.f32.mrb[0].mxu0
      %v11344 = vadd.f32 %v10991, %v11343
      %v11345 = vpop.f32.mrb[0].mxu0
      %v11346 = vadd.f32 %v10993, %v11345
      %11347 = vmatprep.mubr.bf16.mxu0 %v3321
      %11348 = vmatmul.mubr.bf16.gmra.mrb[0].mxu0 %v3320
      %v11349 = vpop.f32.mrb[0].mxu0
      %v11350 = vadd.f32 %v10997, %v11349
      %v11351 = vpop.f32.mrb[0].mxu0
      %v11352 = vadd.f32 %v10999, %v11351
      %v11353 = vpop.f32.mrb[0].mxu0
      %v11354 = vadd.f32 %v11001, %v11353
      %v11355 = vpop.f32.mrb[0].mxu0
      %v11356 = vadd.f32 %v11003, %v11355
      %11357 = vmatprep.mubr.bf16.mxu0 %v3337
      %11358 = vmatmul.mubr.bf16.gmra.mrb[0].mxu0 %v3336
      %v11359 = vpop.f32.mrb[0].mxu0
      %v11360 = vadd.f32 %v11007, %v11359
      %v11361 = vpop.f32.mrb[0].mxu0
      %v11362 = vadd.f32 %v11009, %v11361
      %v11363 = vpop.f32.mrb[0].mxu0
      %v11364 = vadd.f32 %v11011, %v11363
      %v11365 = vpop.f32.mrb[0].mxu0
      %v11366 = vadd.f32 %v11013, %v11365
      %11367 = vmatprep.mubr.bf16.mxu0 %v3353
      %11368 = vmatmul.mubr.bf16.gmra.mrb[0].mxu0 %v3352
      %v11369 = vpop.f32.mrb[0].mxu0
      %v11370 = vadd.f32 %v11017, %v11369
      %v11371 = vpop.f32.mrb[0].mxu0
      %v11372 = vadd.f32 %v11019, %v11371
      %v11373 = vpop.f32.mrb[0].mxu0
      %v11374 = vadd.f32 %v11021, %v11373
      %v11375 = vpop.f32.mrb[0].mxu0
      %v11376 = vadd.f32 %v11023, %v11375
      %11377 = vmatprep.mubr.bf16.mxu0 %v3369
      %11378 = vmatmul.mubr.bf16.gmra.mrb[0].mxu0 %v3368
      %v11379 = vpop.f32.mrb[0].mxu0
      %v11380 = vadd.f32 %v11027, %v11379
      %v11381 = vpop.f32.mrb[0].mxu0
      %v11382 = vadd.f32 %v11029, %v11381
      %v11383 = vpop.f32.mrb[0].mxu0
      %v11384 = vadd.f32 %v11031, %v11383
      %v11385 = vpop.f32.mrb[0].mxu0
      %v11386 = vadd.f32 %v11033, %v11385
      %11387 = vdwg.mxu0
      %11388 = vmatprep.subr.bf16.mxu0 %v5809
      %11389 = vmatpush1.bf16.msra.mxu0 %v5808
      %11390 = vmatprep.subr.bf16.mxu0 %v5813
      %11391 = vmatpush1.bf16.msra.mxu0 %v5812
      %11392 = vmatprep.subr.bf16.mxu0 %v5817
      %11393 = vmatpush1.bf16.msra.mxu0 %v5816
      %11394 = vmatprep.subr.bf16.mxu0 %v5821
      %11395 = vmatpush1.bf16.msra.mxu0 %v5820
      %11396 = vmatprep.subr.bf16.mxu0 %v5825
      %11397 = vmatpush1.bf16.msra.mxu0 %v5824
      %11398 = vmatprep.subr.bf16.mxu0 %v5829
      %11399 = vmatpush1.bf16.msra.mxu0 %v5828
      %11400 = vmatprep.subr.bf16.mxu0 %v5833
      %11401 = vmatpush1.bf16.msra.mxu0 %v5832
      %11402 = vmatprep.subr.bf16.mxu0 %v5837
      %11403 = vmatpush1.bf16.msra.mxu0 %v5836
      %11404 = vmatprep.subr.bf16.mxu0 %v5841
      %11405 = vmatpush1.bf16.msra.mxu0 %v5840
      %11406 = vmatprep.subr.bf16.mxu0 %v5845
      %11407 = vmatpush1.bf16.msra.mxu0 %v5844
      %11408 = vmatprep.subr.bf16.mxu0 %v5849
      %11409 = vmatpush1.bf16.msra.mxu0 %v5848
      %11410 = vmatprep.subr.bf16.mxu0 %v5853
      %11411 = vmatpush1.bf16.msra.mxu0 %v5852
      %11412 = vmatprep.subr.bf16.mxu0 %v5857
      %11413 = vmatpush1.bf16.msra.mxu0 %v5856
      %11414 = vmatprep.subr.bf16.mxu0 %v5861
      %11415 = vmatpush1.bf16.msra.mxu0 %v5860
      %11416 = vmatprep.subr.bf16.mxu0 %v5865
      %11417 = vmatpush1.bf16.msra.mxu0 %v5864
      %11418 = vmatprep.subr.bf16.mxu0 %v5869
      %11419 = vmatpush1.bf16.msra.mxu0 %v5868
      %11420 = vmatprep.mubr.bf16.mxu0 %v2875
      %11421 = vmatmul.mubr.bf16.gmra.mrb[0].mxu0 %v2874
      %v11422 = vpop.f32.mrb[0].mxu0
      %v11423 = vadd.f32 %v11070, %v11422
      %v11424 = vpop.f32.mrb[0].mxu0
      %v11425 = vadd.f32 %v11072, %v11424
      %v11426 = vpop.f32.mrb[0].mxu0
      %v11427 = vadd.f32 %v11074, %v11426
      %v11428 = vpop.f32.mrb[0].mxu0
      %v11429 = vadd.f32 %v11076, %v11428
      %11430 = vmatprep.mubr.bf16.mxu0 %v2891
      %11431 = vmatmul.mubr.bf16.gmra.mrb[0].mxu0 %v2890
      %v11432 = vpop.f32.mrb[0].mxu0
      %v11433 = vadd.f32 %v11080, %v11432
      %v11434 = vpop.f32.mrb[0].mxu0
      %v11435 = vadd.f32 %v11082, %v11434
      %v11436 = vpop.f32.mrb[0].mxu0
      %v11437 = vadd.f32 %v11084, %v11436
      %v11438 = vpop.f32.mrb[0].mxu0
      %v11439 = vadd.f32 %v11086, %v11438
      %11440 = vmatprep.mubr.bf16.mxu0 %v2907
      %11441 = vmatmul.mubr.bf16.gmra.mrb[0].mxu0 %v2906
      %v11442 = vpop.f32.mrb[0].mxu0
      %v11443 = vadd.f32 %v11090, %v11442
      %v11444 = vpop.f32.mrb[0].mxu0
      %v11445 = vadd.f32 %v11092, %v11444
      %v11446 = vpop.f32.mrb[0].mxu0
      %v11447 = vadd.f32 %v11094, %v11446
      %v11448 = vpop.f32.mrb[0].mxu0
      %v11449 = vadd.f32 %v11096, %v11448
      %11450 = vmatprep.mubr.bf16.mxu0 %v2923
      %11451 = vmatmul.mubr.bf16.gmra.mrb[0].mxu0 %v2922
      %v11452 = vpop.f32.mrb[0].mxu0
      %v11453 = vadd.f32 %v11100, %v11452
      %v11454 = vpop.f32.mrb[0].mxu0
      %v11455 = vadd.f32 %v11102, %v11454
      %v11456 = vpop.f32.mrb[0].mxu0
      %v11457 = vadd.f32 %v11104, %v11456
      %v11458 = vpop.f32.mrb[0].mxu0
      %v11459 = vadd.f32 %v11106, %v11458
      %11460 = vmatprep.mubr.bf16.mxu0 %v2939
      %11461 = vmatmul.mubr.bf16.gmra.mrb[0].mxu0 %v2938
      %v11462 = vpop.f32.mrb[0].mxu0
      %v11463 = vadd.f32 %v11110, %v11462
      %v11464 = vpop.f32.mrb[0].mxu0
      %v11465 = vadd.f32 %v11112, %v11464
      %v11466 = vpop.f32.mrb[0].mxu0
      %v11467 = vadd.f32 %v11114, %v11466
      %v11468 = vpop.f32.mrb[0].mxu0
      %v11469 = vadd.f32 %v11116, %v11468
      %11470 = vmatprep.mubr.bf16.mxu0 %v2955
      %11471 = vmatmul.mubr.bf16.gmra.mrb[0].mxu0 %v2954
      %v11472 = vpop.f32.mrb[0].mxu0
      %v11473 = vadd.f32 %v11120, %v11472
      %v11474 = vpop.f32.mrb[0].mxu0
      %v11475 = vadd.f32 %v11122, %v11474
      %v11476 = vpop.f32.mrb[0].mxu0
      %v11477 = vadd.f32 %v11124, %v11476
      %v11478 = vpop.f32.mrb[0].mxu0
      %v11479 = vadd.f32 %v11126, %v11478
      %11480 = vmatprep.mubr.bf16.mxu0 %v2971
      %11481 = vmatmul.mubr.bf16.gmra.mrb[0].mxu0 %v2970
      %v11482 = vpop.f32.mrb[0].mxu0
      %v11483 = vadd.f32 %v11130, %v11482
      %v11484 = vpop.f32.mrb[0].mxu0
      %v11485 = vadd.f32 %v11132, %v11484
      %v11486 = vpop.f32.mrb[0].mxu0
      %v11487 = vadd.f32 %v11134, %v11486
      %v11488 = vpop.f32.mrb[0].mxu0
      %v11489 = vadd.f32 %v11136, %v11488
      %11490 = vmatprep.mubr.bf16.mxu0 %v2987
      %11491 = vmatmul.mubr.bf16.gmra.mrb[0].mxu0 %v2986
      %v11492 = vpop.f32.mrb[0].mxu0
      %v11493 = vadd.f32 %v11140, %v11492
      %v11494 = vpop.f32.mrb[0].mxu0
      %v11495 = vadd.f32 %v11142, %v11494
      %v11496 = vpop.f32.mrb[0].mxu0
      %v11497 = vadd.f32 %v11144, %v11496
      %v11498 = vpop.f32.mrb[0].mxu0
      %v11499 = vadd.f32 %v11146, %v11498
      %11500 = vmatprep.mubr.bf16.mxu0 %v3003
      %11501 = vmatmul.mubr.bf16.gmra.mrb[0].mxu0 %v3002
      %v11502 = vpop.f32.mrb[0].mxu0
      %v11503 = vadd.f32 %v11150, %v11502
      %v11504 = vpop.f32.mrb[0].mxu0
      %v11505 = vadd.f32 %v11152, %v11504
      %v11506 = vpop.f32.mrb[0].mxu0
      %v11507 = vadd.f32 %v11154, %v11506
      %v11508 = vpop.f32.mrb[0].mxu0
      %v11509 = vadd.f32 %v11156, %v11508
      %11510 = vmatprep.mubr.bf16.mxu0 %v3019
      %11511 = vmatmul.mubr.bf16.gmra.mrb[0].mxu0 %v3018
      %v11512 = vpop.f32.mrb[0].mxu0
      %v11513 = vadd.f32 %v11160, %v11512
      %v11514 = vpop.f32.mrb[0].mxu0
      %v11515 = vadd.f32 %v11162, %v11514
      %v11516 = vpop.f32.mrb[0].mxu0
      %v11517 = vadd.f32 %v11164, %v11516
      %v11518 = vpop.f32.mrb[0].mxu0
      %v11519 = vadd.f32 %v11166, %v11518
      %11520 = vmatprep.mubr.bf16.mxu0 %v3035
      %11521 = vmatmul.mubr.bf16.gmra.mrb[0].mxu0 %v3034
      %v11522 = vpop.f32.mrb[0].mxu0
      %v11523 = vadd.f32 %v11170, %v11522
      %v11524 = vpop.f32.mrb[0].mxu0
      %v11525 = vadd.f32 %v11172, %v11524
      %v11526 = vpop.f32.mrb[0].mxu0
      %v11527 = vadd.f32 %v11174, %v11526
      %v11528 = vpop.f32.mrb[0].mxu0
      %v11529 = vadd.f32 %v11176, %v11528
      %11530 = vmatprep.mubr.bf16.mxu0 %v3051
      %11531 = vmatmul.mubr.bf16.gmra.mrb[0].mxu0 %v3050
      %v11532 = vpop.f32.mrb[0].mxu0
      %v11533 = vadd.f32 %v11180, %v11532
      %v11534 = vpop.f32.mrb[0].mxu0
      %v11535 = vadd.f32 %v11182, %v11534
      %v11536 = vpop.f32.mrb[0].mxu0
      %v11537 = vadd.f32 %v11184, %v11536
      %v11538 = vpop.f32.mrb[0].mxu0
      %v11539 = vadd.f32 %v11186, %v11538
      %11540 = vmatprep.mubr.bf16.mxu0 %v3067
      %11541 = vmatmul.mubr.bf16.gmra.mrb[0].mxu0 %v3066
      %v11542 = vpop.f32.mrb[0].mxu0
      %v11543 = vadd.f32 %v11190, %v11542
      %v11544 = vpop.f32.mrb[0].mxu0
      %v11545 = vadd.f32 %v11192, %v11544
      %v11546 = vpop.f32.mrb[0].mxu0
      %v11547 = vadd.f32 %v11194, %v11546
      %v11548 = vpop.f32.mrb[0].mxu0
      %v11549 = vadd.f32 %v11196, %v11548
      %11550 = vmatprep.mubr.bf16.mxu0 %v3083
      %11551 = vmatmul.mubr.bf16.gmra.mrb[0].mxu0 %v3082
      %v11552 = vpop.f32.mrb[0].mxu0
      %v11553 = vadd.f32 %v11200, %v11552
      %v11554 = vpop.f32.mrb[0].mxu0
      %v11555 = vadd.f32 %v11202, %v11554
      %v11556 = vpop.f32.mrb[0].mxu0
      %v11557 = vadd.f32 %v11204, %v11556
      %v11558 = vpop.f32.mrb[0].mxu0
      %v11559 = vadd.f32 %v11206, %v11558
      %11560 = vmatprep.mubr.bf16.mxu0 %v3099
      %11561 = vmatmul.mubr.bf16.gmra.mrb[0].mxu0 %v3098
      %v11562 = vpop.f32.mrb[0].mxu0
      %v11563 = vadd.f32 %v11210, %v11562
      %v11564 = vpop.f32.mrb[0].mxu0
      %v11565 = vadd.f32 %v11212, %v11564
      %v11566 = vpop.f32.mrb[0].mxu0
      %v11567 = vadd.f32 %v11214, %v11566
      %v11568 = vpop.f32.mrb[0].mxu0
      %v11569 = vadd.f32 %v11216, %v11568
      %11570 = vmatprep.mubr.bf16.mxu0 %v3115
      %11571 = vmatmul.mubr.bf16.gmra.mrb[0].mxu0 %v3114
      %v11572 = vpop.f32.mrb[0].mxu0
      %v11573 = vadd.f32 %v11220, %v11572
      %v11574 = vpop.f32.mrb[0].mxu0
      %v11575 = vadd.f32 %v11222, %v11574
      %v11576 = vpop.f32.mrb[0].mxu0
      %v11577 = vadd.f32 %v11224, %v11576
      %v11578 = vpop.f32.mrb[0].mxu0
      %v11579 = vadd.f32 %v11226, %v11578
      %11580 = vmatprep.mubr.bf16.mxu0 %v3131
      %11581 = vmatmul.mubr.bf16.gmra.mrb[0].mxu0 %v3130
      %v11582 = vpop.f32.mrb[0].mxu0
      %v11583 = vadd.f32 %v11230, %v11582
      %v11584 = vpop.f32.mrb[0].mxu0
      %v11585 = vadd.f32 %v11232, %v11584
      %v11586 = vpop.f32.mrb[0].mxu0
      %v11587 = vadd.f32 %v11234, %v11586
      %v11588 = vpop.f32.mrb[0].mxu0
      %v11589 = vadd.f32 %v11236, %v11588
      %11590 = vmatprep.mubr.bf16.mxu0 %v3147
      %11591 = vmatmul.mubr.bf16.gmra.mrb[0].mxu0 %v3146
      %v11592 = vpop.f32.mrb[0].mxu0
      %v11593 = vadd.f32 %v11240, %v11592
      %v11594 = vpop.f32.mrb[0].mxu0
      %v11595 = vadd.f32 %v11242, %v11594
      %v11596 = vpop.f32.mrb[0].mxu0
      %v11597 = vadd.f32 %v11244, %v11596
      %v11598 = vpop.f32.mrb[0].mxu0
      %v11599 = vadd.f32 %v11246, %v11598
      %11600 = vmatprep.mubr.bf16.mxu0 %v3163
      %11601 = vmatmul.mubr.bf16.gmra.mrb[0].mxu0 %v3162
      %v11602 = vpop.f32.mrb[0].mxu0
      %v11603 = vadd.f32 %v11250, %v11602
      %v11604 = vpop.f32.mrb[0].mxu0
      %v11605 = vadd.f32 %v11252, %v11604
      %v11606 = vpop.f32.mrb[0].mxu0
      %v11607 = vadd.f32 %v11254, %v11606
      %v11608 = vpop.f32.mrb[0].mxu0
      %v11609 = vadd.f32 %v11256, %v11608
      %11610 = vmatprep.mubr.bf16.mxu0 %v3179
      %11611 = vmatmul.mubr.bf16.gmra.mrb[0].mxu0 %v3178
      %v11612 = vpop.f32.mrb[0].mxu0
      %v11613 = vadd.f32 %v11260, %v11612
      %v11614 = vpop.f32.mrb[0].mxu0
      %v11615 = vadd.f32 %v11262, %v11614
      %v11616 = vpop.f32.mrb[0].mxu0
      %v11617 = vadd.f32 %v11264, %v11616
      %v11618 = vpop.f32.mrb[0].mxu0
      %v11619 = vadd.f32 %v11266, %v11618
      %11620 = vmatprep.mubr.bf16.mxu0 %v3195
      %11621 = vmatmul.mubr.bf16.gmra.mrb[0].mxu0 %v3194
      %v11622 = vpop.f32.mrb[0].mxu0
      %v11623 = vadd.f32 %v11270, %v11622
      %v11624 = vpop.f32.mrb[0].mxu0
      %v11625 = vadd.f32 %v11272, %v11624
      %v11626 = vpop.f32.mrb[0].mxu0
      %v11627 = vadd.f32 %v11274, %v11626
      %v11628 = vpop.f32.mrb[0].mxu0
      %v11629 = vadd.f32 %v11276, %v11628
      %11630 = vmatprep.mubr.bf16.mxu0 %v3211
      %11631 = vmatmul.mubr.bf16.gmra.mrb[0].mxu0 %v3210
      %v11632 = vpop.f32.mrb[0].mxu0
      %v11633 = vadd.f32 %v11280, %v11632
      %v11634 = vpop.f32.mrb[0].mxu0
      %v11635 = vadd.f32 %v11282, %v11634
      %v11636 = vpop.f32.mrb[0].mxu0
      %v11637 = vadd.f32 %v11284, %v11636
      %v11638 = vpop.f32.mrb[0].mxu0
      %v11639 = vadd.f32 %v11286, %v11638
      %11640 = vmatprep.mubr.bf16.mxu0 %v3227
      %11641 = vmatmul.mubr.bf16.gmra.mrb[0].mxu0 %v3226
      %v11642 = vpop.f32.mrb[0].mxu0
      %v11643 = vadd.f32 %v11290, %v11642
      %v11644 = vpop.f32.mrb[0].mxu0
      %v11645 = vadd.f32 %v11292, %v11644
      %v11646 = vpop.f32.mrb[0].mxu0
      %v11647 = vadd.f32 %v11294, %v11646
      %v11648 = vpop.f32.mrb[0].mxu0
      %v11649 = vadd.f32 %v11296, %v11648
      %11650 = vmatprep.mubr.bf16.mxu0 %v3243
      %11651 = vmatmul.mubr.bf16.gmra.mrb[0].mxu0 %v3242
      %v11652 = vpop.f32.mrb[0].mxu0
      %v11653 = vadd.f32 %v11300, %v11652
      %v11654 = vpop.f32.mrb[0].mxu0
      %v11655 = vadd.f32 %v11302, %v11654
      %v11656 = vpop.f32.mrb[0].mxu0
      %v11657 = vadd.f32 %v11304, %v11656
      %v11658 = vpop.f32.mrb[0].mxu0
      %v11659 = vadd.f32 %v11306, %v11658
      %11660 = vmatprep.mubr.bf16.mxu0 %v3259
      %11661 = vmatmul.mubr.bf16.gmra.mrb[0].mxu0 %v3258
      %v11662 = vpop.f32.mrb[0].mxu0
      %v11663 = vadd.f32 %v11310, %v11662
      %v11664 = vpop.f32.mrb[0].mxu0
      %v11665 = vadd.f32 %v11312, %v11664
      %v11666 = vpop.f32.mrb[0].mxu0
      %v11667 = vadd.f32 %v11314, %v11666
      %v11668 = vpop.f32.mrb[0].mxu0
      %v11669 = vadd.f32 %v11316, %v11668
      %11670 = vmatprep.mubr.bf16.mxu0 %v3275
      %11671 = vmatmul.mubr.bf16.gmra.mrb[0].mxu0 %v3274
      %v11672 = vpop.f32.mrb[0].mxu0
      %v11673 = vadd.f32 %v11320, %v11672
      %v11674 = vpop.f32.mrb[0].mxu0
      %v11675 = vadd.f32 %v11322, %v11674
      %v11676 = vpop.f32.mrb[0].mxu0
      %v11677 = vadd.f32 %v11324, %v11676
      %v11678 = vpop.f32.mrb[0].mxu0
      %v11679 = vadd.f32 %v11326, %v11678
      %11680 = vmatprep.mubr.bf16.mxu0 %v3291
      %11681 = vmatmul.mubr.bf16.gmra.mrb[0].mxu0 %v3290
      %v11682 = vpop.f32.mrb[0].mxu0
      %v11683 = vadd.f32 %v11330, %v11682
      %v11684 = vpop.f32.mrb[0].mxu0
      %v11685 = vadd.f32 %v11332, %v11684
      %v11686 = vpop.f32.mrb[0].mxu0
      %v11687 = vadd.f32 %v11334, %v11686
      %v11688 = vpop.f32.mrb[0].mxu0
      %v11689 = vadd.f32 %v11336, %v11688
      %11690 = vmatprep.mubr.bf16.mxu0 %v3307
      %11691 = vmatmul.mubr.bf16.gmra.mrb[0].mxu0 %v3306
      %v11692 = vpop.f32.mrb[0].mxu0
      %v11693 = vadd.f32 %v11340, %v11692
      %v11694 = vpop.f32.mrb[0].mxu0
      %v11695 = vadd.f32 %v11342, %v11694
      %v11696 = vpop.f32.mrb[0].mxu0
      %v11697 = vadd.f32 %v11344, %v11696
      %v11698 = vpop.f32.mrb[0].mxu0
      %v11699 = vadd.f32 %v11346, %v11698
      %11700 = vmatprep.mubr.bf16.mxu0 %v3323
      %11701 = vmatmul.mubr.bf16.gmra.mrb[0].mxu0 %v3322
      %v11702 = vpop.f32.mrb[0].mxu0
      %v11703 = vadd.f32 %v11350, %v11702
      %v11704 = vpop.f32.mrb[0].mxu0
      %v11705 = vadd.f32 %v11352, %v11704
      %v11706 = vpop.f32.mrb[0].mxu0
      %v11707 = vadd.f32 %v11354, %v11706
      %v11708 = vpop.f32.mrb[0].mxu0
      %v11709 = vadd.f32 %v11356, %v11708
      %11710 = vmatprep.mubr.bf16.mxu0 %v3339
      %11711 = vmatmul.mubr.bf16.gmra.mrb[0].mxu0 %v3338
      %v11712 = vpop.f32.mrb[0].mxu0
      %v11713 = vadd.f32 %v11360, %v11712
      %v11714 = vpop.f32.mrb[0].mxu0
      %v11715 = vadd.f32 %v11362, %v11714
      %v11716 = vpop.f32.mrb[0].mxu0
      %v11717 = vadd.f32 %v11364, %v11716
      %v11718 = vpop.f32.mrb[0].mxu0
      %v11719 = vadd.f32 %v11366, %v11718
      %11720 = vmatprep.mubr.bf16.mxu0 %v3355
      %11721 = vmatmul.mubr.bf16.gmra.mrb[0].mxu0 %v3354
      %v11722 = vpop.f32.mrb[0].mxu0
      %v11723 = vadd.f32 %v11370, %v11722
      %v11724 = vpop.f32.mrb[0].mxu0
      %v11725 = vadd.f32 %v11372, %v11724
      %v11726 = vpop.f32.mrb[0].mxu0
      %v11727 = vadd.f32 %v11374, %v11726
      %v11728 = vpop.f32.mrb[0].mxu0
      %v11729 = vadd.f32 %v11376, %v11728
      %11730 = vmatprep.mubr.bf16.mxu0 %v3371
      %11731 = vmatmul.mubr.bf16.gmra.mrb[0].mxu0 %v3370
      %v11732 = vpop.f32.mrb[0].mxu0
      %v11733 = vadd.f32 %v11380, %v11732
      %v11734 = vpop.f32.mrb[0].mxu0
      %v11735 = vadd.f32 %v11382, %v11734
      %v11736 = vpop.f32.mrb[0].mxu0
      %v11737 = vadd.f32 %v11384, %v11736
      %v11738 = vpop.f32.mrb[0].mxu0
      %v11739 = vadd.f32 %v11386, %v11738
      %11740 = vdwg.mxu0
      %11741 = vmatprep.subr.bf16.mxu0 %v5873
      %11742 = vmatpush1.bf16.msra.mxu0 %v5872
      %11743 = vmatprep.subr.bf16.mxu0 %v5877
      %11744 = vmatpush1.bf16.msra.mxu0 %v5876
      %11745 = vmatprep.subr.bf16.mxu0 %v5881
      %11746 = vmatpush1.bf16.msra.mxu0 %v5880
      %11747 = vmatprep.subr.bf16.mxu0 %v5885
      %11748 = vmatpush1.bf16.msra.mxu0 %v5884
      %11749 = vmatprep.subr.bf16.mxu0 %v5889
      %11750 = vmatpush1.bf16.msra.mxu0 %v5888
      %11751 = vmatprep.subr.bf16.mxu0 %v5893
      %11752 = vmatpush1.bf16.msra.mxu0 %v5892
      %11753 = vmatprep.subr.bf16.mxu0 %v5897
      %11754 = vmatpush1.bf16.msra.mxu0 %v5896
      %11755 = vmatprep.subr.bf16.mxu0 %v5901
      %11756 = vmatpush1.bf16.msra.mxu0 %v5900
      %11757 = vmatprep.subr.bf16.mxu0 %v5905
      %11758 = vmatpush1.bf16.msra.mxu0 %v5904
      %11759 = vmatprep.subr.bf16.mxu0 %v5909
      %11760 = vmatpush1.bf16.msra.mxu0 %v5908
      %11761 = vmatprep.subr.bf16.mxu0 %v5913
      %11762 = vmatpush1.bf16.msra.mxu0 %v5912
      %11763 = vmatprep.subr.bf16.mxu0 %v5917
      %11764 = vmatpush1.bf16.msra.mxu0 %v5916
      %11765 = vmatprep.subr.bf16.mxu0 %v5921
      %11766 = vmatpush1.bf16.msra.mxu0 %v5920
      %11767 = vmatprep.subr.bf16.mxu0 %v5925
      %11768 = vmatpush1.bf16.msra.mxu0 %v5924
      %11769 = vmatprep.subr.bf16.mxu0 %v5929
      %11770 = vmatpush1.bf16.msra.mxu0 %v5928
      %11771 = vmatprep.subr.bf16.mxu0 %v5933
      %11772 = vmatpush1.bf16.msra.mxu0 %v5932
      %11773 = vmatprep.mubr.bf16.mxu0 %v2877
      %11774 = vmatmul.mubr.bf16.gmra.mrb[0].mxu0 %v2876
      %v11775 = vpop.f32.mrb[0].mxu0
      %v11776 = vadd.f32 %v11423, %v11775
      %v11777 = vpop.f32.mrb[0].mxu0
      %v11778 = vadd.f32 %v11425, %v11777
      %v11779 = vpop.f32.mrb[0].mxu0
      %v11780 = vadd.f32 %v11427, %v11779
      %v11781 = vpop.f32.mrb[0].mxu0
      %v11782 = vadd.f32 %v11429, %v11781
      %11783 = vmatprep.mubr.bf16.mxu0 %v2893
      %11784 = vmatmul.mubr.bf16.gmra.mrb[0].mxu0 %v2892
      %v11785 = vpop.f32.mrb[0].mxu0
      %v11786 = vadd.f32 %v11433, %v11785
      %v11787 = vpop.f32.mrb[0].mxu0
      %v11788 = vadd.f32 %v11435, %v11787
      %v11789 = vpop.f32.mrb[0].mxu0
      %v11790 = vadd.f32 %v11437, %v11789
      %v11791 = vpop.f32.mrb[0].mxu0
      %v11792 = vadd.f32 %v11439, %v11791
      %11793 = vmatprep.mubr.bf16.mxu0 %v2909
      %11794 = vmatmul.mubr.bf16.gmra.mrb[0].mxu0 %v2908
      %v11795 = vpop.f32.mrb[0].mxu0
      %v11796 = vadd.f32 %v11443, %v11795
      %v11797 = vpop.f32.mrb[0].mxu0
      %v11798 = vadd.f32 %v11445, %v11797
      %v11799 = vpop.f32.mrb[0].mxu0
      %v11800 = vadd.f32 %v11447, %v11799
      %v11801 = vpop.f32.mrb[0].mxu0
      %v11802 = vadd.f32 %v11449, %v11801
      %11803 = vmatprep.mubr.bf16.mxu0 %v2925
      %11804 = vmatmul.mubr.bf16.gmra.mrb[0].mxu0 %v2924
      %v11805 = vpop.f32.mrb[0].mxu0
      %v11806 = vadd.f32 %v11453, %v11805
      %v11807 = vpop.f32.mrb[0].mxu0
      %v11808 = vadd.f32 %v11455, %v11807
      %v11809 = vpop.f32.mrb[0].mxu0
      %v11810 = vadd.f32 %v11457, %v11809
      %v11811 = vpop.f32.mrb[0].mxu0
      %v11812 = vadd.f32 %v11459, %v11811
      %11813 = vmatprep.mubr.bf16.mxu0 %v2941
      %11814 = vmatmul.mubr.bf16.gmra.mrb[0].mxu0 %v2940
      %v11815 = vpop.f32.mrb[0].mxu0
      %v11816 = vadd.f32 %v11463, %v11815
      %v11817 = vpop.f32.mrb[0].mxu0
      %v11818 = vadd.f32 %v11465, %v11817
      %v11819 = vpop.f32.mrb[0].mxu0
      %v11820 = vadd.f32 %v11467, %v11819
      %v11821 = vpop.f32.mrb[0].mxu0
      %v11822 = vadd.f32 %v11469, %v11821
      %11823 = vmatprep.mubr.bf16.mxu0 %v2957
      %11824 = vmatmul.mubr.bf16.gmra.mrb[0].mxu0 %v2956
      %v11825 = vpop.f32.mrb[0].mxu0
      %v11826 = vadd.f32 %v11473, %v11825
      %v11827 = vpop.f32.mrb[0].mxu0
      %v11828 = vadd.f32 %v11475, %v11827
      %v11829 = vpop.f32.mrb[0].mxu0
      %v11830 = vadd.f32 %v11477, %v11829
      %v11831 = vpop.f32.mrb[0].mxu0
      %v11832 = vadd.f32 %v11479, %v11831
      %11833 = vmatprep.mubr.bf16.mxu0 %v2973
      %11834 = vmatmul.mubr.bf16.gmra.mrb[0].mxu0 %v2972
      %v11835 = vpop.f32.mrb[0].mxu0
      %v11836 = vadd.f32 %v11483, %v11835
      %v11837 = vpop.f32.mrb[0].mxu0
      %v11838 = vadd.f32 %v11485, %v11837
      %v11839 = vpop.f32.mrb[0].mxu0
      %v11840 = vadd.f32 %v11487, %v11839
      %v11841 = vpop.f32.mrb[0].mxu0
      %v11842 = vadd.f32 %v11489, %v11841
      %11843 = vmatprep.mubr.bf16.mxu0 %v2989
      %11844 = vmatmul.mubr.bf16.gmra.mrb[0].mxu0 %v2988
      %v11845 = vpop.f32.mrb[0].mxu0
      %v11846 = vadd.f32 %v11493, %v11845
      %v11847 = vpop.f32.mrb[0].mxu0
      %v11848 = vadd.f32 %v11495, %v11847
      %v11849 = vpop.f32.mrb[0].mxu0
      %v11850 = vadd.f32 %v11497, %v11849
      %v11851 = vpop.f32.mrb[0].mxu0
      %v11852 = vadd.f32 %v11499, %v11851
      %11853 = vmatprep.mubr.bf16.mxu0 %v3005
      %11854 = vmatmul.mubr.bf16.gmra.mrb[0].mxu0 %v3004
      %v11855 = vpop.f32.mrb[0].mxu0
      %v11856 = vadd.f32 %v11503, %v11855
      %v11857 = vpop.f32.mrb[0].mxu0
      %v11858 = vadd.f32 %v11505, %v11857
      %v11859 = vpop.f32.mrb[0].mxu0
      %v11860 = vadd.f32 %v11507, %v11859
      %v11861 = vpop.f32.mrb[0].mxu0
      %v11862 = vadd.f32 %v11509, %v11861
      %11863 = vmatprep.mubr.bf16.mxu0 %v3021
      %11864 = vmatmul.mubr.bf16.gmra.mrb[0].mxu0 %v3020
      %v11865 = vpop.f32.mrb[0].mxu0
      %v11866 = vadd.f32 %v11513, %v11865
      %v11867 = vpop.f32.mrb[0].mxu0
      %v11868 = vadd.f32 %v11515, %v11867
      %v11869 = vpop.f32.mrb[0].mxu0
      %v11870 = vadd.f32 %v11517, %v11869
      %v11871 = vpop.f32.mrb[0].mxu0
      %v11872 = vadd.f32 %v11519, %v11871
      %11873 = vmatprep.mubr.bf16.mxu0 %v3037
      %11874 = vmatmul.mubr.bf16.gmra.mrb[0].mxu0 %v3036
      %v11875 = vpop.f32.mrb[0].mxu0
      %v11876 = vadd.f32 %v11523, %v11875
      %v11877 = vpop.f32.mrb[0].mxu0
      %v11878 = vadd.f32 %v11525, %v11877
      %v11879 = vpop.f32.mrb[0].mxu0
      %v11880 = vadd.f32 %v11527, %v11879
      %v11881 = vpop.f32.mrb[0].mxu0
      %v11882 = vadd.f32 %v11529, %v11881
      %11883 = vmatprep.mubr.bf16.mxu0 %v3053
      %11884 = vmatmul.mubr.bf16.gmra.mrb[0].mxu0 %v3052
      %v11885 = vpop.f32.mrb[0].mxu0
      %v11886 = vadd.f32 %v11533, %v11885
      %v11887 = vpop.f32.mrb[0].mxu0
      %v11888 = vadd.f32 %v11535, %v11887
      %v11889 = vpop.f32.mrb[0].mxu0
      %v11890 = vadd.f32 %v11537, %v11889
      %v11891 = vpop.f32.mrb[0].mxu0
      %v11892 = vadd.f32 %v11539, %v11891
      %11893 = vmatprep.mubr.bf16.mxu0 %v3069
      %11894 = vmatmul.mubr.bf16.gmra.mrb[0].mxu0 %v3068
      %v11895 = vpop.f32.mrb[0].mxu0
      %v11896 = vadd.f32 %v11543, %v11895
      %v11897 = vpop.f32.mrb[0].mxu0
      %v11898 = vadd.f32 %v11545, %v11897
      %v11899 = vpop.f32.mrb[0].mxu0
      %v11900 = vadd.f32 %v11547, %v11899
      %v11901 = vpop.f32.mrb[0].mxu0
      %v11902 = vadd.f32 %v11549, %v11901
      %11903 = vmatprep.mubr.bf16.mxu0 %v3085
      %11904 = vmatmul.mubr.bf16.gmra.mrb[0].mxu0 %v3084
      %v11905 = vpop.f32.mrb[0].mxu0
      %v11906 = vadd.f32 %v11553, %v11905
      %v11907 = vpop.f32.mrb[0].mxu0
      %v11908 = vadd.f32 %v11555, %v11907
      %v11909 = vpop.f32.mrb[0].mxu0
      %v11910 = vadd.f32 %v11557, %v11909
      %v11911 = vpop.f32.mrb[0].mxu0
      %v11912 = vadd.f32 %v11559, %v11911
      %11913 = vmatprep.mubr.bf16.mxu0 %v3101
      %11914 = vmatmul.mubr.bf16.gmra.mrb[0].mxu0 %v3100
      %v11915 = vpop.f32.mrb[0].mxu0
      %v11916 = vadd.f32 %v11563, %v11915
      %v11917 = vpop.f32.mrb[0].mxu0
      %v11918 = vadd.f32 %v11565, %v11917
      %v11919 = vpop.f32.mrb[0].mxu0
      %v11920 = vadd.f32 %v11567, %v11919
      %v11921 = vpop.f32.mrb[0].mxu0
      %v11922 = vadd.f32 %v11569, %v11921
      %11923 = vmatprep.mubr.bf16.mxu0 %v3117
      %11924 = vmatmul.mubr.bf16.gmra.mrb[0].mxu0 %v3116
      %v11925 = vpop.f32.mrb[0].mxu0
      %v11926 = vadd.f32 %v11573, %v11925
      %v11927 = vpop.f32.mrb[0].mxu0
      %v11928 = vadd.f32 %v11575, %v11927
      %v11929 = vpop.f32.mrb[0].mxu0
      %v11930 = vadd.f32 %v11577, %v11929
      %v11931 = vpop.f32.mrb[0].mxu0
      %v11932 = vadd.f32 %v11579, %v11931
      %11933 = vmatprep.mubr.bf16.mxu0 %v3133
      %11934 = vmatmul.mubr.bf16.gmra.mrb[0].mxu0 %v3132
      %v11935 = vpop.f32.mrb[0].mxu0
      %v11936 = vadd.f32 %v11583, %v11935
      %v11937 = vpop.f32.mrb[0].mxu0
      %v11938 = vadd.f32 %v11585, %v11937
      %v11939 = vpop.f32.mrb[0].mxu0
      %v11940 = vadd.f32 %v11587, %v11939
      %v11941 = vpop.f32.mrb[0].mxu0
      %v11942 = vadd.f32 %v11589, %v11941
      %11943 = vmatprep.mubr.bf16.mxu0 %v3149
      %11944 = vmatmul.mubr.bf16.gmra.mrb[0].mxu0 %v3148
      %v11945 = vpop.f32.mrb[0].mxu0
      %v11946 = vadd.f32 %v11593, %v11945
      %v11947 = vpop.f32.mrb[0].mxu0
      %v11948 = vadd.f32 %v11595, %v11947
      %v11949 = vpop.f32.mrb[0].mxu0
      %v11950 = vadd.f32 %v11597, %v11949
      %v11951 = vpop.f32.mrb[0].mxu0
      %v11952 = vadd.f32 %v11599, %v11951
      %11953 = vmatprep.mubr.bf16.mxu0 %v3165
      %11954 = vmatmul.mubr.bf16.gmra.mrb[0].mxu0 %v3164
      %v11955 = vpop.f32.mrb[0].mxu0
      %v11956 = vadd.f32 %v11603, %v11955
      %v11957 = vpop.f32.mrb[0].mxu0
      %v11958 = vadd.f32 %v11605, %v11957
      %v11959 = vpop.f32.mrb[0].mxu0
      %v11960 = vadd.f32 %v11607, %v11959
      %v11961 = vpop.f32.mrb[0].mxu0
      %v11962 = vadd.f32 %v11609, %v11961
      %11963 = vmatprep.mubr.bf16.mxu0 %v3181
      %11964 = vmatmul.mubr.bf16.gmra.mrb[0].mxu0 %v3180
      %v11965 = vpop.f32.mrb[0].mxu0
      %v11966 = vadd.f32 %v11613, %v11965
      %v11967 = vpop.f32.mrb[0].mxu0
      %v11968 = vadd.f32 %v11615, %v11967
      %v11969 = vpop.f32.mrb[0].mxu0
      %v11970 = vadd.f32 %v11617, %v11969
      %v11971 = vpop.f32.mrb[0].mxu0
      %v11972 = vadd.f32 %v11619, %v11971
      %11973 = vmatprep.mubr.bf16.mxu0 %v3197
      %11974 = vmatmul.mubr.bf16.gmra.mrb[0].mxu0 %v3196
      %v11975 = vpop.f32.mrb[0].mxu0
      %v11976 = vadd.f32 %v11623, %v11975
      %v11977 = vpop.f32.mrb[0].mxu0
      %v11978 = vadd.f32 %v11625, %v11977
      %v11979 = vpop.f32.mrb[0].mxu0
      %v11980 = vadd.f32 %v11627, %v11979
      %v11981 = vpop.f32.mrb[0].mxu0
      %v11982 = vadd.f32 %v11629, %v11981
      %11983 = vmatprep.mubr.bf16.mxu0 %v3213
      %11984 = vmatmul.mubr.bf16.gmra.mrb[0].mxu0 %v3212
      %v11985 = vpop.f32.mrb[0].mxu0
      %v11986 = vadd.f32 %v11633, %v11985
      %v11987 = vpop.f32.mrb[0].mxu0
      %v11988 = vadd.f32 %v11635, %v11987
      %v11989 = vpop.f32.mrb[0].mxu0
      %v11990 = vadd.f32 %v11637, %v11989
      %v11991 = vpop.f32.mrb[0].mxu0
      %v11992 = vadd.f32 %v11639, %v11991
      %11993 = vmatprep.mubr.bf16.mxu0 %v3229
      %11994 = vmatmul.mubr.bf16.gmra.mrb[0].mxu0 %v3228
      %v11995 = vpop.f32.mrb[0].mxu0
      %v11996 = vadd.f32 %v11643, %v11995
      %v11997 = vpop.f32.mrb[0].mxu0
      %v11998 = vadd.f32 %v11645, %v11997
      %v11999 = vpop.f32.mrb[0].mxu0
      %v12000 = vadd.f32 %v11647, %v11999
      %v12001 = vpop.f32.mrb[0].mxu0
      %v12002 = vadd.f32 %v11649, %v12001
      %12003 = vmatprep.mubr.bf16.mxu0 %v3245
      %12004 = vmatmul.mubr.bf16.gmra.mrb[0].mxu0 %v3244
      %v12005 = vpop.f32.mrb[0].mxu0
      %v12006 = vadd.f32 %v11653, %v12005
      %v12007 = vpop.f32.mrb[0].mxu0
      %v12008 = vadd.f32 %v11655, %v12007
      %v12009 = vpop.f32.mrb[0].mxu0
      %v12010 = vadd.f32 %v11657, %v12009
      %v12011 = vpop.f32.mrb[0].mxu0
      %v12012 = vadd.f32 %v11659, %v12011
      %12013 = vmatprep.mubr.bf16.mxu0 %v3261
      %12014 = vmatmul.mubr.bf16.gmra.mrb[0].mxu0 %v3260
      %v12015 = vpop.f32.mrb[0].mxu0
      %v12016 = vadd.f32 %v11663, %v12015
      %v12017 = vpop.f32.mrb[0].mxu0
      %v12018 = vadd.f32 %v11665, %v12017
      %v12019 = vpop.f32.mrb[0].mxu0
      %v12020 = vadd.f32 %v11667, %v12019
      %v12021 = vpop.f32.mrb[0].mxu0
      %v12022 = vadd.f32 %v11669, %v12021
      %12023 = vmatprep.mubr.bf16.mxu0 %v3277
      %12024 = vmatmul.mubr.bf16.gmra.mrb[0].mxu0 %v3276
      %v12025 = vpop.f32.mrb[0].mxu0
      %v12026 = vadd.f32 %v11673, %v12025
      %v12027 = vpop.f32.mrb[0].mxu0
      %v12028 = vadd.f32 %v11675, %v12027
      %v12029 = vpop.f32.mrb[0].mxu0
      %v12030 = vadd.f32 %v11677, %v12029
      %v12031 = vpop.f32.mrb[0].mxu0
      %v12032 = vadd.f32 %v11679, %v12031
      %12033 = vmatprep.mubr.bf16.mxu0 %v3293
      %12034 = vmatmul.mubr.bf16.gmra.mrb[0].mxu0 %v3292
      %v12035 = vpop.f32.mrb[0].mxu0
      %v12036 = vadd.f32 %v11683, %v12035
      %v12037 = vpop.f32.mrb[0].mxu0
      %v12038 = vadd.f32 %v11685, %v12037
      %v12039 = vpop.f32.mrb[0].mxu0
      %v12040 = vadd.f32 %v11687, %v12039
      %v12041 = vpop.f32.mrb[0].mxu0
      %v12042 = vadd.f32 %v11689, %v12041
      %12043 = vmatprep.mubr.bf16.mxu0 %v3309
      %12044 = vmatmul.mubr.bf16.gmra.mrb[0].mxu0 %v3308
      %v12045 = vpop.f32.mrb[0].mxu0
      %v12046 = vadd.f32 %v11693, %v12045
      %v12047 = vpop.f32.mrb[0].mxu0
      %v12048 = vadd.f32 %v11695, %v12047
      %v12049 = vpop.f32.mrb[0].mxu0
      %v12050 = vadd.f32 %v11697, %v12049
      %v12051 = vpop.f32.mrb[0].mxu0
      %v12052 = vadd.f32 %v11699, %v12051
      %12053 = vmatprep.mubr.bf16.mxu0 %v3325
      %12054 = vmatmul.mubr.bf16.gmra.mrb[0].mxu0 %v3324
      %v12055 = vpop.f32.mrb[0].mxu0
      %v12056 = vadd.f32 %v11703, %v12055
      %v12057 = vpop.f32.mrb[0].mxu0
      %v12058 = vadd.f32 %v11705, %v12057
      %v12059 = vpop.f32.mrb[0].mxu0
      %v12060 = vadd.f32 %v11707, %v12059
      %v12061 = vpop.f32.mrb[0].mxu0
      %v12062 = vadd.f32 %v11709, %v12061
      %12063 = vmatprep.mubr.bf16.mxu0 %v3341
      %12064 = vmatmul.mubr.bf16.gmra.mrb[0].mxu0 %v3340
      %v12065 = vpop.f32.mrb[0].mxu0
      %v12066 = vadd.f32 %v11713, %v12065
      %v12067 = vpop.f32.mrb[0].mxu0
      %v12068 = vadd.f32 %v11715, %v12067
      %v12069 = vpop.f32.mrb[0].mxu0
      %v12070 = vadd.f32 %v11717, %v12069
      %v12071 = vpop.f32.mrb[0].mxu0
      %v12072 = vadd.f32 %v11719, %v12071
      %12073 = vmatprep.mubr.bf16.mxu0 %v3357
      %12074 = vmatmul.mubr.bf16.gmra.mrb[0].mxu0 %v3356
      %v12075 = vpop.f32.mrb[0].mxu0
      %v12076 = vadd.f32 %v11723, %v12075
      %v12077 = vpop.f32.mrb[0].mxu0
      %v12078 = vadd.f32 %v11725, %v12077
      %v12079 = vpop.f32.mrb[0].mxu0
      %v12080 = vadd.f32 %v11727, %v12079
      %v12081 = vpop.f32.mrb[0].mxu0
      %v12082 = vadd.f32 %v11729, %v12081
      %12083 = vmatprep.mubr.bf16.mxu0 %v3373
      %12084 = vmatmul.mubr.bf16.gmra.mrb[0].mxu0 %v3372
      %v12085 = vpop.f32.mrb[0].mxu0
      %v12086 = vadd.f32 %v11733, %v12085
      %v12087 = vpop.f32.mrb[0].mxu0
      %v12088 = vadd.f32 %v11735, %v12087
      %v12089 = vpop.f32.mrb[0].mxu0
      %v12090 = vadd.f32 %v11737, %v12089
      %v12091 = vpop.f32.mrb[0].mxu0
      %v12092 = vadd.f32 %v11739, %v12091
      %12093 = vdwg.mxu0
      %v12094 = vld [vmem:[%s274] sm:$0xff]
      %v12095 = vld [vmem:[%s274 + $0x8] sm:$0xff]
      %v12096 = vld [vmem:[%s274 + $0x10] sm:$0xff]
      %v12097 = vld [vmem:[%s274 + $0x18] sm:$0xff]
      %v12098 = vld [vmem:[%s274 + $0x20] sm:$0xff]
      %v12099 = vld [vmem:[%s274 + $0x28] sm:$0xff]
      %v12100 = vld [vmem:[%s274 + $0x30] sm:$0xff]
      %v12101 = vld [vmem:[%s274 + $0x38] sm:$0xff]
      %v12102 = vld [vmem:[%s274 + $0x40] sm:$0xff]
      %v12103 = vld [vmem:[%s274 + $0x48] sm:$0xff]
      %v12104 = vld [vmem:[%s274 + $0x50] sm:$0xff]
      %v12105 = vld [vmem:[%s274 + $0x58] sm:$0xff]
      %v12106 = vld [vmem:[%s274 + $0x60] sm:$0xff]
      %v12107 = vld [vmem:[%s274 + $0x68] sm:$0xff]
      %v12108 = vld [vmem:[%s274 + $0x70] sm:$0xff]
      %v12109 = vld [vmem:[%s274 + $0x78] sm:$0xff]
      %v12110 = vld [vmem:[%s274 + $0x80] sm:$0xff]
      %v12111 = vld [vmem:[%s274 + $0x88] sm:$0xff]
      %v12112 = vld [vmem:[%s274 + $0x90] sm:$0xff]
      %v12113 = vld [vmem:[%s274 + $0x98] sm:$0xff]
      %v12114 = vld [vmem:[%s274 + $0xa0] sm:$0xff]
      %v12115 = vld [vmem:[%s274 + $0xa8] sm:$0xff]
      %v12116 = vld [vmem:[%s274 + $0xb0] sm:$0xff]
      %v12117 = vld [vmem:[%s274 + $0xb8] sm:$0xff]
      %12118 = vmatprep.subr.mxu0 %v8954
      %12119 = vmatpush1.msra.mxu0 %v8952
      %12120 = vmatprep.subr.mxu0 %v8958
      %12121 = vmatpush1.msra.mxu0 %v8956
      %12122 = vmatprep.subr.mxu0 %v8964
      %12123 = vmatpush1.msra.mxu0 %v8962
      %12124 = vmatprep.subr.mxu0 %v8968
      %12125 = vmatpush1.msra.mxu0 %v8966
      %12126 = vmatprep.subr.mxu0 %v8974
      %12127 = vmatpush1.msra.mxu0 %v8972
      %12128 = vmatprep.subr.mxu0 %v8978
      %12129 = vmatpush1.msra.mxu0 %v8976
      %12130 = vmatprep.subr.mxu0 %v8984
      %12131 = vmatpush1.msra.mxu0 %v8982
      %12132 = vmatprep.subr.mxu0 %v8988
      %12133 = vmatpush1.msra.mxu0 %v8986
      %12134 = vmatprep.subr.mxu0 %v8994
      %12135 = vmatpush1.msra.mxu0 %v8992
      %12136 = vmatprep.subr.mxu0 %v8998
      %12137 = vmatpush1.msra.mxu0 %v8996
      %12138 = vmatprep.subr.mxu0 %v9004
      %12139 = vmatpush1.msra.mxu0 %v9002
      %12140 = vmatprep.subr.mxu0 %v9008
      %12141 = vmatpush1.msra.mxu0 %v9006
      %12142 = vmatprep.subr.mxu0 %v9014
      %12143 = vmatpush1.msra.mxu0 %v9012
      %12144 = vmatprep.subr.mxu0 %v9018
      %12145 = vmatpush1.msra.mxu0 %v9016
      %12146 = vmatprep.subr.mxu0 %v9024
      %12147 = vmatpush1.msra.mxu0 %v9022
      %12148 = vmatprep.subr.mxu0 %v9028
      %12149 = vmatpush1.msra.mxu0 %v9026
      %12150 = vmatprep.subr.mxu0 %v9034
      %12151 = vmatpush1.msra.mxu0 %v9032
      %12152 = vmatprep.subr.mxu0 %v9038
      %12153 = vmatpush1.msra.mxu0 %v9036
      %12154 = vmatprep.subr.mxu0 %v9044
      %12155 = vmatpush1.msra.mxu0 %v9042
      %12156 = vmatprep.subr.mxu0 %v9048
      %12157 = vmatpush1.msra.mxu0 %v9046
      %12158 = vmatprep.subr.mxu0 %v9054
      %12159 = vmatpush1.msra.mxu0 %v9052
      %12160 = vmatprep.subr.mxu0 %v9058
      %12161 = vmatpush1.msra.mxu0 %v9056
      %12162 = vmatprep.subr.mxu0 %v9064
      %12163 = vmatpush1.msra.mxu0 %v9062
      %12164 = vmatprep.subr.mxu0 %v9068
      %12165 = vmatpush1.msra.mxu0 %v9066
      %12166 = vmatprep.subr.mxu0 %v9074
      %12167 = vmatpush1.msra.mxu0 %v9072
      %12168 = vmatprep.subr.mxu0 %v9078
      %12169 = vmatpush1.msra.mxu0 %v9076
      %12170 = vmatprep.subr.mxu0 %v9084
      %12171 = vmatpush1.msra.mxu0 %v9082
      %12172 = vmatprep.subr.mxu0 %v9088
      %12173 = vmatpush1.msra.mxu0 %v9086
      %12174 = vmatprep.subr.mxu0 %v9094
      %12175 = vmatpush1.msra.mxu0 %v9092
      %12176 = vmatprep.subr.mxu0 %v9098
      %12177 = vmatpush1.msra.mxu0 %v9096
      %12178 = vmatprep.subr.mxu0 %v9104
      %12179 = vmatpush1.msra.mxu0 %v9102
      %12180 = vmatprep.subr.mxu0 %v9108
      %12181 = vmatpush1.msra.mxu0 %v9106
      %12182 = vmatprep.mubr.f32.mxu0 %v12095
      %12183 = vmatmul.mubr.f32.gmra.mrb[0].mxu0 %v12094
      %v12184 = vpop.f32.mrb[0].mxu0
      %v12185 = vadd.f32 0.0, %v12184
      %v12186 = vpop.f32.mrb[0].mxu0
      %v12187 = vadd.f32 0.0, %v12186
      %12188 = vmatprep.mubr.f32.mxu0 %v12099
      %12189 = vmatmul.mubr.f32.gmra.mrb[0].mxu0 %v12098
      %v12190 = vpop.f32.mrb[0].mxu0
      %v12191 = vadd.f32 0.0, %v12190
      %v12192 = vpop.f32.mrb[0].mxu0
      %v12193 = vadd.f32 0.0, %v12192
      %12194 = vmatprep.mubr.f32.mxu0 %v12103
      %12195 = vmatmul.mubr.f32.gmra.mrb[0].mxu0 %v12102
      %v12196 = vpop.f32.mrb[0].mxu0
      %v12197 = vadd.f32 0.0, %v12196
      %v12198 = vpop.f32.mrb[0].mxu0
      %v12199 = vadd.f32 0.0, %v12198
      %12200 = vmatprep.mubr.f32.mxu0 %v12107
      %12201 = vmatmul.mubr.f32.gmra.mrb[0].mxu0 %v12106
      %v12202 = vpop.f32.mrb[0].mxu0
      %v12203 = vadd.f32 0.0, %v12202
      %v12204 = vpop.f32.mrb[0].mxu0
      %v12205 = vadd.f32 0.0, %v12204
      %12206 = vmatprep.mubr.f32.mxu0 %v12111
      %12207 = vmatmul.mubr.f32.gmra.mrb[0].mxu0 %v12110
      %v12208 = vpop.f32.mrb[0].mxu0
      %v12209 = vadd.f32 0.0, %v12208
      %v12210 = vpop.f32.mrb[0].mxu0
      %v12211 = vadd.f32 0.0, %v12210
      %12212 = vmatprep.mubr.f32.mxu0 %v12115
      %12213 = vmatmul.mubr.f32.gmra.mrb[0].mxu0 %v12114
      %v12214 = vpop.f32.mrb[0].mxu0
      %v12215 = vadd.f32 0.0, %v12214
      %v12216 = vpop.f32.mrb[0].mxu0
      %v12217 = vadd.f32 0.0, %v12216
      %12218 = vdwg.mxu0
      %12219 = vmatprep.subr.mxu0 %v9114
      %12220 = vmatpush1.msra.mxu0 %v9112
      %12221 = vmatprep.subr.mxu0 %v9118
      %12222 = vmatpush1.msra.mxu0 %v9116
      %12223 = vmatprep.subr.mxu0 %v9124
      %12224 = vmatpush1.msra.mxu0 %v9122
      %12225 = vmatprep.subr.mxu0 %v9128
      %12226 = vmatpush1.msra.mxu0 %v9126
      %12227 = vmatprep.subr.mxu0 %v9134
      %12228 = vmatpush1.msra.mxu0 %v9132
      %12229 = vmatprep.subr.mxu0 %v9138
      %12230 = vmatpush1.msra.mxu0 %v9136
      %12231 = vmatprep.subr.mxu0 %v9144
      %12232 = vmatpush1.msra.mxu0 %v9142
      %12233 = vmatprep.subr.mxu0 %v9148
      %12234 = vmatpush1.msra.mxu0 %v9146
      %12235 = vmatprep.subr.mxu0 %v9154
      %12236 = vmatpush1.msra.mxu0 %v9152
      %12237 = vmatprep.subr.mxu0 %v9158
      %12238 = vmatpush1.msra.mxu0 %v9156
      %12239 = vmatprep.subr.mxu0 %v9164
      %12240 = vmatpush1.msra.mxu0 %v9162
      %12241 = vmatprep.subr.mxu0 %v9168
      %12242 = vmatpush1.msra.mxu0 %v9166
      %12243 = vmatprep.subr.mxu0 %v9174
      %12244 = vmatpush1.msra.mxu0 %v9172
      %12245 = vmatprep.subr.mxu0 %v9178
      %12246 = vmatpush1.msra.mxu0 %v9176
      %12247 = vmatprep.subr.mxu0 %v9184
      %12248 = vmatpush1.msra.mxu0 %v9182
      %12249 = vmatprep.subr.mxu0 %v9188
      %12250 = vmatpush1.msra.mxu0 %v9186
      %12251 = vmatprep.subr.mxu0 %v9194
      %12252 = vmatpush1.msra.mxu0 %v9192
      %12253 = vmatprep.subr.mxu0 %v9198
      %12254 = vmatpush1.msra.mxu0 %v9196
      %12255 = vmatprep.subr.mxu0 %v9204
      %12256 = vmatpush1.msra.mxu0 %v9202
      %12257 = vmatprep.subr.mxu0 %v9208
      %12258 = vmatpush1.msra.mxu0 %v9206
      %12259 = vmatprep.subr.mxu0 %v9214
      %12260 = vmatpush1.msra.mxu0 %v9212
      %12261 = vmatprep.subr.mxu0 %v9218
      %12262 = vmatpush1.msra.mxu0 %v9216
      %12263 = vmatprep.subr.mxu0 %v9224
      %12264 = vmatpush1.msra.mxu0 %v9222
      %12265 = vmatprep.subr.mxu0 %v9228
      %12266 = vmatpush1.msra.mxu0 %v9226
      %12267 = vmatprep.subr.mxu0 %v9234
      %12268 = vmatpush1.msra.mxu0 %v9232
      %12269 = vmatprep.subr.mxu0 %v9238
      %12270 = vmatpush1.msra.mxu0 %v9236
      %12271 = vmatprep.subr.mxu0 %v9244
      %12272 = vmatpush1.msra.mxu0 %v9242
      %12273 = vmatprep.subr.mxu0 %v9248
      %12274 = vmatpush1.msra.mxu0 %v9246
      %12275 = vmatprep.subr.mxu0 %v9254
      %12276 = vmatpush1.msra.mxu0 %v9252
      %12277 = vmatprep.subr.mxu0 %v9258
      %12278 = vmatpush1.msra.mxu0 %v9256
      %12279 = vmatprep.subr.mxu0 %v9264
      %12280 = vmatpush1.msra.mxu0 %v9262
      %12281 = vmatprep.subr.mxu0 %v9268
      %12282 = vmatpush1.msra.mxu0 %v9266
      %12283 = vmatprep.mubr.f32.mxu0 %v12097
      %12284 = vmatmul.mubr.f32.gmra.mrb[0].mxu0 %v12096
      %v12285 = vpop.f32.mrb[0].mxu0
      %v12286 = vadd.f32 %v12185, %v12285
      %v12287 = vpop.f32.mrb[0].mxu0
      %v12288 = vadd.f32 %v12187, %v12287
      %12289 = vmatprep.mubr.f32.mxu0 %v12101
      %12290 = vmatmul.mubr.f32.gmra.mrb[0].mxu0 %v12100
      %v12291 = vpop.f32.mrb[0].mxu0
      %v12292 = vadd.f32 %v12191, %v12291
      %v12293 = vpop.f32.mrb[0].mxu0
      %v12294 = vadd.f32 %v12193, %v12293
      %12295 = vmatprep.mubr.f32.mxu0 %v12105
      %12296 = vmatmul.mubr.f32.gmra.mrb[0].mxu0 %v12104
      %v12297 = vpop.f32.mrb[0].mxu0
      %v12298 = vadd.f32 %v12197, %v12297
      %v12299 = vpop.f32.mrb[0].mxu0
      %v12300 = vadd.f32 %v12199, %v12299
      %12301 = vmatprep.mubr.f32.mxu0 %v12109
      %12302 = vmatmul.mubr.f32.gmra.mrb[0].mxu0 %v12108
      %v12303 = vpop.f32.mrb[0].mxu0
      %v12304 = vadd.f32 %v12203, %v12303
      %v12305 = vpop.f32.mrb[0].mxu0
      %v12306 = vadd.f32 %v12205, %v12305
      %12307 = vmatprep.mubr.f32.mxu0 %v12113
      %12308 = vmatmul.mubr.f32.gmra.mrb[0].mxu0 %v12112
      %v12309 = vpop.f32.mrb[0].mxu0
      %v12310 = vadd.f32 %v12209, %v12309
      %v12311 = vpop.f32.mrb[0].mxu0
      %v12312 = vadd.f32 %v12211, %v12311
      %12313 = vmatprep.mubr.f32.mxu0 %v12117
      %12314 = vmatmul.mubr.f32.gmra.mrb[0].mxu0 %v12116
      %v12315 = vpop.f32.mrb[0].mxu0
      %v12316 = vadd.f32 %v12215, %v12315
      %v12317 = vpop.f32.mrb[0].mxu0
      %v12318 = vadd.f32 %v12217, %v12317
      %12319 = vdwg.mxu0
      %12320 = vmatprep.subr.mxu0 %v11778
      %12321 = vmatpush1.msra.mxu0 %v11776
      %12322 = vmatprep.subr.mxu0 %v11782
      %12323 = vmatpush1.msra.mxu0 %v11780
      %12324 = vmatprep.subr.mxu0 %v11788
      %12325 = vmatpush1.msra.mxu0 %v11786
      %12326 = vmatprep.subr.mxu0 %v11792
      %12327 = vmatpush1.msra.mxu0 %v11790
      %12328 = vmatprep.subr.mxu0 %v11798
      %12329 = vmatpush1.msra.mxu0 %v11796
      %12330 = vmatprep.subr.mxu0 %v11802
      %12331 = vmatpush1.msra.mxu0 %v11800
      %12332 = vmatprep.subr.mxu0 %v11808
      %12333 = vmatpush1.msra.mxu0 %v11806
      %12334 = vmatprep.subr.mxu0 %v11812
      %12335 = vmatpush1.msra.mxu0 %v11810
      %12336 = vmatprep.subr.mxu0 %v11818
      %12337 = vmatpush1.msra.mxu0 %v11816
      %12338 = vmatprep.subr.mxu0 %v11822
      %12339 = vmatpush1.msra.mxu0 %v11820
      %12340 = vmatprep.subr.mxu0 %v11828
      %12341 = vmatpush1.msra.mxu0 %v11826
      %12342 = vmatprep.subr.mxu0 %v11832
      %12343 = vmatpush1.msra.mxu0 %v11830
      %12344 = vmatprep.subr.mxu0 %v11838
      %12345 = vmatpush1.msra.mxu0 %v11836
      %12346 = vmatprep.subr.mxu0 %v11842
      %12347 = vmatpush1.msra.mxu0 %v11840
      %12348 = vmatprep.subr.mxu0 %v11848
      %12349 = vmatpush1.msra.mxu0 %v11846
      %12350 = vmatprep.subr.mxu0 %v11852
      %12351 = vmatpush1.msra.mxu0 %v11850
      %12352 = vmatprep.subr.mxu0 %v11858
      %12353 = vmatpush1.msra.mxu0 %v11856
      %12354 = vmatprep.subr.mxu0 %v11862
      %12355 = vmatpush1.msra.mxu0 %v11860
      %12356 = vmatprep.subr.mxu0 %v11868
      %12357 = vmatpush1.msra.mxu0 %v11866
      %12358 = vmatprep.subr.mxu0 %v11872
      %12359 = vmatpush1.msra.mxu0 %v11870
      %12360 = vmatprep.subr.mxu0 %v11878
      %12361 = vmatpush1.msra.mxu0 %v11876
      %12362 = vmatprep.subr.mxu0 %v11882
      %12363 = vmatpush1.msra.mxu0 %v11880
      %12364 = vmatprep.subr.mxu0 %v11888
      %12365 = vmatpush1.msra.mxu0 %v11886
      %12366 = vmatprep.subr.mxu0 %v11892
      %12367 = vmatpush1.msra.mxu0 %v11890
      %12368 = vmatprep.subr.mxu0 %v11898
      %12369 = vmatpush1.msra.mxu0 %v11896
      %12370 = vmatprep.subr.mxu0 %v11902
      %12371 = vmatpush1.msra.mxu0 %v11900
      %12372 = vmatprep.subr.mxu0 %v11908
      %12373 = vmatpush1.msra.mxu0 %v11906
      %12374 = vmatprep.subr.mxu0 %v11912
      %12375 = vmatpush1.msra.mxu0 %v11910
      %12376 = vmatprep.subr.mxu0 %v11918
      %12377 = vmatpush1.msra.mxu0 %v11916
      %12378 = vmatprep.subr.mxu0 %v11922
      %12379 = vmatpush1.msra.mxu0 %v11920
      %12380 = vmatprep.subr.mxu0 %v11928
      %12381 = vmatpush1.msra.mxu0 %v11926
      %12382 = vmatprep.subr.mxu0 %v11932
      %12383 = vmatpush1.msra.mxu0 %v11930
      %12384 = vmatprep.mubr.f32.mxu0 %v12095
      %12385 = vmatmul.mubr.f32.gmra.mrb[0].mxu0 %v12094
      %v12386 = vpop.f32.mrb[0].mxu0
      %v12387 = vadd.f32 0.0, %v12386
      %v12388 = vpop.f32.mrb[0].mxu0
      %v12389 = vadd.f32 0.0, %v12388
      %12390 = vmatprep.mubr.f32.mxu0 %v12099
      %12391 = vmatmul.mubr.f32.gmra.mrb[0].mxu0 %v12098
      %v12392 = vpop.f32.mrb[0].mxu0
      %v12393 = vadd.f32 0.0, %v12392
      %v12394 = vpop.f32.mrb[0].mxu0
      %v12395 = vadd.f32 0.0, %v12394
      %12396 = vmatprep.mubr.f32.mxu0 %v12103
      %12397 = vmatmul.mubr.f32.gmra.mrb[0].mxu0 %v12102
      %v12398 = vpop.f32.mrb[0].mxu0
      %v12399 = vadd.f32 0.0, %v12398
      %v12400 = vpop.f32.mrb[0].mxu0
      %v12401 = vadd.f32 0.0, %v12400
      %12402 = vmatprep.mubr.f32.mxu0 %v12107
      %12403 = vmatmul.mubr.f32.gmra.mrb[0].mxu0 %v12106
      %v12404 = vpop.f32.mrb[0].mxu0
      %v12405 = vadd.f32 0.0, %v12404
      %v12406 = vpop.f32.mrb[0].mxu0
      %v12407 = vadd.f32 0.0, %v12406
      %12408 = vmatprep.mubr.f32.mxu0 %v12111
      %12409 = vmatmul.mubr.f32.gmra.mrb[0].mxu0 %v12110
      %v12410 = vpop.f32.mrb[0].mxu0
      %v12411 = vadd.f32 0.0, %v12410
      %v12412 = vpop.f32.mrb[0].mxu0
      %v12413 = vadd.f32 0.0, %v12412
      %12414 = vmatprep.mubr.f32.mxu0 %v12115
      %12415 = vmatmul.mubr.f32.gmra.mrb[0].mxu0 %v12114
      %v12416 = vpop.f32.mrb[0].mxu0
      %v12417 = vadd.f32 0.0, %v12416
      %v12418 = vpop.f32.mrb[0].mxu0
      %v12419 = vadd.f32 0.0, %v12418
      %12420 = vdwg.mxu0
      %12421 = vmatprep.subr.mxu0 %v11938
      %12422 = vmatpush1.msra.mxu0 %v11936
      %12423 = vmatprep.subr.mxu0 %v11942
      %12424 = vmatpush1.msra.mxu0 %v11940
      %12425 = vmatprep.subr.mxu0 %v11948
      %12426 = vmatpush1.msra.mxu0 %v11946
      %12427 = vmatprep.subr.mxu0 %v11952
      %12428 = vmatpush1.msra.mxu0 %v11950
      %12429 = vmatprep.subr.mxu0 %v11958
      %12430 = vmatpush1.msra.mxu0 %v11956
      %12431 = vmatprep.subr.mxu0 %v11962
      %12432 = vmatpush1.msra.mxu0 %v11960
      %12433 = vmatprep.subr.mxu0 %v11968
      %12434 = vmatpush1.msra.mxu0 %v11966
      %12435 = vmatprep.subr.mxu0 %v11972
      %12436 = vmatpush1.msra.mxu0 %v11970
      %12437 = vmatprep.subr.mxu0 %v11978
      %12438 = vmatpush1.msra.mxu0 %v11976
      %12439 = vmatprep.subr.mxu0 %v11982
      %12440 = vmatpush1.msra.mxu0 %v11980
      %12441 = vmatprep.subr.mxu0 %v11988
      %12442 = vmatpush1.msra.mxu0 %v11986
      %12443 = vmatprep.subr.mxu0 %v11992
      %12444 = vmatpush1.msra.mxu0 %v11990
      %12445 = vmatprep.subr.mxu0 %v11998
      %12446 = vmatpush1.msra.mxu0 %v11996
      %12447 = vmatprep.subr.mxu0 %v12002
      %12448 = vmatpush1.msra.mxu0 %v12000
      %12449 = vmatprep.subr.mxu0 %v12008
      %12450 = vmatpush1.msra.mxu0 %v12006
      %12451 = vmatprep.subr.mxu0 %v12012
      %12452 = vmatpush1.msra.mxu0 %v12010
      %12453 = vmatprep.subr.mxu0 %v12018
      %12454 = vmatpush1.msra.mxu0 %v12016
      %12455 = vmatprep.subr.mxu0 %v12022
      %12456 = vmatpush1.msra.mxu0 %v12020
      %12457 = vmatprep.subr.mxu0 %v12028
      %12458 = vmatpush1.msra.mxu0 %v12026
      %12459 = vmatprep.subr.mxu0 %v12032
      %12460 = vmatpush1.msra.mxu0 %v12030
      %12461 = vmatprep.subr.mxu0 %v12038
      %12462 = vmatpush1.msra.mxu0 %v12036
      %12463 = vmatprep.subr.mxu0 %v12042
      %12464 = vmatpush1.msra.mxu0 %v12040
      %12465 = vmatprep.subr.mxu0 %v12048
      %12466 = vmatpush1.msra.mxu0 %v12046
      %12467 = vmatprep.subr.mxu0 %v12052
      %12468 = vmatpush1.msra.mxu0 %v12050
      %12469 = vmatprep.subr.mxu0 %v12058
      %12470 = vmatpush1.msra.mxu0 %v12056
      %12471 = vmatprep.subr.mxu0 %v12062
      %12472 = vmatpush1.msra.mxu0 %v12060
      %12473 = vmatprep.subr.mxu0 %v12068
      %12474 = vmatpush1.msra.mxu0 %v12066
      %12475 = vmatprep.subr.mxu0 %v12072
      %12476 = vmatpush1.msra.mxu0 %v12070
      %12477 = vmatprep.subr.mxu0 %v12078
      %12478 = vmatpush1.msra.mxu0 %v12076
      %12479 = vmatprep.subr.mxu0 %v12082
      %12480 = vmatpush1.msra.mxu0 %v12080
      %12481 = vmatprep.subr.mxu0 %v12088
      %12482 = vmatpush1.msra.mxu0 %v12086
      %12483 = vmatprep.subr.mxu0 %v12092
      %12484 = vmatpush1.msra.mxu0 %v12090
      %12485 = vmatprep.mubr.f32.mxu0 %v12097
      %12486 = vmatmul.mubr.f32.gmra.mrb[0].mxu0 %v12096
      %v12487 = vpop.f32.mrb[0].mxu0
      %v12488 = vadd.f32 %v12387, %v12487
      %v12489 = vpop.f32.mrb[0].mxu0
      %v12490 = vadd.f32 %v12389, %v12489
      %12491 = vmatprep.mubr.f32.mxu0 %v12101
      %12492 = vmatmul.mubr.f32.gmra.mrb[0].mxu0 %v12100
      %v12493 = vpop.f32.mrb[0].mxu0
      %v12494 = vadd.f32 %v12393, %v12493
      %v12495 = vpop.f32.mrb[0].mxu0
      %v12496 = vadd.f32 %v12395, %v12495
      %12497 = vmatprep.mubr.f32.mxu0 %v12105
      %12498 = vmatmul.mubr.f32.gmra.mrb[0].mxu0 %v12104
      %v12499 = vpop.f32.mrb[0].mxu0
      %v12500 = vadd.f32 %v12399, %v12499
      %v12501 = vpop.f32.mrb[0].mxu0
      %v12502 = vadd.f32 %v12401, %v12501
      %12503 = vmatprep.mubr.f32.mxu0 %v12109
      %12504 = vmatmul.mubr.f32.gmra.mrb[0].mxu0 %v12108
      %v12505 = vpop.f32.mrb[0].mxu0
      %v12506 = vadd.f32 %v12405, %v12505
      %v12507 = vpop.f32.mrb[0].mxu0
      %v12508 = vadd.f32 %v12407, %v12507
      %12509 = vmatprep.mubr.f32.mxu0 %v12113
      %12510 = vmatmul.mubr.f32.gmra.mrb[0].mxu0 %v12112
      %v12511 = vpop.f32.mrb[0].mxu0
      %v12512 = vadd.f32 %v12411, %v12511
      %v12513 = vpop.f32.mrb[0].mxu0
      %v12514 = vadd.f32 %v12413, %v12513
      %12515 = vmatprep.mubr.f32.mxu0 %v12117
      %12516 = vmatmul.mubr.f32.gmra.mrb[0].mxu0 %v12116
      %v12517 = vpop.f32.mrb[0].mxu0
      %v12518 = vadd.f32 %v12417, %v12517
      %v12519 = vpop.f32.mrb[0].mxu0
      %v12520 = vadd.f32 %v12419, %v12519
      %12521 = vdwg.mxu0
      %v12522 = vmax.f32 %v12286, %v12292
      %v12523 = vmax.f32 %v12522, %v12298
      %v12524 = vmax.f32 %v12523, %v12304
      %v12525 = vmax.f32 %v12524, %v12310
      %v12526 = vrot.slane %v12525, 4
      %v12527 = vmax.f32 %v12525, %v12526
      %v12528 = vrot.slane %v12527, 2
      %v12529 = vmax.f32 %v12527, %v12528
      %v12530 = vrot.slane %v12529, 1
      %v12531 = vmax.f32 %v12529, %v12530
      %v12532 = vmax.f32 %v12288, %v12294
      %v12533 = vmax.f32 %v12532, %v12300
      %v12534 = vmax.f32 %v12533, %v12306
      %v12535 = vmax.f32 %v12534, %v12312
      %v12536 = vrot.slane %v12535, 4
      %v12537 = vmax.f32 %v12535, %v12536
      %v12538 = vrot.slane %v12537, 2
      %v12539 = vmax.f32 %v12537, %v12538
      %v12540 = vrot.slane %v12539, 1
      %v12541 = vmax.f32 %v12539, %v12540
      %v12542 = vmax.f32 %v12488, %v12494
      %v12543 = vmax.f32 %v12542, %v12500
      %v12544 = vmax.f32 %v12543, %v12506
      %v12545 = vmax.f32 %v12544, %v12512
      %v12546 = vrot.slane %v12545, 4
      %v12547 = vmax.f32 %v12545, %v12546
      %v12548 = vrot.slane %v12547, 2
      %v12549 = vmax.f32 %v12547, %v12548
      %v12550 = vrot.slane %v12549, 1
      %v12551 = vmax.f32 %v12549, %v12550
      %v12552 = vmax.f32 %v12490, %v12496
      %v12553 = vmax.f32 %v12552, %v12502
      %v12554 = vmax.f32 %v12553, %v12508
      %v12555 = vmax.f32 %v12554, %v12514
      %v12556 = vrot.slane %v12555, 4
      %v12557 = vmax.f32 %v12555, %v12556
      %v12558 = vrot.slane %v12557, 2
      %v12559 = vmax.f32 %v12557, %v12558
      %v12560 = vrot.slane %v12559, 1
      %v12561 = vmax.f32 %v12559, %v12560
      %v12562 = vrot.slane %v12316, 4
      %v12563 = vmax.f32 %v12316, %v12562
      %v12564 = vrot.slane %v12563, 2
      %v12565 = vmax.f32 %v12563, %v12564
      %v12566 = vrot.slane %v12565, 1
      %v12567 = vmax.f32 %v12565, %v12566
      %v12568 = vrot.slane %v12318, 4
      %v12569 = vmax.f32 %v12318, %v12568
      %v12570 = vrot.slane %v12569, 2
      %v12571 = vmax.f32 %v12569, %v12570
      %v12572 = vrot.slane %v12571, 1
      %v12573 = vmax.f32 %v12571, %v12572
      %v12574 = vrot.slane %v12518, 4
      %v12575 = vmax.f32 %v12518, %v12574
      %v12576 = vrot.slane %v12575, 2
      %v12577 = vmax.f32 %v12575, %v12576
      %v12578 = vrot.slane %v12577, 1
      %v12579 = vmax.f32 %v12577, %v12578
      %v12580 = vrot.slane %v12520, 4
      %v12581 = vmax.f32 %v12520, %v12580
      %v12582 = vrot.slane %v12581, 2
      %v12583 = vmax.f32 %v12581, %v12582
      %v12584 = vrot.slane %v12583, 1
      %v12585 = vmax.f32 %v12583, %v12584
      %v12586 = vld [vmem:[%s4] ss:$2 sm:$0xff]
      %v12588 = vlaneseq
      %v12589 = vshrl.u32 %v12588, 7
      %v12590 = vsub.s32 0, %v12589
      %v12591 = vrot.slane %v12586, %v12590
      %v12592 = vlaneseq
      %v12593 = vshrl.u32 %v12592, 7
      %v12594 = vsub.s32 1, %v12593
      %v12595 = vrot.slane %v12586, %v12594
      %v12596 = vlaneseq
      %v12597 = vshrl.u32 %v12596, 7
      %v12598 = vsub.s32 2, %v12597
      %v12599 = vrot.slane %v12586, %v12598
      %v12600 = vlaneseq
      %v12601 = vshrl.u32 %v12600, 7
      %v12602 = vsub.s32 3, %v12601
      %v12603 = vrot.slane %v12586, %v12602
      %v12604 = vlaneseq
      %v12605 = vshrl.u32 %v12604, 7
      %v12606 = vsub.s32 4, %v12605
      %v12607 = vrot.slane %v12586, %v12606
      %v12608 = vlaneseq
      %v12609 = vshrl.u32 %v12608, 7
      %v12610 = vsub.s32 5, %v12609
      %v12611 = vrot.slane %v12586, %v12610
      %v12612 = vlaneseq
      %v12613 = vshrl.u32 %v12612, 7
      %v12614 = vsub.s32 6, %v12613
      %v12615 = vrot.slane %v12586, %v12614
      %v12616 = vlaneseq
      %v12617 = vshrl.u32 %v12616, 7
      %v12618 = vsub.s32 7, %v12617
      %v12619 = vrot.slane %v12586, %v12618
      %v12628 = vmul.f32 %v12531, %v12591
      %v12629 = vmul.f32 %v12541, %v12595
      %v12630 = vmul.f32 %v12551, %v12599
      %v12631 = vmul.f32 %v12561, %v12603
      %v12632 = vmul.f32 %v12567, %v12607
      %v12633 = vmul.f32 %v12573, %v12611
      %v12634 = vmul.f32 %v12579, %v12615
      %v12635 = vmul.f32 %v12585, %v12619
      %vm12636 = vcmask 1040384
      %v12637 = vsel %vm12636, %v12628, 0.0
      %v12638 = vsel %vm12636, %v12629, 0.0
      %v12639 = vadd.f32 %v12637, %v12638
      %v12640 = vsel %vm12636, %v12630, 0.0
      %v12641 = vadd.f32 %v12639, %v12640
      %v12642 = vsel %vm12636, %v12631, 0.0
      %v12643 = vadd.f32 %v12641, %v12642
      %v12644 = vsel %vm12636, %v12632, 0.0
      %v12645 = vadd.f32 %v12643, %v12644
      %v12646 = vsel %vm12636, %v12633, 0.0
      %v12647 = vadd.f32 %v12645, %v12646
      %v12648 = vsel %vm12636, %v12634, 0.0
      %v12649 = vadd.f32 %v12647, %v12648
      %v12650 = vsel %vm12636, %v12635, 0.0
      %v12651 = vadd.f32 %v12649, %v12650
      %12652 = vadd.xlane.f32.xlu0 %v12651
      %v12653 = vpop.xlane.xlu0 %12652
      %s12654 = scalar_lea.vmem %s4, 1
      %v12655 = vld [vmem:[%s12654] ss:$2 sm:$0xff]
      %v12657 = vlaneseq
      %v12658 = vshrl.u32 %v12657, 7
      %v12659 = vsub.s32 0, %v12658
      %v12660 = vrot.slane %v12655, %v12659
      %v12661 = vlaneseq
      %v12662 = vshrl.u32 %v12661, 7
      %v12663 = vsub.s32 1, %v12662
      %v12664 = vrot.slane %v12655, %v12663
      %v12665 = vlaneseq
      %v12666 = vshrl.u32 %v12665, 7
      %v12667 = vsub.s32 2, %v12666
      %v12668 = vrot.slane %v12655, %v12667
      %v12669 = vlaneseq
      %v12670 = vshrl.u32 %v12669, 7
      %v12671 = vsub.s32 3, %v12670
      %v12672 = vrot.slane %v12655, %v12671
      %v12673 = vlaneseq
      %v12674 = vshrl.u32 %v12673, 7
      %v12675 = vsub.s32 4, %v12674
      %v12676 = vrot.slane %v12655, %v12675
      %v12677 = vlaneseq
      %v12678 = vshrl.u32 %v12677, 7
      %v12679 = vsub.s32 5, %v12678
      %v12680 = vrot.slane %v12655, %v12679
      %v12681 = vlaneseq
      %v12682 = vshrl.u32 %v12681, 7
      %v12683 = vsub.s32 6, %v12682
      %v12684 = vrot.slane %v12655, %v12683
      %v12685 = vlaneseq
      %v12686 = vshrl.u32 %v12685, 7
      %v12687 = vsub.s32 7, %v12686
      %v12688 = vrot.slane %v12655, %v12687
      %v12697 = vmul.f32 %v12531, %v12660
      %v12698 = vmul.f32 %v12541, %v12664
      %v12699 = vmul.f32 %v12551, %v12668
      %v12700 = vmul.f32 %v12561, %v12672
      %v12701 = vmul.f32 %v12567, %v12676
      %v12702 = vmul.f32 %v12573, %v12680
      %v12703 = vmul.f32 %v12579, %v12684
      %v12704 = vmul.f32 %v12585, %v12688
      %v12705 = vsel %vm12636, %v12697, 0.0
      %v12706 = vsel %vm12636, %v12698, 0.0
      %v12707 = vadd.f32 %v12705, %v12706
      %v12708 = vsel %vm12636, %v12699, 0.0
      %v12709 = vadd.f32 %v12707, %v12708
      %v12710 = vsel %vm12636, %v12700, 0.0
      %v12711 = vadd.f32 %v12709, %v12710
      %v12712 = vsel %vm12636, %v12701, 0.0
      %v12713 = vadd.f32 %v12711, %v12712
      %v12714 = vsel %vm12636, %v12702, 0.0
      %v12715 = vadd.f32 %v12713, %v12714
      %v12716 = vsel %vm12636, %v12703, 0.0
      %v12717 = vadd.f32 %v12715, %v12716
      %v12718 = vsel %vm12636, %v12704, 0.0
      %v12719 = vadd.f32 %v12717, %v12718
      %12720 = vadd.xlane.f32.xlu0 %v12719
      %v12721 = vpop.xlane.xlu0 %12720
      %vm12722 = vcmask 7168
      %v12723 = vsel %vm12722, %v12653, %v12721
      %v12724 = vld [vmem:[%s5] sm:$0x1]
      %v12725 = vadd.f32 %v12723, %v12724
      %vm12726 = vcmask 8192
      %v12727 = vsel %vm12726, %v12725, -inf
      %12728 = vmax.xlane.f32.xlu0 %v12727
      %v12729 = vpop.xlane.xlu0 %12728
      %v12730 = vsub.f32 %v12725, %v12729
      %v12731 = vmul.f32 %v12730, 1.442695
      %v12732 = vpow.pop %v12731
      %v12733 = vsel %vm12726, %v12732, 0.0
      %12734 = vadd.xlane.f32.xlu0 %v12733
      %v12735 = vpop.xlane.xlu0 %12734
      %v12736 = vrcp.pop %v12735
      %v12737 = vmul.f32 %v12732, %v12736
      %12739 = vset.pattern.permute.xlu0 0
      %12740 = vperm.xlu0 %12739, %v12737
      %v12741 = vpop.permute.xlu0 %12740
      %12743 = vset.pattern.permute.xlu0 1
      %12744 = vperm.xlu0 %12743, %v12737
      %v12745 = vpop.permute.xlu0 %12744
      %v12746 = vrot.slane %v12745, 7
      %v12748 = vsel %vm12636, %v12741, %v12746
      %vm12749 = vcmask 1041408
      %v12750 = vsel %vm12749, %v12748, 0.0
      %12751 = vst [vmem:[%s279] sm:$0xff] %v12750
      %p12752 = scmp.lt.s32.totalorder %s17, 1
      %s12753 = scalar_select %p12752, %s17, 1
      %s12754 = smul.addr %s12753, 8
      %s12755 = scalar_lea.vmem %s6, %s12754
      // Predicated region
      $region45: #{v2g_forward.1} parent=43 // pred_check
        %p12756 = pneg %p171
      $region46: #{v2g_forward.1} parent=43 // pred_check_branch
        %12758 = sbr.rel (%p12756) target = $region48
      $region47: #{v2g_forward.1} parent=43 // pred_region
        _
      $region48: #{v2g_forward.1} parent=43 // pred_fallthru
        _
    $region44: #{v2g_forward.1} parent=5 // pred_fallthru
      _
    %p12759 = scmp.le.s32.totalorder 2, %s12
    // Predicated region
    $region49: #{v2g_forward.1} parent=5 // pred_check
      %p12760 = pneg %p12759
    $region50: #{v2g_forward.1} parent=5 // pred_check_branch
      %12762 = sbr.rel (%p12760) target = $region52
    $region51: #{v2g_forward.1} parent=5 // pred_region
      %s12763 = ssub.s32 %s12, 2
      // Predicated region
      $region53: #{v2g_forward.1} parent=51 // pred_check
        %p12764 = pneg %p177
      $region54: #{v2g_forward.1} parent=51 // pred_check_branch
        %12766 = sbr.rel (%p12764) target = $region56
      $region55: #{v2g_forward.1} parent=51 // pred_region
        %p12767 = scmp.lt.s32.totalorder %s18, 1
        %s12768 = scalar_select %p12767, %s18, 1
        %s12769 = smul.addr %s12768, 8
        %s12770 = scalar_lea.vmem %s6, %s12769
      $region56: #{v2g_forward.1} parent=51 // pred_fallthru
        _
    $region52: #{v2g_forward.1} parent=5 // pred_fallthru
      _
  $region6: #{v2g_forward.1} parent=0 // loop_footer
    %s16 = sadd.s32 1, %s12
  $region7: #{v2g_forward.1} parent=0 // loop_footer_branch
    %11 = sbr.rel target = $region3
  $region8: #{v2g_forward.1} parent=0 // loop_exit
    _

</llo_original>
